<compile_context>
chip_gen: v5e
topology: v5e:2x2
jax: 0.10.0
libtpu: 0.0.40
codegen_flags: <defaults>
</compile_context>

<pallas_src>
import functools
import math

import jax
import jax.numpy as jnp
from jax.experimental import pallas as pl
from jax.experimental.pallas import tpu as pltpu


# ----------------------------- in-kernel helpers ----------------------------

def _gelu_tanh(x):
    # tanh-approximate GELU (VPU/EUP), fp32.
    return 0.5 * x * (1.0 + jnp.tanh(
        0.7978845608028654 * (x + 0.044715 * x * x * x)))


def _layer_norm(x, g, b, eps):
    mu = jnp.mean(x, axis=-1, keepdims=True)
    xc = x - mu
    var = jnp.mean(xc * xc, axis=-1, keepdims=True)
    return xc * jax.lax.rsqrt(var + eps) * g + b


# ------------------------------ fused kernel --------------------------------

def _clvit_fused_kernel(patches_ref, pw_ref, tok_bias_ref, attn_bias_ref,
                        wqkv_ref, bqkv_ref, wo_ref, bo_ref, g1_ref, b1_ref,
                        wf1_ref, bf1_ref, wf2_ref, bf2_ref, g2_ref, b2_ref,
                        out_ref, *, num_heads, num_layers, eps):
    M, D = out_ref.shape
    hd = D // num_heads
    scale = 1.0 / math.sqrt(hd)

    # ---- patch-embed matmul + (cls | conv-bias) + positional embedding ----
    # tok_bias already folds cls/pos/conv-bias per token (batch-invariant;
    # padded token rows are zero).  bf16 operands, fp32 accumulation.
    h = jnp.dot(patches_ref[...], pw_ref[...],
                preferred_element_type=jnp.float32) + tok_bias_ref[...]

    # Hoisted per-head multiplicative lane masks, shape (1, D).
    lane = jax.lax.broadcasted_iota(jnp.int32, (1, D), 1)
    head_masks = [
        ((lane >= i * hd) & (lane < (i + 1) * hd)).astype(jnp.float32)
        for i in range(num_heads)]

    # Additive key mask: 0 for same-batch non-padded keys, -1e30 otherwise.
    attn_bias = attn_bias_ref[...]

    for l in range(num_layers):          # unrolled; all weights VMEM-resident
        h_bf = h.astype(jnp.bfloat16)

        # Fused QKV projection (N = 3D keeps the best MXU shape at this size).
        qkv = jnp.dot(h_bf, wqkv_ref[l],
                      preferred_element_type=jnp.float32) + bqkv_ref[l]
        q = qkv[:, 0:D]
        k_bf = qkv[:, D:2 * D].astype(jnp.bfloat16)
        v_bf = qkv[:, 2 * D:3 * D].astype(jnp.bfloat16)

        ctx = jnp.zeros((M, D), jnp.float32)
        for hm in head_masks:
            # Head-h scores: zero Q's other-head lanes, contract over all D.
            qm_bf = (q * hm).astype(jnp.bfloat16)
            s = jax.lax.dot_general(qm_bf, k_bf, (((1,), (1,)), ((), ())),
                                    preferred_element_type=jnp.float32)
            s = s * scale + attn_bias
            m = jnp.max(s, axis=-1, keepdims=True)
            e = jnp.exp(s - m)                                   # fp32 softmax
            p = e * pl.reciprocal(jnp.sum(e, axis=-1, keepdims=True),
                                  approx=True)
            # Head-h context: P @ V over full D, keep only this head's lanes.
            ctx = ctx + hm * jnp.dot(p.astype(jnp.bfloat16), v_bf,
                                     preferred_element_type=jnp.float32)

        o = jnp.dot(ctx.astype(jnp.bfloat16), wo_ref[l],
                    preferred_element_type=jnp.float32) + bo_ref[l]
        h = _layer_norm(h + o, g1_ref[l], b1_ref[l], eps)

        f = _gelu_tanh(jnp.dot(h.astype(jnp.bfloat16), wf1_ref[l],
                               preferred_element_type=jnp.float32)
                       + bf1_ref[l])
        f = jnp.dot(f.astype(jnp.bfloat16), wf2_ref[l],
                    preferred_element_type=jnp.float32) + bf2_ref[l]
        h = _layer_norm(h + f, g2_ref[l], b2_ref[l], eps)

    # TODO(synk): output last dim D=32 (<128 lanes) -> masked stores; making
    # it lane-dense would need an extra in-kernel relayout, not worth it for a
    # single 16 KB writeback.
    out_ref[...] = h.astype(out_ref.dtype)


# ------------------------------- model glue ---------------------------------

def init_params(key, cfg):
    D, ps, L, F = (cfg["hidden_size"], cfg["patch_size"],
                   cfg["num_layers"], cfg["ffn_size"])
    Np = (64 // ps) * (192 // ps)
    T = Np + 1
    keys = jax.random.split(key, 7)

    def nrm(k, shape, dtype=jnp.bfloat16):
        return (jax.random.normal(k, shape, jnp.float32) * 0.02).astype(dtype)

    return {
        # conv weight (D, 3, ps, ps) flattened to (3*ps*ps, D), (c, ph, pw) order
        "patch_w": nrm(keys[0], (3 * ps * ps, D)),                 # bf16
        "patch_b": jnp.zeros((1, D), jnp.float32),
        "cls_token": nrm(keys[1], (1, D), jnp.float32),
        "pos_embed": nrm(keys[2], (T, D), jnp.float32),
        # per-layer weights stacked along a leading L axis; matmul weights bf16
        "w_qkv": nrm(keys[3], (L, D, 3 * D)),
        "b_qkv": jnp.zeros((L, 1, 3 * D), jnp.float32),
        "w_o": nrm(keys[4], (L, D, D)),
        "b_o": jnp.zeros((L, 1, D), jnp.float32),
        "ln1_g": jnp.ones((L, 1, D), jnp.float32),
        "ln1_b": jnp.zeros((L, 1, D), jnp.float32),
        "w_f1": nrm(keys[5], (L, D, F)),
        "b_f1": jnp.zeros((L, 1, F), jnp.float32),
        "w_f2": nrm(keys[6], (L, F, D)),
        "b_f2": jnp.zeros((L, 1, D), jnp.float32),
        "ln2_g": jnp.ones((L, 1, D), jnp.float32),
        "ln2_b": jnp.zeros((L, 1, D), jnp.float32),
    }


def _padded_tokens(T, batch_block):
    """Pad T to a sublane multiple; prefer a lane-dense folded row count."""
    t8 = 8 * pl.cdiv(T, 8)
    lane = 128 // math.gcd(batch_block, 128)
    t_lane = lane * pl.cdiv(T, lane)
    return t_lane if t_lane <= t8 + 16 else t8


def clvit_forward(img, params, cfg):
    # layout: img is NCHW (B, 3, H=64, W=192)
    B, C, H, W = img.shape
    ps, D, nH, L, F = (cfg["patch_size"], cfg["hidden_size"], cfg["num_heads"],
                       cfg["num_layers"], cfg["ffn_size"])
    gh, gw = H // ps, W // ps
    Np = gh * gw
    T = Np + 1
    Cpp = C * ps * ps

    # batch_block batches are folded into one matmul-M block per grid step.
    bb = int(cfg.get("batch_block", B))
    assert B % bb == 0
    num_blocks = B // bb
    T_pad = _padded_tokens(T, bb)
    Mb = bb * T_pad                                  # rows per grid step

    # --- plain-JAX glue: im2col patches (c, ph, pw) order, cls row 0, pad ---
    patches = img.reshape(B, C, gh, ps, gw, ps)
    patches = patches.transpose(0, 2, 4, 1, 3, 5).reshape(B, Np, Cpp)
    patches_pad = jnp.zeros((B, T_pad, Cpp), jnp.bfloat16)
    patches_pad = patches_pad.at[:, 1:Np + 1, :].set(
        patches.astype(jnp.bfloat16))
    patches_flat = patches_pad.reshape(B * T_pad, Cpp)

    # Per-token additive bias (batch-invariant): cls+pos at row 0,
    # conv-bias + pos for patch rows, 0 for padding rows.
    pos = params["pos_embed"]
    bias_t = jnp.zeros((T_pad, D), jnp.float32)
    bias_t = bias_t.at[0].set(params["cls_token"][0] + pos[0])
    bias_t = bias_t.at[1:T].set(params["patch_b"][0] + pos[1:T])
    tok_bias = jnp.tile(bias_t, (bb, 1))                         # (Mb, D)

    # Additive key mask for one row block: valid iff same batch & non-padded.
    rows = jnp.arange(Mb)
    rb = rows // T_pad
    ri = rows % T_pad
    ok = (rb[:, None] == rb[None, :]) & (ri < T)[None, :]
    attn_bias = jnp.where(ok, 0.0, -1e30).astype(jnp.float32)    # (Mb, Mb)

    # Advisory cost estimate for the fused kernel.
    flops_layer = (2 * Mb * D * 3 * D + nH * (4 * Mb * Mb * D)
                   + 2 * Mb * D * D + 4 * Mb * D * F)
    ce = pl.CostEstimate(
        flops=int(num_blocks * (2 * Mb * Cpp * D + L * flops_layer)),
        transcendentals=int(num_blocks * L * (nH * Mb * Mb + Mb * F)),
        bytes_accessed=int(
            patches_flat.size * 2 + tok_bias.size * 4 + attn_bias.size * 4
            + B * T_pad * D * 4
            + sum(int(v.size) * v.dtype.itemsize for v in params.values())))

    full = lambda shape: pl.BlockSpec(shape, lambda i, _s=shape: (0,) * len(_s))

    out = pl.pallas_call(
        functools.partial(_clvit_fused_kernel, num_heads=nH, num_layers=L,
                          eps=1e-5),
        grid=(num_blocks,),
        out_shape=jax.ShapeDtypeStruct((B * T_pad, D), jnp.float32),
        in_specs=[
            pl.BlockSpec((Mb, Cpp), lambda i: (i, 0)),   # patches (+cls/pad)
            full((Cpp, D)),                              # patch_w
            full((Mb, D)),                               # tok_bias
            full((Mb, Mb)),                              # attn_bias
            full((L, D, 3 * D)),                         # w_qkv
            full((L, 1, 3 * D)),                         # b_qkv
            full((L, D, D)),                             # w_o
            full((L, 1, D)),                             # b_o
            full((L, 1, D)),                             # ln1_g
            full((L, 1, D)),                             # ln1_b
            full((L, D, F)),                             # w_f1
            full((L, 1, F)),                             # b_f1
            full((L, F, D)),                             # w_f2
            full((L, 1, D)),                             # b_f2
            full((L, 1, D)),                             # ln2_g
            full((L, 1, D)),                             # ln2_b
        ],
        out_specs=pl.BlockSpec((Mb, D), lambda i: (i, 0)),
        compiler_params=pltpu.CompilerParams(
            dimension_semantics=("parallel",),
            vmem_limit_bytes=32 * 1024 * 1024),
        cost_estimate=ce,
    )(patches_flat, params["patch_w"], tok_bias, attn_bias,
      params["w_qkv"], params["b_qkv"], params["w_o"], params["b_o"],
      params["ln1_g"], params["ln1_b"], params["w_f1"], params["b_f1"],
      params["w_f2"], params["b_f2"], params["ln2_g"], params["ln2_b"])

    # fairseq-style (T, B, C) encoder output; drop padded rows.
    encoder_out = out.reshape(B, T_pad, D)[:, :T, :].transpose(1, 0, 2)
    # mask shape = (enShape[1], enShape[0]) = (B, T), all-False bools
    encoder_padding_mask = jnp.zeros((B, T), dtype=jnp.bool_)
    return encoder_out, encoder_padding_mask


if __name__ == "__main__":
    cfg = dict(patch_size=16, hidden_size=32, num_heads=4, ffn_size=64,
               num_layers=2)
    key = jax.random.PRNGKey(0)
    pkey, ikey = jax.random.split(key)
    params = init_params(pkey, cfg)
    img = jax.random.normal(ikey, (2, 3, 64, 192), jnp.float32)

    fwd = jax.jit(functools.partial(clvit_forward, cfg=cfg))
    encoder_out, pad_mask = fwd(img, params)
    jax.block_until_ready(encoder_out)
    jax.block_until_ready(pad_mask)

    T = (64 // cfg["patch_size"]) * (192 // cfg["patch_size"]) + 1
    assert encoder_out.shape == (T, 2, cfg["hidden_size"]), encoder_out.shape
    assert pad_mask.shape == (2, T) and pad_mask.dtype == jnp.bool_
    assert bool(jnp.isfinite(encoder_out).all())
    print("KERNEL_OK")
</pallas_src>

<mosaic_0001>
module attributes {stable_mosaic.version = 11 : i64} {
  func.func @_clvit_fused_kernel(%arg0: i32, %arg1: memref<128x768xbf16, #tpu.memory_space<vmem>>, %arg2: memref<768x32xbf16, #tpu.memory_space<vmem>>, %arg3: memref<128x32xf32, #tpu.memory_space<vmem>>, %arg4: memref<128x128xf32, #tpu.memory_space<vmem>>, %arg5: memref<2x32x96xbf16, #tpu.memory_space<vmem>>, %arg6: memref<2x1x96xf32, #tpu.memory_space<vmem>>, %arg7: memref<2x32x32xbf16, #tpu.memory_space<vmem>>, %arg8: memref<2x1x32xf32, #tpu.memory_space<vmem>>, %arg9: memref<2x1x32xf32, #tpu.memory_space<vmem>>, %arg10: memref<2x1x32xf32, #tpu.memory_space<vmem>>, %arg11: memref<2x32x64xbf16, #tpu.memory_space<vmem>>, %arg12: memref<2x1x64xf32, #tpu.memory_space<vmem>>, %arg13: memref<2x64x32xbf16, #tpu.memory_space<vmem>>, %arg14: memref<2x1x32xf32, #tpu.memory_space<vmem>>, %arg15: memref<2x1x32xf32, #tpu.memory_space<vmem>>, %arg16: memref<2x1x32xf32, #tpu.memory_space<vmem>>, %arg17: memref<128x32xf32, #tpu.memory_space<vmem>>) attributes {dimension_semantics = [#tpu.dimension_semantics<parallel>], iteration_bounds = array<i64: 1>, scalar_prefetch = 0 : i64, scratch_operands = 0 : i64, tpu.core_type = #tpu.core_type<tc>, window_params = [{transform_indices = @transform_0, window_bounds = array<i64: 128, 768>}, {pipeline_mode = #tpu.pipeline_mode<synchronous>, transform_indices = @transform_1, window_bounds = array<i64: 768, 32>}, {pipeline_mode = #tpu.pipeline_mode<synchronous>, transform_indices = @transform_2, window_bounds = array<i64: 128, 32>}, {pipeline_mode = #tpu.pipeline_mode<synchronous>, transform_indices = @transform_3, window_bounds = array<i64: 128, 128>}, {pipeline_mode = #tpu.pipeline_mode<synchronous>, transform_indices = @transform_4, window_bounds = array<i64: 2, 32, 96>}, {pipeline_mode = #tpu.pipeline_mode<synchronous>, transform_indices = @transform_5, window_bounds = array<i64: 2, 1, 96>}, {pipeline_mode = #tpu.pipeline_mode<synchronous>, transform_indices = @transform_6, window_bounds = array<i64: 2, 32, 32>}, {pipeline_mode = #tpu.pipeline_mode<synchronous>, transform_indices = @transform_7, window_bounds = array<i64: 2, 1, 32>}, {pipeline_mode = #tpu.pipeline_mode<synchronous>, transform_indices = @transform_8, window_bounds = array<i64: 2, 1, 32>}, {pipeline_mode = #tpu.pipeline_mode<synchronous>, transform_indices = @transform_9, window_bounds = array<i64: 2, 1, 32>}, {pipeline_mode = #tpu.pipeline_mode<synchronous>, transform_indices = @transform_10, window_bounds = array<i64: 2, 32, 64>}, {pipeline_mode = #tpu.pipeline_mode<synchronous>, transform_indices = @transform_11, window_bounds = array<i64: 2, 1, 64>}, {pipeline_mode = #tpu.pipeline_mode<synchronous>, transform_indices = @transform_12, window_bounds = array<i64: 2, 64, 32>}, {pipeline_mode = #tpu.pipeline_mode<synchronous>, transform_indices = @transform_13, window_bounds = array<i64: 2, 1, 32>}, {pipeline_mode = #tpu.pipeline_mode<synchronous>, transform_indices = @transform_14, window_bounds = array<i64: 2, 1, 32>}, {pipeline_mode = #tpu.pipeline_mode<synchronous>, transform_indices = @transform_15, window_bounds = array<i64: 2, 1, 32>}, {transform_indices = @transform_16, window_bounds = array<i64: 128, 32>}]} {
    %c0 = arith.constant 0 : index
    %c0_0 = arith.constant 0 : index
    %0 = vector.load %arg1[%c0, %c0_0] : memref<128x768xbf16, #tpu.memory_space<vmem>>, vector<128x768xbf16>
    %c0_1 = arith.constant 0 : index
    %c0_2 = arith.constant 0 : index
    %1 = vector.load %arg2[%c0_1, %c0_2] : memref<768x32xbf16, #tpu.memory_space<vmem>>, vector<768x32xbf16>
    %cst = arith.constant dense<0.000000e+00> : vector<128x32xf32>
    %2 = tpu.matmul %0, %1, %cst {dimension_numbers = #tpu.dot_dimension_numbers<[1], [0], [0], [1], [0, 0, 1, 1], [], []>} : vector<128x768xbf16>, vector<768x32xbf16>, vector<128x32xf32> -> vector<128x32xf32>
    %c0_3 = arith.constant 0 : index
    %c0_4 = arith.constant 0 : index
    %3 = vector.load %arg3[%c0_3, %c0_4] : memref<128x32xf32, #tpu.memory_space<vmem>>, vector<128x32xf32>
    %4 = arith.addf %2, %3 : vector<128x32xf32>
    %5 = tpu.iota {dimensions = array<i32: 1>} : vector<1x32xi32>
    %c0_i32 = arith.constant 0 : i32
    %6 = vector.broadcast %c0_i32 : i32 to vector<1x32xi32>
    %7 = arith.cmpi sge, %5, %6 : vector<1x32xi32>
    %c8_i32 = arith.constant 8 : i32
    %8 = vector.broadcast %c8_i32 : i32 to vector<1x32xi32>
    %9 = arith.cmpi slt, %5, %8 : vector<1x32xi32>
    %10 = arith.andi %7, %9 : vector<1x32xi1>
    %11 = arith.extui %10 : vector<1x32xi1> to vector<1x32xi32>
    %12 = arith.sitofp %11 : vector<1x32xi32> to vector<1x32xf32>
    %c8_i32_5 = arith.constant 8 : i32
    %13 = vector.broadcast %c8_i32_5 : i32 to vector<1x32xi32>
    %14 = arith.cmpi sge, %5, %13 : vector<1x32xi32>
    %c16_i32 = arith.constant 16 : i32
    %15 = vector.broadcast %c16_i32 : i32 to vector<1x32xi32>
    %16 = arith.cmpi slt, %5, %15 : vector<1x32xi32>
    %17 = arith.andi %14, %16 : vector<1x32xi1>
    %18 = arith.extui %17 : vector<1x32xi1> to vector<1x32xi32>
    %19 = arith.sitofp %18 : vector<1x32xi32> to vector<1x32xf32>
    %c16_i32_6 = arith.constant 16 : i32
    %20 = vector.broadcast %c16_i32_6 : i32 to vector<1x32xi32>
    %21 = arith.cmpi sge, %5, %20 : vector<1x32xi32>
    %c24_i32 = arith.constant 24 : i32
    %22 = vector.broadcast %c24_i32 : i32 to vector<1x32xi32>
    %23 = arith.cmpi slt, %5, %22 : vector<1x32xi32>
    %24 = arith.andi %21, %23 : vector<1x32xi1>
    %25 = arith.extui %24 : vector<1x32xi1> to vector<1x32xi32>
    %26 = arith.sitofp %25 : vector<1x32xi32> to vector<1x32xf32>
    %c24_i32_7 = arith.constant 24 : i32
    %27 = vector.broadcast %c24_i32_7 : i32 to vector<1x32xi32>
    %28 = arith.cmpi sge, %5, %27 : vector<1x32xi32>
    %c32_i32 = arith.constant 32 : i32
    %29 = vector.broadcast %c32_i32 : i32 to vector<1x32xi32>
    %30 = arith.cmpi slt, %5, %29 : vector<1x32xi32>
    %31 = arith.andi %28, %30 : vector<1x32xi1>
    %32 = arith.extui %31 : vector<1x32xi1> to vector<1x32xi32>
    %33 = arith.sitofp %32 : vector<1x32xi32> to vector<1x32xf32>
    %c0_8 = arith.constant 0 : index
    %c0_9 = arith.constant 0 : index
    %34 = vector.load %arg4[%c0_8, %c0_9] : memref<128x128xf32, #tpu.memory_space<vmem>>, vector<128x128xf32>
    %35 = arith.truncf %4 : vector<128x32xf32> to vector<128x32xbf16>
    %c0_10 = arith.constant 0 : index
    %c0_11 = arith.constant 0 : index
    %c0_12 = arith.constant 0 : index
    %36 = vector.load %arg5[%c0_10, %c0_11, %c0_12] : memref<2x32x96xbf16, #tpu.memory_space<vmem>>, vector<1x32x96xbf16>
    %37 = vector.shape_cast %36 : vector<1x32x96xbf16> to vector<32x96xbf16>
    %cst_13 = arith.constant dense<0.000000e+00> : vector<128x96xf32>
    %38 = tpu.matmul %35, %37, %cst_13 {dimension_numbers = #tpu.dot_dimension_numbers<[1], [0], [0], [1], [0, 0, 1, 1], [], []>} : vector<128x32xbf16>, vector<32x96xbf16>, vector<128x96xf32> -> vector<128x96xf32>
    %c0_14 = arith.constant 0 : index
    %c0_15 = arith.constant 0 : index
    %c0_16 = arith.constant 0 : index
    %39 = vector.load %arg6[%c0_14, %c0_15, %c0_16] : memref<2x1x96xf32, #tpu.memory_space<vmem>>, vector<1x1x96xf32>
    %40 = vector.shape_cast %39 : vector<1x1x96xf32> to vector<1x96xf32>
    %41 = vector.broadcast %40 : vector<1x96xf32> to vector<128x96xf32>
    %42 = arith.addf %38, %41 : vector<128x96xf32>
    %43 = vector.extract_strided_slice %42 {offsets = [0, 0], sizes = [128, 32], strides = [1, 1]} : vector<128x96xf32> to vector<128x32xf32>
    %44 = vector.extract_strided_slice %42 {offsets = [0, 32], sizes = [128, 32], strides = [1, 1]} : vector<128x96xf32> to vector<128x32xf32>
    %45 = arith.truncf %44 : vector<128x32xf32> to vector<128x32xbf16>
    %46 = vector.extract_strided_slice %42 {offsets = [0, 64], sizes = [128, 32], strides = [1, 1]} : vector<128x96xf32> to vector<128x32xf32>
    %47 = arith.truncf %46 : vector<128x32xf32> to vector<128x32xbf16>
    %cst_17 = arith.constant 0.000000e+00 : f32
    %48 = vector.broadcast %cst_17 : f32 to vector<128x32xf32>
    %49 = vector.broadcast %12 : vector<1x32xf32> to vector<128x32xf32>
    %50 = arith.mulf %43, %49 : vector<128x32xf32>
    %51 = arith.truncf %50 : vector<128x32xf32> to vector<128x32xbf16>
    %cst_18 = arith.constant dense<0.000000e+00> : vector<128x128xf32>
    %52 = tpu.matmul %51, %45, %cst_18 {dimension_numbers = #tpu.dot_dimension_numbers<[1], [1], [0], [0], [0, 0, 1, 0], [], []>} : vector<128x32xbf16>, vector<128x32xbf16>, vector<128x128xf32> -> vector<128x128xf32>
    %cst_19 = arith.constant 0.353553385 : f32
    %53 = vector.broadcast %cst_19 : f32 to vector<128x128xf32>
    %54 = arith.mulf %52, %53 : vector<128x128xf32>
    %55 = arith.addf %54, %34 : vector<128x128xf32>
    %cst_20 = arith.constant dense<0xFF800000> : vector<128xf32>
    %56 = vector.multi_reduction <maximumf>, %55, %cst_20 [1] : vector<128x128xf32> to vector<128xf32>
    %57 = vector.shape_cast %56 : vector<128xf32> to vector<128x1xf32>
    %58 = vector.broadcast %57 : vector<128x1xf32> to vector<128x128xf32>
    %59 = arith.subf %55, %58 : vector<128x128xf32>
    %60 = math.exp %59 : vector<128x128xf32>
    %cst_21 = arith.constant dense<0.000000e+00> : vector<128xf32>
    %61 = vector.multi_reduction <add>, %60, %cst_21 [1] : vector<128x128xf32> to vector<128xf32>
    %62 = vector.shape_cast %61 : vector<128xf32> to vector<128x1xf32>
    %63 = tpu.reciprocal %62 {approx = true} : vector<128x1xf32> -> vector<128x1xf32>
    %64 = vector.broadcast %63 : vector<128x1xf32> to vector<128x128xf32>
    %65 = arith.mulf %60, %64 : vector<128x128xf32>
    %66 = arith.truncf %65 : vector<128x128xf32> to vector<128x128xbf16>
    %cst_22 = arith.constant dense<0.000000e+00> : vector<128x32xf32>
    %67 = tpu.matmul %66, %47, %cst_22 {dimension_numbers = #tpu.dot_dimension_numbers<[1], [0], [0], [1], [0, 0, 1, 1], [], []>} : vector<128x128xbf16>, vector<128x32xbf16>, vector<128x32xf32> -> vector<128x32xf32>
    %68 = vector.broadcast %12 : vector<1x32xf32> to vector<128x32xf32>
    %69 = arith.mulf %68, %67 : vector<128x32xf32>
    %70 = arith.addf %48, %69 : vector<128x32xf32>
    %71 = vector.broadcast %19 : vector<1x32xf32> to vector<128x32xf32>
    %72 = arith.mulf %43, %71 : vector<128x32xf32>
    %73 = arith.truncf %72 : vector<128x32xf32> to vector<128x32xbf16>
    %cst_23 = arith.constant dense<0.000000e+00> : vector<128x128xf32>
    %74 = tpu.matmul %73, %45, %cst_23 {dimension_numbers = #tpu.dot_dimension_numbers<[1], [1], [0], [0], [0, 0, 1, 0], [], []>} : vector<128x32xbf16>, vector<128x32xbf16>, vector<128x128xf32> -> vector<128x128xf32>
    %cst_24 = arith.constant 0.353553385 : f32
    %75 = vector.broadcast %cst_24 : f32 to vector<128x128xf32>
    %76 = arith.mulf %74, %75 : vector<128x128xf32>
    %77 = arith.addf %76, %34 : vector<128x128xf32>
    %cst_25 = arith.constant dense<0xFF800000> : vector<128xf32>
    %78 = vector.multi_reduction <maximumf>, %77, %cst_25 [1] : vector<128x128xf32> to vector<128xf32>
    %79 = vector.shape_cast %78 : vector<128xf32> to vector<128x1xf32>
    %80 = vector.broadcast %79 : vector<128x1xf32> to vector<128x128xf32>
    %81 = arith.subf %77, %80 : vector<128x128xf32>
    %82 = math.exp %81 : vector<128x128xf32>
    %cst_26 = arith.constant dense<0.000000e+00> : vector<128xf32>
    %83 = vector.multi_reduction <add>, %82, %cst_26 [1] : vector<128x128xf32> to vector<128xf32>
    %84 = vector.shape_cast %83 : vector<128xf32> to vector<128x1xf32>
    %85 = tpu.reciprocal %84 {approx = true} : vector<128x1xf32> -> vector<128x1xf32>
    %86 = vector.broadcast %85 : vector<128x1xf32> to vector<128x128xf32>
    %87 = arith.mulf %82, %86 : vector<128x128xf32>
    %88 = arith.truncf %87 : vector<128x128xf32> to vector<128x128xbf16>
    %cst_27 = arith.constant dense<0.000000e+00> : vector<128x32xf32>
    %89 = tpu.matmul %88, %47, %cst_27 {dimension_numbers = #tpu.dot_dimension_numbers<[1], [0], [0], [1], [0, 0, 1, 1], [], []>} : vector<128x128xbf16>, vector<128x32xbf16>, vector<128x32xf32> -> vector<128x32xf32>
    %90 = vector.broadcast %19 : vector<1x32xf32> to vector<128x32xf32>
    %91 = arith.mulf %90, %89 : vector<128x32xf32>
    %92 = arith.addf %70, %91 : vector<128x32xf32>
    %93 = vector.broadcast %26 : vector<1x32xf32> to vector<128x32xf32>
    %94 = arith.mulf %43, %93 : vector<128x32xf32>
    %95 = arith.truncf %94 : vector<128x32xf32> to vector<128x32xbf16>
    %cst_28 = arith.constant dense<0.000000e+00> : vector<128x128xf32>
    %96 = tpu.matmul %95, %45, %cst_28 {dimension_numbers = #tpu.dot_dimension_numbers<[1], [1], [0], [0], [0, 0, 1, 0], [], []>} : vector<128x32xbf16>, vector<128x32xbf16>, vector<128x128xf32> -> vector<128x128xf32>
    %cst_29 = arith.constant 0.353553385 : f32
    %97 = vector.broadcast %cst_29 : f32 to vector<128x128xf32>
    %98 = arith.mulf %96, %97 : vector<128x128xf32>
    %99 = arith.addf %98, %34 : vector<128x128xf32>
    %cst_30 = arith.constant dense<0xFF800000> : vector<128xf32>
    %100 = vector.multi_reduction <maximumf>, %99, %cst_30 [1] : vector<128x128xf32> to vector<128xf32>
    %101 = vector.shape_cast %100 : vector<128xf32> to vector<128x1xf32>
    %102 = vector.broadcast %101 : vector<128x1xf32> to vector<128x128xf32>
    %103 = arith.subf %99, %102 : vector<128x128xf32>
    %104 = math.exp %103 : vector<128x128xf32>
    %cst_31 = arith.constant dense<0.000000e+00> : vector<128xf32>
    %105 = vector.multi_reduction <add>, %104, %cst_31 [1] : vector<128x128xf32> to vector<128xf32>
    %106 = vector.shape_cast %105 : vector<128xf32> to vector<128x1xf32>
    %107 = tpu.reciprocal %106 {approx = true} : vector<128x1xf32> -> vector<128x1xf32>
    %108 = vector.broadcast %107 : vector<128x1xf32> to vector<128x128xf32>
    %109 = arith.mulf %104, %108 : vector<128x128xf32>
    %110 = arith.truncf %109 : vector<128x128xf32> to vector<128x128xbf16>
    %cst_32 = arith.constant dense<0.000000e+00> : vector<128x32xf32>
    %111 = tpu.matmul %110, %47, %cst_32 {dimension_numbers = #tpu.dot_dimension_numbers<[1], [0], [0], [1], [0, 0, 1, 1], [], []>} : vector<128x128xbf16>, vector<128x32xbf16>, vector<128x32xf32> -> vector<128x32xf32>
    %112 = vector.broadcast %26 : vector<1x32xf32> to vector<128x32xf32>
    %113 = arith.mulf %112, %111 : vector<128x32xf32>
    %114 = arith.addf %92, %113 : vector<128x32xf32>
    %115 = vector.broadcast %33 : vector<1x32xf32> to vector<128x32xf32>
    %116 = arith.mulf %43, %115 : vector<128x32xf32>
    %117 = arith.truncf %116 : vector<128x32xf32> to vector<128x32xbf16>
    %cst_33 = arith.constant dense<0.000000e+00> : vector<128x128xf32>
    %118 = tpu.matmul %117, %45, %cst_33 {dimension_numbers = #tpu.dot_dimension_numbers<[1], [1], [0], [0], [0, 0, 1, 0], [], []>} : vector<128x32xbf16>, vector<128x32xbf16>, vector<128x128xf32> -> vector<128x128xf32>
    %cst_34 = arith.constant 0.353553385 : f32
    %119 = vector.broadcast %cst_34 : f32 to vector<128x128xf32>
    %120 = arith.mulf %118, %119 : vector<128x128xf32>
    %121 = arith.addf %120, %34 : vector<128x128xf32>
    %cst_35 = arith.constant dense<0xFF800000> : vector<128xf32>
    %122 = vector.multi_reduction <maximumf>, %121, %cst_35 [1] : vector<128x128xf32> to vector<128xf32>
    %123 = vector.shape_cast %122 : vector<128xf32> to vector<128x1xf32>
    %124 = vector.broadcast %123 : vector<128x1xf32> to vector<128x128xf32>
    %125 = arith.subf %121, %124 : vector<128x128xf32>
    %126 = math.exp %125 : vector<128x128xf32>
    %cst_36 = arith.constant dense<0.000000e+00> : vector<128xf32>
    %127 = vector.multi_reduction <add>, %126, %cst_36 [1] : vector<128x128xf32> to vector<128xf32>
    %128 = vector.shape_cast %127 : vector<128xf32> to vector<128x1xf32>
    %129 = tpu.reciprocal %128 {approx = true} : vector<128x1xf32> -> vector<128x1xf32>
    %130 = vector.broadcast %129 : vector<128x1xf32> to vector<128x128xf32>
    %131 = arith.mulf %126, %130 : vector<128x128xf32>
    %132 = arith.truncf %131 : vector<128x128xf32> to vector<128x128xbf16>
    %cst_37 = arith.constant dense<0.000000e+00> : vector<128x32xf32>
    %133 = tpu.matmul %132, %47, %cst_37 {dimension_numbers = #tpu.dot_dimension_numbers<[1], [0], [0], [1], [0, 0, 1, 1], [], []>} : vector<128x128xbf16>, vector<128x32xbf16>, vector<128x32xf32> -> vector<128x32xf32>
    %134 = vector.broadcast %33 : vector<1x32xf32> to vector<128x32xf32>
    %135 = arith.mulf %134, %133 : vector<128x32xf32>
    %136 = arith.addf %114, %135 : vector<128x32xf32>
    %137 = arith.truncf %136 : vector<128x32xf32> to vector<128x32xbf16>
    %c0_38 = arith.constant 0 : index
    %c0_39 = arith.constant 0 : index
    %c0_40 = arith.constant 0 : index
    %138 = vector.load %arg7[%c0_38, %c0_39, %c0_40] : memref<2x32x32xbf16, #tpu.memory_space<vmem>>, vector<1x32x32xbf16>
    %139 = vector.shape_cast %138 : vector<1x32x32xbf16> to vector<32x32xbf16>
    %cst_41 = arith.constant dense<0.000000e+00> : vector<128x32xf32>
    %140 = tpu.matmul %137, %139, %cst_41 {dimension_numbers = #tpu.dot_dimension_numbers<[1], [0], [0], [1], [0, 0, 1, 1], [], []>} : vector<128x32xbf16>, vector<32x32xbf16>, vector<128x32xf32> -> vector<128x32xf32>
    %c0_42 = arith.constant 0 : index
    %c0_43 = arith.constant 0 : index
    %c0_44 = arith.constant 0 : index
    %141 = vector.load %arg8[%c0_42, %c0_43, %c0_44] : memref<2x1x32xf32, #tpu.memory_space<vmem>>, vector<1x1x32xf32>
    %142 = vector.shape_cast %141 : vector<1x1x32xf32> to vector<1x32xf32>
    %143 = vector.broadcast %142 : vector<1x32xf32> to vector<128x32xf32>
    %144 = arith.addf %140, %143 : vector<128x32xf32>
    %145 = arith.addf %4, %144 : vector<128x32xf32>
    %c0_45 = arith.constant 0 : index
    %c0_46 = arith.constant 0 : index
    %c0_47 = arith.constant 0 : index
    %146 = vector.load %arg9[%c0_45, %c0_46, %c0_47] : memref<2x1x32xf32, #tpu.memory_space<vmem>>, vector<1x1x32xf32>
    %147 = vector.shape_cast %146 : vector<1x1x32xf32> to vector<1x32xf32>
    %c0_48 = arith.constant 0 : index
    %c0_49 = arith.constant 0 : index
    %c0_50 = arith.constant 0 : index
    %148 = vector.load %arg10[%c0_48, %c0_49, %c0_50] : memref<2x1x32xf32, #tpu.memory_space<vmem>>, vector<1x1x32xf32>
    %149 = vector.shape_cast %148 : vector<1x1x32xf32> to vector<1x32xf32>
    %cst_51 = arith.constant dense<0.000000e+00> : vector<128xf32>
    %150 = vector.multi_reduction <add>, %145, %cst_51 [1] : vector<128x32xf32> to vector<128xf32>
    %151 = vector.shape_cast %150 : vector<128xf32> to vector<128x1xf32>
    %cst_52 = arith.constant 3.200000e+01 : f32
    %152 = vector.broadcast %cst_52 : f32 to vector<128x1xf32>
    %153 = arith.divf %151, %152 : vector<128x1xf32>
    %154 = vector.broadcast %153 : vector<128x1xf32> to vector<128x32xf32>
    %155 = arith.subf %145, %154 : vector<128x32xf32>
    %156 = arith.mulf %155, %155 : vector<128x32xf32>
    %cst_53 = arith.constant dense<0.000000e+00> : vector<128xf32>
    %157 = vector.multi_reduction <add>, %156, %cst_53 [1] : vector<128x32xf32> to vector<128xf32>
    %158 = vector.shape_cast %157 : vector<128xf32> to vector<128x1xf32>
    %cst_54 = arith.constant 3.200000e+01 : f32
    %159 = vector.broadcast %cst_54 : f32 to vector<128x1xf32>
    %160 = arith.divf %158, %159 : vector<128x1xf32>
    %cst_55 = arith.constant 9.99999974E-6 : f32
    %161 = vector.broadcast %cst_55 : f32 to vector<128x1xf32>
    %162 = arith.addf %160, %161 : vector<128x1xf32>
    %163 = math.rsqrt %162 : vector<128x1xf32>
    %164 = vector.broadcast %163 : vector<128x1xf32> to vector<128x32xf32>
    %165 = arith.mulf %155, %164 : vector<128x32xf32>
    %166 = vector.broadcast %147 : vector<1x32xf32> to vector<128x32xf32>
    %167 = arith.mulf %165, %166 : vector<128x32xf32>
    %168 = vector.broadcast %149 : vector<1x32xf32> to vector<128x32xf32>
    %169 = arith.addf %167, %168 : vector<128x32xf32>
    %170 = arith.truncf %169 : vector<128x32xf32> to vector<128x32xbf16>
    %c0_56 = arith.constant 0 : index
    %c0_57 = arith.constant 0 : index
    %c0_58 = arith.constant 0 : index
    %171 = vector.load %arg11[%c0_56, %c0_57, %c0_58] : memref<2x32x64xbf16, #tpu.memory_space<vmem>>, vector<1x32x64xbf16>
    %172 = vector.shape_cast %171 : vector<1x32x64xbf16> to vector<32x64xbf16>
    %cst_59 = arith.constant dense<0.000000e+00> : vector<128x64xf32>
    %173 = tpu.matmul %170, %172, %cst_59 {dimension_numbers = #tpu.dot_dimension_numbers<[1], [0], [0], [1], [0, 0, 1, 1], [], []>} : vector<128x32xbf16>, vector<32x64xbf16>, vector<128x64xf32> -> vector<128x64xf32>
    %c0_60 = arith.constant 0 : index
    %c0_61 = arith.constant 0 : index
    %c0_62 = arith.constant 0 : index
    %174 = vector.load %arg12[%c0_60, %c0_61, %c0_62] : memref<2x1x64xf32, #tpu.memory_space<vmem>>, vector<1x1x64xf32>
    %175 = vector.shape_cast %174 : vector<1x1x64xf32> to vector<1x64xf32>
    %176 = vector.broadcast %175 : vector<1x64xf32> to vector<128x64xf32>
    %177 = arith.addf %173, %176 : vector<128x64xf32>
    %cst_63 = arith.constant 5.000000e-01 : f32
    %178 = vector.broadcast %cst_63 : f32 to vector<128x64xf32>
    %179 = arith.mulf %178, %177 : vector<128x64xf32>
    %cst_64 = arith.constant 4.471500e-02 : f32
    %180 = vector.broadcast %cst_64 : f32 to vector<128x64xf32>
    %181 = arith.mulf %180, %177 : vector<128x64xf32>
    %182 = arith.mulf %181, %177 : vector<128x64xf32>
    %183 = arith.mulf %182, %177 : vector<128x64xf32>
    %184 = arith.addf %177, %183 : vector<128x64xf32>
    %cst_65 = arith.constant 0.797884583 : f32
    %185 = vector.broadcast %cst_65 : f32 to vector<128x64xf32>
    %186 = arith.mulf %185, %184 : vector<128x64xf32>
    %187 = math.tanh %186 : vector<128x64xf32>
    %cst_66 = arith.constant 1.000000e+00 : f32
    %188 = vector.broadcast %cst_66 : f32 to vector<128x64xf32>
    %189 = arith.addf %188, %187 : vector<128x64xf32>
    %190 = arith.mulf %179, %189 : vector<128x64xf32>
    %191 = arith.truncf %190 : vector<128x64xf32> to vector<128x64xbf16>
    %c0_67 = arith.constant 0 : index
    %c0_68 = arith.constant 0 : index
    %c0_69 = arith.constant 0 : index
    %192 = vector.load %arg13[%c0_67, %c0_68, %c0_69] : memref<2x64x32xbf16, #tpu.memory_space<vmem>>, vector<1x64x32xbf16>
    %193 = vector.shape_cast %192 : vector<1x64x32xbf16> to vector<64x32xbf16>
    %cst_70 = arith.constant dense<0.000000e+00> : vector<128x32xf32>
    %194 = tpu.matmul %191, %193, %cst_70 {dimension_numbers = #tpu.dot_dimension_numbers<[1], [0], [0], [1], [0, 0, 1, 1], [], []>} : vector<128x64xbf16>, vector<64x32xbf16>, vector<128x32xf32> -> vector<128x32xf32>
    %c0_71 = arith.constant 0 : index
    %c0_72 = arith.constant 0 : index
    %c0_73 = arith.constant 0 : index
    %195 = vector.load %arg14[%c0_71, %c0_72, %c0_73] : memref<2x1x32xf32, #tpu.memory_space<vmem>>, vector<1x1x32xf32>
    %196 = vector.shape_cast %195 : vector<1x1x32xf32> to vector<1x32xf32>
    %197 = vector.broadcast %196 : vector<1x32xf32> to vector<128x32xf32>
    %198 = arith.addf %194, %197 : vector<128x32xf32>
    %199 = arith.addf %169, %198 : vector<128x32xf32>
    %c0_74 = arith.constant 0 : index
    %c0_75 = arith.constant 0 : index
    %c0_76 = arith.constant 0 : index
    %200 = vector.load %arg15[%c0_74, %c0_75, %c0_76] : memref<2x1x32xf32, #tpu.memory_space<vmem>>, vector<1x1x32xf32>
    %201 = vector.shape_cast %200 : vector<1x1x32xf32> to vector<1x32xf32>
    %c0_77 = arith.constant 0 : index
    %c0_78 = arith.constant 0 : index
    %c0_79 = arith.constant 0 : index
    %202 = vector.load %arg16[%c0_77, %c0_78, %c0_79] : memref<2x1x32xf32, #tpu.memory_space<vmem>>, vector<1x1x32xf32>
    %203 = vector.shape_cast %202 : vector<1x1x32xf32> to vector<1x32xf32>
    %cst_80 = arith.constant dense<0.000000e+00> : vector<128xf32>
    %204 = vector.multi_reduction <add>, %199, %cst_80 [1] : vector<128x32xf32> to vector<128xf32>
    %205 = vector.shape_cast %204 : vector<128xf32> to vector<128x1xf32>
    %cst_81 = arith.constant 3.200000e+01 : f32
    %206 = vector.broadcast %cst_81 : f32 to vector<128x1xf32>
    %207 = arith.divf %205, %206 : vector<128x1xf32>
    %208 = vector.broadcast %207 : vector<128x1xf32> to vector<128x32xf32>
    %209 = arith.subf %199, %208 : vector<128x32xf32>
    %210 = arith.mulf %209, %209 : vector<128x32xf32>
    %cst_82 = arith.constant dense<0.000000e+00> : vector<128xf32>
    %211 = vector.multi_reduction <add>, %210, %cst_82 [1] : vector<128x32xf32> to vector<128xf32>
    %212 = vector.shape_cast %211 : vector<128xf32> to vector<128x1xf32>
    %cst_83 = arith.constant 3.200000e+01 : f32
    %213 = vector.broadcast %cst_83 : f32 to vector<128x1xf32>
    %214 = arith.divf %212, %213 : vector<128x1xf32>
    %cst_84 = arith.constant 9.99999974E-6 : f32
    %215 = vector.broadcast %cst_84 : f32 to vector<128x1xf32>
    %216 = arith.addf %214, %215 : vector<128x1xf32>
    %217 = math.rsqrt %216 : vector<128x1xf32>
    %218 = vector.broadcast %217 : vector<128x1xf32> to vector<128x32xf32>
    %219 = arith.mulf %209, %218 : vector<128x32xf32>
    %220 = vector.broadcast %201 : vector<1x32xf32> to vector<128x32xf32>
    %221 = arith.mulf %219, %220 : vector<128x32xf32>
    %222 = vector.broadcast %203 : vector<1x32xf32> to vector<128x32xf32>
    %223 = arith.addf %221, %222 : vector<128x32xf32>
    %224 = arith.truncf %223 : vector<128x32xf32> to vector<128x32xbf16>
    %c1 = arith.constant 1 : index
    %c0_85 = arith.constant 0 : index
    %c0_86 = arith.constant 0 : index
    %225 = vector.load %arg5[%c1, %c0_85, %c0_86] : memref<2x32x96xbf16, #tpu.memory_space<vmem>>, vector<1x32x96xbf16>
    %226 = vector.shape_cast %225 : vector<1x32x96xbf16> to vector<32x96xbf16>
    %cst_87 = arith.constant dense<0.000000e+00> : vector<128x96xf32>
    %227 = tpu.matmul %224, %226, %cst_87 {dimension_numbers = #tpu.dot_dimension_numbers<[1], [0], [0], [1], [0, 0, 1, 1], [], []>} : vector<128x32xbf16>, vector<32x96xbf16>, vector<128x96xf32> -> vector<128x96xf32>
    %c1_88 = arith.constant 1 : index
    %c0_89 = arith.constant 0 : index
    %c0_90 = arith.constant 0 : index
    %228 = vector.load %arg6[%c1_88, %c0_89, %c0_90] : memref<2x1x96xf32, #tpu.memory_space<vmem>>, vector<1x1x96xf32>
    %229 = vector.shape_cast %228 : vector<1x1x96xf32> to vector<1x96xf32>
    %230 = vector.broadcast %229 : vector<1x96xf32> to vector<128x96xf32>
    %231 = arith.addf %227, %230 : vector<128x96xf32>
    %232 = vector.extract_strided_slice %231 {offsets = [0, 0], sizes = [128, 32], strides = [1, 1]} : vector<128x96xf32> to vector<128x32xf32>
    %233 = vector.extract_strided_slice %231 {offsets = [0, 32], sizes = [128, 32], strides = [1, 1]} : vector<128x96xf32> to vector<128x32xf32>
    %234 = arith.truncf %233 : vector<128x32xf32> to vector<128x32xbf16>
    %235 = vector.extract_strided_slice %231 {offsets = [0, 64], sizes = [128, 32], strides = [1, 1]} : vector<128x96xf32> to vector<128x32xf32>
    %236 = arith.truncf %235 : vector<128x32xf32> to vector<128x32xbf16>
    %cst_91 = arith.constant 0.000000e+00 : f32
    %237 = vector.broadcast %cst_91 : f32 to vector<128x32xf32>
    %238 = vector.broadcast %12 : vector<1x32xf32> to vector<128x32xf32>
    %239 = arith.mulf %232, %238 : vector<128x32xf32>
    %240 = arith.truncf %239 : vector<128x32xf32> to vector<128x32xbf16>
    %cst_92 = arith.constant dense<0.000000e+00> : vector<128x128xf32>
    %241 = tpu.matmul %240, %234, %cst_92 {dimension_numbers = #tpu.dot_dimension_numbers<[1], [1], [0], [0], [0, 0, 1, 0], [], []>} : vector<128x32xbf16>, vector<128x32xbf16>, vector<128x128xf32> -> vector<128x128xf32>
    %cst_93 = arith.constant 0.353553385 : f32
    %242 = vector.broadcast %cst_93 : f32 to vector<128x128xf32>
    %243 = arith.mulf %241, %242 : vector<128x128xf32>
    %244 = arith.addf %243, %34 : vector<128x128xf32>
    %cst_94 = arith.constant dense<0xFF800000> : vector<128xf32>
    %245 = vector.multi_reduction <maximumf>, %244, %cst_94 [1] : vector<128x128xf32> to vector<128xf32>
    %246 = vector.shape_cast %245 : vector<128xf32> to vector<128x1xf32>
    %247 = vector.broadcast %246 : vector<128x1xf32> to vector<128x128xf32>
    %248 = arith.subf %244, %247 : vector<128x128xf32>
    %249 = math.exp %248 : vector<128x128xf32>
    %cst_95 = arith.constant dense<0.000000e+00> : vector<128xf32>
    %250 = vector.multi_reduction <add>, %249, %cst_95 [1] : vector<128x128xf32> to vector<128xf32>
    %251 = vector.shape_cast %250 : vector<128xf32> to vector<128x1xf32>
    %252 = tpu.reciprocal %251 {approx = true} : vector<128x1xf32> -> vector<128x1xf32>
    %253 = vector.broadcast %252 : vector<128x1xf32> to vector<128x128xf32>
    %254 = arith.mulf %249, %253 : vector<128x128xf32>
    %255 = arith.truncf %254 : vector<128x128xf32> to vector<128x128xbf16>
    %cst_96 = arith.constant dense<0.000000e+00> : vector<128x32xf32>
    %256 = tpu.matmul %255, %236, %cst_96 {dimension_numbers = #tpu.dot_dimension_numbers<[1], [0], [0], [1], [0, 0, 1, 1], [], []>} : vector<128x128xbf16>, vector<128x32xbf16>, vector<128x32xf32> -> vector<128x32xf32>
    %257 = vector.broadcast %12 : vector<1x32xf32> to vector<128x32xf32>
    %258 = arith.mulf %257, %256 : vector<128x32xf32>
    %259 = arith.addf %237, %258 : vector<128x32xf32>
    %260 = vector.broadcast %19 : vector<1x32xf32> to vector<128x32xf32>
    %261 = arith.mulf %232, %260 : vector<128x32xf32>
    %262 = arith.truncf %261 : vector<128x32xf32> to vector<128x32xbf16>
    %cst_97 = arith.constant dense<0.000000e+00> : vector<128x128xf32>
    %263 = tpu.matmul %262, %234, %cst_97 {dimension_numbers = #tpu.dot_dimension_numbers<[1], [1], [0], [0], [0, 0, 1, 0], [], []>} : vector<128x32xbf16>, vector<128x32xbf16>, vector<128x128xf32> -> vector<128x128xf32>
    %cst_98 = arith.constant 0.353553385 : f32
    %264 = vector.broadcast %cst_98 : f32 to vector<128x128xf32>
    %265 = arith.mulf %263, %264 : vector<128x128xf32>
    %266 = arith.addf %265, %34 : vector<128x128xf32>
    %cst_99 = arith.constant dense<0xFF800000> : vector<128xf32>
    %267 = vector.multi_reduction <maximumf>, %266, %cst_99 [1] : vector<128x128xf32> to vector<128xf32>
    %268 = vector.shape_cast %267 : vector<128xf32> to vector<128x1xf32>
    %269 = vector.broadcast %268 : vector<128x1xf32> to vector<128x128xf32>
    %270 = arith.subf %266, %269 : vector<128x128xf32>
    %271 = math.exp %270 : vector<128x128xf32>
    %cst_100 = arith.constant dense<0.000000e+00> : vector<128xf32>
    %272 = vector.multi_reduction <add>, %271, %cst_100 [1] : vector<128x128xf32> to vector<128xf32>
    %273 = vector.shape_cast %272 : vector<128xf32> to vector<128x1xf32>
    %274 = tpu.reciprocal %273 {approx = true} : vector<128x1xf32> -> vector<128x1xf32>
    %275 = vector.broadcast %274 : vector<128x1xf32> to vector<128x128xf32>
    %276 = arith.mulf %271, %275 : vector<128x128xf32>
    %277 = arith.truncf %276 : vector<128x128xf32> to vector<128x128xbf16>
    %cst_101 = arith.constant dense<0.000000e+00> : vector<128x32xf32>
    %278 = tpu.matmul %277, %236, %cst_101 {dimension_numbers = #tpu.dot_dimension_numbers<[1], [0], [0], [1], [0, 0, 1, 1], [], []>} : vector<128x128xbf16>, vector<128x32xbf16>, vector<128x32xf32> -> vector<128x32xf32>
    %279 = vector.broadcast %19 : vector<1x32xf32> to vector<128x32xf32>
    %280 = arith.mulf %279, %278 : vector<128x32xf32>
    %281 = arith.addf %259, %280 : vector<128x32xf32>
    %282 = vector.broadcast %26 : vector<1x32xf32> to vector<128x32xf32>
    %283 = arith.mulf %232, %282 : vector<128x32xf32>
    %284 = arith.truncf %283 : vector<128x32xf32> to vector<128x32xbf16>
    %cst_102 = arith.constant dense<0.000000e+00> : vector<128x128xf32>
    %285 = tpu.matmul %284, %234, %cst_102 {dimension_numbers = #tpu.dot_dimension_numbers<[1], [1], [0], [0], [0, 0, 1, 0], [], []>} : vector<128x32xbf16>, vector<128x32xbf16>, vector<128x128xf32> -> vector<128x128xf32>
    %cst_103 = arith.constant 0.353553385 : f32
    %286 = vector.broadcast %cst_103 : f32 to vector<128x128xf32>
    %287 = arith.mulf %285, %286 : vector<128x128xf32>
    %288 = arith.addf %287, %34 : vector<128x128xf32>
    %cst_104 = arith.constant dense<0xFF800000> : vector<128xf32>
    %289 = vector.multi_reduction <maximumf>, %288, %cst_104 [1] : vector<128x128xf32> to vector<128xf32>
    %290 = vector.shape_cast %289 : vector<128xf32> to vector<128x1xf32>
    %291 = vector.broadcast %290 : vector<128x1xf32> to vector<128x128xf32>
    %292 = arith.subf %288, %291 : vector<128x128xf32>
    %293 = math.exp %292 : vector<128x128xf32>
    %cst_105 = arith.constant dense<0.000000e+00> : vector<128xf32>
    %294 = vector.multi_reduction <add>, %293, %cst_105 [1] : vector<128x128xf32> to vector<128xf32>
    %295 = vector.shape_cast %294 : vector<128xf32> to vector<128x1xf32>
    %296 = tpu.reciprocal %295 {approx = true} : vector<128x1xf32> -> vector<128x1xf32>
    %297 = vector.broadcast %296 : vector<128x1xf32> to vector<128x128xf32>
    %298 = arith.mulf %293, %297 : vector<128x128xf32>
    %299 = arith.truncf %298 : vector<128x128xf32> to vector<128x128xbf16>
    %cst_106 = arith.constant dense<0.000000e+00> : vector<128x32xf32>
    %300 = tpu.matmul %299, %236, %cst_106 {dimension_numbers = #tpu.dot_dimension_numbers<[1], [0], [0], [1], [0, 0, 1, 1], [], []>} : vector<128x128xbf16>, vector<128x32xbf16>, vector<128x32xf32> -> vector<128x32xf32>
    %301 = vector.broadcast %26 : vector<1x32xf32> to vector<128x32xf32>
    %302 = arith.mulf %301, %300 : vector<128x32xf32>
    %303 = arith.addf %281, %302 : vector<128x32xf32>
    %304 = vector.broadcast %33 : vector<1x32xf32> to vector<128x32xf32>
    %305 = arith.mulf %232, %304 : vector<128x32xf32>
    %306 = arith.truncf %305 : vector<128x32xf32> to vector<128x32xbf16>
    %cst_107 = arith.constant dense<0.000000e+00> : vector<128x128xf32>
    %307 = tpu.matmul %306, %234, %cst_107 {dimension_numbers = #tpu.dot_dimension_numbers<[1], [1], [0], [0], [0, 0, 1, 0], [], []>} : vector<128x32xbf16>, vector<128x32xbf16>, vector<128x128xf32> -> vector<128x128xf32>
    %cst_108 = arith.constant 0.353553385 : f32
    %308 = vector.broadcast %cst_108 : f32 to vector<128x128xf32>
    %309 = arith.mulf %307, %308 : vector<128x128xf32>
    %310 = arith.addf %309, %34 : vector<128x128xf32>
    %cst_109 = arith.constant dense<0xFF800000> : vector<128xf32>
    %311 = vector.multi_reduction <maximumf>, %310, %cst_109 [1] : vector<128x128xf32> to vector<128xf32>
    %312 = vector.shape_cast %311 : vector<128xf32> to vector<128x1xf32>
    %313 = vector.broadcast %312 : vector<128x1xf32> to vector<128x128xf32>
    %314 = arith.subf %310, %313 : vector<128x128xf32>
    %315 = math.exp %314 : vector<128x128xf32>
    %cst_110 = arith.constant dense<0.000000e+00> : vector<128xf32>
    %316 = vector.multi_reduction <add>, %315, %cst_110 [1] : vector<128x128xf32> to vector<128xf32>
    %317 = vector.shape_cast %316 : vector<128xf32> to vector<128x1xf32>
    %318 = tpu.reciprocal %317 {approx = true} : vector<128x1xf32> -> vector<128x1xf32>
    %319 = vector.broadcast %318 : vector<128x1xf32> to vector<128x128xf32>
    %320 = arith.mulf %315, %319 : vector<128x128xf32>
    %321 = arith.truncf %320 : vector<128x128xf32> to vector<128x128xbf16>
    %cst_111 = arith.constant dense<0.000000e+00> : vector<128x32xf32>
    %322 = tpu.matmul %321, %236, %cst_111 {dimension_numbers = #tpu.dot_dimension_numbers<[1], [0], [0], [1], [0, 0, 1, 1], [], []>} : vector<128x128xbf16>, vector<128x32xbf16>, vector<128x32xf32> -> vector<128x32xf32>
    %323 = vector.broadcast %33 : vector<1x32xf32> to vector<128x32xf32>
    %324 = arith.mulf %323, %322 : vector<128x32xf32>
    %325 = arith.addf %303, %324 : vector<128x32xf32>
    %326 = arith.truncf %325 : vector<128x32xf32> to vector<128x32xbf16>
    %c1_112 = arith.constant 1 : index
    %c0_113 = arith.constant 0 : index
    %c0_114 = arith.constant 0 : index
    %327 = vector.load %arg7[%c1_112, %c0_113, %c0_114] : memref<2x32x32xbf16, #tpu.memory_space<vmem>>, vector<1x32x32xbf16>
    %328 = vector.shape_cast %327 : vector<1x32x32xbf16> to vector<32x32xbf16>
    %cst_115 = arith.constant dense<0.000000e+00> : vector<128x32xf32>
    %329 = tpu.matmul %326, %328, %cst_115 {dimension_numbers = #tpu.dot_dimension_numbers<[1], [0], [0], [1], [0, 0, 1, 1], [], []>} : vector<128x32xbf16>, vector<32x32xbf16>, vector<128x32xf32> -> vector<128x32xf32>
    %c1_116 = arith.constant 1 : index
    %c0_117 = arith.constant 0 : index
    %c0_118 = arith.constant 0 : index
    %330 = vector.load %arg8[%c1_116, %c0_117, %c0_118] : memref<2x1x32xf32, #tpu.memory_space<vmem>>, vector<1x1x32xf32>
    %331 = vector.shape_cast %330 : vector<1x1x32xf32> to vector<1x32xf32>
    %332 = vector.broadcast %331 : vector<1x32xf32> to vector<128x32xf32>
    %333 = arith.addf %329, %332 : vector<128x32xf32>
    %334 = arith.addf %223, %333 : vector<128x32xf32>
    %c1_119 = arith.constant 1 : index
    %c0_120 = arith.constant 0 : index
    %c0_121 = arith.constant 0 : index
    %335 = vector.load %arg9[%c1_119, %c0_120, %c0_121] : memref<2x1x32xf32, #tpu.memory_space<vmem>>, vector<1x1x32xf32>
    %336 = vector.shape_cast %335 : vector<1x1x32xf32> to vector<1x32xf32>
    %c1_122 = arith.constant 1 : index
    %c0_123 = arith.constant 0 : index
    %c0_124 = arith.constant 0 : index
    %337 = vector.load %arg10[%c1_122, %c0_123, %c0_124] : memref<2x1x32xf32, #tpu.memory_space<vmem>>, vector<1x1x32xf32>
    %338 = vector.shape_cast %337 : vector<1x1x32xf32> to vector<1x32xf32>
    %cst_125 = arith.constant dense<0.000000e+00> : vector<128xf32>
    %339 = vector.multi_reduction <add>, %334, %cst_125 [1] : vector<128x32xf32> to vector<128xf32>
    %340 = vector.shape_cast %339 : vector<128xf32> to vector<128x1xf32>
    %cst_126 = arith.constant 3.200000e+01 : f32
    %341 = vector.broadcast %cst_126 : f32 to vector<128x1xf32>
    %342 = arith.divf %340, %341 : vector<128x1xf32>
    %343 = vector.broadcast %342 : vector<128x1xf32> to vector<128x32xf32>
    %344 = arith.subf %334, %343 : vector<128x32xf32>
    %345 = arith.mulf %344, %344 : vector<128x32xf32>
    %cst_127 = arith.constant dense<0.000000e+00> : vector<128xf32>
    %346 = vector.multi_reduction <add>, %345, %cst_127 [1] : vector<128x32xf32> to vector<128xf32>
    %347 = vector.shape_cast %346 : vector<128xf32> to vector<128x1xf32>
    %cst_128 = arith.constant 3.200000e+01 : f32
    %348 = vector.broadcast %cst_128 : f32 to vector<128x1xf32>
    %349 = arith.divf %347, %348 : vector<128x1xf32>
    %cst_129 = arith.constant 9.99999974E-6 : f32
    %350 = vector.broadcast %cst_129 : f32 to vector<128x1xf32>
    %351 = arith.addf %349, %350 : vector<128x1xf32>
    %352 = math.rsqrt %351 : vector<128x1xf32>
    %353 = vector.broadcast %352 : vector<128x1xf32> to vector<128x32xf32>
    %354 = arith.mulf %344, %353 : vector<128x32xf32>
    %355 = vector.broadcast %336 : vector<1x32xf32> to vector<128x32xf32>
    %356 = arith.mulf %354, %355 : vector<128x32xf32>
    %357 = vector.broadcast %338 : vector<1x32xf32> to vector<128x32xf32>
    %358 = arith.addf %356, %357 : vector<128x32xf32>
    %359 = arith.truncf %358 : vector<128x32xf32> to vector<128x32xbf16>
    %c1_130 = arith.constant 1 : index
    %c0_131 = arith.constant 0 : index
    %c0_132 = arith.constant 0 : index
    %360 = vector.load %arg11[%c1_130, %c0_131, %c0_132] : memref<2x32x64xbf16, #tpu.memory_space<vmem>>, vector<1x32x64xbf16>
    %361 = vector.shape_cast %360 : vector<1x32x64xbf16> to vector<32x64xbf16>
    %cst_133 = arith.constant dense<0.000000e+00> : vector<128x64xf32>
    %362 = tpu.matmul %359, %361, %cst_133 {dimension_numbers = #tpu.dot_dimension_numbers<[1], [0], [0], [1], [0, 0, 1, 1], [], []>} : vector<128x32xbf16>, vector<32x64xbf16>, vector<128x64xf32> -> vector<128x64xf32>
    %c1_134 = arith.constant 1 : index
    %c0_135 = arith.constant 0 : index
    %c0_136 = arith.constant 0 : index
    %363 = vector.load %arg12[%c1_134, %c0_135, %c0_136] : memref<2x1x64xf32, #tpu.memory_space<vmem>>, vector<1x1x64xf32>
    %364 = vector.shape_cast %363 : vector<1x1x64xf32> to vector<1x64xf32>
    %365 = vector.broadcast %364 : vector<1x64xf32> to vector<128x64xf32>
    %366 = arith.addf %362, %365 : vector<128x64xf32>
    %cst_137 = arith.constant 5.000000e-01 : f32
    %367 = vector.broadcast %cst_137 : f32 to vector<128x64xf32>
    %368 = arith.mulf %367, %366 : vector<128x64xf32>
    %cst_138 = arith.constant 4.471500e-02 : f32
    %369 = vector.broadcast %cst_138 : f32 to vector<128x64xf32>
    %370 = arith.mulf %369, %366 : vector<128x64xf32>
    %371 = arith.mulf %370, %366 : vector<128x64xf32>
    %372 = arith.mulf %371, %366 : vector<128x64xf32>
    %373 = arith.addf %366, %372 : vector<128x64xf32>
    %cst_139 = arith.constant 0.797884583 : f32
    %374 = vector.broadcast %cst_139 : f32 to vector<128x64xf32>
    %375 = arith.mulf %374, %373 : vector<128x64xf32>
    %376 = math.tanh %375 : vector<128x64xf32>
    %cst_140 = arith.constant 1.000000e+00 : f32
    %377 = vector.broadcast %cst_140 : f32 to vector<128x64xf32>
    %378 = arith.addf %377, %376 : vector<128x64xf32>
    %379 = arith.mulf %368, %378 : vector<128x64xf32>
    %380 = arith.truncf %379 : vector<128x64xf32> to vector<128x64xbf16>
    %c1_141 = arith.constant 1 : index
    %c0_142 = arith.constant 0 : index
    %c0_143 = arith.constant 0 : index
    %381 = vector.load %arg13[%c1_141, %c0_142, %c0_143] : memref<2x64x32xbf16, #tpu.memory_space<vmem>>, vector<1x64x32xbf16>
    %382 = vector.shape_cast %381 : vector<1x64x32xbf16> to vector<64x32xbf16>
    %cst_144 = arith.constant dense<0.000000e+00> : vector<128x32xf32>
    %383 = tpu.matmul %380, %382, %cst_144 {dimension_numbers = #tpu.dot_dimension_numbers<[1], [0], [0], [1], [0, 0, 1, 1], [], []>} : vector<128x64xbf16>, vector<64x32xbf16>, vector<128x32xf32> -> vector<128x32xf32>
    %c1_145 = arith.constant 1 : index
    %c0_146 = arith.constant 0 : index
    %c0_147 = arith.constant 0 : index
    %384 = vector.load %arg14[%c1_145, %c0_146, %c0_147] : memref<2x1x32xf32, #tpu.memory_space<vmem>>, vector<1x1x32xf32>
    %385 = vector.shape_cast %384 : vector<1x1x32xf32> to vector<1x32xf32>
    %386 = vector.broadcast %385 : vector<1x32xf32> to vector<128x32xf32>
    %387 = arith.addf %383, %386 : vector<128x32xf32>
    %388 = arith.addf %358, %387 : vector<128x32xf32>
    %c1_148 = arith.constant 1 : index
    %c0_149 = arith.constant 0 : index
    %c0_150 = arith.constant 0 : index
    %389 = vector.load %arg15[%c1_148, %c0_149, %c0_150] : memref<2x1x32xf32, #tpu.memory_space<vmem>>, vector<1x1x32xf32>
    %390 = vector.shape_cast %389 : vector<1x1x32xf32> to vector<1x32xf32>
    %c1_151 = arith.constant 1 : index
    %c0_152 = arith.constant 0 : index
    %c0_153 = arith.constant 0 : index
    %391 = vector.load %arg16[%c1_151, %c0_152, %c0_153] : memref<2x1x32xf32, #tpu.memory_space<vmem>>, vector<1x1x32xf32>
    %392 = vector.shape_cast %391 : vector<1x1x32xf32> to vector<1x32xf32>
    %cst_154 = arith.constant dense<0.000000e+00> : vector<128xf32>
    %393 = vector.multi_reduction <add>, %388, %cst_154 [1] : vector<128x32xf32> to vector<128xf32>
    %394 = vector.shape_cast %393 : vector<128xf32> to vector<128x1xf32>
    %cst_155 = arith.constant 3.200000e+01 : f32
    %395 = vector.broadcast %cst_155 : f32 to vector<128x1xf32>
    %396 = arith.divf %394, %395 : vector<128x1xf32>
    %397 = vector.broadcast %396 : vector<128x1xf32> to vector<128x32xf32>
    %398 = arith.subf %388, %397 : vector<128x32xf32>
    %399 = arith.mulf %398, %398 : vector<128x32xf32>
    %cst_156 = arith.constant dense<0.000000e+00> : vector<128xf32>
    %400 = vector.multi_reduction <add>, %399, %cst_156 [1] : vector<128x32xf32> to vector<128xf32>
    %401 = vector.shape_cast %400 : vector<128xf32> to vector<128x1xf32>
    %cst_157 = arith.constant 3.200000e+01 : f32
    %402 = vector.broadcast %cst_157 : f32 to vector<128x1xf32>
    %403 = arith.divf %401, %402 : vector<128x1xf32>
    %cst_158 = arith.constant 9.99999974E-6 : f32
    %404 = vector.broadcast %cst_158 : f32 to vector<128x1xf32>
    %405 = arith.addf %403, %404 : vector<128x1xf32>
    %406 = math.rsqrt %405 : vector<128x1xf32>
    %407 = vector.broadcast %406 : vector<128x1xf32> to vector<128x32xf32>
    %408 = arith.mulf %398, %407 : vector<128x32xf32>
    %409 = vector.broadcast %390 : vector<1x32xf32> to vector<128x32xf32>
    %410 = arith.mulf %408, %409 : vector<128x32xf32>
    %411 = vector.broadcast %392 : vector<1x32xf32> to vector<128x32xf32>
    %412 = arith.addf %410, %411 : vector<128x32xf32>
    %c0_159 = arith.constant 0 : index
    %c0_160 = arith.constant 0 : index
    %413 = vector.load %arg17[%c0_159, %c0_160] : memref<128x32xf32, #tpu.memory_space<vmem>>, vector<128x32xf32>
    tpu.vector_store %arg17[%c0_159, %c0_160], %412 {strides = array<i32>} : memref<128x32xf32, #tpu.memory_space<vmem>>, vector<128x32xf32>,
    return
  }
  func.func @transform_0(%arg0: i32) -> (i32, i32) {
    %c0_i32 = arith.constant 0 : i32
    %c0_i32_0 = arith.constant 0 : i32
    return %arg0, %c0_i32 : i32, i32
  }
  func.func @transform_1(%arg0: i32) -> (i32, i32) {
    %c0_i32 = arith.constant 0 : i32
    %c0_i32_0 = arith.constant 0 : i32
    %c0_i32_1 = arith.constant 0 : i32
    return %c0_i32, %c0_i32_0 : i32, i32
  }
  func.func @transform_2(%arg0: i32) -> (i32, i32) {
    %c0_i32 = arith.constant 0 : i32
    %c0_i32_0 = arith.constant 0 : i32
    %c0_i32_1 = arith.constant 0 : i32
    return %c0_i32, %c0_i32_0 : i32, i32
  }
  func.func @transform_3(%arg0: i32) -> (i32, i32) {
    %c0_i32 = arith.constant 0 : i32
    %c0_i32_0 = arith.constant 0 : i32
    %c0_i32_1 = arith.constant 0 : i32
    return %c0_i32, %c0_i32_0 : i32, i32
  }
  func.func @transform_4(%arg0: i32) -> (i32, i32, i32) {
    %c0_i32 = arith.constant 0 : i32
    %c0_i32_0 = arith.constant 0 : i32
    %c0_i32_1 = arith.constant 0 : i32
    %c0_i32_2 = arith.constant 0 : i32
    return %c0_i32, %c0_i32_0, %c0_i32_1 : i32, i32, i32
  }
  func.func @transform_5(%arg0: i32) -> (i32, i32, i32) {
    %c0_i32 = arith.constant 0 : i32
    %c0_i32_0 = arith.constant 0 : i32
    %c0_i32_1 = arith.constant 0 : i32
    %c0_i32_2 = arith.constant 0 : i32
    return %c0_i32, %c0_i32_0, %c0_i32_1 : i32, i32, i32
  }
  func.func @transform_6(%arg0: i32) -> (i32, i32, i32) {
    %c0_i32 = arith.constant 0 : i32
    %c0_i32_0 = arith.constant 0 : i32
    %c0_i32_1 = arith.constant 0 : i32
    %c0_i32_2 = arith.constant 0 : i32
    return %c0_i32, %c0_i32_0, %c0_i32_1 : i32, i32, i32
  }
  func.func @transform_7(%arg0: i32) -> (i32, i32, i32) {
    %c0_i32 = arith.constant 0 : i32
    %c0_i32_0 = arith.constant 0 : i32
    %c0_i32_1 = arith.constant 0 : i32
    %c0_i32_2 = arith.constant 0 : i32
    return %c0_i32, %c0_i32_0, %c0_i32_1 : i32, i32, i32
  }
  func.func @transform_8(%arg0: i32) -> (i32, i32, i32) {
    %c0_i32 = arith.constant 0 : i32
    %c0_i32_0 = arith.constant 0 : i32
    %c0_i32_1 = arith.constant 0 : i32
    %c0_i32_2 = arith.constant 0 : i32
    return %c0_i32, %c0_i32_0, %c0_i32_1 : i32, i32, i32
  }
  func.func @transform_9(%arg0: i32) -> (i32, i32, i32) {
    %c0_i32 = arith.constant 0 : i32
    %c0_i32_0 = arith.constant 0 : i32
    %c0_i32_1 = arith.constant 0 : i32
    %c0_i32_2 = arith.constant 0 : i32
    return %c0_i32, %c0_i32_0, %c0_i32_1 : i32, i32, i32
  }
  func.func @transform_10(%arg0: i32) -> (i32, i32, i32) {
    %c0_i32 = arith.constant 0 : i32
    %c0_i32_0 = arith.constant 0 : i32
    %c0_i32_1 = arith.constant 0 : i32
    %c0_i32_2 = arith.constant 0 : i32
    return %c0_i32, %c0_i32_0, %c0_i32_1 : i32, i32, i32
  }
  func.func @transform_11(%arg0: i32) -> (i32, i32, i32) {
    %c0_i32 = arith.constant 0 : i32
    %c0_i32_0 = arith.constant 0 : i32
    %c0_i32_1 = arith.constant 0 : i32
    %c0_i32_2 = arith.constant 0 : i32
    return %c0_i32, %c0_i32_0, %c0_i32_1 : i32, i32, i32
  }
  func.func @transform_12(%arg0: i32) -> (i32, i32, i32) {
    %c0_i32 = arith.constant 0 : i32
    %c0_i32_0 = arith.constant 0 : i32
    %c0_i32_1 = arith.constant 0 : i32
    %c0_i32_2 = arith.constant 0 : i32
    return %c0_i32, %c0_i32_0, %c0_i32_1 : i32, i32, i32
  }
  func.func @transform_13(%arg0: i32) -> (i32, i32, i32) {
    %c0_i32 = arith.constant 0 : i32
    %c0_i32_0 = arith.constant 0 : i32
    %c0_i32_1 = arith.constant 0 : i32
    %c0_i32_2 = arith.constant 0 : i32
    return %c0_i32, %c0_i32_0, %c0_i32_1 : i32, i32, i32
  }
  func.func @transform_14(%arg0: i32) -> (i32, i32, i32) {
    %c0_i32 = arith.constant 0 : i32
    %c0_i32_0 = arith.constant 0 : i32
    %c0_i32_1 = arith.constant 0 : i32
    %c0_i32_2 = arith.constant 0 : i32
    return %c0_i32, %c0_i32_0, %c0_i32_1 : i32, i32, i32
  }
  func.func @transform_15(%arg0: i32) -> (i32, i32, i32) {
    %c0_i32 = arith.constant 0 : i32
    %c0_i32_0 = arith.constant 0 : i32
    %c0_i32_1 = arith.constant 0 : i32
    %c0_i32_2 = arith.constant 0 : i32
    return %c0_i32, %c0_i32_0, %c0_i32_1 : i32, i32, i32
  }
  func.func @transform_16(%arg0: i32) -> (i32, i32) {
    %c0_i32 = arith.constant 0 : i32
    %c0_i32_0 = arith.constant 0 : i32
    return %arg0, %c0_i32 : i32, i32
  }
}

</mosaic_0001>

<llo_original>
// kernel: clvit_forward.1
$region0: #{clvit_forward.1}
  #allocation0 [shape = 'u32[]', space=smem, size = 0x4, offset = 0x4, fixed_abs, tag = 'smem constant byte address 0x4 - core index']
  #allocation1 [shape = 'u32[72,128]{1,0:T(1,128)}', space=vmem, size = 0x9000, scoped, tag = 'internal scratch']
  %s0 = inlined_call_operand.vmem [shape: bf16[128,768], index: 0, kind: input, shape index: {}]
  %s1 = inlined_call_operand.vmem [shape: bf16[768,32], index: 1, kind: input, shape index: {}]
  %s2 = inlined_call_operand.vmem [shape: f32[128,32], index: 2, kind: input, shape index: {}]
  %s3 = inlined_call_operand.vmem [shape: f32[128,128], index: 3, kind: input, shape index: {}]
  %s4 = inlined_call_operand.vmem [shape: bf16[2,32,96], index: 4, kind: input, shape index: {}]
  %s5 = inlined_call_operand.vmem [shape: f32[2,1,96], index: 5, kind: input, shape index: {}]
  %s6 = inlined_call_operand.vmem [shape: bf16[2,32,32], index: 6, kind: input, shape index: {}]
  %s7 = inlined_call_operand.vmem [shape: f32[2,1,32], index: 7, kind: input, shape index: {}]
  %s8 = inlined_call_operand.vmem [shape: f32[2,1,32], index: 8, kind: input, shape index: {}]
  %s9 = inlined_call_operand.vmem [shape: f32[2,1,32], index: 9, kind: input, shape index: {}]
  %s10 = inlined_call_operand.vmem [shape: bf16[2,32,64], index: 10, kind: input, shape index: {}]
  %s11 = inlined_call_operand.vmem [shape: f32[2,1,64], index: 11, kind: input, shape index: {}]
  %s12 = inlined_call_operand.vmem [shape: bf16[2,64,32], index: 12, kind: input, shape index: {}]
  %s13 = inlined_call_operand.vmem [shape: f32[2,1,32], index: 13, kind: input, shape index: {}]
  %s14 = inlined_call_operand.vmem [shape: f32[2,1,32], index: 14, kind: input, shape index: {}]
  %s15 = inlined_call_operand.vmem [shape: f32[2,1,32], index: 15, kind: input, shape index: {}]
  %s16 = inlined_call_operand.vmem [shape: f32[128,32], index: 16, kind: output, shape index: {}]
  %s17 = sld [smem:[#allocation0]]
  $region74: #{clvit_forward.1} parent=0
    _
  %s19 = ssub.s32 1, %s17
  %s20 = scalar_select 0, %s19, %s17
  // Predicated region
  $region2: #{clvit_forward.1} parent=0 // pred_check
    _
  $region3: #{clvit_forward.1} parent=0 // pred_check_branch
    %22 = sbr.rel (0) target = $region5
  $region4: #{clvit_forward.1} parent=0 // pred_region
    _
  $region5: #{clvit_forward.1} parent=0 // pred_fallthru
    _
  // Predicated region
  $region6: #{clvit_forward.1} parent=0 // pred_check
    _
  $region7: #{clvit_forward.1} parent=0 // pred_check_branch
    %24 = sbr.rel (0) target = $region9
  $region8: #{clvit_forward.1} parent=0 // pred_region
    _
  $region9: #{clvit_forward.1} parent=0 // pred_fallthru
    _
  // Predicated region
  $region10: #{clvit_forward.1} parent=0 // pred_check
    _
  $region11: #{clvit_forward.1} parent=0 // pred_check_branch
    %26 = sbr.rel (0) target = $region13
  $region12: #{clvit_forward.1} parent=0 // pred_region
    _
  $region13: #{clvit_forward.1} parent=0 // pred_fallthru
    _
  // Predicated region
  $region14: #{clvit_forward.1} parent=0 // pred_check
    _
  $region15: #{clvit_forward.1} parent=0 // pred_check_branch
    %28 = sbr.rel (0) target = $region17
  $region16: #{clvit_forward.1} parent=0 // pred_region
    _
  $region17: #{clvit_forward.1} parent=0 // pred_fallthru
    _
  // Predicated region
  $region18: #{clvit_forward.1} parent=0 // pred_check
    _
  $region19: #{clvit_forward.1} parent=0 // pred_check_branch
    %30 = sbr.rel (0) target = $region21
  $region20: #{clvit_forward.1} parent=0 // pred_region
    _
  $region21: #{clvit_forward.1} parent=0 // pred_fallthru
    _
  // Predicated region
  $region22: #{clvit_forward.1} parent=0 // pred_check
    _
  $region23: #{clvit_forward.1} parent=0 // pred_check_branch
    %32 = sbr.rel (0) target = $region25
  $region24: #{clvit_forward.1} parent=0 // pred_region
    _
  $region25: #{clvit_forward.1} parent=0 // pred_fallthru
    _
  // Predicated region
  $region26: #{clvit_forward.1} parent=0 // pred_check
    _
  $region27: #{clvit_forward.1} parent=0 // pred_check_branch
    %34 = sbr.rel (0) target = $region29
  $region28: #{clvit_forward.1} parent=0 // pred_region
    _
  $region29: #{clvit_forward.1} parent=0 // pred_fallthru
    _
  // Predicated region
  $region30: #{clvit_forward.1} parent=0 // pred_check
    _
  $region31: #{clvit_forward.1} parent=0 // pred_check_branch
    %36 = sbr.rel (0) target = $region33
  $region32: #{clvit_forward.1} parent=0 // pred_region
    _
  $region33: #{clvit_forward.1} parent=0 // pred_fallthru
    _
  // Predicated region
  $region34: #{clvit_forward.1} parent=0 // pred_check
    _
  $region35: #{clvit_forward.1} parent=0 // pred_check_branch
    %38 = sbr.rel (0) target = $region37
  $region36: #{clvit_forward.1} parent=0 // pred_region
    _
  $region37: #{clvit_forward.1} parent=0 // pred_fallthru
    _
  // Predicated region
  $region38: #{clvit_forward.1} parent=0 // pred_check
    _
  $region39: #{clvit_forward.1} parent=0 // pred_check_branch
    %40 = sbr.rel (0) target = $region41
  $region40: #{clvit_forward.1} parent=0 // pred_region
    _
  $region41: #{clvit_forward.1} parent=0 // pred_fallthru
    _
  // Predicated region
  $region42: #{clvit_forward.1} parent=0 // pred_check
    _
  $region43: #{clvit_forward.1} parent=0 // pred_check_branch
    %42 = sbr.rel (0) target = $region45
  $region44: #{clvit_forward.1} parent=0 // pred_region
    _
  $region45: #{clvit_forward.1} parent=0 // pred_fallthru
    _
  // Predicated region
  $region46: #{clvit_forward.1} parent=0 // pred_check
    _
  $region47: #{clvit_forward.1} parent=0 // pred_check_branch
    %44 = sbr.rel (0) target = $region49
  $region48: #{clvit_forward.1} parent=0 // pred_region
    _
  $region49: #{clvit_forward.1} parent=0 // pred_fallthru
    _
  // Predicated region
  $region50: #{clvit_forward.1} parent=0 // pred_check
    _
  $region51: #{clvit_forward.1} parent=0 // pred_check_branch
    %46 = sbr.rel (0) target = $region53
  $region52: #{clvit_forward.1} parent=0 // pred_region
    _
  $region53: #{clvit_forward.1} parent=0 // pred_fallthru
    _
  // Predicated region
  $region54: #{clvit_forward.1} parent=0 // pred_check
    _
  $region55: #{clvit_forward.1} parent=0 // pred_check_branch
    %48 = sbr.rel (0) target = $region57
  $region56: #{clvit_forward.1} parent=0 // pred_region
    _
  $region57: #{clvit_forward.1} parent=0 // pred_fallthru
    _
  // Predicated region
  $region58: #{clvit_forward.1} parent=0 // pred_check
    _
  $region59: #{clvit_forward.1} parent=0 // pred_check_branch
    %50 = sbr.rel (0) target = $region61
  $region60: #{clvit_forward.1} parent=0 // pred_region
    _
  $region61: #{clvit_forward.1} parent=0 // pred_fallthru
    _
  // Predicated region
  $region62: #{clvit_forward.1} parent=0 // pred_check
    _
  $region63: #{clvit_forward.1} parent=0 // pred_check_branch
    %52 = sbr.rel (0) target = $region65
  $region64: #{clvit_forward.1} parent=0 // pred_region
    _
  $region65: #{clvit_forward.1} parent=0 // pred_fallthru
    _
  %v54 = vld [vmem:[%s0] sm:$0xff]
  %v55 = vld [vmem:[%s0 + $0x8] sm:$0xff]
  %v56 = vld [vmem:[%s0 + $0x10] sm:$0xff]
  %v57 = vld [vmem:[%s0 + $0x18] sm:$0xff]
  %v58 = vld [vmem:[%s0 + $0x20] sm:$0xff]
  %v59 = vld [vmem:[%s0 + $0x28] sm:$0xff]
  %v60 = vld [vmem:[%s0 + $0x30] sm:$0xff]
  %v61 = vld [vmem:[%s0 + $0x38] sm:$0xff]
  %v62 = vld [vmem:[%s0 + $0x40] sm:$0xff]
  %v63 = vld [vmem:[%s0 + $0x48] sm:$0xff]
  %v64 = vld [vmem:[%s0 + $0x50] sm:$0xff]
  %v65 = vld [vmem:[%s0 + $0x58] sm:$0xff]
  %v66 = vld [vmem:[%s0 + $0x60] sm:$0xff]
  %v67 = vld [vmem:[%s0 + $0x68] sm:$0xff]
  %v68 = vld [vmem:[%s0 + $0x70] sm:$0xff]
  %v69 = vld [vmem:[%s0 + $0x78] sm:$0xff]
  %v70 = vld [vmem:[%s0 + $0x80] sm:$0xff]
  %v71 = vld [vmem:[%s0 + $0x88] sm:$0xff]
  %v72 = vld [vmem:[%s0 + $0x90] sm:$0xff]
  %v73 = vld [vmem:[%s0 + $0x98] sm:$0xff]
  %v74 = vld [vmem:[%s0 + $0xa0] sm:$0xff]
  %v75 = vld [vmem:[%s0 + $0xa8] sm:$0xff]
  %v76 = vld [vmem:[%s0 + $0xb0] sm:$0xff]
  %v77 = vld [vmem:[%s0 + $0xb8] sm:$0xff]
  %v78 = vld [vmem:[%s0 + $0xc0] sm:$0xff]
  %v79 = vld [vmem:[%s0 + $0xc8] sm:$0xff]
  %v80 = vld [vmem:[%s0 + $0xd0] sm:$0xff]
  %v81 = vld [vmem:[%s0 + $0xd8] sm:$0xff]
  %v82 = vld [vmem:[%s0 + $0xe0] sm:$0xff]
  %v83 = vld [vmem:[%s0 + $0xe8] sm:$0xff]
  %v84 = vld [vmem:[%s0 + $0xf0] sm:$0xff]
  %v85 = vld [vmem:[%s0 + $0xf8] sm:$0xff]
  %v86 = vld [vmem:[%s0 + $0x100] sm:$0xff]
  %v87 = vld [vmem:[%s0 + $0x108] sm:$0xff]
  %v88 = vld [vmem:[%s0 + $0x110] sm:$0xff]
  %v89 = vld [vmem:[%s0 + $0x118] sm:$0xff]
  %v90 = vld [vmem:[%s0 + $0x120] sm:$0xff]
  %v91 = vld [vmem:[%s0 + $0x128] sm:$0xff]
  %v92 = vld [vmem:[%s0 + $0x130] sm:$0xff]
  %v93 = vld [vmem:[%s0 + $0x138] sm:$0xff]
  %v94 = vld [vmem:[%s0 + $0x140] sm:$0xff]
  %v95 = vld [vmem:[%s0 + $0x148] sm:$0xff]
  %v96 = vld [vmem:[%s0 + $0x150] sm:$0xff]
  %v97 = vld [vmem:[%s0 + $0x158] sm:$0xff]
  %v98 = vld [vmem:[%s0 + $0x160] sm:$0xff]
  %v99 = vld [vmem:[%s0 + $0x168] sm:$0xff]
  %v100 = vld [vmem:[%s0 + $0x170] sm:$0xff]
  %v101 = vld [vmem:[%s0 + $0x178] sm:$0xff]
  %v102 = vld [vmem:[%s1] sm:$0xf]
  %v103 = vld [vmem:[%s1 + $0x4] sm:$0xf]
  %v104 = vld [vmem:[%s1 + $0x8] sm:$0xf]
  %v105 = vld [vmem:[%s1 + $0xc] sm:$0xf]
  %v106 = vld [vmem:[%s1 + $0x10] sm:$0xf]
  %v107 = vld [vmem:[%s1 + $0x14] sm:$0xf]
  %v108 = vld [vmem:[%s1 + $0x18] sm:$0xf]
  %v109 = vld [vmem:[%s1 + $0x1c] sm:$0xf]
  %v110 = vld [vmem:[%s1 + $0x20] sm:$0xf]
  %v111 = vld [vmem:[%s1 + $0x24] sm:$0xf]
  %v112 = vld [vmem:[%s1 + $0x28] sm:$0xf]
  %v113 = vld [vmem:[%s1 + $0x2c] sm:$0xf]
  %v114 = vld [vmem:[%s1 + $0x30] sm:$0xf]
  %v115 = vld [vmem:[%s1 + $0x34] sm:$0xf]
  %v116 = vld [vmem:[%s1 + $0x38] sm:$0xf]
  %v117 = vld [vmem:[%s1 + $0x3c] sm:$0xf]
  %v118 = vld [vmem:[%s1 + $0x40] sm:$0xf]
  %v119 = vld [vmem:[%s1 + $0x44] sm:$0xf]
  %v120 = vld [vmem:[%s1 + $0x48] sm:$0xf]
  %v121 = vld [vmem:[%s1 + $0x4c] sm:$0xf]
  %v122 = vld [vmem:[%s1 + $0x50] sm:$0xf]
  %v123 = vld [vmem:[%s1 + $0x54] sm:$0xf]
  %v124 = vld [vmem:[%s1 + $0x58] sm:$0xf]
  %v125 = vld [vmem:[%s1 + $0x5c] sm:$0xf]
  %v126 = vld [vmem:[%s1 + $0x60] sm:$0xf]
  %v127 = vld [vmem:[%s1 + $0x64] sm:$0xf]
  %v128 = vld [vmem:[%s1 + $0x68] sm:$0xf]
  %v129 = vld [vmem:[%s1 + $0x6c] sm:$0xf]
  %v130 = vld [vmem:[%s1 + $0x70] sm:$0xf]
  %v131 = vld [vmem:[%s1 + $0x74] sm:$0xf]
  %v132 = vld [vmem:[%s1 + $0x78] sm:$0xf]
  %v133 = vld [vmem:[%s1 + $0x7c] sm:$0xf]
  %v134 = vld [vmem:[%s1 + $0x80] sm:$0xf]
  %v135 = vld [vmem:[%s1 + $0x84] sm:$0xf]
  %v136 = vld [vmem:[%s1 + $0x88] sm:$0xf]
  %v137 = vld [vmem:[%s1 + $0x8c] sm:$0xf]
  %v138 = vld [vmem:[%s1 + $0x90] sm:$0xf]
  %v139 = vld [vmem:[%s1 + $0x94] sm:$0xf]
  %v140 = vld [vmem:[%s1 + $0x98] sm:$0xf]
  %v141 = vld [vmem:[%s1 + $0x9c] sm:$0xf]
  %v142 = vld [vmem:[%s1 + $0xa0] sm:$0xf]
  %v143 = vld [vmem:[%s1 + $0xa4] sm:$0xf]
  %v144 = vld [vmem:[%s1 + $0xa8] sm:$0xf]
  %v145 = vld [vmem:[%s1 + $0xac] sm:$0xf]
  %v146 = vld [vmem:[%s1 + $0xb0] sm:$0xf]
  %v147 = vld [vmem:[%s1 + $0xb4] sm:$0xf]
  %v148 = vld [vmem:[%s1 + $0xb8] sm:$0xf]
  %v149 = vld [vmem:[%s1 + $0xbc] sm:$0xf]
  %v150 = vld [vmem:[%s1 + $0xc0] sm:$0xf]
  %v151 = vld [vmem:[%s1 + $0xc4] sm:$0xf]
  %v152 = vld [vmem:[%s1 + $0xc8] sm:$0xf]
  %v153 = vld [vmem:[%s1 + $0xcc] sm:$0xf]
  %v154 = vld [vmem:[%s1 + $0xd0] sm:$0xf]
  %v155 = vld [vmem:[%s1 + $0xd4] sm:$0xf]
  %v156 = vld [vmem:[%s1 + $0xd8] sm:$0xf]
  %v157 = vld [vmem:[%s1 + $0xdc] sm:$0xf]
  %v158 = vld [vmem:[%s1 + $0xe0] sm:$0xf]
  %v159 = vld [vmem:[%s1 + $0xe4] sm:$0xf]
  %v160 = vld [vmem:[%s1 + $0xe8] sm:$0xf]
  %v161 = vld [vmem:[%s1 + $0xec] sm:$0xf]
  %v162 = vld [vmem:[%s1 + $0xf0] sm:$0xf]
  %v163 = vld [vmem:[%s1 + $0xf4] sm:$0xf]
  %v164 = vld [vmem:[%s1 + $0xf8] sm:$0xf]
  %v165 = vld [vmem:[%s1 + $0xfc] sm:$0xf]
  %v166 = vld [vmem:[%s1 + $0x100] sm:$0xf]
  %v167 = vld [vmem:[%s1 + $0x104] sm:$0xf]
  %v168 = vld [vmem:[%s1 + $0x108] sm:$0xf]
  %v169 = vld [vmem:[%s1 + $0x10c] sm:$0xf]
  %v170 = vld [vmem:[%s1 + $0x110] sm:$0xf]
  %v171 = vld [vmem:[%s1 + $0x114] sm:$0xf]
  %v172 = vld [vmem:[%s1 + $0x118] sm:$0xf]
  %v173 = vld [vmem:[%s1 + $0x11c] sm:$0xf]
  %v174 = vld [vmem:[%s1 + $0x120] sm:$0xf]
  %v175 = vld [vmem:[%s1 + $0x124] sm:$0xf]
  %v176 = vld [vmem:[%s1 + $0x128] sm:$0xf]
  %v177 = vld [vmem:[%s1 + $0x12c] sm:$0xf]
  %v178 = vld [vmem:[%s1 + $0x130] sm:$0xf]
  %v179 = vld [vmem:[%s1 + $0x134] sm:$0xf]
  %v180 = vld [vmem:[%s1 + $0x138] sm:$0xf]
  %v181 = vld [vmem:[%s1 + $0x13c] sm:$0xf]
  %v182 = vld [vmem:[%s1 + $0x140] sm:$0xf]
  %v183 = vld [vmem:[%s1 + $0x144] sm:$0xf]
  %v184 = vld [vmem:[%s1 + $0x148] sm:$0xf]
  %v185 = vld [vmem:[%s1 + $0x14c] sm:$0xf]
  %v186 = vld [vmem:[%s1 + $0x150] sm:$0xf]
  %v187 = vld [vmem:[%s1 + $0x154] sm:$0xf]
  %v188 = vld [vmem:[%s1 + $0x158] sm:$0xf]
  %v189 = vld [vmem:[%s1 + $0x15c] sm:$0xf]
  %v190 = vld [vmem:[%s1 + $0x160] sm:$0xf]
  %v191 = vld [vmem:[%s1 + $0x164] sm:$0xf]
  %v192 = vld [vmem:[%s1 + $0x168] sm:$0xf]
  %v193 = vld [vmem:[%s1 + $0x16c] sm:$0xf]
  %v194 = vld [vmem:[%s1 + $0x170] sm:$0xf]
  %v195 = vld [vmem:[%s1 + $0x174] sm:$0xf]
  %v196 = vld [vmem:[%s1 + $0x178] sm:$0xf]
  %v197 = vld [vmem:[%s1 + $0x17c] sm:$0xf]
  %v198 = vld [vmem:[%s2] sm:$0xff]
  %v199 = vld [vmem:[%s2 + $0x8] sm:$0xff]
  %v200 = vld [vmem:[%s2 + $0x10] sm:$0xff]
  %v201 = vld [vmem:[%s2 + $0x18] sm:$0xff]
  %v202 = vld [vmem:[%s2 + $0x20] sm:$0xff]
  %v203 = vld [vmem:[%s2 + $0x28] sm:$0xff]
  %v204 = vld [vmem:[%s2 + $0x30] sm:$0xff]
  %v205 = vld [vmem:[%s2 + $0x38] sm:$0xff]
  %v206 = vld [vmem:[%s2 + $0x40] sm:$0xff]
  %v207 = vld [vmem:[%s2 + $0x48] sm:$0xff]
  %v208 = vld [vmem:[%s2 + $0x50] sm:$0xff]
  %v209 = vld [vmem:[%s2 + $0x58] sm:$0xff]
  %v210 = vld [vmem:[%s2 + $0x60] sm:$0xff]
  %v211 = vld [vmem:[%s2 + $0x68] sm:$0xff]
  %v212 = vld [vmem:[%s2 + $0x70] sm:$0xff]
  %v213 = vld [vmem:[%s2 + $0x78] sm:$0xff]
  %v262 = vunpack.c.l.b16 %v54
  %v263 = vunpack.c.h.b16 %v54
  %v264 = vunpack.c.l.b16 %v55
  %v265 = vunpack.c.h.b16 %v55
  %v266 = vunpack.c.l.b16 %v56
  %v267 = vunpack.c.h.b16 %v56
  %v268 = vunpack.c.l.b16 %v57
  %v269 = vunpack.c.h.b16 %v57
  %v270 = vunpack.c.l.b16 %v58
  %v271 = vunpack.c.h.b16 %v58
  %v272 = vunpack.c.l.b16 %v59
  %v273 = vunpack.c.h.b16 %v59
  %v274 = vunpack.c.l.b16 %v60
  %v275 = vunpack.c.h.b16 %v60
  %v276 = vunpack.c.l.b16 %v61
  %v277 = vunpack.c.h.b16 %v61
  %v278 = vunpack.c.l.b16 %v62
  %v279 = vunpack.c.h.b16 %v62
  %v280 = vunpack.c.l.b16 %v63
  %v281 = vunpack.c.h.b16 %v63
  %v282 = vunpack.c.l.b16 %v64
  %v283 = vunpack.c.h.b16 %v64
  %v284 = vunpack.c.l.b16 %v65
  %v285 = vunpack.c.h.b16 %v65
  %v286 = vunpack.c.l.b16 %v66
  %v287 = vunpack.c.h.b16 %v66
  %v288 = vunpack.c.l.b16 %v67
  %v289 = vunpack.c.h.b16 %v67
  %v290 = vunpack.c.l.b16 %v68
  %v291 = vunpack.c.h.b16 %v68
  %v292 = vunpack.c.l.b16 %v69
  %v293 = vunpack.c.h.b16 %v69
  %v294 = vunpack.c.l.b16 %v70
  %v295 = vunpack.c.h.b16 %v70
  %v296 = vunpack.c.l.b16 %v71
  %v297 = vunpack.c.h.b16 %v71
  %v298 = vunpack.c.l.b16 %v72
  %v299 = vunpack.c.h.b16 %v72
  %v300 = vunpack.c.l.b16 %v73
  %v301 = vunpack.c.h.b16 %v73
  %v302 = vunpack.c.l.b16 %v74
  %v303 = vunpack.c.h.b16 %v74
  %v304 = vunpack.c.l.b16 %v75
  %v305 = vunpack.c.h.b16 %v75
  %v306 = vunpack.c.l.b16 %v76
  %v307 = vunpack.c.h.b16 %v76
  %v308 = vunpack.c.l.b16 %v77
  %v309 = vunpack.c.h.b16 %v77
  %v310 = vunpack.c.l.b16 %v78
  %v311 = vunpack.c.h.b16 %v78
  %v312 = vunpack.c.l.b16 %v79
  %v313 = vunpack.c.h.b16 %v79
  %v314 = vunpack.c.l.b16 %v80
  %v315 = vunpack.c.h.b16 %v80
  %v316 = vunpack.c.l.b16 %v81
  %v317 = vunpack.c.h.b16 %v81
  %v318 = vunpack.c.l.b16 %v82
  %v319 = vunpack.c.h.b16 %v82
  %v320 = vunpack.c.l.b16 %v83
  %v321 = vunpack.c.h.b16 %v83
  %v322 = vunpack.c.l.b16 %v84
  %v323 = vunpack.c.h.b16 %v84
  %v324 = vunpack.c.l.b16 %v85
  %v325 = vunpack.c.h.b16 %v85
  %v326 = vunpack.c.l.b16 %v86
  %v327 = vunpack.c.h.b16 %v86
  %v328 = vunpack.c.l.b16 %v87
  %v329 = vunpack.c.h.b16 %v87
  %v330 = vunpack.c.l.b16 %v88
  %v331 = vunpack.c.h.b16 %v88
  %v332 = vunpack.c.l.b16 %v89
  %v333 = vunpack.c.h.b16 %v89
  %v334 = vunpack.c.l.b16 %v90
  %v335 = vunpack.c.h.b16 %v90
  %v336 = vunpack.c.l.b16 %v91
  %v337 = vunpack.c.h.b16 %v91
  %v338 = vunpack.c.l.b16 %v92
  %v339 = vunpack.c.h.b16 %v92
  %v340 = vunpack.c.l.b16 %v93
  %v341 = vunpack.c.h.b16 %v93
  %v342 = vunpack.c.l.b16 %v94
  %v343 = vunpack.c.h.b16 %v94
  %v344 = vunpack.c.l.b16 %v95
  %v345 = vunpack.c.h.b16 %v95
  %v346 = vunpack.c.l.b16 %v96
  %v347 = vunpack.c.h.b16 %v96
  %v348 = vunpack.c.l.b16 %v97
  %v349 = vunpack.c.h.b16 %v97
  %v350 = vunpack.c.l.b16 %v98
  %v351 = vunpack.c.h.b16 %v98
  %v352 = vunpack.c.l.b16 %v99
  %v353 = vunpack.c.h.b16 %v99
  %v354 = vunpack.c.l.b16 %v100
  %v355 = vunpack.c.h.b16 %v100
  %v356 = vunpack.c.l.b16 %v101
  %v357 = vunpack.c.h.b16 %v101
  %v358 = vpack.c.b16 %v268, %v262
  %v359 = vpack.c.b16 %v269, %v263
  %v360 = vpack.c.b16 %v270, %v264
  %v361 = vpack.c.b16 %v271, %v265
  %v362 = vpack.c.b16 %v272, %v266
  %v363 = vpack.c.b16 %v273, %v267
  %v364 = vpack.c.b16 %v280, %v274
  %v365 = vpack.c.b16 %v281, %v275
  %v366 = vpack.c.b16 %v282, %v276
  %v367 = vpack.c.b16 %v283, %v277
  %v368 = vpack.c.b16 %v284, %v278
  %v369 = vpack.c.b16 %v285, %v279
  %v370 = vpack.c.b16 %v292, %v286
  %v371 = vpack.c.b16 %v293, %v287
  %v372 = vpack.c.b16 %v294, %v288
  %v373 = vpack.c.b16 %v295, %v289
  %v374 = vpack.c.b16 %v296, %v290
  %v375 = vpack.c.b16 %v297, %v291
  %v376 = vpack.c.b16 %v304, %v298
  %v377 = vpack.c.b16 %v305, %v299
  %v378 = vpack.c.b16 %v306, %v300
  %v379 = vpack.c.b16 %v307, %v301
  %v380 = vpack.c.b16 %v308, %v302
  %v381 = vpack.c.b16 %v309, %v303
  %v382 = vpack.c.b16 %v316, %v310
  %v383 = vpack.c.b16 %v317, %v311
  %v384 = vpack.c.b16 %v318, %v312
  %v385 = vpack.c.b16 %v319, %v313
  %v386 = vpack.c.b16 %v320, %v314
  %v387 = vpack.c.b16 %v321, %v315
  %v388 = vpack.c.b16 %v328, %v322
  %v389 = vpack.c.b16 %v329, %v323
  %v390 = vpack.c.b16 %v330, %v324
  %v391 = vpack.c.b16 %v331, %v325
  %v392 = vpack.c.b16 %v332, %v326
  %v393 = vpack.c.b16 %v333, %v327
  %v394 = vpack.c.b16 %v340, %v334
  %v395 = vpack.c.b16 %v341, %v335
  %v396 = vpack.c.b16 %v342, %v336
  %v397 = vpack.c.b16 %v343, %v337
  %v398 = vpack.c.b16 %v344, %v338
  %v399 = vpack.c.b16 %v345, %v339
  %v400 = vpack.c.b16 %v352, %v346
  %v401 = vpack.c.b16 %v353, %v347
  %v402 = vpack.c.b16 %v354, %v348
  %v403 = vpack.c.b16 %v355, %v349
  %v404 = vpack.c.b16 %v356, %v350
  %v405 = vpack.c.b16 %v357, %v351
  %v550 = vunpack.c.l.b16 %v102
  %v551 = vunpack.c.l.b16 %v103
  %v552 = vunpack.c.l.b16 %v104
  %v553 = vunpack.c.l.b16 %v105
  %v554 = vunpack.c.l.b16 %v106
  %v555 = vunpack.c.l.b16 %v107
  %v556 = vunpack.c.l.b16 %v108
  %v557 = vunpack.c.l.b16 %v109
  %v558 = vunpack.c.l.b16 %v110
  %v559 = vunpack.c.l.b16 %v111
  %v560 = vunpack.c.l.b16 %v112
  %v561 = vunpack.c.l.b16 %v113
  %v562 = vunpack.c.l.b16 %v114
  %v563 = vunpack.c.l.b16 %v115
  %v564 = vunpack.c.l.b16 %v116
  %v565 = vunpack.c.l.b16 %v117
  %v566 = vunpack.c.l.b16 %v118
  %v567 = vunpack.c.l.b16 %v119
  %v568 = vunpack.c.l.b16 %v120
  %v569 = vunpack.c.l.b16 %v121
  %v570 = vunpack.c.l.b16 %v122
  %v571 = vunpack.c.l.b16 %v123
  %v572 = vunpack.c.l.b16 %v124
  %v573 = vunpack.c.l.b16 %v125
  %v574 = vunpack.c.l.b16 %v126
  %v575 = vunpack.c.l.b16 %v127
  %v576 = vunpack.c.l.b16 %v128
  %v577 = vunpack.c.l.b16 %v129
  %v578 = vunpack.c.l.b16 %v130
  %v579 = vunpack.c.l.b16 %v131
  %v580 = vunpack.c.l.b16 %v132
  %v581 = vunpack.c.l.b16 %v133
  %v582 = vunpack.c.l.b16 %v134
  %v583 = vunpack.c.l.b16 %v135
  %v584 = vunpack.c.l.b16 %v136
  %v585 = vunpack.c.l.b16 %v137
  %v586 = vunpack.c.l.b16 %v138
  %v587 = vunpack.c.l.b16 %v139
  %v588 = vunpack.c.l.b16 %v140
  %v589 = vunpack.c.l.b16 %v141
  %v590 = vunpack.c.l.b16 %v142
  %v591 = vunpack.c.l.b16 %v143
  %v592 = vunpack.c.l.b16 %v144
  %v593 = vunpack.c.l.b16 %v145
  %v594 = vunpack.c.l.b16 %v146
  %v595 = vunpack.c.l.b16 %v147
  %v596 = vunpack.c.l.b16 %v148
  %v597 = vunpack.c.l.b16 %v149
  %v598 = vunpack.c.l.b16 %v150
  %v599 = vunpack.c.l.b16 %v151
  %v600 = vunpack.c.l.b16 %v152
  %v601 = vunpack.c.l.b16 %v153
  %v602 = vunpack.c.l.b16 %v154
  %v603 = vunpack.c.l.b16 %v155
  %v604 = vunpack.c.l.b16 %v156
  %v605 = vunpack.c.l.b16 %v157
  %v606 = vunpack.c.l.b16 %v158
  %v607 = vunpack.c.l.b16 %v159
  %v608 = vunpack.c.l.b16 %v160
  %v609 = vunpack.c.l.b16 %v161
  %v610 = vunpack.c.l.b16 %v162
  %v611 = vunpack.c.l.b16 %v163
  %v612 = vunpack.c.l.b16 %v164
  %v613 = vunpack.c.l.b16 %v165
  %v614 = vunpack.c.l.b16 %v166
  %v615 = vunpack.c.l.b16 %v167
  %v616 = vunpack.c.l.b16 %v168
  %v617 = vunpack.c.l.b16 %v169
  %v618 = vunpack.c.l.b16 %v170
  %v619 = vunpack.c.l.b16 %v171
  %v620 = vunpack.c.l.b16 %v172
  %v621 = vunpack.c.l.b16 %v173
  %v622 = vunpack.c.l.b16 %v174
  %v623 = vunpack.c.l.b16 %v175
  %v624 = vunpack.c.l.b16 %v176
  %v625 = vunpack.c.l.b16 %v177
  %v626 = vunpack.c.l.b16 %v178
  %v627 = vunpack.c.l.b16 %v179
  %v628 = vunpack.c.l.b16 %v180
  %v629 = vunpack.c.l.b16 %v181
  %v630 = vunpack.c.l.b16 %v182
  %v631 = vunpack.c.l.b16 %v183
  %v632 = vunpack.c.l.b16 %v184
  %v633 = vunpack.c.l.b16 %v185
  %v634 = vunpack.c.l.b16 %v186
  %v635 = vunpack.c.l.b16 %v187
  %v636 = vunpack.c.l.b16 %v188
  %v637 = vunpack.c.l.b16 %v189
  %v638 = vunpack.c.l.b16 %v190
  %v639 = vunpack.c.l.b16 %v191
  %v640 = vunpack.c.l.b16 %v192
  %v641 = vunpack.c.l.b16 %v193
  %v642 = vunpack.c.l.b16 %v194
  %v643 = vunpack.c.l.b16 %v195
  %v644 = vunpack.c.l.b16 %v196
  %v645 = vunpack.c.l.b16 %v197
  %v646 = vpack.c.b16 %v551, %v550
  %v647 = vpack.c.b16 %v553, %v552
  %v648 = vpack.c.b16 %v555, %v554
  %v649 = vpack.c.b16 %v557, %v556
  %v650 = vpack.c.b16 %v559, %v558
  %v651 = vpack.c.b16 %v561, %v560
  %v652 = vpack.c.b16 %v563, %v562
  %v653 = vpack.c.b16 %v565, %v564
  %v654 = vpack.c.b16 %v567, %v566
  %v655 = vpack.c.b16 %v569, %v568
  %v656 = vpack.c.b16 %v571, %v570
  %v657 = vpack.c.b16 %v573, %v572
  %v658 = vpack.c.b16 %v575, %v574
  %v659 = vpack.c.b16 %v577, %v576
  %v660 = vpack.c.b16 %v579, %v578
  %v661 = vpack.c.b16 %v581, %v580
  %v662 = vpack.c.b16 %v583, %v582
  %v663 = vpack.c.b16 %v585, %v584
  %v664 = vpack.c.b16 %v587, %v586
  %v665 = vpack.c.b16 %v589, %v588
  %v666 = vpack.c.b16 %v591, %v590
  %v667 = vpack.c.b16 %v593, %v592
  %v668 = vpack.c.b16 %v595, %v594
  %v669 = vpack.c.b16 %v597, %v596
  %v670 = vpack.c.b16 %v599, %v598
  %v671 = vpack.c.b16 %v601, %v600
  %v672 = vpack.c.b16 %v603, %v602
  %v673 = vpack.c.b16 %v605, %v604
  %v674 = vpack.c.b16 %v607, %v606
  %v675 = vpack.c.b16 %v609, %v608
  %v676 = vpack.c.b16 %v611, %v610
  %v677 = vpack.c.b16 %v613, %v612
  %v678 = vpack.c.b16 %v615, %v614
  %v679 = vpack.c.b16 %v617, %v616
  %v680 = vpack.c.b16 %v619, %v618
  %v681 = vpack.c.b16 %v621, %v620
  %v682 = vpack.c.b16 %v623, %v622
  %v683 = vpack.c.b16 %v625, %v624
  %v684 = vpack.c.b16 %v627, %v626
  %v685 = vpack.c.b16 %v629, %v628
  %v686 = vpack.c.b16 %v631, %v630
  %v687 = vpack.c.b16 %v633, %v632
  %v688 = vpack.c.b16 %v635, %v634
  %v689 = vpack.c.b16 %v637, %v636
  %v690 = vpack.c.b16 %v639, %v638
  %v691 = vpack.c.b16 %v641, %v640
  %v692 = vpack.c.b16 %v643, %v642
  %v693 = vpack.c.b16 %v645, %v644
  %742 = vmatpush.bf16.msra.mxu0 %v653
  %743 = vmatpush.bf16.msra.mxu0 %v652
  %744 = vmatpush.bf16.msra.mxu0 %v651
  %745 = vmatpush.bf16.msra.mxu0 %v650
  %746 = vmatpush.bf16.msra.mxu0 %v649
  %747 = vmatpush.bf16.msra.mxu0 %v648
  %748 = vmatpush.bf16.msra.mxu0 %v647
  %749 = vmatpush.bf16.msra.mxu0 %v646
  %750 = vmatmul.bf16.gmra.mxu0 %v358
  %v751 = vpop.f32.mrf.mxu0
  %v752 = vadd.f32 %v198, %v751
  %v753 = vpop.f32.mrf.mxu0
  %v754 = vadd.f32 %v199, %v753
  %755 = vmatmul.bf16.gmra.mxu0 %v364
  %v756 = vpop.f32.mrf.mxu0
  %v757 = vadd.f32 %v200, %v756
  %v758 = vpop.f32.mrf.mxu0
  %v759 = vadd.f32 %v201, %v758
  %760 = vmatmul.bf16.gmra.mxu0 %v370
  %v761 = vpop.f32.mrf.mxu0
  %v762 = vadd.f32 %v202, %v761
  %v763 = vpop.f32.mrf.mxu0
  %v764 = vadd.f32 %v203, %v763
  %765 = vmatmul.bf16.gmra.mxu0 %v376
  %v766 = vpop.f32.mrf.mxu0
  %v767 = vadd.f32 %v204, %v766
  %v768 = vpop.f32.mrf.mxu0
  %v769 = vadd.f32 %v205, %v768
  %770 = vmatmul.bf16.gmra.mxu0 %v382
  %v771 = vpop.f32.mrf.mxu0
  %v772 = vadd.f32 %v206, %v771
  %v773 = vpop.f32.mrf.mxu0
  %v774 = vadd.f32 %v207, %v773
  %775 = vmatmul.bf16.gmra.mxu0 %v388
  %v776 = vpop.f32.mrf.mxu0
  %v777 = vadd.f32 %v208, %v776
  %v778 = vpop.f32.mrf.mxu0
  %v779 = vadd.f32 %v209, %v778
  %780 = vmatmul.bf16.gmra.mxu0 %v394
  %v781 = vpop.f32.mrf.mxu0
  %v782 = vadd.f32 %v210, %v781
  %v783 = vpop.f32.mrf.mxu0
  %v784 = vadd.f32 %v211, %v783
  %785 = vmatmul.bf16.gmra.mxu0 %v400
  %v786 = vpop.f32.mrf.mxu0
  %v787 = vadd.f32 %v212, %v786
  %v788 = vpop.f32.mrf.mxu0
  %v789 = vadd.f32 %v213, %v788
  %790 = vdwg.mxu0
  %791 = vmatpush.bf16.msra.mxu0 %v661
  %792 = vmatpush.bf16.msra.mxu0 %v660
  %793 = vmatpush.bf16.msra.mxu0 %v659
  %794 = vmatpush.bf16.msra.mxu0 %v658
  %795 = vmatpush.bf16.msra.mxu0 %v657
  %796 = vmatpush.bf16.msra.mxu0 %v656
  %797 = vmatpush.bf16.msra.mxu0 %v655
  %798 = vmatpush.bf16.msra.mxu0 %v654
  %799 = vmatmul.bf16.gmra.mxu0 %v359
  %v800 = vpop.f32.mrf.mxu0
  %v801 = vadd.f32 %v752, %v800
  %v802 = vpop.f32.mrf.mxu0
  %v803 = vadd.f32 %v754, %v802
  %804 = vmatmul.bf16.gmra.mxu0 %v365
  %v805 = vpop.f32.mrf.mxu0
  %v806 = vadd.f32 %v757, %v805
  %v807 = vpop.f32.mrf.mxu0
  %v808 = vadd.f32 %v759, %v807
  %809 = vmatmul.bf16.gmra.mxu0 %v371
  %v810 = vpop.f32.mrf.mxu0
  %v811 = vadd.f32 %v762, %v810
  %v812 = vpop.f32.mrf.mxu0
  %v813 = vadd.f32 %v764, %v812
  %814 = vmatmul.bf16.gmra.mxu0 %v377
  %v815 = vpop.f32.mrf.mxu0
  %v816 = vadd.f32 %v767, %v815
  %v817 = vpop.f32.mrf.mxu0
  %v818 = vadd.f32 %v769, %v817
  %819 = vmatmul.bf16.gmra.mxu0 %v383
  %v820 = vpop.f32.mrf.mxu0
  %v821 = vadd.f32 %v772, %v820
  %v822 = vpop.f32.mrf.mxu0
  %v823 = vadd.f32 %v774, %v822
  %824 = vmatmul.bf16.gmra.mxu0 %v389
  %v825 = vpop.f32.mrf.mxu0
  %v826 = vadd.f32 %v777, %v825
  %v827 = vpop.f32.mrf.mxu0
  %v828 = vadd.f32 %v779, %v827
  %829 = vmatmul.bf16.gmra.mxu0 %v395
  %v830 = vpop.f32.mrf.mxu0
  %v831 = vadd.f32 %v782, %v830
  %v832 = vpop.f32.mrf.mxu0
  %v833 = vadd.f32 %v784, %v832
  %834 = vmatmul.bf16.gmra.mxu0 %v401
  %v835 = vpop.f32.mrf.mxu0
  %v836 = vadd.f32 %v787, %v835
  %v837 = vpop.f32.mrf.mxu0
  %v838 = vadd.f32 %v789, %v837
  %839 = vdwg.mxu0
  %840 = vmatpush.bf16.msra.mxu0 %v669
  %841 = vmatpush.bf16.msra.mxu0 %v668
  %842 = vmatpush.bf16.msra.mxu0 %v667
  %843 = vmatpush.bf16.msra.mxu0 %v666
  %844 = vmatpush.bf16.msra.mxu0 %v665
  %845 = vmatpush.bf16.msra.mxu0 %v664
  %846 = vmatpush.bf16.msra.mxu0 %v663
  %847 = vmatpush.bf16.msra.mxu0 %v662
  %848 = vmatmul.bf16.gmra.mxu0 %v360
  %v849 = vpop.f32.mrf.mxu0
  %v850 = vadd.f32 %v801, %v849
  %v851 = vpop.f32.mrf.mxu0
  %v852 = vadd.f32 %v803, %v851
  %853 = vmatmul.bf16.gmra.mxu0 %v366
  %v854 = vpop.f32.mrf.mxu0
  %v855 = vadd.f32 %v806, %v854
  %v856 = vpop.f32.mrf.mxu0
  %v857 = vadd.f32 %v808, %v856
  %858 = vmatmul.bf16.gmra.mxu0 %v372
  %v859 = vpop.f32.mrf.mxu0
  %v860 = vadd.f32 %v811, %v859
  %v861 = vpop.f32.mrf.mxu0
  %v862 = vadd.f32 %v813, %v861
  %863 = vmatmul.bf16.gmra.mxu0 %v378
  %v864 = vpop.f32.mrf.mxu0
  %v865 = vadd.f32 %v816, %v864
  %v866 = vpop.f32.mrf.mxu0
  %v867 = vadd.f32 %v818, %v866
  %868 = vmatmul.bf16.gmra.mxu0 %v384
  %v869 = vpop.f32.mrf.mxu0
  %v870 = vadd.f32 %v821, %v869
  %v871 = vpop.f32.mrf.mxu0
  %v872 = vadd.f32 %v823, %v871
  %873 = vmatmul.bf16.gmra.mxu0 %v390
  %v874 = vpop.f32.mrf.mxu0
  %v875 = vadd.f32 %v826, %v874
  %v876 = vpop.f32.mrf.mxu0
  %v877 = vadd.f32 %v828, %v876
  %878 = vmatmul.bf16.gmra.mxu0 %v396
  %v879 = vpop.f32.mrf.mxu0
  %v880 = vadd.f32 %v831, %v879
  %v881 = vpop.f32.mrf.mxu0
  %v882 = vadd.f32 %v833, %v881
  %883 = vmatmul.bf16.gmra.mxu0 %v402
  %v884 = vpop.f32.mrf.mxu0
  %v885 = vadd.f32 %v836, %v884
  %v886 = vpop.f32.mrf.mxu0
  %v887 = vadd.f32 %v838, %v886
  %888 = vdwg.mxu0
  %889 = vmatpush.bf16.msra.mxu0 %v677
  %890 = vmatpush.bf16.msra.mxu0 %v676
  %891 = vmatpush.bf16.msra.mxu0 %v675
  %892 = vmatpush.bf16.msra.mxu0 %v674
  %893 = vmatpush.bf16.msra.mxu0 %v673
  %894 = vmatpush.bf16.msra.mxu0 %v672
  %895 = vmatpush.bf16.msra.mxu0 %v671
  %896 = vmatpush.bf16.msra.mxu0 %v670
  %897 = vmatmul.bf16.gmra.mxu0 %v361
  %v898 = vpop.f32.mrf.mxu0
  %v899 = vadd.f32 %v850, %v898
  %v900 = vpop.f32.mrf.mxu0
  %v901 = vadd.f32 %v852, %v900
  %902 = vmatmul.bf16.gmra.mxu0 %v367
  %v903 = vpop.f32.mrf.mxu0
  %v904 = vadd.f32 %v855, %v903
  %v905 = vpop.f32.mrf.mxu0
  %v906 = vadd.f32 %v857, %v905
  %907 = vmatmul.bf16.gmra.mxu0 %v373
  %v908 = vpop.f32.mrf.mxu0
  %v909 = vadd.f32 %v860, %v908
  %v910 = vpop.f32.mrf.mxu0
  %v911 = vadd.f32 %v862, %v910
  %912 = vmatmul.bf16.gmra.mxu0 %v379
  %v913 = vpop.f32.mrf.mxu0
  %v914 = vadd.f32 %v865, %v913
  %v915 = vpop.f32.mrf.mxu0
  %v916 = vadd.f32 %v867, %v915
  %917 = vmatmul.bf16.gmra.mxu0 %v385
  %v918 = vpop.f32.mrf.mxu0
  %v919 = vadd.f32 %v870, %v918
  %v920 = vpop.f32.mrf.mxu0
  %v921 = vadd.f32 %v872, %v920
  %922 = vmatmul.bf16.gmra.mxu0 %v391
  %v923 = vpop.f32.mrf.mxu0
  %v924 = vadd.f32 %v875, %v923
  %v925 = vpop.f32.mrf.mxu0
  %v926 = vadd.f32 %v877, %v925
  %927 = vmatmul.bf16.gmra.mxu0 %v397
  %v928 = vpop.f32.mrf.mxu0
  %v929 = vadd.f32 %v880, %v928
  %v930 = vpop.f32.mrf.mxu0
  %v931 = vadd.f32 %v882, %v930
  %932 = vmatmul.bf16.gmra.mxu0 %v403
  %v933 = vpop.f32.mrf.mxu0
  %v934 = vadd.f32 %v885, %v933
  %v935 = vpop.f32.mrf.mxu0
  %v936 = vadd.f32 %v887, %v935
  %937 = vdwg.mxu0
  %938 = vmatpush.bf16.msra.mxu0 %v685
  %939 = vmatpush.bf16.msra.mxu0 %v684
  %940 = vmatpush.bf16.msra.mxu0 %v683
  %941 = vmatpush.bf16.msra.mxu0 %v682
  %942 = vmatpush.bf16.msra.mxu0 %v681
  %943 = vmatpush.bf16.msra.mxu0 %v680
  %944 = vmatpush.bf16.msra.mxu0 %v679
  %945 = vmatpush.bf16.msra.mxu0 %v678
  %946 = vmatmul.bf16.gmra.mxu0 %v362
  %v947 = vpop.f32.mrf.mxu0
  %v948 = vadd.f32 %v899, %v947
  %v949 = vpop.f32.mrf.mxu0
  %v950 = vadd.f32 %v901, %v949
  %951 = vmatmul.bf16.gmra.mxu0 %v368
  %v952 = vpop.f32.mrf.mxu0
  %v953 = vadd.f32 %v904, %v952
  %v954 = vpop.f32.mrf.mxu0
  %v955 = vadd.f32 %v906, %v954
  %956 = vmatmul.bf16.gmra.mxu0 %v374
  %v957 = vpop.f32.mrf.mxu0
  %v958 = vadd.f32 %v909, %v957
  %v959 = vpop.f32.mrf.mxu0
  %v960 = vadd.f32 %v911, %v959
  %961 = vmatmul.bf16.gmra.mxu0 %v380
  %v962 = vpop.f32.mrf.mxu0
  %v963 = vadd.f32 %v914, %v962
  %v964 = vpop.f32.mrf.mxu0
  %v965 = vadd.f32 %v916, %v964
  %966 = vmatmul.bf16.gmra.mxu0 %v386
  %v967 = vpop.f32.mrf.mxu0
  %v968 = vadd.f32 %v919, %v967
  %v969 = vpop.f32.mrf.mxu0
  %v970 = vadd.f32 %v921, %v969
  %971 = vmatmul.bf16.gmra.mxu0 %v392
  %v972 = vpop.f32.mrf.mxu0
  %v973 = vadd.f32 %v924, %v972
  %v974 = vpop.f32.mrf.mxu0
  %v975 = vadd.f32 %v926, %v974
  %976 = vmatmul.bf16.gmra.mxu0 %v398
  %v977 = vpop.f32.mrf.mxu0
  %v978 = vadd.f32 %v929, %v977
  %v979 = vpop.f32.mrf.mxu0
  %v980 = vadd.f32 %v931, %v979
  %981 = vmatmul.bf16.gmra.mxu0 %v404
  %v982 = vpop.f32.mrf.mxu0
  %v983 = vadd.f32 %v934, %v982
  %v984 = vpop.f32.mrf.mxu0
  %v985 = vadd.f32 %v936, %v984
  %986 = vdwg.mxu0
  %987 = vmatpush.bf16.msra.mxu0 %v693
  %988 = vmatpush.bf16.msra.mxu0 %v692
  %989 = vmatpush.bf16.msra.mxu0 %v691
  %990 = vmatpush.bf16.msra.mxu0 %v690
  %991 = vmatpush.bf16.msra.mxu0 %v689
  %992 = vmatpush.bf16.msra.mxu0 %v688
  %993 = vmatpush.bf16.msra.mxu0 %v687
  %994 = vmatpush.bf16.msra.mxu0 %v686
  %995 = vmatmul.bf16.gmra.mxu0 %v363
  %v996 = vpop.f32.mrf.mxu0
  %v997 = vadd.f32 %v948, %v996
  %v998 = vpop.f32.mrf.mxu0
  %v999 = vadd.f32 %v950, %v998
  %1000 = vmatmul.bf16.gmra.mxu0 %v369
  %v1001 = vpop.f32.mrf.mxu0
  %v1002 = vadd.f32 %v953, %v1001
  %v1003 = vpop.f32.mrf.mxu0
  %v1004 = vadd.f32 %v955, %v1003
  %1005 = vmatmul.bf16.gmra.mxu0 %v375
  %v1006 = vpop.f32.mrf.mxu0
  %v1007 = vadd.f32 %v958, %v1006
  %v1008 = vpop.f32.mrf.mxu0
  %v1009 = vadd.f32 %v960, %v1008
  %1010 = vmatmul.bf16.gmra.mxu0 %v381
  %v1011 = vpop.f32.mrf.mxu0
  %v1012 = vadd.f32 %v963, %v1011
  %v1013 = vpop.f32.mrf.mxu0
  %v1014 = vadd.f32 %v965, %v1013
  %1015 = vmatmul.bf16.gmra.mxu0 %v387
  %v1016 = vpop.f32.mrf.mxu0
  %v1017 = vadd.f32 %v968, %v1016
  %v1018 = vpop.f32.mrf.mxu0
  %v1019 = vadd.f32 %v970, %v1018
  %1020 = vmatmul.bf16.gmra.mxu0 %v393
  %v1021 = vpop.f32.mrf.mxu0
  %v1022 = vadd.f32 %v973, %v1021
  %v1023 = vpop.f32.mrf.mxu0
  %v1024 = vadd.f32 %v975, %v1023
  %1025 = vmatmul.bf16.gmra.mxu0 %v399
  %v1026 = vpop.f32.mrf.mxu0
  %v1027 = vadd.f32 %v978, %v1026
  %v1028 = vpop.f32.mrf.mxu0
  %v1029 = vadd.f32 %v980, %v1028
  %1030 = vmatmul.bf16.gmra.mxu0 %v405
  %v1031 = vpop.f32.mrf.mxu0
  %v1032 = vadd.f32 %v983, %v1031
  %v1033 = vpop.f32.mrf.mxu0
  %v1034 = vadd.f32 %v985, %v1033
  %1035 = vdwg.mxu0
  %v1036 = vlaneseq
  %v1037 = vand.u32 %v1036, 127
  %vm1038 = vcmp.ge.s32.totalorder %v1037, 0
  %vm1039 = vcmp.lt.s32.totalorder %v1037, 8
  %vm1040 = vmand %vm1038, %vm1039
  %v1041 = vsel %vm1040, 1, 0
  %v1042 = vcvt.s32.f32 %v1041
  %vm1043 = vcmp.ge.s32.totalorder %v1037, 8
  %vm1044 = vcmp.lt.s32.totalorder %v1037, 16
  %vm1045 = vmand %vm1043, %vm1044
  %v1046 = vsel %vm1045, 1, 0
  %v1047 = vcvt.s32.f32 %v1046
  %vm1048 = vcmp.ge.s32.totalorder %v1037, 16
  %vm1049 = vcmp.lt.s32.totalorder %v1037, 24
  %vm1050 = vmand %vm1048, %vm1049
  %v1051 = vsel %vm1050, 1, 0
  %v1052 = vcvt.s32.f32 %v1051
  %vm1053 = vcmp.ge.s32.totalorder %v1037, 24
  %vm1054 = vcmp.lt.s32.totalorder %v1037, 32
  %vm1055 = vmand %vm1053, %vm1054
  %v1056 = vsel %vm1055, 1, 0
  %v1057 = vcvt.s32.f32 %v1056
  %v1058 = vld [vmem:[%s3] sm:$0xff]
  %v1059 = vld [vmem:[%s3 + $0x8] sm:$0xff]
  %v1060 = vld [vmem:[%s3 + $0x10] sm:$0xff]
  %v1061 = vld [vmem:[%s3 + $0x18] sm:$0xff]
  %v1062 = vld [vmem:[%s3 + $0x20] sm:$0xff]
  %v1063 = vld [vmem:[%s3 + $0x28] sm:$0xff]
  %v1064 = vld [vmem:[%s3 + $0x30] sm:$0xff]
  %v1065 = vld [vmem:[%s3 + $0x38] sm:$0xff]
  %v1066 = vld [vmem:[%s3 + $0x40] sm:$0xff]
  %v1067 = vld [vmem:[%s3 + $0x48] sm:$0xff]
  %v1068 = vld [vmem:[%s3 + $0x50] sm:$0xff]
  %v1069 = vld [vmem:[%s3 + $0x58] sm:$0xff]
  %v1070 = vld [vmem:[%s3 + $0x60] sm:$0xff]
  %v1071 = vld [vmem:[%s3 + $0x68] sm:$0xff]
  %v1072 = vld [vmem:[%s3 + $0x70] sm:$0xff]
  %v1073 = vld [vmem:[%s3 + $0x78] sm:$0xff]
  %v1074 = vpack.c.bf16 %v999, %v997
  %v1075 = vpack.c.bf16 %v1004, %v1002
  %v1076 = vpack.c.bf16 %v1009, %v1007
  %v1077 = vpack.c.bf16 %v1014, %v1012
  %v1078 = vpack.c.bf16 %v1019, %v1017
  %v1079 = vpack.c.bf16 %v1024, %v1022
  %v1080 = vpack.c.bf16 %v1029, %v1027
  %v1081 = vpack.c.bf16 %v1034, %v1032
  %v1082 = vld [vmem:[%s4] sm:$0xf]
  %v1083 = vld [vmem:[%s4 + $0x4] sm:$0xf]
  %v1084 = vld [vmem:[%s4 + $0x8] sm:$0xf]
  %v1085 = vld [vmem:[%s4 + $0xc] sm:$0xf]
  %v1086 = vld [vmem:[%s5] sm:$0x1]
  %v1088 = vperm.slane %v1086, 0
  %v1094 = vunpack.c.l.b16 %v1082
  %v1095 = vunpack.c.l.b16 %v1083
  %v1096 = vunpack.c.l.b16 %v1084
  %v1097 = vunpack.c.l.b16 %v1085
  %v1098 = vpack.c.b16 %v1095, %v1094
  %v1099 = vpack.c.b16 %v1097, %v1096
  %vm1102 = vcmask 261120
  %v1104 = vsel %vm1102, %v1074, 0
  %v1107 = vsel %vm1102, %v1075, 0
  %v1110 = vsel %vm1102, %v1076, 0
  %v1113 = vsel %vm1102, %v1077, 0
  %v1116 = vsel %vm1102, %v1078, 0
  %v1119 = vsel %vm1102, %v1079, 0
  %v1122 = vsel %vm1102, %v1080, 0
  %v1125 = vsel %vm1102, %v1081, 0
  %1127 = vmatpush.bf16.msra.mxu0 0
  %1128 = vmatpush.bf16.msra.mxu0 0
  %1129 = vmatpush.bf16.msra.mxu0 0
  %1130 = vmatpush.bf16.msra.mxu0 0
  %1131 = vmatpush.bf16.msra.mxu0 0
  %1132 = vmatpush.bf16.msra.mxu0 0
  %1133 = vmatpush.bf16.msra.mxu0 %v1099
  %1134 = vmatpush.bf16.msra.mxu0 %v1098
  %1135 = vmatmul.bf16.gmra.mxu0 %v1104
  %v1136 = vpop.f32.mrf.mxu0
  %v1137 = vadd.f32 %v1088, %v1136
  %v1138 = vpop.f32.mrf.mxu0
  %v1139 = vadd.f32 %v1088, %v1138
  %1140 = vmatmul.bf16.gmra.mxu0 %v1107
  %v1141 = vpop.f32.mrf.mxu0
  %v1142 = vadd.f32 %v1088, %v1141
  %v1143 = vpop.f32.mrf.mxu0
  %v1144 = vadd.f32 %v1088, %v1143
  %1145 = vmatmul.bf16.gmra.mxu0 %v1110
  %v1146 = vpop.f32.mrf.mxu0
  %v1147 = vadd.f32 %v1088, %v1146
  %v1148 = vpop.f32.mrf.mxu0
  %v1149 = vadd.f32 %v1088, %v1148
  %1150 = vmatmul.bf16.gmra.mxu0 %v1113
  %v1151 = vpop.f32.mrf.mxu0
  %v1152 = vadd.f32 %v1088, %v1151
  %v1153 = vpop.f32.mrf.mxu0
  %v1154 = vadd.f32 %v1088, %v1153
  %1155 = vmatmul.bf16.gmra.mxu0 %v1116
  %v1156 = vpop.f32.mrf.mxu0
  %v1157 = vadd.f32 %v1088, %v1156
  %v1158 = vpop.f32.mrf.mxu0
  %v1159 = vadd.f32 %v1088, %v1158
  %1160 = vmatmul.bf16.gmra.mxu0 %v1119
  %v1161 = vpop.f32.mrf.mxu0
  %v1162 = vadd.f32 %v1088, %v1161
  %v1163 = vpop.f32.mrf.mxu0
  %v1164 = vadd.f32 %v1088, %v1163
  %1165 = vmatmul.bf16.gmra.mxu0 %v1122
  %v1166 = vpop.f32.mrf.mxu0
  %v1167 = vadd.f32 %v1088, %v1166
  %v1168 = vpop.f32.mrf.mxu0
  %v1169 = vadd.f32 %v1088, %v1168
  %1170 = vmatmul.bf16.gmra.mxu0 %v1125
  %v1171 = vpop.f32.mrf.mxu0
  %v1172 = vadd.f32 %v1088, %v1171
  %v1173 = vpop.f32.mrf.mxu0
  %v1174 = vadd.f32 %v1088, %v1173
  %1175 = vdwg.mxu0
  %v1176 = vpack.c.bf16 %v1139, %v1137
  %v1177 = vpack.c.bf16 %v1144, %v1142
  %v1178 = vpack.c.bf16 %v1149, %v1147
  %v1179 = vpack.c.bf16 %v1154, %v1152
  %v1180 = vpack.c.bf16 %v1159, %v1157
  %v1181 = vpack.c.bf16 %v1164, %v1162
  %v1182 = vpack.c.bf16 %v1169, %v1167
  %v1183 = vpack.c.bf16 %v1174, %v1172
  %v1184 = vmul.f32 %v1137, %v1042
  %v1185 = vmul.f32 %v1139, %v1042
  %v1186 = vmul.f32 %v1142, %v1042
  %v1187 = vmul.f32 %v1144, %v1042
  %v1188 = vmul.f32 %v1147, %v1042
  %v1189 = vmul.f32 %v1149, %v1042
  %v1190 = vmul.f32 %v1152, %v1042
  %v1191 = vmul.f32 %v1154, %v1042
  %v1192 = vmul.f32 %v1157, %v1042
  %v1193 = vmul.f32 %v1159, %v1042
  %v1194 = vmul.f32 %v1162, %v1042
  %v1195 = vmul.f32 %v1164, %v1042
  %v1196 = vmul.f32 %v1167, %v1042
  %v1197 = vmul.f32 %v1169, %v1042
  %v1198 = vmul.f32 %v1172, %v1042
  %v1199 = vmul.f32 %v1174, %v1042
  %v1200 = vpack.c.bf16 %v1185, %v1184
  %v1201 = vpack.c.bf16 %v1187, %v1186
  %v1202 = vpack.c.bf16 %v1189, %v1188
  %v1203 = vpack.c.bf16 %v1191, %v1190
  %v1204 = vpack.c.bf16 %v1193, %v1192
  %v1205 = vpack.c.bf16 %v1195, %v1194
  %v1206 = vpack.c.bf16 %v1197, %v1196
  %v1207 = vpack.c.bf16 %v1199, %v1198
  %1216 = vrot.lane.b32.xlu0 %v1176, 96
  %v1217 = vpop.permute.xlu0 %1216
  %1218 = vrot.lane.b32.xlu0 %v1177, 96
  %v1219 = vpop.permute.xlu0 %1218
  %1220 = vrot.lane.b32.xlu0 %v1178, 96
  %v1221 = vpop.permute.xlu0 %1220
  %1222 = vrot.lane.b32.xlu0 %v1179, 96
  %v1223 = vpop.permute.xlu0 %1222
  %1224 = vrot.lane.b32.xlu0 %v1180, 96
  %v1225 = vpop.permute.xlu0 %1224
  %1226 = vrot.lane.b32.xlu0 %v1181, 96
  %v1227 = vpop.permute.xlu0 %1226
  %1228 = vrot.lane.b32.xlu0 %v1182, 96
  %v1229 = vpop.permute.xlu0 %1228
  %1230 = vrot.lane.b32.xlu0 %v1183, 96
  %v1231 = vpop.permute.xlu0 %1230
  %v1233 = vsel %vm1102, %v1200, 0
  %v1236 = vsel %vm1102, %v1201, 0
  %v1239 = vsel %vm1102, %v1202, 0
  %v1242 = vsel %vm1102, %v1203, 0
  %v1245 = vsel %vm1102, %v1204, 0
  %v1248 = vsel %vm1102, %v1205, 0
  %v1251 = vsel %vm1102, %v1206, 0
  %v1254 = vsel %vm1102, %v1207, 0
  %v1257 = vsel %vm1102, %v1217, 0
  %v1260 = vsel %vm1102, %v1219, 0
  %v1263 = vsel %vm1102, %v1221, 0
  %v1266 = vsel %vm1102, %v1223, 0
  %v1269 = vsel %vm1102, %v1225, 0
  %v1272 = vsel %vm1102, %v1227, 0
  %v1275 = vsel %vm1102, %v1229, 0
  %v1278 = vsel %vm1102, %v1231, 0
  %1280 = vmatpush.bf16.xpose.msra.mxu0 %v1278
  %1281 = vmatpush.bf16.xpose.msra.mxu0 %v1275
  %1282 = vmatpush.bf16.xpose.msra.mxu0 %v1272
  %1283 = vmatpush.bf16.xpose.msra.mxu0 %v1269
  %1284 = vmatpush.bf16.xpose.msra.mxu0 %v1266
  %1285 = vmatpush.bf16.xpose.msra.mxu0 %v1263
  %1286 = vmatpush.bf16.xpose.msra.mxu0 %v1260
  %1287 = vmatpush.bf16.xpose.msra.mxu0 %v1257
  %1288 = vmatmul.bf16.gmra.mxu0 %v1233
  %v1289 = vpop.f32.mrf.mxu0
  %v1290 = vadd.f32 0.0, %v1289
  %v1291 = vpop.f32.mrf.mxu0
  %v1292 = vadd.f32 0.0, %v1291
  %1293 = vmatmul.bf16.gmra.mxu0 %v1236
  %v1294 = vpop.f32.mrf.mxu0
  %v1295 = vadd.f32 0.0, %v1294
  %v1296 = vpop.f32.mrf.mxu0
  %v1297 = vadd.f32 0.0, %v1296
  %1298 = vmatmul.bf16.gmra.mxu0 %v1239
  %v1299 = vpop.f32.mrf.mxu0
  %v1300 = vadd.f32 0.0, %v1299
  %v1301 = vpop.f32.mrf.mxu0
  %v1302 = vadd.f32 0.0, %v1301
  %1303 = vmatmul.bf16.gmra.mxu0 %v1242
  %v1304 = vpop.f32.mrf.mxu0
  %v1305 = vadd.f32 0.0, %v1304
  %v1306 = vpop.f32.mrf.mxu0
  %v1307 = vadd.f32 0.0, %v1306
  %1308 = vmatmul.bf16.gmra.mxu0 %v1245
  %v1309 = vpop.f32.mrf.mxu0
  %v1310 = vadd.f32 0.0, %v1309
  %v1311 = vpop.f32.mrf.mxu0
  %v1312 = vadd.f32 0.0, %v1311
  %1313 = vmatmul.bf16.gmra.mxu0 %v1248
  %v1314 = vpop.f32.mrf.mxu0
  %v1315 = vadd.f32 0.0, %v1314
  %v1316 = vpop.f32.mrf.mxu0
  %v1317 = vadd.f32 0.0, %v1316
  %1318 = vmatmul.bf16.gmra.mxu0 %v1251
  %v1319 = vpop.f32.mrf.mxu0
  %v1320 = vadd.f32 0.0, %v1319
  %v1321 = vpop.f32.mrf.mxu0
  %v1322 = vadd.f32 0.0, %v1321
  %1323 = vmatmul.bf16.gmra.mxu0 %v1254
  %v1324 = vpop.f32.mrf.mxu0
  %v1325 = vadd.f32 0.0, %v1324
  %v1326 = vpop.f32.mrf.mxu0
  %v1327 = vadd.f32 0.0, %v1326
  %1328 = vdwg.mxu0
  %v1329 = vmul.f32 %v1290, 0.35355338
  %v1330 = vmul.f32 %v1292, 0.35355338
  %v1331 = vmul.f32 %v1295, 0.35355338
  %v1332 = vmul.f32 %v1297, 0.35355338
  %v1333 = vmul.f32 %v1300, 0.35355338
  %v1334 = vmul.f32 %v1302, 0.35355338
  %v1335 = vmul.f32 %v1305, 0.35355338
  %v1336 = vmul.f32 %v1307, 0.35355338
  %v1337 = vmul.f32 %v1310, 0.35355338
  %v1338 = vmul.f32 %v1312, 0.35355338
  %v1339 = vmul.f32 %v1315, 0.35355338
  %v1340 = vmul.f32 %v1317, 0.35355338
  %v1341 = vmul.f32 %v1320, 0.35355338
  %v1342 = vmul.f32 %v1322, 0.35355338
  %v1343 = vmul.f32 %v1325, 0.35355338
  %v1344 = vmul.f32 %v1327, 0.35355338
  %v1345 = vadd.f32 %v1329, %v1058
  %v1346 = vadd.f32 %v1330, %v1059
  %v1347 = vadd.f32 %v1331, %v1060
  %v1348 = vadd.f32 %v1332, %v1061
  %v1349 = vadd.f32 %v1333, %v1062
  %v1350 = vadd.f32 %v1334, %v1063
  %v1351 = vadd.f32 %v1335, %v1064
  %v1352 = vadd.f32 %v1336, %v1065
  %v1353 = vadd.f32 %v1337, %v1066
  %v1354 = vadd.f32 %v1338, %v1067
  %v1355 = vadd.f32 %v1339, %v1068
  %v1356 = vadd.f32 %v1340, %v1069
  %v1357 = vadd.f32 %v1341, %v1070
  %v1358 = vadd.f32 %v1342, %v1071
  %v1359 = vadd.f32 %v1343, %v1072
  %v1360 = vadd.f32 %v1344, %v1073
  %1361 = vmax.xlane.f32.xlu0 %v1345
  %v1362 = vpop.xlane.xlu0 %1361
  %1363 = vmax.xlane.f32.xlu0 %v1346
  %v1364 = vpop.xlane.xlu0 %1363
  %1365 = vmax.xlane.f32.xlu0 %v1347
  %v1366 = vpop.xlane.xlu0 %1365
  %1367 = vmax.xlane.f32.xlu0 %v1348
  %v1368 = vpop.xlane.xlu0 %1367
  %1369 = vmax.xlane.f32.xlu0 %v1349
  %v1370 = vpop.xlane.xlu0 %1369
  %1371 = vmax.xlane.f32.xlu0 %v1350
  %v1372 = vpop.xlane.xlu0 %1371
  %1373 = vmax.xlane.f32.xlu0 %v1351
  %v1374 = vpop.xlane.xlu0 %1373
  %1375 = vmax.xlane.f32.xlu0 %v1352
  %v1376 = vpop.xlane.xlu0 %1375
  %1377 = vmax.xlane.f32.xlu0 %v1353
  %v1378 = vpop.xlane.xlu0 %1377
  %1379 = vmax.xlane.f32.xlu0 %v1354
  %v1380 = vpop.xlane.xlu0 %1379
  %1381 = vmax.xlane.f32.xlu0 %v1355
  %v1382 = vpop.xlane.xlu0 %1381
  %1383 = vmax.xlane.f32.xlu0 %v1356
  %v1384 = vpop.xlane.xlu0 %1383
  %1385 = vmax.xlane.f32.xlu0 %v1357
  %v1386 = vpop.xlane.xlu0 %1385
  %1387 = vmax.xlane.f32.xlu0 %v1358
  %v1388 = vpop.xlane.xlu0 %1387
  %1389 = vmax.xlane.f32.xlu0 %v1359
  %v1390 = vpop.xlane.xlu0 %1389
  %1391 = vmax.xlane.f32.xlu0 %v1360
  %v1392 = vpop.xlane.xlu0 %1391
  %v1393 = vsub.f32 %v1345, %v1362
  %v1394 = vsub.f32 %v1346, %v1364
  %v1395 = vsub.f32 %v1347, %v1366
  %v1396 = vsub.f32 %v1348, %v1368
  %v1397 = vsub.f32 %v1349, %v1370
  %v1398 = vsub.f32 %v1350, %v1372
  %v1399 = vsub.f32 %v1351, %v1374
  %v1400 = vsub.f32 %v1352, %v1376
  %v1401 = vsub.f32 %v1353, %v1378
  %v1402 = vsub.f32 %v1354, %v1380
  %v1403 = vsub.f32 %v1355, %v1382
  %v1404 = vsub.f32 %v1356, %v1384
  %v1405 = vsub.f32 %v1357, %v1386
  %v1406 = vsub.f32 %v1358, %v1388
  %v1407 = vsub.f32 %v1359, %v1390
  %v1408 = vsub.f32 %v1360, %v1392
  %v1409 = vmul.f32 %v1393, 1.442695
  %v1410 = vpow.pop %v1409
  %v1411 = vmul.f32 %v1394, 1.442695
  %v1412 = vpow.pop %v1411
  %v1413 = vmul.f32 %v1395, 1.442695
  %v1414 = vpow.pop %v1413
  %v1415 = vmul.f32 %v1396, 1.442695
  %v1416 = vpow.pop %v1415
  %v1417 = vmul.f32 %v1397, 1.442695
  %v1418 = vpow.pop %v1417
  %v1419 = vmul.f32 %v1398, 1.442695
  %v1420 = vpow.pop %v1419
  %v1421 = vmul.f32 %v1399, 1.442695
  %v1422 = vpow.pop %v1421
  %v1423 = vmul.f32 %v1400, 1.442695
  %v1424 = vpow.pop %v1423
  %v1425 = vmul.f32 %v1401, 1.442695
  %v1426 = vpow.pop %v1425
  %v1427 = vmul.f32 %v1402, 1.442695
  %v1428 = vpow.pop %v1427
  %v1429 = vmul.f32 %v1403, 1.442695
  %v1430 = vpow.pop %v1429
  %v1431 = vmul.f32 %v1404, 1.442695
  %v1432 = vpow.pop %v1431
  %v1433 = vmul.f32 %v1405, 1.442695
  %v1434 = vpow.pop %v1433
  %v1435 = vmul.f32 %v1406, 1.442695
  %v1436 = vpow.pop %v1435
  %v1437 = vmul.f32 %v1407, 1.442695
  %v1438 = vpow.pop %v1437
  %v1439 = vmul.f32 %v1408, 1.442695
  %v1440 = vpow.pop %v1439
  %1441 = vadd.xlane.f32.xlu0 %v1410
  %v1442 = vpop.xlane.xlu0 %1441
  %1443 = vadd.xlane.f32.xlu0 %v1412
  %v1444 = vpop.xlane.xlu0 %1443
  %1445 = vadd.xlane.f32.xlu0 %v1414
  %v1446 = vpop.xlane.xlu0 %1445
  %1447 = vadd.xlane.f32.xlu0 %v1416
  %v1448 = vpop.xlane.xlu0 %1447
  %1449 = vadd.xlane.f32.xlu0 %v1418
  %v1450 = vpop.xlane.xlu0 %1449
  %1451 = vadd.xlane.f32.xlu0 %v1420
  %v1452 = vpop.xlane.xlu0 %1451
  %1453 = vadd.xlane.f32.xlu0 %v1422
  %v1454 = vpop.xlane.xlu0 %1453
  %1455 = vadd.xlane.f32.xlu0 %v1424
  %v1456 = vpop.xlane.xlu0 %1455
  %1457 = vadd.xlane.f32.xlu0 %v1426
  %v1458 = vpop.xlane.xlu0 %1457
  %1459 = vadd.xlane.f32.xlu0 %v1428
  %v1460 = vpop.xlane.xlu0 %1459
  %1461 = vadd.xlane.f32.xlu0 %v1430
  %v1462 = vpop.xlane.xlu0 %1461
  %1463 = vadd.xlane.f32.xlu0 %v1432
  %v1464 = vpop.xlane.xlu0 %1463
  %1465 = vadd.xlane.f32.xlu0 %v1434
  %v1466 = vpop.xlane.xlu0 %1465
  %1467 = vadd.xlane.f32.xlu0 %v1436
  %v1468 = vpop.xlane.xlu0 %1467
  %1469 = vadd.xlane.f32.xlu0 %v1438
  %v1470 = vpop.xlane.xlu0 %1469
  %1471 = vadd.xlane.f32.xlu0 %v1440
  %v1472 = vpop.xlane.xlu0 %1471
  %v1473 = vrcp.pop %v1442
  %v1474 = vrcp.pop %v1444
  %v1475 = vrcp.pop %v1446
  %v1476 = vrcp.pop %v1448
  %v1477 = vrcp.pop %v1450
  %v1478 = vrcp.pop %v1452
  %v1479 = vrcp.pop %v1454
  %v1480 = vrcp.pop %v1456
  %v1481 = vrcp.pop %v1458
  %v1482 = vrcp.pop %v1460
  %v1483 = vrcp.pop %v1462
  %v1484 = vrcp.pop %v1464
  %v1485 = vrcp.pop %v1466
  %v1486 = vrcp.pop %v1468
  %v1487 = vrcp.pop %v1470
  %v1488 = vrcp.pop %v1472
  %v1489 = vmul.f32 %v1410, %v1473
  %v1490 = vmul.f32 %v1412, %v1474
  %v1491 = vmul.f32 %v1414, %v1475
  %v1492 = vmul.f32 %v1416, %v1476
  %v1493 = vmul.f32 %v1418, %v1477
  %v1494 = vmul.f32 %v1420, %v1478
  %v1495 = vmul.f32 %v1422, %v1479
  %v1496 = vmul.f32 %v1424, %v1480
  %v1497 = vmul.f32 %v1426, %v1481
  %v1498 = vmul.f32 %v1428, %v1482
  %v1499 = vmul.f32 %v1430, %v1483
  %v1500 = vmul.f32 %v1432, %v1484
  %v1501 = vmul.f32 %v1434, %v1485
  %v1502 = vmul.f32 %v1436, %v1486
  %v1503 = vmul.f32 %v1438, %v1487
  %v1504 = vmul.f32 %v1440, %v1488
  %v1505 = vpack.c.bf16 %v1490, %v1489
  %v1506 = vpack.c.bf16 %v1492, %v1491
  %v1507 = vpack.c.bf16 %v1494, %v1493
  %v1508 = vpack.c.bf16 %v1496, %v1495
  %v1509 = vpack.c.bf16 %v1498, %v1497
  %v1510 = vpack.c.bf16 %v1500, %v1499
  %v1511 = vpack.c.bf16 %v1502, %v1501
  %v1512 = vpack.c.bf16 %v1504, %v1503
  %1513 = vrot.lane.b32.xlu0 %v1176, 64
  %v1514 = vpop.permute.xlu0 %1513
  %1515 = vrot.lane.b32.xlu0 %v1177, 64
  %v1516 = vpop.permute.xlu0 %1515
  %1517 = vrot.lane.b32.xlu0 %v1178, 64
  %v1518 = vpop.permute.xlu0 %1517
  %1519 = vrot.lane.b32.xlu0 %v1179, 64
  %v1520 = vpop.permute.xlu0 %1519
  %1521 = vrot.lane.b32.xlu0 %v1180, 64
  %v1522 = vpop.permute.xlu0 %1521
  %1523 = vrot.lane.b32.xlu0 %v1181, 64
  %v1524 = vpop.permute.xlu0 %1523
  %1525 = vrot.lane.b32.xlu0 %v1182, 64
  %v1526 = vpop.permute.xlu0 %1525
  %1527 = vrot.lane.b32.xlu0 %v1183, 64
  %v1528 = vpop.permute.xlu0 %1527
  %1537 = vmatpush.bf16.msra.mxu0 %v1528
  %1538 = vmatpush.bf16.msra.mxu0 %v1526
  %1539 = vmatpush.bf16.msra.mxu0 %v1524
  %1540 = vmatpush.bf16.msra.mxu0 %v1522
  %1541 = vmatpush.bf16.msra.mxu0 %v1520
  %1542 = vmatpush.bf16.msra.mxu0 %v1518
  %1543 = vmatpush.bf16.msra.mxu0 %v1516
  %1544 = vmatpush.bf16.msra.mxu0 %v1514
  %1545 = vmatmul.bf16.gmra.mxu0 %v1505
  %v1546 = vpop.f32.mrf.mxu0
  %v1547 = vadd.f32 0.0, %v1546
  %v1548 = vpop.f32.mrf.mxu0
  %v1549 = vadd.f32 0.0, %v1548
  %1550 = vmatmul.bf16.gmra.mxu0 %v1506
  %v1551 = vpop.f32.mrf.mxu0
  %v1552 = vadd.f32 0.0, %v1551
  %v1553 = vpop.f32.mrf.mxu0
  %v1554 = vadd.f32 0.0, %v1553
  %1555 = vmatmul.bf16.gmra.mxu0 %v1507
  %v1556 = vpop.f32.mrf.mxu0
  %v1557 = vadd.f32 0.0, %v1556
  %v1558 = vpop.f32.mrf.mxu0
  %v1559 = vadd.f32 0.0, %v1558
  %1560 = vmatmul.bf16.gmra.mxu0 %v1508
  %v1561 = vpop.f32.mrf.mxu0
  %v1562 = vadd.f32 0.0, %v1561
  %v1563 = vpop.f32.mrf.mxu0
  %v1564 = vadd.f32 0.0, %v1563
  %1565 = vmatmul.bf16.gmra.mxu0 %v1509
  %v1566 = vpop.f32.mrf.mxu0
  %v1567 = vadd.f32 0.0, %v1566
  %v1568 = vpop.f32.mrf.mxu0
  %v1569 = vadd.f32 0.0, %v1568
  %1570 = vmatmul.bf16.gmra.mxu0 %v1510
  %v1571 = vpop.f32.mrf.mxu0
  %v1572 = vadd.f32 0.0, %v1571
  %v1573 = vpop.f32.mrf.mxu0
  %v1574 = vadd.f32 0.0, %v1573
  %1575 = vmatmul.bf16.gmra.mxu0 %v1511
  %v1576 = vpop.f32.mrf.mxu0
  %v1577 = vadd.f32 0.0, %v1576
  %v1578 = vpop.f32.mrf.mxu0
  %v1579 = vadd.f32 0.0, %v1578
  %1580 = vmatmul.bf16.gmra.mxu0 %v1512
  %v1581 = vpop.f32.mrf.mxu0
  %v1582 = vadd.f32 0.0, %v1581
  %v1583 = vpop.f32.mrf.mxu0
  %v1584 = vadd.f32 0.0, %v1583
  %1585 = vdwg.mxu0
  %v1586 = vmul.f32 %v1042, %v1547
  %v1587 = vmul.f32 %v1042, %v1549
  %v1588 = vmul.f32 %v1042, %v1552
  %v1589 = vmul.f32 %v1042, %v1554
  %v1590 = vmul.f32 %v1042, %v1557
  %v1591 = vmul.f32 %v1042, %v1559
  %v1592 = vmul.f32 %v1042, %v1562
  %v1593 = vmul.f32 %v1042, %v1564
  %v1594 = vmul.f32 %v1042, %v1567
  %v1595 = vmul.f32 %v1042, %v1569
  %v1596 = vmul.f32 %v1042, %v1572
  %v1597 = vmul.f32 %v1042, %v1574
  %v1598 = vmul.f32 %v1042, %v1577
  %v1599 = vmul.f32 %v1042, %v1579
  %v1600 = vmul.f32 %v1042, %v1582
  %v1601 = vmul.f32 %v1042, %v1584
  %v1602 = vadd.f32 %v1586, 0.0
  %v1603 = vadd.f32 %v1587, 0.0
  %v1604 = vadd.f32 %v1588, 0.0
  %v1605 = vadd.f32 %v1589, 0.0
  %v1606 = vadd.f32 %v1590, 0.0
  %v1607 = vadd.f32 %v1591, 0.0
  %v1608 = vadd.f32 %v1592, 0.0
  %v1609 = vadd.f32 %v1593, 0.0
  %v1610 = vadd.f32 %v1594, 0.0
  %v1611 = vadd.f32 %v1595, 0.0
  %v1612 = vadd.f32 %v1596, 0.0
  %v1613 = vadd.f32 %v1597, 0.0
  %v1614 = vadd.f32 %v1598, 0.0
  %v1615 = vadd.f32 %v1599, 0.0
  %v1616 = vadd.f32 %v1600, 0.0
  %v1617 = vadd.f32 %v1601, 0.0
  %v1618 = vmul.f32 %v1137, %v1047
  %v1619 = vmul.f32 %v1139, %v1047
  %v1620 = vmul.f32 %v1142, %v1047
  %v1621 = vmul.f32 %v1144, %v1047
  %v1622 = vmul.f32 %v1147, %v1047
  %v1623 = vmul.f32 %v1149, %v1047
  %v1624 = vmul.f32 %v1152, %v1047
  %v1625 = vmul.f32 %v1154, %v1047
  %v1626 = vmul.f32 %v1157, %v1047
  %v1627 = vmul.f32 %v1159, %v1047
  %v1628 = vmul.f32 %v1162, %v1047
  %v1629 = vmul.f32 %v1164, %v1047
  %v1630 = vmul.f32 %v1167, %v1047
  %v1631 = vmul.f32 %v1169, %v1047
  %v1632 = vmul.f32 %v1172, %v1047
  %v1633 = vmul.f32 %v1174, %v1047
  %v1634 = vpack.c.bf16 %v1619, %v1618
  %v1635 = vpack.c.bf16 %v1621, %v1620
  %v1636 = vpack.c.bf16 %v1623, %v1622
  %v1637 = vpack.c.bf16 %v1625, %v1624
  %v1638 = vpack.c.bf16 %v1627, %v1626
  %v1639 = vpack.c.bf16 %v1629, %v1628
  %v1640 = vpack.c.bf16 %v1631, %v1630
  %v1641 = vpack.c.bf16 %v1633, %v1632
  %v1643 = vsel %vm1102, %v1634, 0
  %v1646 = vsel %vm1102, %v1635, 0
  %v1649 = vsel %vm1102, %v1636, 0
  %v1652 = vsel %vm1102, %v1637, 0
  %v1655 = vsel %vm1102, %v1638, 0
  %v1658 = vsel %vm1102, %v1639, 0
  %v1661 = vsel %vm1102, %v1640, 0
  %v1664 = vsel %vm1102, %v1641, 0
  %1666 = vmatpush.bf16.xpose.msra.mxu0 %v1278
  %1667 = vmatpush.bf16.xpose.msra.mxu0 %v1275
  %1668 = vmatpush.bf16.xpose.msra.mxu0 %v1272
  %1669 = vmatpush.bf16.xpose.msra.mxu0 %v1269
  %1670 = vmatpush.bf16.xpose.msra.mxu0 %v1266
  %1671 = vmatpush.bf16.xpose.msra.mxu0 %v1263
  %1672 = vmatpush.bf16.xpose.msra.mxu0 %v1260
  %1673 = vmatpush.bf16.xpose.msra.mxu0 %v1257
  %1674 = vmatmul.bf16.gmra.mxu0 %v1643
  %v1675 = vpop.f32.mrf.mxu0
  %v1676 = vadd.f32 0.0, %v1675
  %v1677 = vpop.f32.mrf.mxu0
  %v1678 = vadd.f32 0.0, %v1677
  %1679 = vmatmul.bf16.gmra.mxu0 %v1646
  %v1680 = vpop.f32.mrf.mxu0
  %v1681 = vadd.f32 0.0, %v1680
  %v1682 = vpop.f32.mrf.mxu0
  %v1683 = vadd.f32 0.0, %v1682
  %1684 = vmatmul.bf16.gmra.mxu0 %v1649
  %v1685 = vpop.f32.mrf.mxu0
  %v1686 = vadd.f32 0.0, %v1685
  %v1687 = vpop.f32.mrf.mxu0
  %v1688 = vadd.f32 0.0, %v1687
  %1689 = vmatmul.bf16.gmra.mxu0 %v1652
  %v1690 = vpop.f32.mrf.mxu0
  %v1691 = vadd.f32 0.0, %v1690
  %v1692 = vpop.f32.mrf.mxu0
  %v1693 = vadd.f32 0.0, %v1692
  %1694 = vmatmul.bf16.gmra.mxu0 %v1655
  %v1695 = vpop.f32.mrf.mxu0
  %v1696 = vadd.f32 0.0, %v1695
  %v1697 = vpop.f32.mrf.mxu0
  %v1698 = vadd.f32 0.0, %v1697
  %1699 = vmatmul.bf16.gmra.mxu0 %v1658
  %v1700 = vpop.f32.mrf.mxu0
  %v1701 = vadd.f32 0.0, %v1700
  %v1702 = vpop.f32.mrf.mxu0
  %v1703 = vadd.f32 0.0, %v1702
  %1704 = vmatmul.bf16.gmra.mxu0 %v1661
  %v1705 = vpop.f32.mrf.mxu0
  %v1706 = vadd.f32 0.0, %v1705
  %v1707 = vpop.f32.mrf.mxu0
  %v1708 = vadd.f32 0.0, %v1707
  %1709 = vmatmul.bf16.gmra.mxu0 %v1664
  %v1710 = vpop.f32.mrf.mxu0
  %v1711 = vadd.f32 0.0, %v1710
  %v1712 = vpop.f32.mrf.mxu0
  %v1713 = vadd.f32 0.0, %v1712
  %1714 = vdwg.mxu0
  %v1715 = vmul.f32 %v1676, 0.35355338
  %v1716 = vmul.f32 %v1678, 0.35355338
  %v1717 = vmul.f32 %v1681, 0.35355338
  %v1718 = vmul.f32 %v1683, 0.35355338
  %v1719 = vmul.f32 %v1686, 0.35355338
  %v1720 = vmul.f32 %v1688, 0.35355338
  %v1721 = vmul.f32 %v1691, 0.35355338
  %v1722 = vmul.f32 %v1693, 0.35355338
  %v1723 = vmul.f32 %v1696, 0.35355338
  %v1724 = vmul.f32 %v1698, 0.35355338
  %v1725 = vmul.f32 %v1701, 0.35355338
  %v1726 = vmul.f32 %v1703, 0.35355338
  %v1727 = vmul.f32 %v1706, 0.35355338
  %v1728 = vmul.f32 %v1708, 0.35355338
  %v1729 = vmul.f32 %v1711, 0.35355338
  %v1730 = vmul.f32 %v1713, 0.35355338
  %v1731 = vadd.f32 %v1715, %v1058
  %v1732 = vadd.f32 %v1716, %v1059
  %v1733 = vadd.f32 %v1717, %v1060
  %v1734 = vadd.f32 %v1718, %v1061
  %v1735 = vadd.f32 %v1719, %v1062
  %v1736 = vadd.f32 %v1720, %v1063
  %v1737 = vadd.f32 %v1721, %v1064
  %v1738 = vadd.f32 %v1722, %v1065
  %v1739 = vadd.f32 %v1723, %v1066
  %v1740 = vadd.f32 %v1724, %v1067
  %v1741 = vadd.f32 %v1725, %v1068
  %v1742 = vadd.f32 %v1726, %v1069
  %v1743 = vadd.f32 %v1727, %v1070
  %v1744 = vadd.f32 %v1728, %v1071
  %v1745 = vadd.f32 %v1729, %v1072
  %v1746 = vadd.f32 %v1730, %v1073
  %1747 = vmax.xlane.f32.xlu0 %v1731
  %v1748 = vpop.xlane.xlu0 %1747
  %1749 = vmax.xlane.f32.xlu0 %v1732
  %v1750 = vpop.xlane.xlu0 %1749
  %1751 = vmax.xlane.f32.xlu0 %v1733
  %v1752 = vpop.xlane.xlu0 %1751
  %1753 = vmax.xlane.f32.xlu0 %v1734
  %v1754 = vpop.xlane.xlu0 %1753
  %1755 = vmax.xlane.f32.xlu0 %v1735
  %v1756 = vpop.xlane.xlu0 %1755
  %1757 = vmax.xlane.f32.xlu0 %v1736
  %v1758 = vpop.xlane.xlu0 %1757
  %1759 = vmax.xlane.f32.xlu0 %v1737
  %v1760 = vpop.xlane.xlu0 %1759
  %1761 = vmax.xlane.f32.xlu0 %v1738
  %v1762 = vpop.xlane.xlu0 %1761
  %1763 = vmax.xlane.f32.xlu0 %v1739
  %v1764 = vpop.xlane.xlu0 %1763
  %1765 = vmax.xlane.f32.xlu0 %v1740
  %v1766 = vpop.xlane.xlu0 %1765
  %1767 = vmax.xlane.f32.xlu0 %v1741
  %v1768 = vpop.xlane.xlu0 %1767
  %1769 = vmax.xlane.f32.xlu0 %v1742
  %v1770 = vpop.xlane.xlu0 %1769
  %1771 = vmax.xlane.f32.xlu0 %v1743
  %v1772 = vpop.xlane.xlu0 %1771
  %1773 = vmax.xlane.f32.xlu0 %v1744
  %v1774 = vpop.xlane.xlu0 %1773
  %1775 = vmax.xlane.f32.xlu0 %v1745
  %v1776 = vpop.xlane.xlu0 %1775
  %1777 = vmax.xlane.f32.xlu0 %v1746
  %v1778 = vpop.xlane.xlu0 %1777
  %v1779 = vsub.f32 %v1731, %v1748
  %v1780 = vsub.f32 %v1732, %v1750
  %v1781 = vsub.f32 %v1733, %v1752
  %v1782 = vsub.f32 %v1734, %v1754
  %v1783 = vsub.f32 %v1735, %v1756
  %v1784 = vsub.f32 %v1736, %v1758
  %v1785 = vsub.f32 %v1737, %v1760
  %v1786 = vsub.f32 %v1738, %v1762
  %v1787 = vsub.f32 %v1739, %v1764
  %v1788 = vsub.f32 %v1740, %v1766
  %v1789 = vsub.f32 %v1741, %v1768
  %v1790 = vsub.f32 %v1742, %v1770
  %v1791 = vsub.f32 %v1743, %v1772
  %v1792 = vsub.f32 %v1744, %v1774
  %v1793 = vsub.f32 %v1745, %v1776
  %v1794 = vsub.f32 %v1746, %v1778
  %v1795 = vmul.f32 %v1779, 1.442695
  %v1796 = vpow.pop %v1795
  %v1797 = vmul.f32 %v1780, 1.442695
  %v1798 = vpow.pop %v1797
  %v1799 = vmul.f32 %v1781, 1.442695
  %v1800 = vpow.pop %v1799
  %v1801 = vmul.f32 %v1782, 1.442695
  %v1802 = vpow.pop %v1801
  %v1803 = vmul.f32 %v1783, 1.442695
  %v1804 = vpow.pop %v1803
  %v1805 = vmul.f32 %v1784, 1.442695
  %v1806 = vpow.pop %v1805
  %v1807 = vmul.f32 %v1785, 1.442695
  %v1808 = vpow.pop %v1807
  %v1809 = vmul.f32 %v1786, 1.442695
  %v1810 = vpow.pop %v1809
  %v1811 = vmul.f32 %v1787, 1.442695
  %v1812 = vpow.pop %v1811
  %v1813 = vmul.f32 %v1788, 1.442695
  %v1814 = vpow.pop %v1813
  %v1815 = vmul.f32 %v1789, 1.442695
  %v1816 = vpow.pop %v1815
  %v1817 = vmul.f32 %v1790, 1.442695
  %v1818 = vpow.pop %v1817
  %v1819 = vmul.f32 %v1791, 1.442695
  %v1820 = vpow.pop %v1819
  %v1821 = vmul.f32 %v1792, 1.442695
  %v1822 = vpow.pop %v1821
  %v1823 = vmul.f32 %v1793, 1.442695
  %v1824 = vpow.pop %v1823
  %v1825 = vmul.f32 %v1794, 1.442695
  %v1826 = vpow.pop %v1825
  %1827 = vadd.xlane.f32.xlu0 %v1796
  %v1828 = vpop.xlane.xlu0 %1827
  %1829 = vadd.xlane.f32.xlu0 %v1798
  %v1830 = vpop.xlane.xlu0 %1829
  %1831 = vadd.xlane.f32.xlu0 %v1800
  %v1832 = vpop.xlane.xlu0 %1831
  %1833 = vadd.xlane.f32.xlu0 %v1802
  %v1834 = vpop.xlane.xlu0 %1833
  %1835 = vadd.xlane.f32.xlu0 %v1804
  %v1836 = vpop.xlane.xlu0 %1835
  %1837 = vadd.xlane.f32.xlu0 %v1806
  %v1838 = vpop.xlane.xlu0 %1837
  %1839 = vadd.xlane.f32.xlu0 %v1808
  %v1840 = vpop.xlane.xlu0 %1839
  %1841 = vadd.xlane.f32.xlu0 %v1810
  %v1842 = vpop.xlane.xlu0 %1841
  %1843 = vadd.xlane.f32.xlu0 %v1812
  %v1844 = vpop.xlane.xlu0 %1843
  %1845 = vadd.xlane.f32.xlu0 %v1814
  %v1846 = vpop.xlane.xlu0 %1845
  %1847 = vadd.xlane.f32.xlu0 %v1816
  %v1848 = vpop.xlane.xlu0 %1847
  %1849 = vadd.xlane.f32.xlu0 %v1818
  %v1850 = vpop.xlane.xlu0 %1849
  %1851 = vadd.xlane.f32.xlu0 %v1820
  %v1852 = vpop.xlane.xlu0 %1851
  %1853 = vadd.xlane.f32.xlu0 %v1822
  %v1854 = vpop.xlane.xlu0 %1853
  %1855 = vadd.xlane.f32.xlu0 %v1824
  %v1856 = vpop.xlane.xlu0 %1855
  %1857 = vadd.xlane.f32.xlu0 %v1826
  %v1858 = vpop.xlane.xlu0 %1857
  %v1859 = vrcp.pop %v1828
  %v1860 = vrcp.pop %v1830
  %v1861 = vrcp.pop %v1832
  %v1862 = vrcp.pop %v1834
  %v1863 = vrcp.pop %v1836
  %v1864 = vrcp.pop %v1838
  %v1865 = vrcp.pop %v1840
  %v1866 = vrcp.pop %v1842
  %v1867 = vrcp.pop %v1844
  %v1868 = vrcp.pop %v1846
  %v1869 = vrcp.pop %v1848
  %v1870 = vrcp.pop %v1850
  %v1871 = vrcp.pop %v1852
  %v1872 = vrcp.pop %v1854
  %v1873 = vrcp.pop %v1856
  %v1874 = vrcp.pop %v1858
  %v1875 = vmul.f32 %v1796, %v1859
  %v1876 = vmul.f32 %v1798, %v1860
  %v1877 = vmul.f32 %v1800, %v1861
  %v1878 = vmul.f32 %v1802, %v1862
  %v1879 = vmul.f32 %v1804, %v1863
  %v1880 = vmul.f32 %v1806, %v1864
  %v1881 = vmul.f32 %v1808, %v1865
  %v1882 = vmul.f32 %v1810, %v1866
  %v1883 = vmul.f32 %v1812, %v1867
  %v1884 = vmul.f32 %v1814, %v1868
  %v1885 = vmul.f32 %v1816, %v1869
  %v1886 = vmul.f32 %v1818, %v1870
  %v1887 = vmul.f32 %v1820, %v1871
  %v1888 = vmul.f32 %v1822, %v1872
  %v1889 = vmul.f32 %v1824, %v1873
  %v1890 = vmul.f32 %v1826, %v1874
  %v1891 = vpack.c.bf16 %v1876, %v1875
  %v1892 = vpack.c.bf16 %v1878, %v1877
  %v1893 = vpack.c.bf16 %v1880, %v1879
  %v1894 = vpack.c.bf16 %v1882, %v1881
  %v1895 = vpack.c.bf16 %v1884, %v1883
  %v1896 = vpack.c.bf16 %v1886, %v1885
  %v1897 = vpack.c.bf16 %v1888, %v1887
  %v1898 = vpack.c.bf16 %v1890, %v1889
  %1899 = vmatpush.bf16.msra.mxu0 %v1528
  %1900 = vmatpush.bf16.msra.mxu0 %v1526
  %1901 = vmatpush.bf16.msra.mxu0 %v1524
  %1902 = vmatpush.bf16.msra.mxu0 %v1522
  %1903 = vmatpush.bf16.msra.mxu0 %v1520
  %1904 = vmatpush.bf16.msra.mxu0 %v1518
  %1905 = vmatpush.bf16.msra.mxu0 %v1516
  %1906 = vmatpush.bf16.msra.mxu0 %v1514
  %1907 = vmatmul.bf16.gmra.mxu0 %v1891
  %v1908 = vpop.f32.mrf.mxu0
  %v1909 = vadd.f32 0.0, %v1908
  %v1910 = vpop.f32.mrf.mxu0
  %v1911 = vadd.f32 0.0, %v1910
  %1912 = vmatmul.bf16.gmra.mxu0 %v1892
  %v1913 = vpop.f32.mrf.mxu0
  %v1914 = vadd.f32 0.0, %v1913
  %v1915 = vpop.f32.mrf.mxu0
  %v1916 = vadd.f32 0.0, %v1915
  %1917 = vmatmul.bf16.gmra.mxu0 %v1893
  %v1918 = vpop.f32.mrf.mxu0
  %v1919 = vadd.f32 0.0, %v1918
  %v1920 = vpop.f32.mrf.mxu0
  %v1921 = vadd.f32 0.0, %v1920
  %1922 = vmatmul.bf16.gmra.mxu0 %v1894
  %v1923 = vpop.f32.mrf.mxu0
  %v1924 = vadd.f32 0.0, %v1923
  %v1925 = vpop.f32.mrf.mxu0
  %v1926 = vadd.f32 0.0, %v1925
  %1927 = vmatmul.bf16.gmra.mxu0 %v1895
  %v1928 = vpop.f32.mrf.mxu0
  %v1929 = vadd.f32 0.0, %v1928
  %v1930 = vpop.f32.mrf.mxu0
  %v1931 = vadd.f32 0.0, %v1930
  %1932 = vmatmul.bf16.gmra.mxu0 %v1896
  %v1933 = vpop.f32.mrf.mxu0
  %v1934 = vadd.f32 0.0, %v1933
  %v1935 = vpop.f32.mrf.mxu0
  %v1936 = vadd.f32 0.0, %v1935
  %1937 = vmatmul.bf16.gmra.mxu0 %v1897
  %v1938 = vpop.f32.mrf.mxu0
  %v1939 = vadd.f32 0.0, %v1938
  %v1940 = vpop.f32.mrf.mxu0
  %v1941 = vadd.f32 0.0, %v1940
  %1942 = vmatmul.bf16.gmra.mxu0 %v1898
  %v1943 = vpop.f32.mrf.mxu0
  %v1944 = vadd.f32 0.0, %v1943
  %v1945 = vpop.f32.mrf.mxu0
  %v1946 = vadd.f32 0.0, %v1945
  %1947 = vdwg.mxu0
  %v1948 = vmul.f32 %v1047, %v1909
  %v1949 = vmul.f32 %v1047, %v1911
  %v1950 = vmul.f32 %v1047, %v1914
  %v1951 = vmul.f32 %v1047, %v1916
  %v1952 = vmul.f32 %v1047, %v1919
  %v1953 = vmul.f32 %v1047, %v1921
  %v1954 = vmul.f32 %v1047, %v1924
  %v1955 = vmul.f32 %v1047, %v1926
  %v1956 = vmul.f32 %v1047, %v1929
  %v1957 = vmul.f32 %v1047, %v1931
  %v1958 = vmul.f32 %v1047, %v1934
  %v1959 = vmul.f32 %v1047, %v1936
  %v1960 = vmul.f32 %v1047, %v1939
  %v1961 = vmul.f32 %v1047, %v1941
  %v1962 = vmul.f32 %v1047, %v1944
  %v1963 = vmul.f32 %v1047, %v1946
  %v1964 = vadd.f32 %v1602, %v1948
  %v1965 = vadd.f32 %v1603, %v1949
  %v1966 = vadd.f32 %v1604, %v1950
  %v1967 = vadd.f32 %v1605, %v1951
  %v1968 = vadd.f32 %v1606, %v1952
  %v1969 = vadd.f32 %v1607, %v1953
  %v1970 = vadd.f32 %v1608, %v1954
  %v1971 = vadd.f32 %v1609, %v1955
  %v1972 = vadd.f32 %v1610, %v1956
  %v1973 = vadd.f32 %v1611, %v1957
  %v1974 = vadd.f32 %v1612, %v1958
  %v1975 = vadd.f32 %v1613, %v1959
  %v1976 = vadd.f32 %v1614, %v1960
  %v1977 = vadd.f32 %v1615, %v1961
  %v1978 = vadd.f32 %v1616, %v1962
  %v1979 = vadd.f32 %v1617, %v1963
  %v1980 = vmul.f32 %v1137, %v1052
  %v1981 = vmul.f32 %v1139, %v1052
  %v1982 = vmul.f32 %v1142, %v1052
  %v1983 = vmul.f32 %v1144, %v1052
  %v1984 = vmul.f32 %v1147, %v1052
  %v1985 = vmul.f32 %v1149, %v1052
  %v1986 = vmul.f32 %v1152, %v1052
  %v1987 = vmul.f32 %v1154, %v1052
  %v1988 = vmul.f32 %v1157, %v1052
  %v1989 = vmul.f32 %v1159, %v1052
  %v1990 = vmul.f32 %v1162, %v1052
  %v1991 = vmul.f32 %v1164, %v1052
  %v1992 = vmul.f32 %v1167, %v1052
  %v1993 = vmul.f32 %v1169, %v1052
  %v1994 = vmul.f32 %v1172, %v1052
  %v1995 = vmul.f32 %v1174, %v1052
  %v1996 = vpack.c.bf16 %v1981, %v1980
  %v1997 = vpack.c.bf16 %v1983, %v1982
  %v1998 = vpack.c.bf16 %v1985, %v1984
  %v1999 = vpack.c.bf16 %v1987, %v1986
  %v2000 = vpack.c.bf16 %v1989, %v1988
  %v2001 = vpack.c.bf16 %v1991, %v1990
  %v2002 = vpack.c.bf16 %v1993, %v1992
  %v2003 = vpack.c.bf16 %v1995, %v1994
  %v2005 = vsel %vm1102, %v1996, 0
  %v2008 = vsel %vm1102, %v1997, 0
  %v2011 = vsel %vm1102, %v1998, 0
  %v2014 = vsel %vm1102, %v1999, 0
  %v2017 = vsel %vm1102, %v2000, 0
  %v2020 = vsel %vm1102, %v2001, 0
  %v2023 = vsel %vm1102, %v2002, 0
  %v2026 = vsel %vm1102, %v2003, 0
  %2028 = vmatpush.bf16.xpose.msra.mxu0 %v1278
  %2029 = vmatpush.bf16.xpose.msra.mxu0 %v1275
  %2030 = vmatpush.bf16.xpose.msra.mxu0 %v1272
  %2031 = vmatpush.bf16.xpose.msra.mxu0 %v1269
  %2032 = vmatpush.bf16.xpose.msra.mxu0 %v1266
  %2033 = vmatpush.bf16.xpose.msra.mxu0 %v1263
  %2034 = vmatpush.bf16.xpose.msra.mxu0 %v1260
  %2035 = vmatpush.bf16.xpose.msra.mxu0 %v1257
  %2036 = vmatmul.bf16.gmra.mxu0 %v2005
  %v2037 = vpop.f32.mrf.mxu0
  %v2038 = vadd.f32 0.0, %v2037
  %v2039 = vpop.f32.mrf.mxu0
  %v2040 = vadd.f32 0.0, %v2039
  %2041 = vmatmul.bf16.gmra.mxu0 %v2008
  %v2042 = vpop.f32.mrf.mxu0
  %v2043 = vadd.f32 0.0, %v2042
  %v2044 = vpop.f32.mrf.mxu0
  %v2045 = vadd.f32 0.0, %v2044
  %2046 = vmatmul.bf16.gmra.mxu0 %v2011
  %v2047 = vpop.f32.mrf.mxu0
  %v2048 = vadd.f32 0.0, %v2047
  %v2049 = vpop.f32.mrf.mxu0
  %v2050 = vadd.f32 0.0, %v2049
  %2051 = vmatmul.bf16.gmra.mxu0 %v2014
  %v2052 = vpop.f32.mrf.mxu0
  %v2053 = vadd.f32 0.0, %v2052
  %v2054 = vpop.f32.mrf.mxu0
  %v2055 = vadd.f32 0.0, %v2054
  %2056 = vmatmul.bf16.gmra.mxu0 %v2017
  %v2057 = vpop.f32.mrf.mxu0
  %v2058 = vadd.f32 0.0, %v2057
  %v2059 = vpop.f32.mrf.mxu0
  %v2060 = vadd.f32 0.0, %v2059
  %2061 = vmatmul.bf16.gmra.mxu0 %v2020
  %v2062 = vpop.f32.mrf.mxu0
  %v2063 = vadd.f32 0.0, %v2062
  %v2064 = vpop.f32.mrf.mxu0
  %v2065 = vadd.f32 0.0, %v2064
  %2066 = vmatmul.bf16.gmra.mxu0 %v2023
  %v2067 = vpop.f32.mrf.mxu0
  %v2068 = vadd.f32 0.0, %v2067
  %v2069 = vpop.f32.mrf.mxu0
  %v2070 = vadd.f32 0.0, %v2069
  %2071 = vmatmul.bf16.gmra.mxu0 %v2026
  %v2072 = vpop.f32.mrf.mxu0
  %v2073 = vadd.f32 0.0, %v2072
  %v2074 = vpop.f32.mrf.mxu0
  %v2075 = vadd.f32 0.0, %v2074
  %2076 = vdwg.mxu0
  %v2077 = vmul.f32 %v2038, 0.35355338
  %v2078 = vmul.f32 %v2040, 0.35355338
  %v2079 = vmul.f32 %v2043, 0.35355338
  %v2080 = vmul.f32 %v2045, 0.35355338
  %v2081 = vmul.f32 %v2048, 0.35355338
  %v2082 = vmul.f32 %v2050, 0.35355338
  %v2083 = vmul.f32 %v2053, 0.35355338
  %v2084 = vmul.f32 %v2055, 0.35355338
  %v2085 = vmul.f32 %v2058, 0.35355338
  %v2086 = vmul.f32 %v2060, 0.35355338
  %v2087 = vmul.f32 %v2063, 0.35355338
  %v2088 = vmul.f32 %v2065, 0.35355338
  %v2089 = vmul.f32 %v2068, 0.35355338
  %v2090 = vmul.f32 %v2070, 0.35355338
  %v2091 = vmul.f32 %v2073, 0.35355338
  %v2092 = vmul.f32 %v2075, 0.35355338
  %v2093 = vadd.f32 %v2077, %v1058
  %v2094 = vadd.f32 %v2078, %v1059
  %v2095 = vadd.f32 %v2079, %v1060
  %v2096 = vadd.f32 %v2080, %v1061
  %v2097 = vadd.f32 %v2081, %v1062
  %v2098 = vadd.f32 %v2082, %v1063
  %v2099 = vadd.f32 %v2083, %v1064
  %v2100 = vadd.f32 %v2084, %v1065
  %v2101 = vadd.f32 %v2085, %v1066
  %v2102 = vadd.f32 %v2086, %v1067
  %v2103 = vadd.f32 %v2087, %v1068
  %v2104 = vadd.f32 %v2088, %v1069
  %v2105 = vadd.f32 %v2089, %v1070
  %v2106 = vadd.f32 %v2090, %v1071
  %v2107 = vadd.f32 %v2091, %v1072
  %v2108 = vadd.f32 %v2092, %v1073
  %2109 = vmax.xlane.f32.xlu0 %v2093
  %v2110 = vpop.xlane.xlu0 %2109
  %2111 = vmax.xlane.f32.xlu0 %v2094
  %v2112 = vpop.xlane.xlu0 %2111
  %2113 = vmax.xlane.f32.xlu0 %v2095
  %v2114 = vpop.xlane.xlu0 %2113
  %2115 = vmax.xlane.f32.xlu0 %v2096
  %v2116 = vpop.xlane.xlu0 %2115
  %2117 = vmax.xlane.f32.xlu0 %v2097
  %v2118 = vpop.xlane.xlu0 %2117
  %2119 = vmax.xlane.f32.xlu0 %v2098
  %v2120 = vpop.xlane.xlu0 %2119
  %2121 = vmax.xlane.f32.xlu0 %v2099
  %v2122 = vpop.xlane.xlu0 %2121
  %2123 = vmax.xlane.f32.xlu0 %v2100
  %v2124 = vpop.xlane.xlu0 %2123
  %2125 = vmax.xlane.f32.xlu0 %v2101
  %v2126 = vpop.xlane.xlu0 %2125
  %2127 = vmax.xlane.f32.xlu0 %v2102
  %v2128 = vpop.xlane.xlu0 %2127
  %2129 = vmax.xlane.f32.xlu0 %v2103
  %v2130 = vpop.xlane.xlu0 %2129
  %2131 = vmax.xlane.f32.xlu0 %v2104
  %v2132 = vpop.xlane.xlu0 %2131
  %2133 = vmax.xlane.f32.xlu0 %v2105
  %v2134 = vpop.xlane.xlu0 %2133
  %2135 = vmax.xlane.f32.xlu0 %v2106
  %v2136 = vpop.xlane.xlu0 %2135
  %2137 = vmax.xlane.f32.xlu0 %v2107
  %v2138 = vpop.xlane.xlu0 %2137
  %2139 = vmax.xlane.f32.xlu0 %v2108
  %v2140 = vpop.xlane.xlu0 %2139
  %v2141 = vsub.f32 %v2093, %v2110
  %v2142 = vsub.f32 %v2094, %v2112
  %v2143 = vsub.f32 %v2095, %v2114
  %v2144 = vsub.f32 %v2096, %v2116
  %v2145 = vsub.f32 %v2097, %v2118
  %v2146 = vsub.f32 %v2098, %v2120
  %v2147 = vsub.f32 %v2099, %v2122
  %v2148 = vsub.f32 %v2100, %v2124
  %v2149 = vsub.f32 %v2101, %v2126
  %v2150 = vsub.f32 %v2102, %v2128
  %v2151 = vsub.f32 %v2103, %v2130
  %v2152 = vsub.f32 %v2104, %v2132
  %v2153 = vsub.f32 %v2105, %v2134
  %v2154 = vsub.f32 %v2106, %v2136
  %v2155 = vsub.f32 %v2107, %v2138
  %v2156 = vsub.f32 %v2108, %v2140
  %v2157 = vmul.f32 %v2141, 1.442695
  %v2158 = vpow.pop %v2157
  %v2159 = vmul.f32 %v2142, 1.442695
  %v2160 = vpow.pop %v2159
  %v2161 = vmul.f32 %v2143, 1.442695
  %v2162 = vpow.pop %v2161
  %v2163 = vmul.f32 %v2144, 1.442695
  %v2164 = vpow.pop %v2163
  %v2165 = vmul.f32 %v2145, 1.442695
  %v2166 = vpow.pop %v2165
  %v2167 = vmul.f32 %v2146, 1.442695
  %v2168 = vpow.pop %v2167
  %v2169 = vmul.f32 %v2147, 1.442695
  %v2170 = vpow.pop %v2169
  %v2171 = vmul.f32 %v2148, 1.442695
  %v2172 = vpow.pop %v2171
  %v2173 = vmul.f32 %v2149, 1.442695
  %v2174 = vpow.pop %v2173
  %v2175 = vmul.f32 %v2150, 1.442695
  %v2176 = vpow.pop %v2175
  %v2177 = vmul.f32 %v2151, 1.442695
  %v2178 = vpow.pop %v2177
  %v2179 = vmul.f32 %v2152, 1.442695
  %v2180 = vpow.pop %v2179
  %v2181 = vmul.f32 %v2153, 1.442695
  %v2182 = vpow.pop %v2181
  %v2183 = vmul.f32 %v2154, 1.442695
  %v2184 = vpow.pop %v2183
  %v2185 = vmul.f32 %v2155, 1.442695
  %v2186 = vpow.pop %v2185
  %v2187 = vmul.f32 %v2156, 1.442695
  %v2188 = vpow.pop %v2187
  %2189 = vadd.xlane.f32.xlu0 %v2158
  %v2190 = vpop.xlane.xlu0 %2189
  %2191 = vadd.xlane.f32.xlu0 %v2160
  %v2192 = vpop.xlane.xlu0 %2191
  %2193 = vadd.xlane.f32.xlu0 %v2162
  %v2194 = vpop.xlane.xlu0 %2193
  %2195 = vadd.xlane.f32.xlu0 %v2164
  %v2196 = vpop.xlane.xlu0 %2195
  %2197 = vadd.xlane.f32.xlu0 %v2166
  %v2198 = vpop.xlane.xlu0 %2197
  %2199 = vadd.xlane.f32.xlu0 %v2168
  %v2200 = vpop.xlane.xlu0 %2199
  %2201 = vadd.xlane.f32.xlu0 %v2170
  %v2202 = vpop.xlane.xlu0 %2201
  %2203 = vadd.xlane.f32.xlu0 %v2172
  %v2204 = vpop.xlane.xlu0 %2203
  %2205 = vadd.xlane.f32.xlu0 %v2174
  %v2206 = vpop.xlane.xlu0 %2205
  %2207 = vadd.xlane.f32.xlu0 %v2176
  %v2208 = vpop.xlane.xlu0 %2207
  %2209 = vadd.xlane.f32.xlu0 %v2178
  %v2210 = vpop.xlane.xlu0 %2209
  %2211 = vadd.xlane.f32.xlu0 %v2180
  %v2212 = vpop.xlane.xlu0 %2211
  %2213 = vadd.xlane.f32.xlu0 %v2182
  %v2214 = vpop.xlane.xlu0 %2213
  %2215 = vadd.xlane.f32.xlu0 %v2184
  %v2216 = vpop.xlane.xlu0 %2215
  %2217 = vadd.xlane.f32.xlu0 %v2186
  %v2218 = vpop.xlane.xlu0 %2217
  %2219 = vadd.xlane.f32.xlu0 %v2188
  %v2220 = vpop.xlane.xlu0 %2219
  %v2221 = vrcp.pop %v2190
  %v2222 = vrcp.pop %v2192
  %v2223 = vrcp.pop %v2194
  %v2224 = vrcp.pop %v2196
  %v2225 = vrcp.pop %v2198
  %v2226 = vrcp.pop %v2200
  %v2227 = vrcp.pop %v2202
  %v2228 = vrcp.pop %v2204
  %v2229 = vrcp.pop %v2206
  %v2230 = vrcp.pop %v2208
  %v2231 = vrcp.pop %v2210
  %v2232 = vrcp.pop %v2212
  %v2233 = vrcp.pop %v2214
  %v2234 = vrcp.pop %v2216
  %v2235 = vrcp.pop %v2218
  %v2236 = vrcp.pop %v2220
  %v2237 = vmul.f32 %v2158, %v2221
  %v2238 = vmul.f32 %v2160, %v2222
  %v2239 = vmul.f32 %v2162, %v2223
  %v2240 = vmul.f32 %v2164, %v2224
  %v2241 = vmul.f32 %v2166, %v2225
  %v2242 = vmul.f32 %v2168, %v2226
  %v2243 = vmul.f32 %v2170, %v2227
  %v2244 = vmul.f32 %v2172, %v2228
  %v2245 = vmul.f32 %v2174, %v2229
  %v2246 = vmul.f32 %v2176, %v2230
  %v2247 = vmul.f32 %v2178, %v2231
  %v2248 = vmul.f32 %v2180, %v2232
  %v2249 = vmul.f32 %v2182, %v2233
  %v2250 = vmul.f32 %v2184, %v2234
  %v2251 = vmul.f32 %v2186, %v2235
  %v2252 = vmul.f32 %v2188, %v2236
  %v2253 = vpack.c.bf16 %v2238, %v2237
  %v2254 = vpack.c.bf16 %v2240, %v2239
  %v2255 = vpack.c.bf16 %v2242, %v2241
  %v2256 = vpack.c.bf16 %v2244, %v2243
  %v2257 = vpack.c.bf16 %v2246, %v2245
  %v2258 = vpack.c.bf16 %v2248, %v2247
  %v2259 = vpack.c.bf16 %v2250, %v2249
  %v2260 = vpack.c.bf16 %v2252, %v2251
  %2261 = vmatpush.bf16.msra.mxu0 %v1528
  %2262 = vmatpush.bf16.msra.mxu0 %v1526
  %2263 = vmatpush.bf16.msra.mxu0 %v1524
  %2264 = vmatpush.bf16.msra.mxu0 %v1522
  %2265 = vmatpush.bf16.msra.mxu0 %v1520
  %2266 = vmatpush.bf16.msra.mxu0 %v1518
  %2267 = vmatpush.bf16.msra.mxu0 %v1516
  %2268 = vmatpush.bf16.msra.mxu0 %v1514
  %2269 = vmatmul.bf16.gmra.mxu0 %v2253
  %v2270 = vpop.f32.mrf.mxu0
  %v2271 = vadd.f32 0.0, %v2270
  %v2272 = vpop.f32.mrf.mxu0
  %v2273 = vadd.f32 0.0, %v2272
  %2274 = vmatmul.bf16.gmra.mxu0 %v2254
  %v2275 = vpop.f32.mrf.mxu0
  %v2276 = vadd.f32 0.0, %v2275
  %v2277 = vpop.f32.mrf.mxu0
  %v2278 = vadd.f32 0.0, %v2277
  %2279 = vmatmul.bf16.gmra.mxu0 %v2255
  %v2280 = vpop.f32.mrf.mxu0
  %v2281 = vadd.f32 0.0, %v2280
  %v2282 = vpop.f32.mrf.mxu0
  %v2283 = vadd.f32 0.0, %v2282
  %2284 = vmatmul.bf16.gmra.mxu0 %v2256
  %v2285 = vpop.f32.mrf.mxu0
  %v2286 = vadd.f32 0.0, %v2285
  %v2287 = vpop.f32.mrf.mxu0
  %v2288 = vadd.f32 0.0, %v2287
  %2289 = vmatmul.bf16.gmra.mxu0 %v2257
  %v2290 = vpop.f32.mrf.mxu0
  %v2291 = vadd.f32 0.0, %v2290
  %v2292 = vpop.f32.mrf.mxu0
  %v2293 = vadd.f32 0.0, %v2292
  %2294 = vmatmul.bf16.gmra.mxu0 %v2258
  %v2295 = vpop.f32.mrf.mxu0
  %v2296 = vadd.f32 0.0, %v2295
  %v2297 = vpop.f32.mrf.mxu0
  %v2298 = vadd.f32 0.0, %v2297
  %2299 = vmatmul.bf16.gmra.mxu0 %v2259
  %v2300 = vpop.f32.mrf.mxu0
  %v2301 = vadd.f32 0.0, %v2300
  %v2302 = vpop.f32.mrf.mxu0
  %v2303 = vadd.f32 0.0, %v2302
  %2304 = vmatmul.bf16.gmra.mxu0 %v2260
  %v2305 = vpop.f32.mrf.mxu0
  %v2306 = vadd.f32 0.0, %v2305
  %v2307 = vpop.f32.mrf.mxu0
  %v2308 = vadd.f32 0.0, %v2307
  %2309 = vdwg.mxu0
  %v2310 = vmul.f32 %v1052, %v2271
  %v2311 = vmul.f32 %v1052, %v2273
  %v2312 = vmul.f32 %v1052, %v2276
  %v2313 = vmul.f32 %v1052, %v2278
  %v2314 = vmul.f32 %v1052, %v2281
  %v2315 = vmul.f32 %v1052, %v2283
  %v2316 = vmul.f32 %v1052, %v2286
  %v2317 = vmul.f32 %v1052, %v2288
  %v2318 = vmul.f32 %v1052, %v2291
  %v2319 = vmul.f32 %v1052, %v2293
  %v2320 = vmul.f32 %v1052, %v2296
  %v2321 = vmul.f32 %v1052, %v2298
  %v2322 = vmul.f32 %v1052, %v2301
  %v2323 = vmul.f32 %v1052, %v2303
  %v2324 = vmul.f32 %v1052, %v2306
  %v2325 = vmul.f32 %v1052, %v2308
  %v2326 = vadd.f32 %v1964, %v2310
  %v2327 = vadd.f32 %v1965, %v2311
  %v2328 = vadd.f32 %v1966, %v2312
  %v2329 = vadd.f32 %v1967, %v2313
  %v2330 = vadd.f32 %v1968, %v2314
  %v2331 = vadd.f32 %v1969, %v2315
  %v2332 = vadd.f32 %v1970, %v2316
  %v2333 = vadd.f32 %v1971, %v2317
  %v2334 = vadd.f32 %v1972, %v2318
  %v2335 = vadd.f32 %v1973, %v2319
  %v2336 = vadd.f32 %v1974, %v2320
  %v2337 = vadd.f32 %v1975, %v2321
  %v2338 = vadd.f32 %v1976, %v2322
  %v2339 = vadd.f32 %v1977, %v2323
  %v2340 = vadd.f32 %v1978, %v2324
  %v2341 = vadd.f32 %v1979, %v2325
  %v2342 = vmul.f32 %v1137, %v1057
  %v2343 = vmul.f32 %v1139, %v1057
  %v2344 = vmul.f32 %v1142, %v1057
  %v2345 = vmul.f32 %v1144, %v1057
  %v2346 = vmul.f32 %v1147, %v1057
  %v2347 = vmul.f32 %v1149, %v1057
  %v2348 = vmul.f32 %v1152, %v1057
  %v2349 = vmul.f32 %v1154, %v1057
  %v2350 = vmul.f32 %v1157, %v1057
  %v2351 = vmul.f32 %v1159, %v1057
  %v2352 = vmul.f32 %v1162, %v1057
  %v2353 = vmul.f32 %v1164, %v1057
  %v2354 = vmul.f32 %v1167, %v1057
  %v2355 = vmul.f32 %v1169, %v1057
  %v2356 = vmul.f32 %v1172, %v1057
  %v2357 = vmul.f32 %v1174, %v1057
  %v2358 = vpack.c.bf16 %v2343, %v2342
  %v2359 = vpack.c.bf16 %v2345, %v2344
  %v2360 = vpack.c.bf16 %v2347, %v2346
  %v2361 = vpack.c.bf16 %v2349, %v2348
  %v2362 = vpack.c.bf16 %v2351, %v2350
  %v2363 = vpack.c.bf16 %v2353, %v2352
  %v2364 = vpack.c.bf16 %v2355, %v2354
  %v2365 = vpack.c.bf16 %v2357, %v2356
  %v2367 = vsel %vm1102, %v2358, 0
  %v2370 = vsel %vm1102, %v2359, 0
  %v2373 = vsel %vm1102, %v2360, 0
  %v2376 = vsel %vm1102, %v2361, 0
  %v2379 = vsel %vm1102, %v2362, 0
  %v2382 = vsel %vm1102, %v2363, 0
  %v2385 = vsel %vm1102, %v2364, 0
  %v2388 = vsel %vm1102, %v2365, 0
  %2390 = vmatpush.bf16.xpose.msra.mxu0 %v1278
  %2391 = vmatpush.bf16.xpose.msra.mxu0 %v1275
  %2392 = vmatpush.bf16.xpose.msra.mxu0 %v1272
  %2393 = vmatpush.bf16.xpose.msra.mxu0 %v1269
  %2394 = vmatpush.bf16.xpose.msra.mxu0 %v1266
  %2395 = vmatpush.bf16.xpose.msra.mxu0 %v1263
  %2396 = vmatpush.bf16.xpose.msra.mxu0 %v1260
  %2397 = vmatpush.bf16.xpose.msra.mxu0 %v1257
  %2398 = vmatmul.bf16.gmra.mxu0 %v2367
  %v2399 = vpop.f32.mrf.mxu0
  %v2400 = vadd.f32 0.0, %v2399
  %v2401 = vpop.f32.mrf.mxu0
  %v2402 = vadd.f32 0.0, %v2401
  %2403 = vmatmul.bf16.gmra.mxu0 %v2370
  %v2404 = vpop.f32.mrf.mxu0
  %v2405 = vadd.f32 0.0, %v2404
  %v2406 = vpop.f32.mrf.mxu0
  %v2407 = vadd.f32 0.0, %v2406
  %2408 = vmatmul.bf16.gmra.mxu0 %v2373
  %v2409 = vpop.f32.mrf.mxu0
  %v2410 = vadd.f32 0.0, %v2409
  %v2411 = vpop.f32.mrf.mxu0
  %v2412 = vadd.f32 0.0, %v2411
  %2413 = vmatmul.bf16.gmra.mxu0 %v2376
  %v2414 = vpop.f32.mrf.mxu0
  %v2415 = vadd.f32 0.0, %v2414
  %v2416 = vpop.f32.mrf.mxu0
  %v2417 = vadd.f32 0.0, %v2416
  %2418 = vmatmul.bf16.gmra.mxu0 %v2379
  %v2419 = vpop.f32.mrf.mxu0
  %v2420 = vadd.f32 0.0, %v2419
  %v2421 = vpop.f32.mrf.mxu0
  %v2422 = vadd.f32 0.0, %v2421
  %2423 = vmatmul.bf16.gmra.mxu0 %v2382
  %v2424 = vpop.f32.mrf.mxu0
  %v2425 = vadd.f32 0.0, %v2424
  %v2426 = vpop.f32.mrf.mxu0
  %v2427 = vadd.f32 0.0, %v2426
  %2428 = vmatmul.bf16.gmra.mxu0 %v2385
  %v2429 = vpop.f32.mrf.mxu0
  %v2430 = vadd.f32 0.0, %v2429
  %v2431 = vpop.f32.mrf.mxu0
  %v2432 = vadd.f32 0.0, %v2431
  %2433 = vmatmul.bf16.gmra.mxu0 %v2388
  %v2434 = vpop.f32.mrf.mxu0
  %v2435 = vadd.f32 0.0, %v2434
  %v2436 = vpop.f32.mrf.mxu0
  %v2437 = vadd.f32 0.0, %v2436
  %2438 = vdwg.mxu0
  %v2439 = vmul.f32 %v2400, 0.35355338
  %v2440 = vmul.f32 %v2402, 0.35355338
  %v2441 = vmul.f32 %v2405, 0.35355338
  %v2442 = vmul.f32 %v2407, 0.35355338
  %v2443 = vmul.f32 %v2410, 0.35355338
  %v2444 = vmul.f32 %v2412, 0.35355338
  %v2445 = vmul.f32 %v2415, 0.35355338
  %v2446 = vmul.f32 %v2417, 0.35355338
  %v2447 = vmul.f32 %v2420, 0.35355338
  %v2448 = vmul.f32 %v2422, 0.35355338
  %v2449 = vmul.f32 %v2425, 0.35355338
  %v2450 = vmul.f32 %v2427, 0.35355338
  %v2451 = vmul.f32 %v2430, 0.35355338
  %v2452 = vmul.f32 %v2432, 0.35355338
  %v2453 = vmul.f32 %v2435, 0.35355338
  %v2454 = vmul.f32 %v2437, 0.35355338
  %v2455 = vadd.f32 %v2439, %v1058
  %v2456 = vadd.f32 %v2440, %v1059
  %v2457 = vadd.f32 %v2441, %v1060
  %v2458 = vadd.f32 %v2442, %v1061
  %v2459 = vadd.f32 %v2443, %v1062
  %v2460 = vadd.f32 %v2444, %v1063
  %v2461 = vadd.f32 %v2445, %v1064
  %v2462 = vadd.f32 %v2446, %v1065
  %v2463 = vadd.f32 %v2447, %v1066
  %v2464 = vadd.f32 %v2448, %v1067
  %v2465 = vadd.f32 %v2449, %v1068
  %v2466 = vadd.f32 %v2450, %v1069
  %v2467 = vadd.f32 %v2451, %v1070
  %v2468 = vadd.f32 %v2452, %v1071
  %v2469 = vadd.f32 %v2453, %v1072
  %v2470 = vadd.f32 %v2454, %v1073
  %2471 = vmax.xlane.f32.xlu0 %v2455
  %v2472 = vpop.xlane.xlu0 %2471
  %2473 = vmax.xlane.f32.xlu0 %v2456
  %v2474 = vpop.xlane.xlu0 %2473
  %2475 = vmax.xlane.f32.xlu0 %v2457
  %v2476 = vpop.xlane.xlu0 %2475
  %2477 = vmax.xlane.f32.xlu0 %v2458
  %v2478 = vpop.xlane.xlu0 %2477
  %2479 = vmax.xlane.f32.xlu0 %v2459
  %v2480 = vpop.xlane.xlu0 %2479
  %2481 = vmax.xlane.f32.xlu0 %v2460
  %v2482 = vpop.xlane.xlu0 %2481
  %2483 = vmax.xlane.f32.xlu0 %v2461
  %v2484 = vpop.xlane.xlu0 %2483
  %2485 = vmax.xlane.f32.xlu0 %v2462
  %v2486 = vpop.xlane.xlu0 %2485
  %2487 = vmax.xlane.f32.xlu0 %v2463
  %v2488 = vpop.xlane.xlu0 %2487
  %2489 = vmax.xlane.f32.xlu0 %v2464
  %v2490 = vpop.xlane.xlu0 %2489
  %2491 = vmax.xlane.f32.xlu0 %v2465
  %v2492 = vpop.xlane.xlu0 %2491
  %2493 = vmax.xlane.f32.xlu0 %v2466
  %v2494 = vpop.xlane.xlu0 %2493
  %2495 = vmax.xlane.f32.xlu0 %v2467
  %v2496 = vpop.xlane.xlu0 %2495
  %2497 = vmax.xlane.f32.xlu0 %v2468
  %v2498 = vpop.xlane.xlu0 %2497
  %2499 = vmax.xlane.f32.xlu0 %v2469
  %v2500 = vpop.xlane.xlu0 %2499
  %2501 = vmax.xlane.f32.xlu0 %v2470
  %v2502 = vpop.xlane.xlu0 %2501
  %v2503 = vsub.f32 %v2455, %v2472
  %v2504 = vsub.f32 %v2456, %v2474
  %v2505 = vsub.f32 %v2457, %v2476
  %v2506 = vsub.f32 %v2458, %v2478
  %v2507 = vsub.f32 %v2459, %v2480
  %v2508 = vsub.f32 %v2460, %v2482
  %v2509 = vsub.f32 %v2461, %v2484
  %v2510 = vsub.f32 %v2462, %v2486
  %v2511 = vsub.f32 %v2463, %v2488
  %v2512 = vsub.f32 %v2464, %v2490
  %v2513 = vsub.f32 %v2465, %v2492
  %v2514 = vsub.f32 %v2466, %v2494
  %v2515 = vsub.f32 %v2467, %v2496
  %v2516 = vsub.f32 %v2468, %v2498
  %v2517 = vsub.f32 %v2469, %v2500
  %v2518 = vsub.f32 %v2470, %v2502
  %v2519 = vmul.f32 %v2503, 1.442695
  %v2520 = vpow.pop %v2519
  %v2521 = vmul.f32 %v2504, 1.442695
  %v2522 = vpow.pop %v2521
  %v2523 = vmul.f32 %v2505, 1.442695
  %v2524 = vpow.pop %v2523
  %v2525 = vmul.f32 %v2506, 1.442695
  %v2526 = vpow.pop %v2525
  %v2527 = vmul.f32 %v2507, 1.442695
  %v2528 = vpow.pop %v2527
  %v2529 = vmul.f32 %v2508, 1.442695
  %v2530 = vpow.pop %v2529
  %v2531 = vmul.f32 %v2509, 1.442695
  %v2532 = vpow.pop %v2531
  %v2533 = vmul.f32 %v2510, 1.442695
  %v2534 = vpow.pop %v2533
  %v2535 = vmul.f32 %v2511, 1.442695
  %v2536 = vpow.pop %v2535
  %v2537 = vmul.f32 %v2512, 1.442695
  %v2538 = vpow.pop %v2537
  %v2539 = vmul.f32 %v2513, 1.442695
  %v2540 = vpow.pop %v2539
  %v2541 = vmul.f32 %v2514, 1.442695
  %v2542 = vpow.pop %v2541
  %v2543 = vmul.f32 %v2515, 1.442695
  %v2544 = vpow.pop %v2543
  %v2545 = vmul.f32 %v2516, 1.442695
  %v2546 = vpow.pop %v2545
  %v2547 = vmul.f32 %v2517, 1.442695
  %v2548 = vpow.pop %v2547
  %v2549 = vmul.f32 %v2518, 1.442695
  %v2550 = vpow.pop %v2549
  %2551 = vadd.xlane.f32.xlu0 %v2520
  %v2552 = vpop.xlane.xlu0 %2551
  %2553 = vadd.xlane.f32.xlu0 %v2522
  %v2554 = vpop.xlane.xlu0 %2553
  %2555 = vadd.xlane.f32.xlu0 %v2524
  %v2556 = vpop.xlane.xlu0 %2555
  %2557 = vadd.xlane.f32.xlu0 %v2526
  %v2558 = vpop.xlane.xlu0 %2557
  %2559 = vadd.xlane.f32.xlu0 %v2528
  %v2560 = vpop.xlane.xlu0 %2559
  %2561 = vadd.xlane.f32.xlu0 %v2530
  %v2562 = vpop.xlane.xlu0 %2561
  %2563 = vadd.xlane.f32.xlu0 %v2532
  %v2564 = vpop.xlane.xlu0 %2563
  %2565 = vadd.xlane.f32.xlu0 %v2534
  %v2566 = vpop.xlane.xlu0 %2565
  %2567 = vadd.xlane.f32.xlu0 %v2536
  %v2568 = vpop.xlane.xlu0 %2567
  %2569 = vadd.xlane.f32.xlu0 %v2538
  %v2570 = vpop.xlane.xlu0 %2569
  %2571 = vadd.xlane.f32.xlu0 %v2540
  %v2572 = vpop.xlane.xlu0 %2571
  %2573 = vadd.xlane.f32.xlu0 %v2542
  %v2574 = vpop.xlane.xlu0 %2573
  %2575 = vadd.xlane.f32.xlu0 %v2544
  %v2576 = vpop.xlane.xlu0 %2575
  %2577 = vadd.xlane.f32.xlu0 %v2546
  %v2578 = vpop.xlane.xlu0 %2577
  %2579 = vadd.xlane.f32.xlu0 %v2548
  %v2580 = vpop.xlane.xlu0 %2579
  %2581 = vadd.xlane.f32.xlu0 %v2550
  %v2582 = vpop.xlane.xlu0 %2581
  %v2583 = vrcp.pop %v2552
  %v2584 = vrcp.pop %v2554
  %v2585 = vrcp.pop %v2556
  %v2586 = vrcp.pop %v2558
  %v2587 = vrcp.pop %v2560
  %v2588 = vrcp.pop %v2562
  %v2589 = vrcp.pop %v2564
  %v2590 = vrcp.pop %v2566
  %v2591 = vrcp.pop %v2568
  %v2592 = vrcp.pop %v2570
  %v2593 = vrcp.pop %v2572
  %v2594 = vrcp.pop %v2574
  %v2595 = vrcp.pop %v2576
  %v2596 = vrcp.pop %v2578
  %v2597 = vrcp.pop %v2580
  %v2598 = vrcp.pop %v2582
  %v2599 = vmul.f32 %v2520, %v2583
  %v2600 = vmul.f32 %v2522, %v2584
  %v2601 = vmul.f32 %v2524, %v2585
  %v2602 = vmul.f32 %v2526, %v2586
  %v2603 = vmul.f32 %v2528, %v2587
  %v2604 = vmul.f32 %v2530, %v2588
  %v2605 = vmul.f32 %v2532, %v2589
  %v2606 = vmul.f32 %v2534, %v2590
  %v2607 = vmul.f32 %v2536, %v2591
  %v2608 = vmul.f32 %v2538, %v2592
  %v2609 = vmul.f32 %v2540, %v2593
  %v2610 = vmul.f32 %v2542, %v2594
  %v2611 = vmul.f32 %v2544, %v2595
  %v2612 = vmul.f32 %v2546, %v2596
  %v2613 = vmul.f32 %v2548, %v2597
  %v2614 = vmul.f32 %v2550, %v2598
  %v2615 = vpack.c.bf16 %v2600, %v2599
  %v2616 = vpack.c.bf16 %v2602, %v2601
  %v2617 = vpack.c.bf16 %v2604, %v2603
  %v2618 = vpack.c.bf16 %v2606, %v2605
  %v2619 = vpack.c.bf16 %v2608, %v2607
  %v2620 = vpack.c.bf16 %v2610, %v2609
  %v2621 = vpack.c.bf16 %v2612, %v2611
  %v2622 = vpack.c.bf16 %v2614, %v2613
  %2623 = vmatpush.bf16.msra.mxu0 %v1528
  %2624 = vmatpush.bf16.msra.mxu0 %v1526
  %2625 = vmatpush.bf16.msra.mxu0 %v1524
  %2626 = vmatpush.bf16.msra.mxu0 %v1522
  %2627 = vmatpush.bf16.msra.mxu0 %v1520
  %2628 = vmatpush.bf16.msra.mxu0 %v1518
  %2629 = vmatpush.bf16.msra.mxu0 %v1516
  %2630 = vmatpush.bf16.msra.mxu0 %v1514
  %2631 = vmatmul.bf16.gmra.mxu0 %v2615
  %v2632 = vpop.f32.mrf.mxu0
  %v2633 = vadd.f32 0.0, %v2632
  %v2634 = vpop.f32.mrf.mxu0
  %v2635 = vadd.f32 0.0, %v2634
  %2636 = vmatmul.bf16.gmra.mxu0 %v2616
  %v2637 = vpop.f32.mrf.mxu0
  %v2638 = vadd.f32 0.0, %v2637
  %v2639 = vpop.f32.mrf.mxu0
  %v2640 = vadd.f32 0.0, %v2639
  %2641 = vmatmul.bf16.gmra.mxu0 %v2617
  %v2642 = vpop.f32.mrf.mxu0
  %v2643 = vadd.f32 0.0, %v2642
  %v2644 = vpop.f32.mrf.mxu0
  %v2645 = vadd.f32 0.0, %v2644
  %2646 = vmatmul.bf16.gmra.mxu0 %v2618
  %v2647 = vpop.f32.mrf.mxu0
  %v2648 = vadd.f32 0.0, %v2647
  %v2649 = vpop.f32.mrf.mxu0
  %v2650 = vadd.f32 0.0, %v2649
  %2651 = vmatmul.bf16.gmra.mxu0 %v2619
  %v2652 = vpop.f32.mrf.mxu0
  %v2653 = vadd.f32 0.0, %v2652
  %v2654 = vpop.f32.mrf.mxu0
  %v2655 = vadd.f32 0.0, %v2654
  %2656 = vmatmul.bf16.gmra.mxu0 %v2620
  %v2657 = vpop.f32.mrf.mxu0
  %v2658 = vadd.f32 0.0, %v2657
  %v2659 = vpop.f32.mrf.mxu0
  %v2660 = vadd.f32 0.0, %v2659
  %2661 = vmatmul.bf16.gmra.mxu0 %v2621
  %v2662 = vpop.f32.mrf.mxu0
  %v2663 = vadd.f32 0.0, %v2662
  %v2664 = vpop.f32.mrf.mxu0
  %v2665 = vadd.f32 0.0, %v2664
  %2666 = vmatmul.bf16.gmra.mxu0 %v2622
  %v2667 = vpop.f32.mrf.mxu0
  %v2668 = vadd.f32 0.0, %v2667
  %v2669 = vpop.f32.mrf.mxu0
  %v2670 = vadd.f32 0.0, %v2669
  %2671 = vdwg.mxu0
  %v2672 = vmul.f32 %v1057, %v2633
  %v2673 = vmul.f32 %v1057, %v2635
  %v2674 = vmul.f32 %v1057, %v2638
  %v2675 = vmul.f32 %v1057, %v2640
  %v2676 = vmul.f32 %v1057, %v2643
  %v2677 = vmul.f32 %v1057, %v2645
  %v2678 = vmul.f32 %v1057, %v2648
  %v2679 = vmul.f32 %v1057, %v2650
  %v2680 = vmul.f32 %v1057, %v2653
  %v2681 = vmul.f32 %v1057, %v2655
  %v2682 = vmul.f32 %v1057, %v2658
  %v2683 = vmul.f32 %v1057, %v2660
  %v2684 = vmul.f32 %v1057, %v2663
  %v2685 = vmul.f32 %v1057, %v2665
  %v2686 = vmul.f32 %v1057, %v2668
  %v2687 = vmul.f32 %v1057, %v2670
  %v2688 = vadd.f32 %v2326, %v2672
  %v2689 = vadd.f32 %v2327, %v2673
  %v2690 = vadd.f32 %v2328, %v2674
  %v2691 = vadd.f32 %v2329, %v2675
  %v2692 = vadd.f32 %v2330, %v2676
  %v2693 = vadd.f32 %v2331, %v2677
  %v2694 = vadd.f32 %v2332, %v2678
  %v2695 = vadd.f32 %v2333, %v2679
  %v2696 = vadd.f32 %v2334, %v2680
  %v2697 = vadd.f32 %v2335, %v2681
  %v2698 = vadd.f32 %v2336, %v2682
  %v2699 = vadd.f32 %v2337, %v2683
  %v2700 = vadd.f32 %v2338, %v2684
  %v2701 = vadd.f32 %v2339, %v2685
  %v2702 = vadd.f32 %v2340, %v2686
  %v2703 = vadd.f32 %v2341, %v2687
  %v2704 = vpack.c.bf16 %v2689, %v2688
  %v2705 = vpack.c.bf16 %v2691, %v2690
  %v2706 = vpack.c.bf16 %v2693, %v2692
  %v2707 = vpack.c.bf16 %v2695, %v2694
  %v2708 = vpack.c.bf16 %v2697, %v2696
  %v2709 = vpack.c.bf16 %v2699, %v2698
  %v2710 = vpack.c.bf16 %v2701, %v2700
  %v2711 = vpack.c.bf16 %v2703, %v2702
  %v2712 = vld [vmem:[%s6] sm:$0xf]
  %v2713 = vld [vmem:[%s6 + $0x4] sm:$0xf]
  %v2714 = vld [vmem:[%s6 + $0x8] sm:$0xf]
  %v2715 = vld [vmem:[%s6 + $0xc] sm:$0xf]
  %v2716 = vld [vmem:[%s7] sm:$0x1]
  %v2718 = vperm.slane %v2716, 0
  %v2724 = vunpack.c.l.b16 %v2712
  %v2725 = vunpack.c.l.b16 %v2713
  %v2726 = vunpack.c.l.b16 %v2714
  %v2727 = vunpack.c.l.b16 %v2715
  %v2728 = vpack.c.b16 %v2725, %v2724
  %v2729 = vpack.c.b16 %v2727, %v2726
  %v2733 = vsel %vm1102, %v2704, 0
  %v2736 = vsel %vm1102, %v2705, 0
  %v2739 = vsel %vm1102, %v2706, 0
  %v2742 = vsel %vm1102, %v2707, 0
  %v2745 = vsel %vm1102, %v2708, 0
  %v2748 = vsel %vm1102, %v2709, 0
  %v2751 = vsel %vm1102, %v2710, 0
  %v2754 = vsel %vm1102, %v2711, 0
  %2756 = vmatpush.bf16.msra.mxu0 0
  %2757 = vmatpush.bf16.msra.mxu0 0
  %2758 = vmatpush.bf16.msra.mxu0 0
  %2759 = vmatpush.bf16.msra.mxu0 0
  %2760 = vmatpush.bf16.msra.mxu0 0
  %2761 = vmatpush.bf16.msra.mxu0 0
  %2762 = vmatpush.bf16.msra.mxu0 %v2729
  %2763 = vmatpush.bf16.msra.mxu0 %v2728
  %2764 = vmatmul.bf16.gmra.mxu0 %v2733
  %v2765 = vpop.f32.mrf.mxu0
  %v2766 = vadd.f32 %v2718, %v2765
  %v2767 = vpop.f32.mrf.mxu0
  %v2768 = vadd.f32 %v2718, %v2767
  %2769 = vmatmul.bf16.gmra.mxu0 %v2736
  %v2770 = vpop.f32.mrf.mxu0
  %v2771 = vadd.f32 %v2718, %v2770
  %v2772 = vpop.f32.mrf.mxu0
  %v2773 = vadd.f32 %v2718, %v2772
  %2774 = vmatmul.bf16.gmra.mxu0 %v2739
  %v2775 = vpop.f32.mrf.mxu0
  %v2776 = vadd.f32 %v2718, %v2775
  %v2777 = vpop.f32.mrf.mxu0
  %v2778 = vadd.f32 %v2718, %v2777
  %2779 = vmatmul.bf16.gmra.mxu0 %v2742
  %v2780 = vpop.f32.mrf.mxu0
  %v2781 = vadd.f32 %v2718, %v2780
  %v2782 = vpop.f32.mrf.mxu0
  %v2783 = vadd.f32 %v2718, %v2782
  %2784 = vmatmul.bf16.gmra.mxu0 %v2745
  %v2785 = vpop.f32.mrf.mxu0
  %v2786 = vadd.f32 %v2718, %v2785
  %v2787 = vpop.f32.mrf.mxu0
  %v2788 = vadd.f32 %v2718, %v2787
  %2789 = vmatmul.bf16.gmra.mxu0 %v2748
  %v2790 = vpop.f32.mrf.mxu0
  %v2791 = vadd.f32 %v2718, %v2790
  %v2792 = vpop.f32.mrf.mxu0
  %v2793 = vadd.f32 %v2718, %v2792
  %2794 = vmatmul.bf16.gmra.mxu0 %v2751
  %v2795 = vpop.f32.mrf.mxu0
  %v2796 = vadd.f32 %v2718, %v2795
  %v2797 = vpop.f32.mrf.mxu0
  %v2798 = vadd.f32 %v2718, %v2797
  %2799 = vmatmul.bf16.gmra.mxu0 %v2754
  %v2800 = vpop.f32.mrf.mxu0
  %v2801 = vadd.f32 %v2718, %v2800
  %v2802 = vpop.f32.mrf.mxu0
  %v2803 = vadd.f32 %v2718, %v2802
  %2804 = vdwg.mxu0
  %v2805 = vadd.f32 %v997, %v2766
  %v2806 = vadd.f32 %v999, %v2768
  %v2807 = vadd.f32 %v1002, %v2771
  %v2808 = vadd.f32 %v1004, %v2773
  %v2809 = vadd.f32 %v1007, %v2776
  %v2810 = vadd.f32 %v1009, %v2778
  %v2811 = vadd.f32 %v1012, %v2781
  %v2812 = vadd.f32 %v1014, %v2783
  %v2813 = vadd.f32 %v1017, %v2786
  %v2814 = vadd.f32 %v1019, %v2788
  %v2815 = vadd.f32 %v1022, %v2791
  %v2816 = vadd.f32 %v1024, %v2793
  %v2817 = vadd.f32 %v1027, %v2796
  %v2818 = vadd.f32 %v1029, %v2798
  %v2819 = vadd.f32 %v1032, %v2801
  %v2820 = vadd.f32 %v1034, %v2803
  %v2821 = vld [vmem:[%s8] sm:$0x1]
  %v2822 = vld [vmem:[%s9] sm:$0x1]
  %v2823 = vsel %vm1102, %v2805, 0.0
  %2824 = vadd.xlane.f32.xlu0 %v2823
  %v2825 = vpop.xlane.xlu0 %2824
  %v2826 = vsel %vm1102, %v2806, 0.0
  %2827 = vadd.xlane.f32.xlu0 %v2826
  %v2828 = vpop.xlane.xlu0 %2827
  %v2829 = vsel %vm1102, %v2807, 0.0
  %2830 = vadd.xlane.f32.xlu0 %v2829
  %v2831 = vpop.xlane.xlu0 %2830
  %v2832 = vsel %vm1102, %v2808, 0.0
  %2833 = vadd.xlane.f32.xlu0 %v2832
  %v2834 = vpop.xlane.xlu0 %2833
  %v2835 = vsel %vm1102, %v2809, 0.0
  %2836 = vadd.xlane.f32.xlu0 %v2835
  %v2837 = vpop.xlane.xlu0 %2836
  %v2838 = vsel %vm1102, %v2810, 0.0
  %2839 = vadd.xlane.f32.xlu0 %v2838
  %v2840 = vpop.xlane.xlu0 %2839
  %v2841 = vsel %vm1102, %v2811, 0.0
  %2842 = vadd.xlane.f32.xlu0 %v2841
  %v2843 = vpop.xlane.xlu0 %2842
  %v2844 = vsel %vm1102, %v2812, 0.0
  %2845 = vadd.xlane.f32.xlu0 %v2844
  %v2846 = vpop.xlane.xlu0 %2845
  %v2847 = vsel %vm1102, %v2813, 0.0
  %2848 = vadd.xlane.f32.xlu0 %v2847
  %v2849 = vpop.xlane.xlu0 %2848
  %v2850 = vsel %vm1102, %v2814, 0.0
  %2851 = vadd.xlane.f32.xlu0 %v2850
  %v2852 = vpop.xlane.xlu0 %2851
  %v2853 = vsel %vm1102, %v2815, 0.0
  %2854 = vadd.xlane.f32.xlu0 %v2853
  %v2855 = vpop.xlane.xlu0 %2854
  %v2856 = vsel %vm1102, %v2816, 0.0
  %2857 = vadd.xlane.f32.xlu0 %v2856
  %v2858 = vpop.xlane.xlu0 %2857
  %v2859 = vsel %vm1102, %v2817, 0.0
  %2860 = vadd.xlane.f32.xlu0 %v2859
  %v2861 = vpop.xlane.xlu0 %2860
  %v2862 = vsel %vm1102, %v2818, 0.0
  %2863 = vadd.xlane.f32.xlu0 %v2862
  %v2864 = vpop.xlane.xlu0 %2863
  %v2865 = vsel %vm1102, %v2819, 0.0
  %2866 = vadd.xlane.f32.xlu0 %v2865
  %v2867 = vpop.xlane.xlu0 %2866
  %v2868 = vsel %vm1102, %v2820, 0.0
  %2869 = vadd.xlane.f32.xlu0 %v2868
  %v2870 = vpop.xlane.xlu0 %2869
  %v2871 = vrcp.pop 32.0
  %v2872 = vmul.f32 32.0, %v2871
  %v2873 = vsub.f32 1.0, %v2872
  %v2874 = vmul.f32 %v2871, %v2873
  %v2875 = vadd.f32 %v2871, %v2874
  %vm2876 = vweird.f32 %v2871
  %v2877 = vsel %vm2876, %v2871, %v2875
  %v2878 = vmul.f32 %v2825, %v2877
  %v2879 = vmul.f32 %v2828, %v2877
  %v2880 = vmul.f32 %v2831, %v2877
  %v2881 = vmul.f32 %v2834, %v2877
  %v2882 = vmul.f32 %v2837, %v2877
  %v2883 = vmul.f32 %v2840, %v2877
  %v2884 = vmul.f32 %v2843, %v2877
  %v2885 = vmul.f32 %v2846, %v2877
  %v2886 = vmul.f32 %v2849, %v2877
  %v2887 = vmul.f32 %v2852, %v2877
  %v2888 = vmul.f32 %v2855, %v2877
  %v2889 = vmul.f32 %v2858, %v2877
  %v2890 = vmul.f32 %v2861, %v2877
  %v2891 = vmul.f32 %v2864, %v2877
  %v2892 = vmul.f32 %v2867, %v2877
  %v2893 = vmul.f32 %v2870, %v2877
  %v2894 = vsub.f32 %v2805, %v2878
  %v2895 = vsub.f32 %v2806, %v2879
  %v2896 = vsub.f32 %v2807, %v2880
  %v2897 = vsub.f32 %v2808, %v2881
  %v2898 = vsub.f32 %v2809, %v2882
  %v2899 = vsub.f32 %v2810, %v2883
  %v2900 = vsub.f32 %v2811, %v2884
  %v2901 = vsub.f32 %v2812, %v2885
  %v2902 = vsub.f32 %v2813, %v2886
  %v2903 = vsub.f32 %v2814, %v2887
  %v2904 = vsub.f32 %v2815, %v2888
  %v2905 = vsub.f32 %v2816, %v2889
  %v2906 = vsub.f32 %v2817, %v2890
  %v2907 = vsub.f32 %v2818, %v2891
  %v2908 = vsub.f32 %v2819, %v2892
  %v2909 = vsub.f32 %v2820, %v2893
  %v2910 = vmul.f32 %v2894, %v2894
  %v2911 = vmul.f32 %v2895, %v2895
  %v2912 = vmul.f32 %v2896, %v2896
  %v2913 = vmul.f32 %v2897, %v2897
  %v2914 = vmul.f32 %v2898, %v2898
  %v2915 = vmul.f32 %v2899, %v2899
  %v2916 = vmul.f32 %v2900, %v2900
  %v2917 = vmul.f32 %v2901, %v2901
  %v2918 = vmul.f32 %v2902, %v2902
  %v2919 = vmul.f32 %v2903, %v2903
  %v2920 = vmul.f32 %v2904, %v2904
  %v2921 = vmul.f32 %v2905, %v2905
  %v2922 = vmul.f32 %v2906, %v2906
  %v2923 = vmul.f32 %v2907, %v2907
  %v2924 = vmul.f32 %v2908, %v2908
  %v2925 = vmul.f32 %v2909, %v2909
  %v2926 = vsel %vm1102, %v2910, 0.0
  %2927 = vadd.xlane.f32.xlu0 %v2926
  %v2928 = vpop.xlane.xlu0 %2927
  %v2929 = vsel %vm1102, %v2911, 0.0
  %2930 = vadd.xlane.f32.xlu0 %v2929
  %v2931 = vpop.xlane.xlu0 %2930
  %v2932 = vsel %vm1102, %v2912, 0.0
  %2933 = vadd.xlane.f32.xlu0 %v2932
  %v2934 = vpop.xlane.xlu0 %2933
  %v2935 = vsel %vm1102, %v2913, 0.0
  %2936 = vadd.xlane.f32.xlu0 %v2935
  %v2937 = vpop.xlane.xlu0 %2936
  %v2938 = vsel %vm1102, %v2914, 0.0
  %2939 = vadd.xlane.f32.xlu0 %v2938
  %v2940 = vpop.xlane.xlu0 %2939
  %v2941 = vsel %vm1102, %v2915, 0.0
  %2942 = vadd.xlane.f32.xlu0 %v2941
  %v2943 = vpop.xlane.xlu0 %2942
  %v2944 = vsel %vm1102, %v2916, 0.0
  %2945 = vadd.xlane.f32.xlu0 %v2944
  %v2946 = vpop.xlane.xlu0 %2945
  %v2947 = vsel %vm1102, %v2917, 0.0
  %2948 = vadd.xlane.f32.xlu0 %v2947
  %v2949 = vpop.xlane.xlu0 %2948
  %v2950 = vsel %vm1102, %v2918, 0.0
  %2951 = vadd.xlane.f32.xlu0 %v2950
  %v2952 = vpop.xlane.xlu0 %2951
  %v2953 = vsel %vm1102, %v2919, 0.0
  %2954 = vadd.xlane.f32.xlu0 %v2953
  %v2955 = vpop.xlane.xlu0 %2954
  %v2956 = vsel %vm1102, %v2920, 0.0
  %2957 = vadd.xlane.f32.xlu0 %v2956
  %v2958 = vpop.xlane.xlu0 %2957
  %v2959 = vsel %vm1102, %v2921, 0.0
  %2960 = vadd.xlane.f32.xlu0 %v2959
  %v2961 = vpop.xlane.xlu0 %2960
  %v2962 = vsel %vm1102, %v2922, 0.0
  %2963 = vadd.xlane.f32.xlu0 %v2962
  %v2964 = vpop.xlane.xlu0 %2963
  %v2965 = vsel %vm1102, %v2923, 0.0
  %2966 = vadd.xlane.f32.xlu0 %v2965
  %v2967 = vpop.xlane.xlu0 %2966
  %v2968 = vsel %vm1102, %v2924, 0.0
  %2969 = vadd.xlane.f32.xlu0 %v2968
  %v2970 = vpop.xlane.xlu0 %2969
  %v2971 = vsel %vm1102, %v2925, 0.0
  %2972 = vadd.xlane.f32.xlu0 %v2971
  %v2973 = vpop.xlane.xlu0 %2972
  %v2974 = vmul.f32 %v2928, %v2877
  %v2975 = vmul.f32 %v2931, %v2877
  %v2976 = vmul.f32 %v2934, %v2877
  %v2977 = vmul.f32 %v2937, %v2877
  %v2978 = vmul.f32 %v2940, %v2877
  %v2979 = vmul.f32 %v2943, %v2877
  %v2980 = vmul.f32 %v2946, %v2877
  %v2981 = vmul.f32 %v2949, %v2877
  %v2982 = vmul.f32 %v2952, %v2877
  %v2983 = vmul.f32 %v2955, %v2877
  %v2984 = vmul.f32 %v2958, %v2877
  %v2985 = vmul.f32 %v2961, %v2877
  %v2986 = vmul.f32 %v2964, %v2877
  %v2987 = vmul.f32 %v2967, %v2877
  %v2988 = vmul.f32 %v2970, %v2877
  %v2989 = vmul.f32 %v2973, %v2877
  %v2990 = vadd.f32 %v2974, 1e-05
  %v2991 = vadd.f32 %v2975, 1e-05
  %v2992 = vadd.f32 %v2976, 1e-05
  %v2993 = vadd.f32 %v2977, 1e-05
  %v2994 = vadd.f32 %v2978, 1e-05
  %v2995 = vadd.f32 %v2979, 1e-05
  %v2996 = vadd.f32 %v2980, 1e-05
  %v2997 = vadd.f32 %v2981, 1e-05
  %v2998 = vadd.f32 %v2982, 1e-05
  %v2999 = vadd.f32 %v2983, 1e-05
  %v3000 = vadd.f32 %v2984, 1e-05
  %v3001 = vadd.f32 %v2985, 1e-05
  %v3002 = vadd.f32 %v2986, 1e-05
  %v3003 = vadd.f32 %v2987, 1e-05
  %v3004 = vadd.f32 %v2988, 1e-05
  %v3005 = vadd.f32 %v2989, 1e-05
  %v3006 = vrsqrt.pop %v2990
  %v3007 = vmul.f32 %v3006, %v2990
  %v3008 = vmul.f32 %v3007, %v3006
  %v3009 = vmul.f32 0.5, %v3008
  %v3010 = vsub.f32 1.5, %v3009
  %v3011 = vmul.f32 %v3006, %v3010
  %vm3012 = vweird.f32 %v2990
  %vm3013 = vweird.f32 %v3006
  %vm3014 = vmor %vm3012, %vm3013
  %v3015 = vsel %vm3014, %v3006, %v3011
  %v3016 = vrsqrt.pop %v2991
  %v3017 = vmul.f32 %v3016, %v2991
  %v3018 = vmul.f32 %v3017, %v3016
  %v3019 = vmul.f32 0.5, %v3018
  %v3020 = vsub.f32 1.5, %v3019
  %v3021 = vmul.f32 %v3016, %v3020
  %vm3022 = vweird.f32 %v2991
  %vm3023 = vweird.f32 %v3016
  %vm3024 = vmor %vm3022, %vm3023
  %v3025 = vsel %vm3024, %v3016, %v3021
  %v3026 = vrsqrt.pop %v2992
  %v3027 = vmul.f32 %v3026, %v2992
  %v3028 = vmul.f32 %v3027, %v3026
  %v3029 = vmul.f32 0.5, %v3028
  %v3030 = vsub.f32 1.5, %v3029
  %v3031 = vmul.f32 %v3026, %v3030
  %vm3032 = vweird.f32 %v2992
  %vm3033 = vweird.f32 %v3026
  %vm3034 = vmor %vm3032, %vm3033
  %v3035 = vsel %vm3034, %v3026, %v3031
  %v3036 = vrsqrt.pop %v2993
  %v3037 = vmul.f32 %v3036, %v2993
  %v3038 = vmul.f32 %v3037, %v3036
  %v3039 = vmul.f32 0.5, %v3038
  %v3040 = vsub.f32 1.5, %v3039
  %v3041 = vmul.f32 %v3036, %v3040
  %vm3042 = vweird.f32 %v2993
  %vm3043 = vweird.f32 %v3036
  %vm3044 = vmor %vm3042, %vm3043
  %v3045 = vsel %vm3044, %v3036, %v3041
  %v3046 = vrsqrt.pop %v2994
  %v3047 = vmul.f32 %v3046, %v2994
  %v3048 = vmul.f32 %v3047, %v3046
  %v3049 = vmul.f32 0.5, %v3048
  %v3050 = vsub.f32 1.5, %v3049
  %v3051 = vmul.f32 %v3046, %v3050
  %vm3052 = vweird.f32 %v2994
  %vm3053 = vweird.f32 %v3046
  %vm3054 = vmor %vm3052, %vm3053
  %v3055 = vsel %vm3054, %v3046, %v3051
  %v3056 = vrsqrt.pop %v2995
  %v3057 = vmul.f32 %v3056, %v2995
  %v3058 = vmul.f32 %v3057, %v3056
  %v3059 = vmul.f32 0.5, %v3058
  %v3060 = vsub.f32 1.5, %v3059
  %v3061 = vmul.f32 %v3056, %v3060
  %vm3062 = vweird.f32 %v2995
  %vm3063 = vweird.f32 %v3056
  %vm3064 = vmor %vm3062, %vm3063
  %v3065 = vsel %vm3064, %v3056, %v3061
  %v3066 = vrsqrt.pop %v2996
  %v3067 = vmul.f32 %v3066, %v2996
  %v3068 = vmul.f32 %v3067, %v3066
  %v3069 = vmul.f32 0.5, %v3068
  %v3070 = vsub.f32 1.5, %v3069
  %v3071 = vmul.f32 %v3066, %v3070
  %vm3072 = vweird.f32 %v2996
  %vm3073 = vweird.f32 %v3066
  %vm3074 = vmor %vm3072, %vm3073
  %v3075 = vsel %vm3074, %v3066, %v3071
  %v3076 = vrsqrt.pop %v2997
  %v3077 = vmul.f32 %v3076, %v2997
  %v3078 = vmul.f32 %v3077, %v3076
  %v3079 = vmul.f32 0.5, %v3078
  %v3080 = vsub.f32 1.5, %v3079
  %v3081 = vmul.f32 %v3076, %v3080
  %vm3082 = vweird.f32 %v2997
  %vm3083 = vweird.f32 %v3076
  %vm3084 = vmor %vm3082, %vm3083
  %v3085 = vsel %vm3084, %v3076, %v3081
  %v3086 = vrsqrt.pop %v2998
  %v3087 = vmul.f32 %v3086, %v2998
  %v3088 = vmul.f32 %v3087, %v3086
  %v3089 = vmul.f32 0.5, %v3088
  %v3090 = vsub.f32 1.5, %v3089
  %v3091 = vmul.f32 %v3086, %v3090
  %vm3092 = vweird.f32 %v2998
  %vm3093 = vweird.f32 %v3086
  %vm3094 = vmor %vm3092, %vm3093
  %v3095 = vsel %vm3094, %v3086, %v3091
  %v3096 = vrsqrt.pop %v2999
  %v3097 = vmul.f32 %v3096, %v2999
  %v3098 = vmul.f32 %v3097, %v3096
  %v3099 = vmul.f32 0.5, %v3098
  %v3100 = vsub.f32 1.5, %v3099
  %v3101 = vmul.f32 %v3096, %v3100
  %vm3102 = vweird.f32 %v2999
  %vm3103 = vweird.f32 %v3096
  %vm3104 = vmor %vm3102, %vm3103
  %v3105 = vsel %vm3104, %v3096, %v3101
  %v3106 = vrsqrt.pop %v3000
  %v3107 = vmul.f32 %v3106, %v3000
  %v3108 = vmul.f32 %v3107, %v3106
  %v3109 = vmul.f32 0.5, %v3108
  %v3110 = vsub.f32 1.5, %v3109
  %v3111 = vmul.f32 %v3106, %v3110
  %vm3112 = vweird.f32 %v3000
  %vm3113 = vweird.f32 %v3106
  %vm3114 = vmor %vm3112, %vm3113
  %v3115 = vsel %vm3114, %v3106, %v3111
  %v3116 = vrsqrt.pop %v3001
  %v3117 = vmul.f32 %v3116, %v3001
  %v3118 = vmul.f32 %v3117, %v3116
  %v3119 = vmul.f32 0.5, %v3118
  %v3120 = vsub.f32 1.5, %v3119
  %v3121 = vmul.f32 %v3116, %v3120
  %vm3122 = vweird.f32 %v3001
  %vm3123 = vweird.f32 %v3116
  %vm3124 = vmor %vm3122, %vm3123
  %v3125 = vsel %vm3124, %v3116, %v3121
  %v3126 = vrsqrt.pop %v3002
  %v3127 = vmul.f32 %v3126, %v3002
  %v3128 = vmul.f32 %v3127, %v3126
  %v3129 = vmul.f32 0.5, %v3128
  %v3130 = vsub.f32 1.5, %v3129
  %v3131 = vmul.f32 %v3126, %v3130
  %vm3132 = vweird.f32 %v3002
  %vm3133 = vweird.f32 %v3126
  %vm3134 = vmor %vm3132, %vm3133
  %v3135 = vsel %vm3134, %v3126, %v3131
  %v3136 = vrsqrt.pop %v3003
  %v3137 = vmul.f32 %v3136, %v3003
  %v3138 = vmul.f32 %v3137, %v3136
  %v3139 = vmul.f32 0.5, %v3138
  %v3140 = vsub.f32 1.5, %v3139
  %v3141 = vmul.f32 %v3136, %v3140
  %vm3142 = vweird.f32 %v3003
  %vm3143 = vweird.f32 %v3136
  %vm3144 = vmor %vm3142, %vm3143
  %v3145 = vsel %vm3144, %v3136, %v3141
  %v3146 = vrsqrt.pop %v3004
  %v3147 = vmul.f32 %v3146, %v3004
  %v3148 = vmul.f32 %v3147, %v3146
  %v3149 = vmul.f32 0.5, %v3148
  %v3150 = vsub.f32 1.5, %v3149
  %v3151 = vmul.f32 %v3146, %v3150
  %vm3152 = vweird.f32 %v3004
  %vm3153 = vweird.f32 %v3146
  %vm3154 = vmor %vm3152, %vm3153
  %v3155 = vsel %vm3154, %v3146, %v3151
  %v3156 = vrsqrt.pop %v3005
  %v3157 = vmul.f32 %v3156, %v3005
  %v3158 = vmul.f32 %v3157, %v3156
  %v3159 = vmul.f32 0.5, %v3158
  %v3160 = vsub.f32 1.5, %v3159
  %v3161 = vmul.f32 %v3156, %v3160
  %vm3162 = vweird.f32 %v3005
  %vm3163 = vweird.f32 %v3156
  %vm3164 = vmor %vm3162, %vm3163
  %v3165 = vsel %vm3164, %v3156, %v3161
  %v3166 = vmul.f32 %v2894, %v3015
  %v3167 = vmul.f32 %v2895, %v3025
  %v3168 = vmul.f32 %v2896, %v3035
  %v3169 = vmul.f32 %v2897, %v3045
  %v3170 = vmul.f32 %v2898, %v3055
  %v3171 = vmul.f32 %v2899, %v3065
  %v3172 = vmul.f32 %v2900, %v3075
  %v3173 = vmul.f32 %v2901, %v3085
  %v3174 = vmul.f32 %v2902, %v3095
  %v3175 = vmul.f32 %v2903, %v3105
  %v3176 = vmul.f32 %v2904, %v3115
  %v3177 = vmul.f32 %v2905, %v3125
  %v3178 = vmul.f32 %v2906, %v3135
  %v3179 = vmul.f32 %v2907, %v3145
  %v3180 = vmul.f32 %v2908, %v3155
  %v3181 = vmul.f32 %v2909, %v3165
  %v3183 = vperm.slane %v2821, 0
  %v3185 = vmul.f32 %v3166, %v3183
  %v3186 = vmul.f32 %v3167, %v3183
  %v3187 = vmul.f32 %v3168, %v3183
  %v3188 = vmul.f32 %v3169, %v3183
  %v3189 = vmul.f32 %v3170, %v3183
  %v3190 = vmul.f32 %v3171, %v3183
  %v3191 = vmul.f32 %v3172, %v3183
  %v3192 = vmul.f32 %v3173, %v3183
  %v3193 = vmul.f32 %v3174, %v3183
  %v3194 = vmul.f32 %v3175, %v3183
  %v3195 = vmul.f32 %v3176, %v3183
  %v3196 = vmul.f32 %v3177, %v3183
  %v3197 = vmul.f32 %v3178, %v3183
  %v3198 = vmul.f32 %v3179, %v3183
  %v3199 = vmul.f32 %v3180, %v3183
  %v3200 = vmul.f32 %v3181, %v3183
  %v3202 = vperm.slane %v2822, 0
  %v3204 = vadd.f32 %v3185, %v3202
  %v3205 = vadd.f32 %v3186, %v3202
  %v3206 = vadd.f32 %v3187, %v3202
  %v3207 = vadd.f32 %v3188, %v3202
  %v3208 = vadd.f32 %v3189, %v3202
  %v3209 = vadd.f32 %v3190, %v3202
  %v3210 = vadd.f32 %v3191, %v3202
  %v3211 = vadd.f32 %v3192, %v3202
  %v3212 = vadd.f32 %v3193, %v3202
  %v3213 = vadd.f32 %v3194, %v3202
  %v3214 = vadd.f32 %v3195, %v3202
  %v3215 = vadd.f32 %v3196, %v3202
  %v3216 = vadd.f32 %v3197, %v3202
  %v3217 = vadd.f32 %v3198, %v3202
  %v3218 = vadd.f32 %v3199, %v3202
  %v3219 = vadd.f32 %v3200, %v3202
  %v3220 = vpack.c.bf16 %v3205, %v3204
  %v3221 = vpack.c.bf16 %v3207, %v3206
  %v3222 = vpack.c.bf16 %v3209, %v3208
  %v3223 = vpack.c.bf16 %v3211, %v3210
  %v3224 = vpack.c.bf16 %v3213, %v3212
  %v3225 = vpack.c.bf16 %v3215, %v3214
  %v3226 = vpack.c.bf16 %v3217, %v3216
  %v3227 = vpack.c.bf16 %v3219, %v3218
  %v3228 = vld [vmem:[%s10] sm:$0xf]
  %v3229 = vld [vmem:[%s10 + $0x4] sm:$0xf]
  %v3230 = vld [vmem:[%s10 + $0x8] sm:$0xf]
  %v3231 = vld [vmem:[%s10 + $0xc] sm:$0xf]
  %v3232 = vld [vmem:[%s11] sm:$0x1]
  %v3234 = vperm.slane %v3232, 0
  %v3240 = vunpack.c.l.b16 %v3228
  %v3241 = vunpack.c.l.b16 %v3229
  %v3242 = vunpack.c.l.b16 %v3230
  %v3243 = vunpack.c.l.b16 %v3231
  %v3244 = vpack.c.b16 %v3241, %v3240
  %v3245 = vpack.c.b16 %v3243, %v3242
  %v3249 = vsel %vm1102, %v3220, 0
  %v3252 = vsel %vm1102, %v3221, 0
  %v3255 = vsel %vm1102, %v3222, 0
  %v3258 = vsel %vm1102, %v3223, 0
  %v3261 = vsel %vm1102, %v3224, 0
  %v3264 = vsel %vm1102, %v3225, 0
  %v3267 = vsel %vm1102, %v3226, 0
  %v3270 = vsel %vm1102, %v3227, 0
  %3272 = vmatpush.bf16.msra.mxu0 0
  %3273 = vmatpush.bf16.msra.mxu0 0
  %3274 = vmatpush.bf16.msra.mxu0 0
  %3275 = vmatpush.bf16.msra.mxu0 0
  %3276 = vmatpush.bf16.msra.mxu0 0
  %3277 = vmatpush.bf16.msra.mxu0 0
  %3278 = vmatpush.bf16.msra.mxu0 %v3245
  %3279 = vmatpush.bf16.msra.mxu0 %v3244
  %3280 = vmatmul.bf16.gmra.mxu0 %v3249
  %v3281 = vpop.f32.mrf.mxu0
  %v3282 = vadd.f32 %v3234, %v3281
  %v3283 = vpop.f32.mrf.mxu0
  %v3284 = vadd.f32 %v3234, %v3283
  %3285 = vmatmul.bf16.gmra.mxu0 %v3252
  %v3286 = vpop.f32.mrf.mxu0
  %v3287 = vadd.f32 %v3234, %v3286
  %v3288 = vpop.f32.mrf.mxu0
  %v3289 = vadd.f32 %v3234, %v3288
  %3290 = vmatmul.bf16.gmra.mxu0 %v3255
  %v3291 = vpop.f32.mrf.mxu0
  %v3292 = vadd.f32 %v3234, %v3291
  %v3293 = vpop.f32.mrf.mxu0
  %v3294 = vadd.f32 %v3234, %v3293
  %3295 = vmatmul.bf16.gmra.mxu0 %v3258
  %v3296 = vpop.f32.mrf.mxu0
  %v3297 = vadd.f32 %v3234, %v3296
  %v3298 = vpop.f32.mrf.mxu0
  %v3299 = vadd.f32 %v3234, %v3298
  %3300 = vmatmul.bf16.gmra.mxu0 %v3261
  %v3301 = vpop.f32.mrf.mxu0
  %v3302 = vadd.f32 %v3234, %v3301
  %v3303 = vpop.f32.mrf.mxu0
  %v3304 = vadd.f32 %v3234, %v3303
  %3305 = vmatmul.bf16.gmra.mxu0 %v3264
  %v3306 = vpop.f32.mrf.mxu0
  %v3307 = vadd.f32 %v3234, %v3306
  %v3308 = vpop.f32.mrf.mxu0
  %v3309 = vadd.f32 %v3234, %v3308
  %3310 = vmatmul.bf16.gmra.mxu0 %v3267
  %v3311 = vpop.f32.mrf.mxu0
  %v3312 = vadd.f32 %v3234, %v3311
  %v3313 = vpop.f32.mrf.mxu0
  %v3314 = vadd.f32 %v3234, %v3313
  %3315 = vmatmul.bf16.gmra.mxu0 %v3270
  %v3316 = vpop.f32.mrf.mxu0
  %v3317 = vadd.f32 %v3234, %v3316
  %v3318 = vpop.f32.mrf.mxu0
  %v3319 = vadd.f32 %v3234, %v3318
  %3320 = vdwg.mxu0
  %v3321 = vmul.f32 %v3282, 0.5
  %v3322 = vmul.f32 %v3284, 0.5
  %v3323 = vmul.f32 %v3287, 0.5
  %v3324 = vmul.f32 %v3289, 0.5
  %v3325 = vmul.f32 %v3292, 0.5
  %v3326 = vmul.f32 %v3294, 0.5
  %v3327 = vmul.f32 %v3297, 0.5
  %v3328 = vmul.f32 %v3299, 0.5
  %v3329 = vmul.f32 %v3302, 0.5
  %v3330 = vmul.f32 %v3304, 0.5
  %v3331 = vmul.f32 %v3307, 0.5
  %v3332 = vmul.f32 %v3309, 0.5
  %v3333 = vmul.f32 %v3312, 0.5
  %v3334 = vmul.f32 %v3314, 0.5
  %v3335 = vmul.f32 %v3317, 0.5
  %v3336 = vmul.f32 %v3319, 0.5
  %v3337 = vmul.f32 %v3282, 0.044715
  %v3338 = vmul.f32 %v3284, 0.044715
  %v3339 = vmul.f32 %v3287, 0.044715
  %v3340 = vmul.f32 %v3289, 0.044715
  %v3341 = vmul.f32 %v3292, 0.044715
  %v3342 = vmul.f32 %v3294, 0.044715
  %v3343 = vmul.f32 %v3297, 0.044715
  %v3344 = vmul.f32 %v3299, 0.044715
  %v3345 = vmul.f32 %v3302, 0.044715
  %v3346 = vmul.f32 %v3304, 0.044715
  %v3347 = vmul.f32 %v3307, 0.044715
  %v3348 = vmul.f32 %v3309, 0.044715
  %v3349 = vmul.f32 %v3312, 0.044715
  %v3350 = vmul.f32 %v3314, 0.044715
  %v3351 = vmul.f32 %v3317, 0.044715
  %v3352 = vmul.f32 %v3319, 0.044715
  %v3353 = vmul.f32 %v3337, %v3282
  %v3354 = vmul.f32 %v3338, %v3284
  %v3355 = vmul.f32 %v3339, %v3287
  %v3356 = vmul.f32 %v3340, %v3289
  %v3357 = vmul.f32 %v3341, %v3292
  %v3358 = vmul.f32 %v3342, %v3294
  %v3359 = vmul.f32 %v3343, %v3297
  %v3360 = vmul.f32 %v3344, %v3299
  %v3361 = vmul.f32 %v3345, %v3302
  %v3362 = vmul.f32 %v3346, %v3304
  %v3363 = vmul.f32 %v3347, %v3307
  %v3364 = vmul.f32 %v3348, %v3309
  %v3365 = vmul.f32 %v3349, %v3312
  %v3366 = vmul.f32 %v3350, %v3314
  %v3367 = vmul.f32 %v3351, %v3317
  %v3368 = vmul.f32 %v3352, %v3319
  %v3369 = vmul.f32 %v3353, %v3282
  %v3370 = vmul.f32 %v3354, %v3284
  %v3371 = vmul.f32 %v3355, %v3287
  %v3372 = vmul.f32 %v3356, %v3289
  %v3373 = vmul.f32 %v3357, %v3292
  %v3374 = vmul.f32 %v3358, %v3294
  %v3375 = vmul.f32 %v3359, %v3297
  %v3376 = vmul.f32 %v3360, %v3299
  %v3377 = vmul.f32 %v3361, %v3302
  %v3378 = vmul.f32 %v3362, %v3304
  %v3379 = vmul.f32 %v3363, %v3307
  %v3380 = vmul.f32 %v3364, %v3309
  %v3381 = vmul.f32 %v3365, %v3312
  %v3382 = vmul.f32 %v3366, %v3314
  %v3383 = vmul.f32 %v3367, %v3317
  %v3384 = vmul.f32 %v3368, %v3319
  %v3385 = vadd.f32 %v3282, %v3369
  %v3386 = vadd.f32 %v3284, %v3370
  %v3387 = vadd.f32 %v3287, %v3371
  %v3388 = vadd.f32 %v3289, %v3372
  %v3389 = vadd.f32 %v3292, %v3373
  %v3390 = vadd.f32 %v3294, %v3374
  %v3391 = vadd.f32 %v3297, %v3375
  %v3392 = vadd.f32 %v3299, %v3376
  %v3393 = vadd.f32 %v3302, %v3377
  %v3394 = vadd.f32 %v3304, %v3378
  %v3395 = vadd.f32 %v3307, %v3379
  %v3396 = vadd.f32 %v3309, %v3380
  %v3397 = vadd.f32 %v3312, %v3381
  %v3398 = vadd.f32 %v3314, %v3382
  %v3399 = vadd.f32 %v3317, %v3383
  %v3400 = vadd.f32 %v3319, %v3384
  %v3401 = vmul.f32 %v3385, 0.7978846
  %v3402 = vmul.f32 %v3386, 0.7978846
  %v3403 = vmul.f32 %v3387, 0.7978846
  %v3404 = vmul.f32 %v3388, 0.7978846
  %v3405 = vmul.f32 %v3389, 0.7978846
  %v3406 = vmul.f32 %v3390, 0.7978846
  %v3407 = vmul.f32 %v3391, 0.7978846
  %v3408 = vmul.f32 %v3392, 0.7978846
  %v3409 = vmul.f32 %v3393, 0.7978846
  %v3410 = vmul.f32 %v3394, 0.7978846
  %v3411 = vmul.f32 %v3395, 0.7978846
  %v3412 = vmul.f32 %v3396, 0.7978846
  %v3413 = vmul.f32 %v3397, 0.7978846
  %v3414 = vmul.f32 %v3398, 0.7978846
  %v3415 = vmul.f32 %v3399, 0.7978846
  %v3416 = vmul.f32 %v3400, 0.7978846
  %v3417 = vtanh.pop %v3401
  %v3418 = vtanh.pop %v3402
  %v3419 = vtanh.pop %v3403
  %v3420 = vtanh.pop %v3404
  %v3421 = vtanh.pop %v3405
  %v3422 = vtanh.pop %v3406
  %v3423 = vtanh.pop %v3407
  %v3424 = vtanh.pop %v3408
  %v3425 = vtanh.pop %v3409
  %v3426 = vtanh.pop %v3410
  %v3427 = vtanh.pop %v3411
  %v3428 = vtanh.pop %v3412
  %v3429 = vtanh.pop %v3413
  %v3430 = vtanh.pop %v3414
  %v3431 = vtanh.pop %v3415
  %v3432 = vtanh.pop %v3416
  %v3433 = vadd.f32 %v3417, 1.0
  %v3434 = vadd.f32 %v3418, 1.0
  %v3435 = vadd.f32 %v3419, 1.0
  %v3436 = vadd.f32 %v3420, 1.0
  %v3437 = vadd.f32 %v3421, 1.0
  %v3438 = vadd.f32 %v3422, 1.0
  %v3439 = vadd.f32 %v3423, 1.0
  %v3440 = vadd.f32 %v3424, 1.0
  %v3441 = vadd.f32 %v3425, 1.0
  %v3442 = vadd.f32 %v3426, 1.0
  %v3443 = vadd.f32 %v3427, 1.0
  %v3444 = vadd.f32 %v3428, 1.0
  %v3445 = vadd.f32 %v3429, 1.0
  %v3446 = vadd.f32 %v3430, 1.0
  %v3447 = vadd.f32 %v3431, 1.0
  %v3448 = vadd.f32 %v3432, 1.0
  %v3449 = vmul.f32 %v3321, %v3433
  %v3450 = vmul.f32 %v3322, %v3434
  %v3451 = vmul.f32 %v3323, %v3435
  %v3452 = vmul.f32 %v3324, %v3436
  %v3453 = vmul.f32 %v3325, %v3437
  %v3454 = vmul.f32 %v3326, %v3438
  %v3455 = vmul.f32 %v3327, %v3439
  %v3456 = vmul.f32 %v3328, %v3440
  %v3457 = vmul.f32 %v3329, %v3441
  %v3458 = vmul.f32 %v3330, %v3442
  %v3459 = vmul.f32 %v3331, %v3443
  %v3460 = vmul.f32 %v3332, %v3444
  %v3461 = vmul.f32 %v3333, %v3445
  %v3462 = vmul.f32 %v3334, %v3446
  %v3463 = vmul.f32 %v3335, %v3447
  %v3464 = vmul.f32 %v3336, %v3448
  %v3465 = vpack.c.bf16 %v3450, %v3449
  %v3466 = vpack.c.bf16 %v3452, %v3451
  %v3467 = vpack.c.bf16 %v3454, %v3453
  %v3468 = vpack.c.bf16 %v3456, %v3455
  %v3469 = vpack.c.bf16 %v3458, %v3457
  %v3470 = vpack.c.bf16 %v3460, %v3459
  %v3471 = vpack.c.bf16 %v3462, %v3461
  %v3472 = vpack.c.bf16 %v3464, %v3463
  %v3473 = vld [vmem:[%s12] sm:$0xf]
  %v3474 = vld [vmem:[%s12 + $0x4] sm:$0xf]
  %v3475 = vld [vmem:[%s12 + $0x8] sm:$0xf]
  %v3476 = vld [vmem:[%s12 + $0xc] sm:$0xf]
  %v3477 = vld [vmem:[%s12 + $0x10] sm:$0xf]
  %v3478 = vld [vmem:[%s12 + $0x14] sm:$0xf]
  %v3479 = vld [vmem:[%s12 + $0x18] sm:$0xf]
  %v3480 = vld [vmem:[%s12 + $0x1c] sm:$0xf]
  %v3481 = vld [vmem:[%s13] sm:$0x1]
  %v3483 = vperm.slane %v3481, 0
  %v3493 = vunpack.c.l.b16 %v3473
  %v3494 = vunpack.c.l.b16 %v3474
  %v3495 = vunpack.c.l.b16 %v3475
  %v3496 = vunpack.c.l.b16 %v3476
  %v3497 = vunpack.c.l.b16 %v3477
  %v3498 = vunpack.c.l.b16 %v3478
  %v3499 = vunpack.c.l.b16 %v3479
  %v3500 = vunpack.c.l.b16 %v3480
  %v3501 = vpack.c.b16 %v3494, %v3493
  %v3502 = vpack.c.b16 %v3496, %v3495
  %v3503 = vpack.c.b16 %v3498, %v3497
  %v3504 = vpack.c.b16 %v3500, %v3499
  %vm3509 = vcmask 523264
  %v3511 = vsel %vm3509, %v3465, 0
  %v3514 = vsel %vm3509, %v3466, 0
  %v3517 = vsel %vm3509, %v3467, 0
  %v3520 = vsel %vm3509, %v3468, 0
  %v3523 = vsel %vm3509, %v3469, 0
  %v3526 = vsel %vm3509, %v3470, 0
  %v3529 = vsel %vm3509, %v3471, 0
  %v3532 = vsel %vm3509, %v3472, 0
  %3534 = vmatpush.bf16.msra.mxu0 0
  %3535 = vmatpush.bf16.msra.mxu0 0
  %3536 = vmatpush.bf16.msra.mxu0 0
  %3537 = vmatpush.bf16.msra.mxu0 0
  %3538 = vmatpush.bf16.msra.mxu0 %v3504
  %3539 = vmatpush.bf16.msra.mxu0 %v3503
  %3540 = vmatpush.bf16.msra.mxu0 %v3502
  %3541 = vmatpush.bf16.msra.mxu0 %v3501
  %3542 = vmatmul.bf16.gmra.mxu0 %v3511
  %v3543 = vpop.f32.mrf.mxu0
  %v3544 = vadd.f32 %v3483, %v3543
  %v3545 = vpop.f32.mrf.mxu0
  %v3546 = vadd.f32 %v3483, %v3545
  %3547 = vmatmul.bf16.gmra.mxu0 %v3514
  %v3548 = vpop.f32.mrf.mxu0
  %v3549 = vadd.f32 %v3483, %v3548
  %v3550 = vpop.f32.mrf.mxu0
  %v3551 = vadd.f32 %v3483, %v3550
  %3552 = vmatmul.bf16.gmra.mxu0 %v3517
  %v3553 = vpop.f32.mrf.mxu0
  %v3554 = vadd.f32 %v3483, %v3553
  %v3555 = vpop.f32.mrf.mxu0
  %v3556 = vadd.f32 %v3483, %v3555
  %3557 = vmatmul.bf16.gmra.mxu0 %v3520
  %v3558 = vpop.f32.mrf.mxu0
  %v3559 = vadd.f32 %v3483, %v3558
  %v3560 = vpop.f32.mrf.mxu0
  %v3561 = vadd.f32 %v3483, %v3560
  %3562 = vmatmul.bf16.gmra.mxu0 %v3523
  %v3563 = vpop.f32.mrf.mxu0
  %v3564 = vadd.f32 %v3483, %v3563
  %v3565 = vpop.f32.mrf.mxu0
  %v3566 = vadd.f32 %v3483, %v3565
  %3567 = vmatmul.bf16.gmra.mxu0 %v3526
  %v3568 = vpop.f32.mrf.mxu0
  %v3569 = vadd.f32 %v3483, %v3568
  %v3570 = vpop.f32.mrf.mxu0
  %v3571 = vadd.f32 %v3483, %v3570
  %3572 = vmatmul.bf16.gmra.mxu0 %v3529
  %v3573 = vpop.f32.mrf.mxu0
  %v3574 = vadd.f32 %v3483, %v3573
  %v3575 = vpop.f32.mrf.mxu0
  %v3576 = vadd.f32 %v3483, %v3575
  %3577 = vmatmul.bf16.gmra.mxu0 %v3532
  %v3578 = vpop.f32.mrf.mxu0
  %v3579 = vadd.f32 %v3483, %v3578
  %v3580 = vpop.f32.mrf.mxu0
  %v3581 = vadd.f32 %v3483, %v3580
  %3582 = vdwg.mxu0
  %v3583 = vadd.f32 %v3204, %v3544
  %v3584 = vadd.f32 %v3205, %v3546
  %v3585 = vadd.f32 %v3206, %v3549
  %v3586 = vadd.f32 %v3207, %v3551
  %v3587 = vadd.f32 %v3208, %v3554
  %v3588 = vadd.f32 %v3209, %v3556
  %v3589 = vadd.f32 %v3210, %v3559
  %v3590 = vadd.f32 %v3211, %v3561
  %v3591 = vadd.f32 %v3212, %v3564
  %v3592 = vadd.f32 %v3213, %v3566
  %v3593 = vadd.f32 %v3214, %v3569
  %v3594 = vadd.f32 %v3215, %v3571
  %v3595 = vadd.f32 %v3216, %v3574
  %v3596 = vadd.f32 %v3217, %v3576
  %v3597 = vadd.f32 %v3218, %v3579
  %v3598 = vadd.f32 %v3219, %v3581
  %v3599 = vld [vmem:[%s14] sm:$0x1]
  %v3600 = vld [vmem:[%s15] sm:$0x1]
  %v3601 = vsel %vm1102, %v3583, 0.0
  %3602 = vadd.xlane.f32.xlu0 %v3601
  %v3603 = vpop.xlane.xlu0 %3602
  %v3604 = vsel %vm1102, %v3584, 0.0
  %3605 = vadd.xlane.f32.xlu0 %v3604
  %v3606 = vpop.xlane.xlu0 %3605
  %v3607 = vsel %vm1102, %v3585, 0.0
  %3608 = vadd.xlane.f32.xlu0 %v3607
  %v3609 = vpop.xlane.xlu0 %3608
  %v3610 = vsel %vm1102, %v3586, 0.0
  %3611 = vadd.xlane.f32.xlu0 %v3610
  %v3612 = vpop.xlane.xlu0 %3611
  %v3613 = vsel %vm1102, %v3587, 0.0
  %3614 = vadd.xlane.f32.xlu0 %v3613
  %v3615 = vpop.xlane.xlu0 %3614
  %v3616 = vsel %vm1102, %v3588, 0.0
  %3617 = vadd.xlane.f32.xlu0 %v3616
  %v3618 = vpop.xlane.xlu0 %3617
  %v3619 = vsel %vm1102, %v3589, 0.0
  %3620 = vadd.xlane.f32.xlu0 %v3619
  %v3621 = vpop.xlane.xlu0 %3620
  %v3622 = vsel %vm1102, %v3590, 0.0
  %3623 = vadd.xlane.f32.xlu0 %v3622
  %v3624 = vpop.xlane.xlu0 %3623
  %v3625 = vsel %vm1102, %v3591, 0.0
  %3626 = vadd.xlane.f32.xlu0 %v3625
  %v3627 = vpop.xlane.xlu0 %3626
  %v3628 = vsel %vm1102, %v3592, 0.0
  %3629 = vadd.xlane.f32.xlu0 %v3628
  %v3630 = vpop.xlane.xlu0 %3629
  %v3631 = vsel %vm1102, %v3593, 0.0
  %3632 = vadd.xlane.f32.xlu0 %v3631
  %v3633 = vpop.xlane.xlu0 %3632
  %v3634 = vsel %vm1102, %v3594, 0.0
  %3635 = vadd.xlane.f32.xlu0 %v3634
  %v3636 = vpop.xlane.xlu0 %3635
  %v3637 = vsel %vm1102, %v3595, 0.0
  %3638 = vadd.xlane.f32.xlu0 %v3637
  %v3639 = vpop.xlane.xlu0 %3638
  %v3640 = vsel %vm1102, %v3596, 0.0
  %3641 = vadd.xlane.f32.xlu0 %v3640
  %v3642 = vpop.xlane.xlu0 %3641
  %v3643 = vsel %vm1102, %v3597, 0.0
  %3644 = vadd.xlane.f32.xlu0 %v3643
  %v3645 = vpop.xlane.xlu0 %3644
  %v3646 = vsel %vm1102, %v3598, 0.0
  %3647 = vadd.xlane.f32.xlu0 %v3646
  %v3648 = vpop.xlane.xlu0 %3647
  %v3649 = vmul.f32 %v3603, %v2877
  %v3650 = vmul.f32 %v3606, %v2877
  %v3651 = vmul.f32 %v3609, %v2877
  %v3652 = vmul.f32 %v3612, %v2877
  %v3653 = vmul.f32 %v3615, %v2877
  %v3654 = vmul.f32 %v3618, %v2877
  %v3655 = vmul.f32 %v3621, %v2877
  %v3656 = vmul.f32 %v3624, %v2877
  %v3657 = vmul.f32 %v3627, %v2877
  %v3658 = vmul.f32 %v3630, %v2877
  %v3659 = vmul.f32 %v3633, %v2877
  %v3660 = vmul.f32 %v3636, %v2877
  %v3661 = vmul.f32 %v3639, %v2877
  %v3662 = vmul.f32 %v3642, %v2877
  %v3663 = vmul.f32 %v3645, %v2877
  %v3664 = vmul.f32 %v3648, %v2877
  %v3665 = vsub.f32 %v3583, %v3649
  %v3666 = vsub.f32 %v3584, %v3650
  %v3667 = vsub.f32 %v3585, %v3651
  %v3668 = vsub.f32 %v3586, %v3652
  %v3669 = vsub.f32 %v3587, %v3653
  %v3670 = vsub.f32 %v3588, %v3654
  %v3671 = vsub.f32 %v3589, %v3655
  %v3672 = vsub.f32 %v3590, %v3656
  %v3673 = vsub.f32 %v3591, %v3657
  %v3674 = vsub.f32 %v3592, %v3658
  %v3675 = vsub.f32 %v3593, %v3659
  %v3676 = vsub.f32 %v3594, %v3660
  %v3677 = vsub.f32 %v3595, %v3661
  %v3678 = vsub.f32 %v3596, %v3662
  %v3679 = vsub.f32 %v3597, %v3663
  %v3680 = vsub.f32 %v3598, %v3664
  %v3681 = vmul.f32 %v3665, %v3665
  %v3682 = vmul.f32 %v3666, %v3666
  %v3683 = vmul.f32 %v3667, %v3667
  %v3684 = vmul.f32 %v3668, %v3668
  %v3685 = vmul.f32 %v3669, %v3669
  %v3686 = vmul.f32 %v3670, %v3670
  %v3687 = vmul.f32 %v3671, %v3671
  %v3688 = vmul.f32 %v3672, %v3672
  %v3689 = vmul.f32 %v3673, %v3673
  %v3690 = vmul.f32 %v3674, %v3674
  %v3691 = vmul.f32 %v3675, %v3675
  %v3692 = vmul.f32 %v3676, %v3676
  %v3693 = vmul.f32 %v3677, %v3677
  %v3694 = vmul.f32 %v3678, %v3678
  %v3695 = vmul.f32 %v3679, %v3679
  %v3696 = vmul.f32 %v3680, %v3680
  %v3697 = vsel %vm1102, %v3681, 0.0
  %3698 = vadd.xlane.f32.xlu0 %v3697
  %v3699 = vpop.xlane.xlu0 %3698
  %v3700 = vsel %vm1102, %v3682, 0.0
  %3701 = vadd.xlane.f32.xlu0 %v3700
  %v3702 = vpop.xlane.xlu0 %3701
  %v3703 = vsel %vm1102, %v3683, 0.0
  %3704 = vadd.xlane.f32.xlu0 %v3703
  %v3705 = vpop.xlane.xlu0 %3704
  %v3706 = vsel %vm1102, %v3684, 0.0
  %3707 = vadd.xlane.f32.xlu0 %v3706
  %v3708 = vpop.xlane.xlu0 %3707
  %v3709 = vsel %vm1102, %v3685, 0.0
  %3710 = vadd.xlane.f32.xlu0 %v3709
  %v3711 = vpop.xlane.xlu0 %3710
  %v3712 = vsel %vm1102, %v3686, 0.0
  %3713 = vadd.xlane.f32.xlu0 %v3712
  %v3714 = vpop.xlane.xlu0 %3713
  %v3715 = vsel %vm1102, %v3687, 0.0
  %3716 = vadd.xlane.f32.xlu0 %v3715
  %v3717 = vpop.xlane.xlu0 %3716
  %v3718 = vsel %vm1102, %v3688, 0.0
  %3719 = vadd.xlane.f32.xlu0 %v3718
  %v3720 = vpop.xlane.xlu0 %3719
  %v3721 = vsel %vm1102, %v3689, 0.0
  %3722 = vadd.xlane.f32.xlu0 %v3721
  %v3723 = vpop.xlane.xlu0 %3722
  %v3724 = vsel %vm1102, %v3690, 0.0
  %3725 = vadd.xlane.f32.xlu0 %v3724
  %v3726 = vpop.xlane.xlu0 %3725
  %v3727 = vsel %vm1102, %v3691, 0.0
  %3728 = vadd.xlane.f32.xlu0 %v3727
  %v3729 = vpop.xlane.xlu0 %3728
  %v3730 = vsel %vm1102, %v3692, 0.0
  %3731 = vadd.xlane.f32.xlu0 %v3730
  %v3732 = vpop.xlane.xlu0 %3731
  %v3733 = vsel %vm1102, %v3693, 0.0
  %3734 = vadd.xlane.f32.xlu0 %v3733
  %v3735 = vpop.xlane.xlu0 %3734
  %v3736 = vsel %vm1102, %v3694, 0.0
  %3737 = vadd.xlane.f32.xlu0 %v3736
  %v3738 = vpop.xlane.xlu0 %3737
  %v3739 = vsel %vm1102, %v3695, 0.0
  %3740 = vadd.xlane.f32.xlu0 %v3739
  %v3741 = vpop.xlane.xlu0 %3740
  %v3742 = vsel %vm1102, %v3696, 0.0
  %3743 = vadd.xlane.f32.xlu0 %v3742
  %v3744 = vpop.xlane.xlu0 %3743
  %v3745 = vmul.f32 %v3699, %v2877
  %v3746 = vmul.f32 %v3702, %v2877
  %v3747 = vmul.f32 %v3705, %v2877
  %v3748 = vmul.f32 %v3708, %v2877
  %v3749 = vmul.f32 %v3711, %v2877
  %v3750 = vmul.f32 %v3714, %v2877
  %v3751 = vmul.f32 %v3717, %v2877
  %v3752 = vmul.f32 %v3720, %v2877
  %v3753 = vmul.f32 %v3723, %v2877
  %v3754 = vmul.f32 %v3726, %v2877
  %v3755 = vmul.f32 %v3729, %v2877
  %v3756 = vmul.f32 %v3732, %v2877
  %v3757 = vmul.f32 %v3735, %v2877
  %v3758 = vmul.f32 %v3738, %v2877
  %v3759 = vmul.f32 %v3741, %v2877
  %v3760 = vmul.f32 %v3744, %v2877
  %v3761 = vadd.f32 %v3745, 1e-05
  %v3762 = vadd.f32 %v3746, 1e-05
  %v3763 = vadd.f32 %v3747, 1e-05
  %v3764 = vadd.f32 %v3748, 1e-05
  %v3765 = vadd.f32 %v3749, 1e-05
  %v3766 = vadd.f32 %v3750, 1e-05
  %v3767 = vadd.f32 %v3751, 1e-05
  %v3768 = vadd.f32 %v3752, 1e-05
  %v3769 = vadd.f32 %v3753, 1e-05
  %v3770 = vadd.f32 %v3754, 1e-05
  %v3771 = vadd.f32 %v3755, 1e-05
  %v3772 = vadd.f32 %v3756, 1e-05
  %v3773 = vadd.f32 %v3757, 1e-05
  %v3774 = vadd.f32 %v3758, 1e-05
  %v3775 = vadd.f32 %v3759, 1e-05
  %v3776 = vadd.f32 %v3760, 1e-05
  %v3777 = vrsqrt.pop %v3761
  %v3778 = vmul.f32 %v3777, %v3761
  %v3779 = vmul.f32 %v3778, %v3777
  %v3780 = vmul.f32 0.5, %v3779
  %v3781 = vsub.f32 1.5, %v3780
  %v3782 = vmul.f32 %v3777, %v3781
  %vm3783 = vweird.f32 %v3761
  %vm3784 = vweird.f32 %v3777
  %vm3785 = vmor %vm3783, %vm3784
  %v3786 = vsel %vm3785, %v3777, %v3782
  %v3787 = vrsqrt.pop %v3762
  %v3788 = vmul.f32 %v3787, %v3762
  %v3789 = vmul.f32 %v3788, %v3787
  %v3790 = vmul.f32 0.5, %v3789
  %v3791 = vsub.f32 1.5, %v3790
  %v3792 = vmul.f32 %v3787, %v3791
  %vm3793 = vweird.f32 %v3762
  %vm3794 = vweird.f32 %v3787
  %vm3795 = vmor %vm3793, %vm3794
  %v3796 = vsel %vm3795, %v3787, %v3792
  %v3797 = vrsqrt.pop %v3763
  %v3798 = vmul.f32 %v3797, %v3763
  %v3799 = vmul.f32 %v3798, %v3797
  %v3800 = vmul.f32 0.5, %v3799
  %v3801 = vsub.f32 1.5, %v3800
  %v3802 = vmul.f32 %v3797, %v3801
  %vm3803 = vweird.f32 %v3763
  %vm3804 = vweird.f32 %v3797
  %vm3805 = vmor %vm3803, %vm3804
  %v3806 = vsel %vm3805, %v3797, %v3802
  %v3807 = vrsqrt.pop %v3764
  %v3808 = vmul.f32 %v3807, %v3764
  %v3809 = vmul.f32 %v3808, %v3807
  %v3810 = vmul.f32 0.5, %v3809
  %v3811 = vsub.f32 1.5, %v3810
  %v3812 = vmul.f32 %v3807, %v3811
  %vm3813 = vweird.f32 %v3764
  %vm3814 = vweird.f32 %v3807
  %vm3815 = vmor %vm3813, %vm3814
  %v3816 = vsel %vm3815, %v3807, %v3812
  %v3817 = vrsqrt.pop %v3765
  %v3818 = vmul.f32 %v3817, %v3765
  %v3819 = vmul.f32 %v3818, %v3817
  %v3820 = vmul.f32 0.5, %v3819
  %v3821 = vsub.f32 1.5, %v3820
  %v3822 = vmul.f32 %v3817, %v3821
  %vm3823 = vweird.f32 %v3765
  %vm3824 = vweird.f32 %v3817
  %vm3825 = vmor %vm3823, %vm3824
  %v3826 = vsel %vm3825, %v3817, %v3822
  %v3827 = vrsqrt.pop %v3766
  %v3828 = vmul.f32 %v3827, %v3766
  %v3829 = vmul.f32 %v3828, %v3827
  %v3830 = vmul.f32 0.5, %v3829
  %v3831 = vsub.f32 1.5, %v3830
  %v3832 = vmul.f32 %v3827, %v3831
  %vm3833 = vweird.f32 %v3766
  %vm3834 = vweird.f32 %v3827
  %vm3835 = vmor %vm3833, %vm3834
  %v3836 = vsel %vm3835, %v3827, %v3832
  %v3837 = vrsqrt.pop %v3767
  %v3838 = vmul.f32 %v3837, %v3767
  %v3839 = vmul.f32 %v3838, %v3837
  %v3840 = vmul.f32 0.5, %v3839
  %v3841 = vsub.f32 1.5, %v3840
  %v3842 = vmul.f32 %v3837, %v3841
  %vm3843 = vweird.f32 %v3767
  %vm3844 = vweird.f32 %v3837
  %vm3845 = vmor %vm3843, %vm3844
  %v3846 = vsel %vm3845, %v3837, %v3842
  %v3847 = vrsqrt.pop %v3768
  %v3848 = vmul.f32 %v3847, %v3768
  %v3849 = vmul.f32 %v3848, %v3847
  %v3850 = vmul.f32 0.5, %v3849
  %v3851 = vsub.f32 1.5, %v3850
  %v3852 = vmul.f32 %v3847, %v3851
  %vm3853 = vweird.f32 %v3768
  %vm3854 = vweird.f32 %v3847
  %vm3855 = vmor %vm3853, %vm3854
  %v3856 = vsel %vm3855, %v3847, %v3852
  %v3857 = vrsqrt.pop %v3769
  %v3858 = vmul.f32 %v3857, %v3769
  %v3859 = vmul.f32 %v3858, %v3857
  %v3860 = vmul.f32 0.5, %v3859
  %v3861 = vsub.f32 1.5, %v3860
  %v3862 = vmul.f32 %v3857, %v3861
  %vm3863 = vweird.f32 %v3769
  %vm3864 = vweird.f32 %v3857
  %vm3865 = vmor %vm3863, %vm3864
  %v3866 = vsel %vm3865, %v3857, %v3862
  %v3867 = vrsqrt.pop %v3770
  %v3868 = vmul.f32 %v3867, %v3770
  %v3869 = vmul.f32 %v3868, %v3867
  %v3870 = vmul.f32 0.5, %v3869
  %v3871 = vsub.f32 1.5, %v3870
  %v3872 = vmul.f32 %v3867, %v3871
  %vm3873 = vweird.f32 %v3770
  %vm3874 = vweird.f32 %v3867
  %vm3875 = vmor %vm3873, %vm3874
  %v3876 = vsel %vm3875, %v3867, %v3872
  %v3877 = vrsqrt.pop %v3771
  %v3878 = vmul.f32 %v3877, %v3771
  %v3879 = vmul.f32 %v3878, %v3877
  %v3880 = vmul.f32 0.5, %v3879
  %v3881 = vsub.f32 1.5, %v3880
  %v3882 = vmul.f32 %v3877, %v3881
  %vm3883 = vweird.f32 %v3771
  %vm3884 = vweird.f32 %v3877
  %vm3885 = vmor %vm3883, %vm3884
  %v3886 = vsel %vm3885, %v3877, %v3882
  %v3887 = vrsqrt.pop %v3772
  %v3888 = vmul.f32 %v3887, %v3772
  %v3889 = vmul.f32 %v3888, %v3887
  %v3890 = vmul.f32 0.5, %v3889
  %v3891 = vsub.f32 1.5, %v3890
  %v3892 = vmul.f32 %v3887, %v3891
  %vm3893 = vweird.f32 %v3772
  %vm3894 = vweird.f32 %v3887
  %vm3895 = vmor %vm3893, %vm3894
  %v3896 = vsel %vm3895, %v3887, %v3892
  %v3897 = vrsqrt.pop %v3773
  %v3898 = vmul.f32 %v3897, %v3773
  %v3899 = vmul.f32 %v3898, %v3897
  %v3900 = vmul.f32 0.5, %v3899
  %v3901 = vsub.f32 1.5, %v3900
  %v3902 = vmul.f32 %v3897, %v3901
  %vm3903 = vweird.f32 %v3773
  %vm3904 = vweird.f32 %v3897
  %vm3905 = vmor %vm3903, %vm3904
  %v3906 = vsel %vm3905, %v3897, %v3902
  %v3907 = vrsqrt.pop %v3774
  %v3908 = vmul.f32 %v3907, %v3774
  %v3909 = vmul.f32 %v3908, %v3907
  %v3910 = vmul.f32 0.5, %v3909
  %v3911 = vsub.f32 1.5, %v3910
  %v3912 = vmul.f32 %v3907, %v3911
  %vm3913 = vweird.f32 %v3774
  %vm3914 = vweird.f32 %v3907
  %vm3915 = vmor %vm3913, %vm3914
  %v3916 = vsel %vm3915, %v3907, %v3912
  %v3917 = vrsqrt.pop %v3775
  %v3918 = vmul.f32 %v3917, %v3775
  %v3919 = vmul.f32 %v3918, %v3917
  %v3920 = vmul.f32 0.5, %v3919
  %v3921 = vsub.f32 1.5, %v3920
  %v3922 = vmul.f32 %v3917, %v3921
  %vm3923 = vweird.f32 %v3775
  %vm3924 = vweird.f32 %v3917
  %vm3925 = vmor %vm3923, %vm3924
  %v3926 = vsel %vm3925, %v3917, %v3922
  %v3927 = vrsqrt.pop %v3776
  %v3928 = vmul.f32 %v3927, %v3776
  %v3929 = vmul.f32 %v3928, %v3927
  %v3930 = vmul.f32 0.5, %v3929
  %v3931 = vsub.f32 1.5, %v3930
  %v3932 = vmul.f32 %v3927, %v3931
  %vm3933 = vweird.f32 %v3776
  %vm3934 = vweird.f32 %v3927
  %vm3935 = vmor %vm3933, %vm3934
  %v3936 = vsel %vm3935, %v3927, %v3932
  %v3937 = vmul.f32 %v3665, %v3786
  %v3938 = vmul.f32 %v3666, %v3796
  %v3939 = vmul.f32 %v3667, %v3806
  %v3940 = vmul.f32 %v3668, %v3816
  %v3941 = vmul.f32 %v3669, %v3826
  %v3942 = vmul.f32 %v3670, %v3836
  %v3943 = vmul.f32 %v3671, %v3846
  %v3944 = vmul.f32 %v3672, %v3856
  %v3945 = vmul.f32 %v3673, %v3866
  %v3946 = vmul.f32 %v3674, %v3876
  %v3947 = vmul.f32 %v3675, %v3886
  %v3948 = vmul.f32 %v3676, %v3896
  %v3949 = vmul.f32 %v3677, %v3906
  %v3950 = vmul.f32 %v3678, %v3916
  %v3951 = vmul.f32 %v3679, %v3926
  %v3952 = vmul.f32 %v3680, %v3936
  %v3954 = vperm.slane %v3599, 0
  %v3956 = vmul.f32 %v3937, %v3954
  %v3957 = vmul.f32 %v3938, %v3954
  %v3958 = vmul.f32 %v3939, %v3954
  %v3959 = vmul.f32 %v3940, %v3954
  %v3960 = vmul.f32 %v3941, %v3954
  %v3961 = vmul.f32 %v3942, %v3954
  %v3962 = vmul.f32 %v3943, %v3954
  %v3963 = vmul.f32 %v3944, %v3954
  %v3964 = vmul.f32 %v3945, %v3954
  %v3965 = vmul.f32 %v3946, %v3954
  %v3966 = vmul.f32 %v3947, %v3954
  %v3967 = vmul.f32 %v3948, %v3954
  %v3968 = vmul.f32 %v3949, %v3954
  %v3969 = vmul.f32 %v3950, %v3954
  %v3970 = vmul.f32 %v3951, %v3954
  %v3971 = vmul.f32 %v3952, %v3954
  %v3973 = vperm.slane %v3600, 0
  %v3975 = vadd.f32 %v3956, %v3973
  %v3976 = vadd.f32 %v3957, %v3973
  %v3977 = vadd.f32 %v3958, %v3973
  %v3978 = vadd.f32 %v3959, %v3973
  %v3979 = vadd.f32 %v3960, %v3973
  %v3980 = vadd.f32 %v3961, %v3973
  %v3981 = vadd.f32 %v3962, %v3973
  %v3982 = vadd.f32 %v3963, %v3973
  %v3983 = vadd.f32 %v3964, %v3973
  %v3984 = vadd.f32 %v3965, %v3973
  %v3985 = vadd.f32 %v3966, %v3973
  %v3986 = vadd.f32 %v3967, %v3973
  %v3987 = vadd.f32 %v3968, %v3973
  %v3988 = vadd.f32 %v3969, %v3973
  %v3989 = vadd.f32 %v3970, %v3973
  %v3990 = vadd.f32 %v3971, %v3973
  %v3991 = vpack.c.bf16 %v3976, %v3975
  %v3992 = vpack.c.bf16 %v3978, %v3977
  %v3993 = vpack.c.bf16 %v3980, %v3979
  %v3994 = vpack.c.bf16 %v3982, %v3981
  %v3995 = vpack.c.bf16 %v3984, %v3983
  %v3996 = vpack.c.bf16 %v3986, %v3985
  %v3997 = vpack.c.bf16 %v3988, %v3987
  %v3998 = vpack.c.bf16 %v3990, %v3989
  %s3999 = scalar_lea.vmem %s4, 16
  %v4000 = vld [vmem:[%s3999] sm:$0xf]
  %v4001 = vld [vmem:[%s3999 + $0x4] sm:$0xf]
  %v4002 = vld [vmem:[%s3999 + $0x8] sm:$0xf]
  %v4003 = vld [vmem:[%s3999 + $0xc] sm:$0xf]
  %s4004 = scalar_lea.vmem %s5, 1
  %v4005 = vld [vmem:[%s4004] sm:$0x1]
  %v4007 = vperm.slane %v4005, 0
  %v4013 = vunpack.c.l.b16 %v4000
  %v4014 = vunpack.c.l.b16 %v4001
  %v4015 = vunpack.c.l.b16 %v4002
  %v4016 = vunpack.c.l.b16 %v4003
  %v4017 = vpack.c.b16 %v4014, %v4013
  %v4018 = vpack.c.b16 %v4016, %v4015
  %v4022 = vsel %vm1102, %v3991, 0
  %v4025 = vsel %vm1102, %v3992, 0
  %v4028 = vsel %vm1102, %v3993, 0
  %v4031 = vsel %vm1102, %v3994, 0
  %v4034 = vsel %vm1102, %v3995, 0
  %v4037 = vsel %vm1102, %v3996, 0
  %v4040 = vsel %vm1102, %v3997, 0
  %v4043 = vsel %vm1102, %v3998, 0
  %4045 = vmatpush.bf16.msra.mxu0 0
  %4046 = vmatpush.bf16.msra.mxu0 0
  %4047 = vmatpush.bf16.msra.mxu0 0
  %4048 = vmatpush.bf16.msra.mxu0 0
  %4049 = vmatpush.bf16.msra.mxu0 0
  %4050 = vmatpush.bf16.msra.mxu0 0
  %4051 = vmatpush.bf16.msra.mxu0 %v4018
  %4052 = vmatpush.bf16.msra.mxu0 %v4017
  %4053 = vmatmul.bf16.gmra.mxu0 %v4022
  %v4054 = vpop.f32.mrf.mxu0
  %v4055 = vadd.f32 %v4007, %v4054
  %v4056 = vpop.f32.mrf.mxu0
  %v4057 = vadd.f32 %v4007, %v4056
  %4058 = vmatmul.bf16.gmra.mxu0 %v4025
  %v4059 = vpop.f32.mrf.mxu0
  %v4060 = vadd.f32 %v4007, %v4059
  %v4061 = vpop.f32.mrf.mxu0
  %v4062 = vadd.f32 %v4007, %v4061
  %4063 = vmatmul.bf16.gmra.mxu0 %v4028
  %v4064 = vpop.f32.mrf.mxu0
  %v4065 = vadd.f32 %v4007, %v4064
  %v4066 = vpop.f32.mrf.mxu0
  %v4067 = vadd.f32 %v4007, %v4066
  %4068 = vmatmul.bf16.gmra.mxu0 %v4031
  %v4069 = vpop.f32.mrf.mxu0
  %v4070 = vadd.f32 %v4007, %v4069
  %v4071 = vpop.f32.mrf.mxu0
  %v4072 = vadd.f32 %v4007, %v4071
  %4073 = vmatmul.bf16.gmra.mxu0 %v4034
  %v4074 = vpop.f32.mrf.mxu0
  %v4075 = vadd.f32 %v4007, %v4074
  %v4076 = vpop.f32.mrf.mxu0
  %v4077 = vadd.f32 %v4007, %v4076
  %4078 = vmatmul.bf16.gmra.mxu0 %v4037
  %v4079 = vpop.f32.mrf.mxu0
  %v4080 = vadd.f32 %v4007, %v4079
  %v4081 = vpop.f32.mrf.mxu0
  %v4082 = vadd.f32 %v4007, %v4081
  %4083 = vmatmul.bf16.gmra.mxu0 %v4040
  %v4084 = vpop.f32.mrf.mxu0
  %v4085 = vadd.f32 %v4007, %v4084
  %v4086 = vpop.f32.mrf.mxu0
  %v4087 = vadd.f32 %v4007, %v4086
  %4088 = vmatmul.bf16.gmra.mxu0 %v4043
  %v4089 = vpop.f32.mrf.mxu0
  %v4090 = vadd.f32 %v4007, %v4089
  %v4091 = vpop.f32.mrf.mxu0
  %v4092 = vadd.f32 %v4007, %v4091
  %4093 = vdwg.mxu0
  %v4094 = vpack.c.bf16 %v4057, %v4055
  %v4095 = vpack.c.bf16 %v4062, %v4060
  %v4096 = vpack.c.bf16 %v4067, %v4065
  %v4097 = vpack.c.bf16 %v4072, %v4070
  %v4098 = vpack.c.bf16 %v4077, %v4075
  %v4099 = vpack.c.bf16 %v4082, %v4080
  %v4100 = vpack.c.bf16 %v4087, %v4085
  %v4101 = vpack.c.bf16 %v4092, %v4090
  %v4102 = vmul.f32 %v4055, %v1042
  %v4103 = vmul.f32 %v4057, %v1042
  %v4104 = vmul.f32 %v4060, %v1042
  %v4105 = vmul.f32 %v4062, %v1042
  %v4106 = vmul.f32 %v4065, %v1042
  %v4107 = vmul.f32 %v4067, %v1042
  %v4108 = vmul.f32 %v4070, %v1042
  %v4109 = vmul.f32 %v4072, %v1042
  %v4110 = vmul.f32 %v4075, %v1042
  %v4111 = vmul.f32 %v4077, %v1042
  %v4112 = vmul.f32 %v4080, %v1042
  %v4113 = vmul.f32 %v4082, %v1042
  %v4114 = vmul.f32 %v4085, %v1042
  %v4115 = vmul.f32 %v4087, %v1042
  %v4116 = vmul.f32 %v4090, %v1042
  %v4117 = vmul.f32 %v4092, %v1042
  %v4118 = vpack.c.bf16 %v4103, %v4102
  %v4119 = vpack.c.bf16 %v4105, %v4104
  %v4120 = vpack.c.bf16 %v4107, %v4106
  %v4121 = vpack.c.bf16 %v4109, %v4108
  %v4122 = vpack.c.bf16 %v4111, %v4110
  %v4123 = vpack.c.bf16 %v4113, %v4112
  %v4124 = vpack.c.bf16 %v4115, %v4114
  %v4125 = vpack.c.bf16 %v4117, %v4116
  %4134 = vrot.lane.b32.xlu0 %v4094, 96
  %v4135 = vpop.permute.xlu0 %4134
  %4136 = vrot.lane.b32.xlu0 %v4095, 96
  %v4137 = vpop.permute.xlu0 %4136
  %4138 = vrot.lane.b32.xlu0 %v4096, 96
  %v4139 = vpop.permute.xlu0 %4138
  %4140 = vrot.lane.b32.xlu0 %v4097, 96
  %v4141 = vpop.permute.xlu0 %4140
  %4142 = vrot.lane.b32.xlu0 %v4098, 96
  %v4143 = vpop.permute.xlu0 %4142
  %4144 = vrot.lane.b32.xlu0 %v4099, 96
  %v4145 = vpop.permute.xlu0 %4144
  %4146 = vrot.lane.b32.xlu0 %v4100, 96
  %v4147 = vpop.permute.xlu0 %4146
  %4148 = vrot.lane.b32.xlu0 %v4101, 96
  %v4149 = vpop.permute.xlu0 %4148
  %v4151 = vsel %vm1102, %v4118, 0
  %v4154 = vsel %vm1102, %v4119, 0
  %v4157 = vsel %vm1102, %v4120, 0
  %v4160 = vsel %vm1102, %v4121, 0
  %v4163 = vsel %vm1102, %v4122, 0
  %v4166 = vsel %vm1102, %v4123, 0
  %v4169 = vsel %vm1102, %v4124, 0
  %v4172 = vsel %vm1102, %v4125, 0
  %v4175 = vsel %vm1102, %v4135, 0
  %v4178 = vsel %vm1102, %v4137, 0
  %v4181 = vsel %vm1102, %v4139, 0
  %v4184 = vsel %vm1102, %v4141, 0
  %v4187 = vsel %vm1102, %v4143, 0
  %v4190 = vsel %vm1102, %v4145, 0
  %v4193 = vsel %vm1102, %v4147, 0
  %v4196 = vsel %vm1102, %v4149, 0
  %4198 = vmatpush.bf16.xpose.msra.mxu0 %v4196
  %4199 = vmatpush.bf16.xpose.msra.mxu0 %v4193
  %4200 = vmatpush.bf16.xpose.msra.mxu0 %v4190
  %4201 = vmatpush.bf16.xpose.msra.mxu0 %v4187
  %4202 = vmatpush.bf16.xpose.msra.mxu0 %v4184
  %4203 = vmatpush.bf16.xpose.msra.mxu0 %v4181
  %4204 = vmatpush.bf16.xpose.msra.mxu0 %v4178
  %4205 = vmatpush.bf16.xpose.msra.mxu0 %v4175
  %4206 = vmatmul.bf16.gmra.mxu0 %v4151
  %v4207 = vpop.f32.mrf.mxu0
  %v4208 = vadd.f32 0.0, %v4207
  %v4209 = vpop.f32.mrf.mxu0
  %v4210 = vadd.f32 0.0, %v4209
  %4211 = vmatmul.bf16.gmra.mxu0 %v4154
  %v4212 = vpop.f32.mrf.mxu0
  %v4213 = vadd.f32 0.0, %v4212
  %v4214 = vpop.f32.mrf.mxu0
  %v4215 = vadd.f32 0.0, %v4214
  %4216 = vmatmul.bf16.gmra.mxu0 %v4157
  %v4217 = vpop.f32.mrf.mxu0
  %v4218 = vadd.f32 0.0, %v4217
  %v4219 = vpop.f32.mrf.mxu0
  %v4220 = vadd.f32 0.0, %v4219
  %4221 = vmatmul.bf16.gmra.mxu0 %v4160
  %v4222 = vpop.f32.mrf.mxu0
  %v4223 = vadd.f32 0.0, %v4222
  %v4224 = vpop.f32.mrf.mxu0
  %v4225 = vadd.f32 0.0, %v4224
  %4226 = vmatmul.bf16.gmra.mxu0 %v4163
  %v4227 = vpop.f32.mrf.mxu0
  %v4228 = vadd.f32 0.0, %v4227
  %v4229 = vpop.f32.mrf.mxu0
  %v4230 = vadd.f32 0.0, %v4229
  %4231 = vmatmul.bf16.gmra.mxu0 %v4166
  %v4232 = vpop.f32.mrf.mxu0
  %v4233 = vadd.f32 0.0, %v4232
  %v4234 = vpop.f32.mrf.mxu0
  %v4235 = vadd.f32 0.0, %v4234
  %4236 = vmatmul.bf16.gmra.mxu0 %v4169
  %v4237 = vpop.f32.mrf.mxu0
  %v4238 = vadd.f32 0.0, %v4237
  %v4239 = vpop.f32.mrf.mxu0
  %v4240 = vadd.f32 0.0, %v4239
  %4241 = vmatmul.bf16.gmra.mxu0 %v4172
  %v4242 = vpop.f32.mrf.mxu0
  %v4243 = vadd.f32 0.0, %v4242
  %v4244 = vpop.f32.mrf.mxu0
  %v4245 = vadd.f32 0.0, %v4244
  %4246 = vdwg.mxu0
  %v4247 = vmul.f32 %v4208, 0.35355338
  %v4248 = vmul.f32 %v4210, 0.35355338
  %v4249 = vmul.f32 %v4213, 0.35355338
  %v4250 = vmul.f32 %v4215, 0.35355338
  %v4251 = vmul.f32 %v4218, 0.35355338
  %v4252 = vmul.f32 %v4220, 0.35355338
  %v4253 = vmul.f32 %v4223, 0.35355338
  %v4254 = vmul.f32 %v4225, 0.35355338
  %v4255 = vmul.f32 %v4228, 0.35355338
  %v4256 = vmul.f32 %v4230, 0.35355338
  %v4257 = vmul.f32 %v4233, 0.35355338
  %v4258 = vmul.f32 %v4235, 0.35355338
  %v4259 = vmul.f32 %v4238, 0.35355338
  %v4260 = vmul.f32 %v4240, 0.35355338
  %v4261 = vmul.f32 %v4243, 0.35355338
  %v4262 = vmul.f32 %v4245, 0.35355338
  %v4263 = vadd.f32 %v4247, %v1058
  %v4264 = vadd.f32 %v4248, %v1059
  %v4265 = vadd.f32 %v4249, %v1060
  %v4266 = vadd.f32 %v4250, %v1061
  %v4267 = vadd.f32 %v4251, %v1062
  %v4268 = vadd.f32 %v4252, %v1063
  %v4269 = vadd.f32 %v4253, %v1064
  %v4270 = vadd.f32 %v4254, %v1065
  %v4271 = vadd.f32 %v4255, %v1066
  %v4272 = vadd.f32 %v4256, %v1067
  %v4273 = vadd.f32 %v4257, %v1068
  %v4274 = vadd.f32 %v4258, %v1069
  %v4275 = vadd.f32 %v4259, %v1070
  %v4276 = vadd.f32 %v4260, %v1071
  %v4277 = vadd.f32 %v4261, %v1072
  %v4278 = vadd.f32 %v4262, %v1073
  %4279 = vmax.xlane.f32.xlu0 %v4263
  %v4280 = vpop.xlane.xlu0 %4279
  %4281 = vmax.xlane.f32.xlu0 %v4264
  %v4282 = vpop.xlane.xlu0 %4281
  %4283 = vmax.xlane.f32.xlu0 %v4265
  %v4284 = vpop.xlane.xlu0 %4283
  %4285 = vmax.xlane.f32.xlu0 %v4266
  %v4286 = vpop.xlane.xlu0 %4285
  %4287 = vmax.xlane.f32.xlu0 %v4267
  %v4288 = vpop.xlane.xlu0 %4287
  %4289 = vmax.xlane.f32.xlu0 %v4268
  %v4290 = vpop.xlane.xlu0 %4289
  %4291 = vmax.xlane.f32.xlu0 %v4269
  %v4292 = vpop.xlane.xlu0 %4291
  %4293 = vmax.xlane.f32.xlu0 %v4270
  %v4294 = vpop.xlane.xlu0 %4293
  %4295 = vmax.xlane.f32.xlu0 %v4271
  %v4296 = vpop.xlane.xlu0 %4295
  %4297 = vmax.xlane.f32.xlu0 %v4272
  %v4298 = vpop.xlane.xlu0 %4297
  %4299 = vmax.xlane.f32.xlu0 %v4273
  %v4300 = vpop.xlane.xlu0 %4299
  %4301 = vmax.xlane.f32.xlu0 %v4274
  %v4302 = vpop.xlane.xlu0 %4301
  %4303 = vmax.xlane.f32.xlu0 %v4275
  %v4304 = vpop.xlane.xlu0 %4303
  %4305 = vmax.xlane.f32.xlu0 %v4276
  %v4306 = vpop.xlane.xlu0 %4305
  %4307 = vmax.xlane.f32.xlu0 %v4277
  %v4308 = vpop.xlane.xlu0 %4307
  %4309 = vmax.xlane.f32.xlu0 %v4278
  %v4310 = vpop.xlane.xlu0 %4309
  %v4311 = vsub.f32 %v4263, %v4280
  %v4312 = vsub.f32 %v4264, %v4282
  %v4313 = vsub.f32 %v4265, %v4284
  %v4314 = vsub.f32 %v4266, %v4286
  %v4315 = vsub.f32 %v4267, %v4288
  %v4316 = vsub.f32 %v4268, %v4290
  %v4317 = vsub.f32 %v4269, %v4292
  %v4318 = vsub.f32 %v4270, %v4294
  %v4319 = vsub.f32 %v4271, %v4296
  %v4320 = vsub.f32 %v4272, %v4298
  %v4321 = vsub.f32 %v4273, %v4300
  %v4322 = vsub.f32 %v4274, %v4302
  %v4323 = vsub.f32 %v4275, %v4304
  %v4324 = vsub.f32 %v4276, %v4306
  %v4325 = vsub.f32 %v4277, %v4308
  %v4326 = vsub.f32 %v4278, %v4310
  %v4327 = vmul.f32 %v4311, 1.442695
  %v4328 = vpow.pop %v4327
  %v4329 = vmul.f32 %v4312, 1.442695
  %v4330 = vpow.pop %v4329
  %v4331 = vmul.f32 %v4313, 1.442695
  %v4332 = vpow.pop %v4331
  %v4333 = vmul.f32 %v4314, 1.442695
  %v4334 = vpow.pop %v4333
  %v4335 = vmul.f32 %v4315, 1.442695
  %v4336 = vpow.pop %v4335
  %v4337 = vmul.f32 %v4316, 1.442695
  %v4338 = vpow.pop %v4337
  %v4339 = vmul.f32 %v4317, 1.442695
  %v4340 = vpow.pop %v4339
  %v4341 = vmul.f32 %v4318, 1.442695
  %v4342 = vpow.pop %v4341
  %v4343 = vmul.f32 %v4319, 1.442695
  %v4344 = vpow.pop %v4343
  %v4345 = vmul.f32 %v4320, 1.442695
  %v4346 = vpow.pop %v4345
  %v4347 = vmul.f32 %v4321, 1.442695
  %v4348 = vpow.pop %v4347
  %v4349 = vmul.f32 %v4322, 1.442695
  %v4350 = vpow.pop %v4349
  %v4351 = vmul.f32 %v4323, 1.442695
  %v4352 = vpow.pop %v4351
  %v4353 = vmul.f32 %v4324, 1.442695
  %v4354 = vpow.pop %v4353
  %v4355 = vmul.f32 %v4325, 1.442695
  %v4356 = vpow.pop %v4355
  %v4357 = vmul.f32 %v4326, 1.442695
  %v4358 = vpow.pop %v4357
  %4359 = vadd.xlane.f32.xlu0 %v4328
  %v4360 = vpop.xlane.xlu0 %4359
  %4361 = vadd.xlane.f32.xlu0 %v4330
  %v4362 = vpop.xlane.xlu0 %4361
  %4363 = vadd.xlane.f32.xlu0 %v4332
  %v4364 = vpop.xlane.xlu0 %4363
  %4365 = vadd.xlane.f32.xlu0 %v4334
  %v4366 = vpop.xlane.xlu0 %4365
  %4367 = vadd.xlane.f32.xlu0 %v4336
  %v4368 = vpop.xlane.xlu0 %4367
  %4369 = vadd.xlane.f32.xlu0 %v4338
  %v4370 = vpop.xlane.xlu0 %4369
  %4371 = vadd.xlane.f32.xlu0 %v4340
  %v4372 = vpop.xlane.xlu0 %4371
  %4373 = vadd.xlane.f32.xlu0 %v4342
  %v4374 = vpop.xlane.xlu0 %4373
  %4375 = vadd.xlane.f32.xlu0 %v4344
  %v4376 = vpop.xlane.xlu0 %4375
  %4377 = vadd.xlane.f32.xlu0 %v4346
  %v4378 = vpop.xlane.xlu0 %4377
  %4379 = vadd.xlane.f32.xlu0 %v4348
  %v4380 = vpop.xlane.xlu0 %4379
  %4381 = vadd.xlane.f32.xlu0 %v4350
  %v4382 = vpop.xlane.xlu0 %4381
  %4383 = vadd.xlane.f32.xlu0 %v4352
  %v4384 = vpop.xlane.xlu0 %4383
  %4385 = vadd.xlane.f32.xlu0 %v4354
  %v4386 = vpop.xlane.xlu0 %4385
  %4387 = vadd.xlane.f32.xlu0 %v4356
  %v4388 = vpop.xlane.xlu0 %4387
  %4389 = vadd.xlane.f32.xlu0 %v4358
  %v4390 = vpop.xlane.xlu0 %4389
  %v4391 = vrcp.pop %v4360
  %v4392 = vrcp.pop %v4362
  %v4393 = vrcp.pop %v4364
  %v4394 = vrcp.pop %v4366
  %v4395 = vrcp.pop %v4368
  %v4396 = vrcp.pop %v4370
  %v4397 = vrcp.pop %v4372
  %v4398 = vrcp.pop %v4374
  %v4399 = vrcp.pop %v4376
  %v4400 = vrcp.pop %v4378
  %v4401 = vrcp.pop %v4380
  %v4402 = vrcp.pop %v4382
  %v4403 = vrcp.pop %v4384
  %v4404 = vrcp.pop %v4386
  %v4405 = vrcp.pop %v4388
  %v4406 = vrcp.pop %v4390
  %v4407 = vmul.f32 %v4328, %v4391
  %v4408 = vmul.f32 %v4330, %v4392
  %v4409 = vmul.f32 %v4332, %v4393
  %v4410 = vmul.f32 %v4334, %v4394
  %v4411 = vmul.f32 %v4336, %v4395
  %v4412 = vmul.f32 %v4338, %v4396
  %v4413 = vmul.f32 %v4340, %v4397
  %v4414 = vmul.f32 %v4342, %v4398
  %v4415 = vmul.f32 %v4344, %v4399
  %v4416 = vmul.f32 %v4346, %v4400
  %v4417 = vmul.f32 %v4348, %v4401
  %v4418 = vmul.f32 %v4350, %v4402
  %v4419 = vmul.f32 %v4352, %v4403
  %v4420 = vmul.f32 %v4354, %v4404
  %v4421 = vmul.f32 %v4356, %v4405
  %v4422 = vmul.f32 %v4358, %v4406
  %v4423 = vpack.c.bf16 %v4408, %v4407
  %v4424 = vpack.c.bf16 %v4410, %v4409
  %v4425 = vpack.c.bf16 %v4412, %v4411
  %v4426 = vpack.c.bf16 %v4414, %v4413
  %v4427 = vpack.c.bf16 %v4416, %v4415
  %v4428 = vpack.c.bf16 %v4418, %v4417
  %v4429 = vpack.c.bf16 %v4420, %v4419
  %v4430 = vpack.c.bf16 %v4422, %v4421
  %4431 = vrot.lane.b32.xlu0 %v4094, 64
  %v4432 = vpop.permute.xlu0 %4431
  %4433 = vrot.lane.b32.xlu0 %v4095, 64
  %v4434 = vpop.permute.xlu0 %4433
  %4435 = vrot.lane.b32.xlu0 %v4096, 64
  %v4436 = vpop.permute.xlu0 %4435
  %4437 = vrot.lane.b32.xlu0 %v4097, 64
  %v4438 = vpop.permute.xlu0 %4437
  %4439 = vrot.lane.b32.xlu0 %v4098, 64
  %v4440 = vpop.permute.xlu0 %4439
  %4441 = vrot.lane.b32.xlu0 %v4099, 64
  %v4442 = vpop.permute.xlu0 %4441
  %4443 = vrot.lane.b32.xlu0 %v4100, 64
  %v4444 = vpop.permute.xlu0 %4443
  %4445 = vrot.lane.b32.xlu0 %v4101, 64
  %v4446 = vpop.permute.xlu0 %4445
  %4455 = vmatpush.bf16.msra.mxu0 %v4446
  %4456 = vmatpush.bf16.msra.mxu0 %v4444
  %4457 = vmatpush.bf16.msra.mxu0 %v4442
  %4458 = vmatpush.bf16.msra.mxu0 %v4440
  %4459 = vmatpush.bf16.msra.mxu0 %v4438
  %4460 = vmatpush.bf16.msra.mxu0 %v4436
  %4461 = vmatpush.bf16.msra.mxu0 %v4434
  %4462 = vmatpush.bf16.msra.mxu0 %v4432
  %4463 = vmatmul.bf16.gmra.mxu0 %v4423
  %v4464 = vpop.f32.mrf.mxu0
  %v4465 = vadd.f32 0.0, %v4464
  %v4466 = vpop.f32.mrf.mxu0
  %v4467 = vadd.f32 0.0, %v4466
  %4468 = vmatmul.bf16.gmra.mxu0 %v4424
  %v4469 = vpop.f32.mrf.mxu0
  %v4470 = vadd.f32 0.0, %v4469
  %v4471 = vpop.f32.mrf.mxu0
  %v4472 = vadd.f32 0.0, %v4471
  %4473 = vmatmul.bf16.gmra.mxu0 %v4425
  %v4474 = vpop.f32.mrf.mxu0
  %v4475 = vadd.f32 0.0, %v4474
  %v4476 = vpop.f32.mrf.mxu0
  %v4477 = vadd.f32 0.0, %v4476
  %4478 = vmatmul.bf16.gmra.mxu0 %v4426
  %v4479 = vpop.f32.mrf.mxu0
  %v4480 = vadd.f32 0.0, %v4479
  %v4481 = vpop.f32.mrf.mxu0
  %v4482 = vadd.f32 0.0, %v4481
  %4483 = vmatmul.bf16.gmra.mxu0 %v4427
  %v4484 = vpop.f32.mrf.mxu0
  %v4485 = vadd.f32 0.0, %v4484
  %v4486 = vpop.f32.mrf.mxu0
  %v4487 = vadd.f32 0.0, %v4486
  %4488 = vmatmul.bf16.gmra.mxu0 %v4428
  %v4489 = vpop.f32.mrf.mxu0
  %v4490 = vadd.f32 0.0, %v4489
  %v4491 = vpop.f32.mrf.mxu0
  %v4492 = vadd.f32 0.0, %v4491
  %4493 = vmatmul.bf16.gmra.mxu0 %v4429
  %v4494 = vpop.f32.mrf.mxu0
  %v4495 = vadd.f32 0.0, %v4494
  %v4496 = vpop.f32.mrf.mxu0
  %v4497 = vadd.f32 0.0, %v4496
  %4498 = vmatmul.bf16.gmra.mxu0 %v4430
  %v4499 = vpop.f32.mrf.mxu0
  %v4500 = vadd.f32 0.0, %v4499
  %v4501 = vpop.f32.mrf.mxu0
  %v4502 = vadd.f32 0.0, %v4501
  %4503 = vdwg.mxu0
  %v4504 = vmul.f32 %v1042, %v4465
  %v4505 = vmul.f32 %v1042, %v4467
  %v4506 = vmul.f32 %v1042, %v4470
  %v4507 = vmul.f32 %v1042, %v4472
  %v4508 = vmul.f32 %v1042, %v4475
  %v4509 = vmul.f32 %v1042, %v4477
  %v4510 = vmul.f32 %v1042, %v4480
  %v4511 = vmul.f32 %v1042, %v4482
  %v4512 = vmul.f32 %v1042, %v4485
  %v4513 = vmul.f32 %v1042, %v4487
  %v4514 = vmul.f32 %v1042, %v4490
  %v4515 = vmul.f32 %v1042, %v4492
  %v4516 = vmul.f32 %v1042, %v4495
  %v4517 = vmul.f32 %v1042, %v4497
  %v4518 = vmul.f32 %v1042, %v4500
  %v4519 = vmul.f32 %v1042, %v4502
  %v4520 = vadd.f32 %v4504, 0.0
  %v4521 = vadd.f32 %v4505, 0.0
  %v4522 = vadd.f32 %v4506, 0.0
  %v4523 = vadd.f32 %v4507, 0.0
  %v4524 = vadd.f32 %v4508, 0.0
  %v4525 = vadd.f32 %v4509, 0.0
  %v4526 = vadd.f32 %v4510, 0.0
  %v4527 = vadd.f32 %v4511, 0.0
  %v4528 = vadd.f32 %v4512, 0.0
  %v4529 = vadd.f32 %v4513, 0.0
  %v4530 = vadd.f32 %v4514, 0.0
  %v4531 = vadd.f32 %v4515, 0.0
  %v4532 = vadd.f32 %v4516, 0.0
  %v4533 = vadd.f32 %v4517, 0.0
  %v4534 = vadd.f32 %v4518, 0.0
  %v4535 = vadd.f32 %v4519, 0.0
  %v4536 = vmul.f32 %v4055, %v1047
  %v4537 = vmul.f32 %v4057, %v1047
  %v4538 = vmul.f32 %v4060, %v1047
  %v4539 = vmul.f32 %v4062, %v1047
  %v4540 = vmul.f32 %v4065, %v1047
  %v4541 = vmul.f32 %v4067, %v1047
  %v4542 = vmul.f32 %v4070, %v1047
  %v4543 = vmul.f32 %v4072, %v1047
  %v4544 = vmul.f32 %v4075, %v1047
  %v4545 = vmul.f32 %v4077, %v1047
  %v4546 = vmul.f32 %v4080, %v1047
  %v4547 = vmul.f32 %v4082, %v1047
  %v4548 = vmul.f32 %v4085, %v1047
  %v4549 = vmul.f32 %v4087, %v1047
  %v4550 = vmul.f32 %v4090, %v1047
  %v4551 = vmul.f32 %v4092, %v1047
  %v4552 = vpack.c.bf16 %v4537, %v4536
  %v4553 = vpack.c.bf16 %v4539, %v4538
  %v4554 = vpack.c.bf16 %v4541, %v4540
  %v4555 = vpack.c.bf16 %v4543, %v4542
  %v4556 = vpack.c.bf16 %v4545, %v4544
  %v4557 = vpack.c.bf16 %v4547, %v4546
  %v4558 = vpack.c.bf16 %v4549, %v4548
  %v4559 = vpack.c.bf16 %v4551, %v4550
  %v4561 = vsel %vm1102, %v4552, 0
  %v4564 = vsel %vm1102, %v4553, 0
  %v4567 = vsel %vm1102, %v4554, 0
  %v4570 = vsel %vm1102, %v4555, 0
  %v4573 = vsel %vm1102, %v4556, 0
  %v4576 = vsel %vm1102, %v4557, 0
  %v4579 = vsel %vm1102, %v4558, 0
  %v4582 = vsel %vm1102, %v4559, 0
  %4584 = vmatpush.bf16.xpose.msra.mxu0 %v4196
  %4585 = vmatpush.bf16.xpose.msra.mxu0 %v4193
  %4586 = vmatpush.bf16.xpose.msra.mxu0 %v4190
  %4587 = vmatpush.bf16.xpose.msra.mxu0 %v4187
  %4588 = vmatpush.bf16.xpose.msra.mxu0 %v4184
  %4589 = vmatpush.bf16.xpose.msra.mxu0 %v4181
  %4590 = vmatpush.bf16.xpose.msra.mxu0 %v4178
  %4591 = vmatpush.bf16.xpose.msra.mxu0 %v4175
  %4592 = vmatmul.bf16.gmra.mxu0 %v4561
  %v4593 = vpop.f32.mrf.mxu0
  %v4594 = vadd.f32 0.0, %v4593
  %v4595 = vpop.f32.mrf.mxu0
  %v4596 = vadd.f32 0.0, %v4595
  %4597 = vmatmul.bf16.gmra.mxu0 %v4564
  %v4598 = vpop.f32.mrf.mxu0
  %v4599 = vadd.f32 0.0, %v4598
  %v4600 = vpop.f32.mrf.mxu0
  %v4601 = vadd.f32 0.0, %v4600
  %4602 = vmatmul.bf16.gmra.mxu0 %v4567
  %v4603 = vpop.f32.mrf.mxu0
  %v4604 = vadd.f32 0.0, %v4603
  %v4605 = vpop.f32.mrf.mxu0
  %v4606 = vadd.f32 0.0, %v4605
  %4607 = vmatmul.bf16.gmra.mxu0 %v4570
  %v4608 = vpop.f32.mrf.mxu0
  %v4609 = vadd.f32 0.0, %v4608
  %v4610 = vpop.f32.mrf.mxu0
  %v4611 = vadd.f32 0.0, %v4610
  %4612 = vmatmul.bf16.gmra.mxu0 %v4573
  %v4613 = vpop.f32.mrf.mxu0
  %v4614 = vadd.f32 0.0, %v4613
  %v4615 = vpop.f32.mrf.mxu0
  %v4616 = vadd.f32 0.0, %v4615
  %4617 = vmatmul.bf16.gmra.mxu0 %v4576
  %v4618 = vpop.f32.mrf.mxu0
  %v4619 = vadd.f32 0.0, %v4618
  %v4620 = vpop.f32.mrf.mxu0
  %v4621 = vadd.f32 0.0, %v4620
  %4622 = vmatmul.bf16.gmra.mxu0 %v4579
  %v4623 = vpop.f32.mrf.mxu0
  %v4624 = vadd.f32 0.0, %v4623
  %v4625 = vpop.f32.mrf.mxu0
  %v4626 = vadd.f32 0.0, %v4625
  %4627 = vmatmul.bf16.gmra.mxu0 %v4582
  %v4628 = vpop.f32.mrf.mxu0
  %v4629 = vadd.f32 0.0, %v4628
  %v4630 = vpop.f32.mrf.mxu0
  %v4631 = vadd.f32 0.0, %v4630
  %4632 = vdwg.mxu0
  %v4633 = vmul.f32 %v4594, 0.35355338
  %v4634 = vmul.f32 %v4596, 0.35355338
  %v4635 = vmul.f32 %v4599, 0.35355338
  %v4636 = vmul.f32 %v4601, 0.35355338
  %v4637 = vmul.f32 %v4604, 0.35355338
  %v4638 = vmul.f32 %v4606, 0.35355338
  %v4639 = vmul.f32 %v4609, 0.35355338
  %v4640 = vmul.f32 %v4611, 0.35355338
  %v4641 = vmul.f32 %v4614, 0.35355338
  %v4642 = vmul.f32 %v4616, 0.35355338
  %v4643 = vmul.f32 %v4619, 0.35355338
  %v4644 = vmul.f32 %v4621, 0.35355338
  %v4645 = vmul.f32 %v4624, 0.35355338
  %v4646 = vmul.f32 %v4626, 0.35355338
  %v4647 = vmul.f32 %v4629, 0.35355338
  %v4648 = vmul.f32 %v4631, 0.35355338
  %v4649 = vadd.f32 %v4633, %v1058
  %v4650 = vadd.f32 %v4634, %v1059
  %v4651 = vadd.f32 %v4635, %v1060
  %v4652 = vadd.f32 %v4636, %v1061
  %v4653 = vadd.f32 %v4637, %v1062
  %v4654 = vadd.f32 %v4638, %v1063
  %v4655 = vadd.f32 %v4639, %v1064
  %v4656 = vadd.f32 %v4640, %v1065
  %v4657 = vadd.f32 %v4641, %v1066
  %v4658 = vadd.f32 %v4642, %v1067
  %v4659 = vadd.f32 %v4643, %v1068
  %v4660 = vadd.f32 %v4644, %v1069
  %v4661 = vadd.f32 %v4645, %v1070
  %v4662 = vadd.f32 %v4646, %v1071
  %v4663 = vadd.f32 %v4647, %v1072
  %v4664 = vadd.f32 %v4648, %v1073
  %4665 = vmax.xlane.f32.xlu0 %v4649
  %v4666 = vpop.xlane.xlu0 %4665
  %4667 = vmax.xlane.f32.xlu0 %v4650
  %v4668 = vpop.xlane.xlu0 %4667
  %4669 = vmax.xlane.f32.xlu0 %v4651
  %v4670 = vpop.xlane.xlu0 %4669
  %4671 = vmax.xlane.f32.xlu0 %v4652
  %v4672 = vpop.xlane.xlu0 %4671
  %4673 = vmax.xlane.f32.xlu0 %v4653
  %v4674 = vpop.xlane.xlu0 %4673
  %4675 = vmax.xlane.f32.xlu0 %v4654
  %v4676 = vpop.xlane.xlu0 %4675
  %4677 = vmax.xlane.f32.xlu0 %v4655
  %v4678 = vpop.xlane.xlu0 %4677
  %4679 = vmax.xlane.f32.xlu0 %v4656
  %v4680 = vpop.xlane.xlu0 %4679
  %4681 = vmax.xlane.f32.xlu0 %v4657
  %v4682 = vpop.xlane.xlu0 %4681
  %4683 = vmax.xlane.f32.xlu0 %v4658
  %v4684 = vpop.xlane.xlu0 %4683
  %4685 = vmax.xlane.f32.xlu0 %v4659
  %v4686 = vpop.xlane.xlu0 %4685
  %4687 = vmax.xlane.f32.xlu0 %v4660
  %v4688 = vpop.xlane.xlu0 %4687
  %4689 = vmax.xlane.f32.xlu0 %v4661
  %v4690 = vpop.xlane.xlu0 %4689
  %4691 = vmax.xlane.f32.xlu0 %v4662
  %v4692 = vpop.xlane.xlu0 %4691
  %4693 = vmax.xlane.f32.xlu0 %v4663
  %v4694 = vpop.xlane.xlu0 %4693
  %4695 = vmax.xlane.f32.xlu0 %v4664
  %v4696 = vpop.xlane.xlu0 %4695
  %v4697 = vsub.f32 %v4649, %v4666
  %v4698 = vsub.f32 %v4650, %v4668
  %v4699 = vsub.f32 %v4651, %v4670
  %v4700 = vsub.f32 %v4652, %v4672
  %v4701 = vsub.f32 %v4653, %v4674
  %v4702 = vsub.f32 %v4654, %v4676
  %v4703 = vsub.f32 %v4655, %v4678
  %v4704 = vsub.f32 %v4656, %v4680
  %v4705 = vsub.f32 %v4657, %v4682
  %v4706 = vsub.f32 %v4658, %v4684
  %v4707 = vsub.f32 %v4659, %v4686
  %v4708 = vsub.f32 %v4660, %v4688
  %v4709 = vsub.f32 %v4661, %v4690
  %v4710 = vsub.f32 %v4662, %v4692
  %v4711 = vsub.f32 %v4663, %v4694
  %v4712 = vsub.f32 %v4664, %v4696
  %v4713 = vmul.f32 %v4697, 1.442695
  %v4714 = vpow.pop %v4713
  %v4715 = vmul.f32 %v4698, 1.442695
  %v4716 = vpow.pop %v4715
  %v4717 = vmul.f32 %v4699, 1.442695
  %v4718 = vpow.pop %v4717
  %v4719 = vmul.f32 %v4700, 1.442695
  %v4720 = vpow.pop %v4719
  %v4721 = vmul.f32 %v4701, 1.442695
  %v4722 = vpow.pop %v4721
  %v4723 = vmul.f32 %v4702, 1.442695
  %v4724 = vpow.pop %v4723
  %v4725 = vmul.f32 %v4703, 1.442695
  %v4726 = vpow.pop %v4725
  %v4727 = vmul.f32 %v4704, 1.442695
  %v4728 = vpow.pop %v4727
  %v4729 = vmul.f32 %v4705, 1.442695
  %v4730 = vpow.pop %v4729
  %v4731 = vmul.f32 %v4706, 1.442695
  %v4732 = vpow.pop %v4731
  %v4733 = vmul.f32 %v4707, 1.442695
  %v4734 = vpow.pop %v4733
  %v4735 = vmul.f32 %v4708, 1.442695
  %v4736 = vpow.pop %v4735
  %v4737 = vmul.f32 %v4709, 1.442695
  %v4738 = vpow.pop %v4737
  %v4739 = vmul.f32 %v4710, 1.442695
  %v4740 = vpow.pop %v4739
  %v4741 = vmul.f32 %v4711, 1.442695
  %v4742 = vpow.pop %v4741
  %v4743 = vmul.f32 %v4712, 1.442695
  %v4744 = vpow.pop %v4743
  %4745 = vadd.xlane.f32.xlu0 %v4714
  %v4746 = vpop.xlane.xlu0 %4745
  %4747 = vadd.xlane.f32.xlu0 %v4716
  %v4748 = vpop.xlane.xlu0 %4747
  %4749 = vadd.xlane.f32.xlu0 %v4718
  %v4750 = vpop.xlane.xlu0 %4749
  %4751 = vadd.xlane.f32.xlu0 %v4720
  %v4752 = vpop.xlane.xlu0 %4751
  %4753 = vadd.xlane.f32.xlu0 %v4722
  %v4754 = vpop.xlane.xlu0 %4753
  %4755 = vadd.xlane.f32.xlu0 %v4724
  %v4756 = vpop.xlane.xlu0 %4755
  %4757 = vadd.xlane.f32.xlu0 %v4726
  %v4758 = vpop.xlane.xlu0 %4757
  %4759 = vadd.xlane.f32.xlu0 %v4728
  %v4760 = vpop.xlane.xlu0 %4759
  %4761 = vadd.xlane.f32.xlu0 %v4730
  %v4762 = vpop.xlane.xlu0 %4761
  %4763 = vadd.xlane.f32.xlu0 %v4732
  %v4764 = vpop.xlane.xlu0 %4763
  %4765 = vadd.xlane.f32.xlu0 %v4734
  %v4766 = vpop.xlane.xlu0 %4765
  %4767 = vadd.xlane.f32.xlu0 %v4736
  %v4768 = vpop.xlane.xlu0 %4767
  %4769 = vadd.xlane.f32.xlu0 %v4738
  %v4770 = vpop.xlane.xlu0 %4769
  %4771 = vadd.xlane.f32.xlu0 %v4740
  %v4772 = vpop.xlane.xlu0 %4771
  %4773 = vadd.xlane.f32.xlu0 %v4742
  %v4774 = vpop.xlane.xlu0 %4773
  %4775 = vadd.xlane.f32.xlu0 %v4744
  %v4776 = vpop.xlane.xlu0 %4775
  %v4777 = vrcp.pop %v4746
  %v4778 = vrcp.pop %v4748
  %v4779 = vrcp.pop %v4750
  %v4780 = vrcp.pop %v4752
  %v4781 = vrcp.pop %v4754
  %v4782 = vrcp.pop %v4756
  %v4783 = vrcp.pop %v4758
  %v4784 = vrcp.pop %v4760
  %v4785 = vrcp.pop %v4762
  %v4786 = vrcp.pop %v4764
  %v4787 = vrcp.pop %v4766
  %v4788 = vrcp.pop %v4768
  %v4789 = vrcp.pop %v4770
  %v4790 = vrcp.pop %v4772
  %v4791 = vrcp.pop %v4774
  %v4792 = vrcp.pop %v4776
  %v4793 = vmul.f32 %v4714, %v4777
  %v4794 = vmul.f32 %v4716, %v4778
  %v4795 = vmul.f32 %v4718, %v4779
  %v4796 = vmul.f32 %v4720, %v4780
  %v4797 = vmul.f32 %v4722, %v4781
  %v4798 = vmul.f32 %v4724, %v4782
  %v4799 = vmul.f32 %v4726, %v4783
  %v4800 = vmul.f32 %v4728, %v4784
  %v4801 = vmul.f32 %v4730, %v4785
  %v4802 = vmul.f32 %v4732, %v4786
  %v4803 = vmul.f32 %v4734, %v4787
  %v4804 = vmul.f32 %v4736, %v4788
  %v4805 = vmul.f32 %v4738, %v4789
  %v4806 = vmul.f32 %v4740, %v4790
  %v4807 = vmul.f32 %v4742, %v4791
  %v4808 = vmul.f32 %v4744, %v4792
  %v4809 = vpack.c.bf16 %v4794, %v4793
  %v4810 = vpack.c.bf16 %v4796, %v4795
  %v4811 = vpack.c.bf16 %v4798, %v4797
  %v4812 = vpack.c.bf16 %v4800, %v4799
  %v4813 = vpack.c.bf16 %v4802, %v4801
  %v4814 = vpack.c.bf16 %v4804, %v4803
  %v4815 = vpack.c.bf16 %v4806, %v4805
  %v4816 = vpack.c.bf16 %v4808, %v4807
  %4817 = vmatpush.bf16.msra.mxu0 %v4446
  %4818 = vmatpush.bf16.msra.mxu0 %v4444
  %4819 = vmatpush.bf16.msra.mxu0 %v4442
  %4820 = vmatpush.bf16.msra.mxu0 %v4440
  %4821 = vmatpush.bf16.msra.mxu0 %v4438
  %4822 = vmatpush.bf16.msra.mxu0 %v4436
  %4823 = vmatpush.bf16.msra.mxu0 %v4434
  %4824 = vmatpush.bf16.msra.mxu0 %v4432
  %4825 = vmatmul.bf16.gmra.mxu0 %v4809
  %v4826 = vpop.f32.mrf.mxu0
  %v4827 = vadd.f32 0.0, %v4826
  %v4828 = vpop.f32.mrf.mxu0
  %v4829 = vadd.f32 0.0, %v4828
  %4830 = vmatmul.bf16.gmra.mxu0 %v4810
  %v4831 = vpop.f32.mrf.mxu0
  %v4832 = vadd.f32 0.0, %v4831
  %v4833 = vpop.f32.mrf.mxu0
  %v4834 = vadd.f32 0.0, %v4833
  %4835 = vmatmul.bf16.gmra.mxu0 %v4811
  %v4836 = vpop.f32.mrf.mxu0
  %v4837 = vadd.f32 0.0, %v4836
  %v4838 = vpop.f32.mrf.mxu0
  %v4839 = vadd.f32 0.0, %v4838
  %4840 = vmatmul.bf16.gmra.mxu0 %v4812
  %v4841 = vpop.f32.mrf.mxu0
  %v4842 = vadd.f32 0.0, %v4841
  %v4843 = vpop.f32.mrf.mxu0
  %v4844 = vadd.f32 0.0, %v4843
  %4845 = vmatmul.bf16.gmra.mxu0 %v4813
  %v4846 = vpop.f32.mrf.mxu0
  %v4847 = vadd.f32 0.0, %v4846
  %v4848 = vpop.f32.mrf.mxu0
  %v4849 = vadd.f32 0.0, %v4848
  %4850 = vmatmul.bf16.gmra.mxu0 %v4814
  %v4851 = vpop.f32.mrf.mxu0
  %v4852 = vadd.f32 0.0, %v4851
  %v4853 = vpop.f32.mrf.mxu0
  %v4854 = vadd.f32 0.0, %v4853
  %4855 = vmatmul.bf16.gmra.mxu0 %v4815
  %v4856 = vpop.f32.mrf.mxu0
  %v4857 = vadd.f32 0.0, %v4856
  %v4858 = vpop.f32.mrf.mxu0
  %v4859 = vadd.f32 0.0, %v4858
  %4860 = vmatmul.bf16.gmra.mxu0 %v4816
  %v4861 = vpop.f32.mrf.mxu0
  %v4862 = vadd.f32 0.0, %v4861
  %v4863 = vpop.f32.mrf.mxu0
  %v4864 = vadd.f32 0.0, %v4863
  %4865 = vdwg.mxu0
  %v4866 = vmul.f32 %v1047, %v4827
  %v4867 = vmul.f32 %v1047, %v4829
  %v4868 = vmul.f32 %v1047, %v4832
  %v4869 = vmul.f32 %v1047, %v4834
  %v4870 = vmul.f32 %v1047, %v4837
  %v4871 = vmul.f32 %v1047, %v4839
  %v4872 = vmul.f32 %v1047, %v4842
  %v4873 = vmul.f32 %v1047, %v4844
  %v4874 = vmul.f32 %v1047, %v4847
  %v4875 = vmul.f32 %v1047, %v4849
  %v4876 = vmul.f32 %v1047, %v4852
  %v4877 = vmul.f32 %v1047, %v4854
  %v4878 = vmul.f32 %v1047, %v4857
  %v4879 = vmul.f32 %v1047, %v4859
  %v4880 = vmul.f32 %v1047, %v4862
  %v4881 = vmul.f32 %v1047, %v4864
  %v4882 = vadd.f32 %v4520, %v4866
  %v4883 = vadd.f32 %v4521, %v4867
  %v4884 = vadd.f32 %v4522, %v4868
  %v4885 = vadd.f32 %v4523, %v4869
  %v4886 = vadd.f32 %v4524, %v4870
  %v4887 = vadd.f32 %v4525, %v4871
  %v4888 = vadd.f32 %v4526, %v4872
  %v4889 = vadd.f32 %v4527, %v4873
  %v4890 = vadd.f32 %v4528, %v4874
  %v4891 = vadd.f32 %v4529, %v4875
  %v4892 = vadd.f32 %v4530, %v4876
  %v4893 = vadd.f32 %v4531, %v4877
  %v4894 = vadd.f32 %v4532, %v4878
  %v4895 = vadd.f32 %v4533, %v4879
  %v4896 = vadd.f32 %v4534, %v4880
  %v4897 = vadd.f32 %v4535, %v4881
  %v4898 = vmul.f32 %v4055, %v1052
  %v4899 = vmul.f32 %v4057, %v1052
  %v4900 = vmul.f32 %v4060, %v1052
  %v4901 = vmul.f32 %v4062, %v1052
  %v4902 = vmul.f32 %v4065, %v1052
  %v4903 = vmul.f32 %v4067, %v1052
  %v4904 = vmul.f32 %v4070, %v1052
  %v4905 = vmul.f32 %v4072, %v1052
  %v4906 = vmul.f32 %v4075, %v1052
  %v4907 = vmul.f32 %v4077, %v1052
  %v4908 = vmul.f32 %v4080, %v1052
  %v4909 = vmul.f32 %v4082, %v1052
  %v4910 = vmul.f32 %v4085, %v1052
  %v4911 = vmul.f32 %v4087, %v1052
  %v4912 = vmul.f32 %v4090, %v1052
  %v4913 = vmul.f32 %v4092, %v1052
  %v4914 = vpack.c.bf16 %v4899, %v4898
  %v4915 = vpack.c.bf16 %v4901, %v4900
  %v4916 = vpack.c.bf16 %v4903, %v4902
  %v4917 = vpack.c.bf16 %v4905, %v4904
  %v4918 = vpack.c.bf16 %v4907, %v4906
  %v4919 = vpack.c.bf16 %v4909, %v4908
  %v4920 = vpack.c.bf16 %v4911, %v4910
  %v4921 = vpack.c.bf16 %v4913, %v4912
  %v4923 = vsel %vm1102, %v4914, 0
  %v4926 = vsel %vm1102, %v4915, 0
  %v4929 = vsel %vm1102, %v4916, 0
  %v4932 = vsel %vm1102, %v4917, 0
  %v4935 = vsel %vm1102, %v4918, 0
  %v4938 = vsel %vm1102, %v4919, 0
  %v4941 = vsel %vm1102, %v4920, 0
  %v4944 = vsel %vm1102, %v4921, 0
  %4946 = vmatpush.bf16.xpose.msra.mxu0 %v4196
  %4947 = vmatpush.bf16.xpose.msra.mxu0 %v4193
  %4948 = vmatpush.bf16.xpose.msra.mxu0 %v4190
  %4949 = vmatpush.bf16.xpose.msra.mxu0 %v4187
  %4950 = vmatpush.bf16.xpose.msra.mxu0 %v4184
  %4951 = vmatpush.bf16.xpose.msra.mxu0 %v4181
  %4952 = vmatpush.bf16.xpose.msra.mxu0 %v4178
  %4953 = vmatpush.bf16.xpose.msra.mxu0 %v4175
  %4954 = vmatmul.bf16.gmra.mxu0 %v4923
  %v4955 = vpop.f32.mrf.mxu0
  %v4956 = vadd.f32 0.0, %v4955
  %v4957 = vpop.f32.mrf.mxu0
  %v4958 = vadd.f32 0.0, %v4957
  %4959 = vmatmul.bf16.gmra.mxu0 %v4926
  %v4960 = vpop.f32.mrf.mxu0
  %v4961 = vadd.f32 0.0, %v4960
  %v4962 = vpop.f32.mrf.mxu0
  %v4963 = vadd.f32 0.0, %v4962
  %4964 = vmatmul.bf16.gmra.mxu0 %v4929
  %v4965 = vpop.f32.mrf.mxu0
  %v4966 = vadd.f32 0.0, %v4965
  %v4967 = vpop.f32.mrf.mxu0
  %v4968 = vadd.f32 0.0, %v4967
  %4969 = vmatmul.bf16.gmra.mxu0 %v4932
  %v4970 = vpop.f32.mrf.mxu0
  %v4971 = vadd.f32 0.0, %v4970
  %v4972 = vpop.f32.mrf.mxu0
  %v4973 = vadd.f32 0.0, %v4972
  %4974 = vmatmul.bf16.gmra.mxu0 %v4935
  %v4975 = vpop.f32.mrf.mxu0
  %v4976 = vadd.f32 0.0, %v4975
  %v4977 = vpop.f32.mrf.mxu0
  %v4978 = vadd.f32 0.0, %v4977
  %4979 = vmatmul.bf16.gmra.mxu0 %v4938
  %v4980 = vpop.f32.mrf.mxu0
  %v4981 = vadd.f32 0.0, %v4980
  %v4982 = vpop.f32.mrf.mxu0
  %v4983 = vadd.f32 0.0, %v4982
  %4984 = vmatmul.bf16.gmra.mxu0 %v4941
  %v4985 = vpop.f32.mrf.mxu0
  %v4986 = vadd.f32 0.0, %v4985
  %v4987 = vpop.f32.mrf.mxu0
  %v4988 = vadd.f32 0.0, %v4987
  %4989 = vmatmul.bf16.gmra.mxu0 %v4944
  %v4990 = vpop.f32.mrf.mxu0
  %v4991 = vadd.f32 0.0, %v4990
  %v4992 = vpop.f32.mrf.mxu0
  %v4993 = vadd.f32 0.0, %v4992
  %4994 = vdwg.mxu0
  %v4995 = vmul.f32 %v4956, 0.35355338
  %v4996 = vmul.f32 %v4958, 0.35355338
  %v4997 = vmul.f32 %v4961, 0.35355338
  %v4998 = vmul.f32 %v4963, 0.35355338
  %v4999 = vmul.f32 %v4966, 0.35355338
  %v5000 = vmul.f32 %v4968, 0.35355338
  %v5001 = vmul.f32 %v4971, 0.35355338
  %v5002 = vmul.f32 %v4973, 0.35355338
  %v5003 = vmul.f32 %v4976, 0.35355338
  %v5004 = vmul.f32 %v4978, 0.35355338
  %v5005 = vmul.f32 %v4981, 0.35355338
  %v5006 = vmul.f32 %v4983, 0.35355338
  %v5007 = vmul.f32 %v4986, 0.35355338
  %v5008 = vmul.f32 %v4988, 0.35355338
  %v5009 = vmul.f32 %v4991, 0.35355338
  %v5010 = vmul.f32 %v4993, 0.35355338
  %v5011 = vadd.f32 %v4995, %v1058
  %v5012 = vadd.f32 %v4996, %v1059
  %v5013 = vadd.f32 %v4997, %v1060
  %v5014 = vadd.f32 %v4998, %v1061
  %v5015 = vadd.f32 %v4999, %v1062
  %v5016 = vadd.f32 %v5000, %v1063
  %v5017 = vadd.f32 %v5001, %v1064
  %v5018 = vadd.f32 %v5002, %v1065
  %v5019 = vadd.f32 %v5003, %v1066
  %v5020 = vadd.f32 %v5004, %v1067
  %v5021 = vadd.f32 %v5005, %v1068
  %v5022 = vadd.f32 %v5006, %v1069
  %v5023 = vadd.f32 %v5007, %v1070
  %v5024 = vadd.f32 %v5008, %v1071
  %v5025 = vadd.f32 %v5009, %v1072
  %v5026 = vadd.f32 %v5010, %v1073
  %5027 = vmax.xlane.f32.xlu0 %v5011
  %v5028 = vpop.xlane.xlu0 %5027
  %5029 = vmax.xlane.f32.xlu0 %v5012
  %v5030 = vpop.xlane.xlu0 %5029
  %5031 = vmax.xlane.f32.xlu0 %v5013
  %v5032 = vpop.xlane.xlu0 %5031
  %5033 = vmax.xlane.f32.xlu0 %v5014
  %v5034 = vpop.xlane.xlu0 %5033
  %5035 = vmax.xlane.f32.xlu0 %v5015
  %v5036 = vpop.xlane.xlu0 %5035
  %5037 = vmax.xlane.f32.xlu0 %v5016
  %v5038 = vpop.xlane.xlu0 %5037
  %5039 = vmax.xlane.f32.xlu0 %v5017
  %v5040 = vpop.xlane.xlu0 %5039
  %5041 = vmax.xlane.f32.xlu0 %v5018
  %v5042 = vpop.xlane.xlu0 %5041
  %5043 = vmax.xlane.f32.xlu0 %v5019
  %v5044 = vpop.xlane.xlu0 %5043
  %5045 = vmax.xlane.f32.xlu0 %v5020
  %v5046 = vpop.xlane.xlu0 %5045
  %5047 = vmax.xlane.f32.xlu0 %v5021
  %v5048 = vpop.xlane.xlu0 %5047
  %5049 = vmax.xlane.f32.xlu0 %v5022
  %v5050 = vpop.xlane.xlu0 %5049
  %5051 = vmax.xlane.f32.xlu0 %v5023
  %v5052 = vpop.xlane.xlu0 %5051
  %5053 = vmax.xlane.f32.xlu0 %v5024
  %v5054 = vpop.xlane.xlu0 %5053
  %5055 = vmax.xlane.f32.xlu0 %v5025
  %v5056 = vpop.xlane.xlu0 %5055
  %5057 = vmax.xlane.f32.xlu0 %v5026
  %v5058 = vpop.xlane.xlu0 %5057
  %v5059 = vsub.f32 %v5011, %v5028
  %v5060 = vsub.f32 %v5012, %v5030
  %v5061 = vsub.f32 %v5013, %v5032
  %v5062 = vsub.f32 %v5014, %v5034
  %v5063 = vsub.f32 %v5015, %v5036
  %v5064 = vsub.f32 %v5016, %v5038
  %v5065 = vsub.f32 %v5017, %v5040
  %v5066 = vsub.f32 %v5018, %v5042
  %v5067 = vsub.f32 %v5019, %v5044
  %v5068 = vsub.f32 %v5020, %v5046
  %v5069 = vsub.f32 %v5021, %v5048
  %v5070 = vsub.f32 %v5022, %v5050
  %v5071 = vsub.f32 %v5023, %v5052
  %v5072 = vsub.f32 %v5024, %v5054
  %v5073 = vsub.f32 %v5025, %v5056
  %v5074 = vsub.f32 %v5026, %v5058
  %v5075 = vmul.f32 %v5059, 1.442695
  %v5076 = vpow.pop %v5075
  %v5077 = vmul.f32 %v5060, 1.442695
  %v5078 = vpow.pop %v5077
  %v5079 = vmul.f32 %v5061, 1.442695
  %v5080 = vpow.pop %v5079
  %v5081 = vmul.f32 %v5062, 1.442695
  %v5082 = vpow.pop %v5081
  %v5083 = vmul.f32 %v5063, 1.442695
  %v5084 = vpow.pop %v5083
  %v5085 = vmul.f32 %v5064, 1.442695
  %v5086 = vpow.pop %v5085
  %v5087 = vmul.f32 %v5065, 1.442695
  %v5088 = vpow.pop %v5087
  %v5089 = vmul.f32 %v5066, 1.442695
  %v5090 = vpow.pop %v5089
  %v5091 = vmul.f32 %v5067, 1.442695
  %v5092 = vpow.pop %v5091
  %v5093 = vmul.f32 %v5068, 1.442695
  %v5094 = vpow.pop %v5093
  %v5095 = vmul.f32 %v5069, 1.442695
  %v5096 = vpow.pop %v5095
  %v5097 = vmul.f32 %v5070, 1.442695
  %v5098 = vpow.pop %v5097
  %v5099 = vmul.f32 %v5071, 1.442695
  %v5100 = vpow.pop %v5099
  %v5101 = vmul.f32 %v5072, 1.442695
  %v5102 = vpow.pop %v5101
  %v5103 = vmul.f32 %v5073, 1.442695
  %v5104 = vpow.pop %v5103
  %v5105 = vmul.f32 %v5074, 1.442695
  %v5106 = vpow.pop %v5105
  %5107 = vadd.xlane.f32.xlu0 %v5076
  %v5108 = vpop.xlane.xlu0 %5107
  %5109 = vadd.xlane.f32.xlu0 %v5078
  %v5110 = vpop.xlane.xlu0 %5109
  %5111 = vadd.xlane.f32.xlu0 %v5080
  %v5112 = vpop.xlane.xlu0 %5111
  %5113 = vadd.xlane.f32.xlu0 %v5082
  %v5114 = vpop.xlane.xlu0 %5113
  %5115 = vadd.xlane.f32.xlu0 %v5084
  %v5116 = vpop.xlane.xlu0 %5115
  %5117 = vadd.xlane.f32.xlu0 %v5086
  %v5118 = vpop.xlane.xlu0 %5117
  %5119 = vadd.xlane.f32.xlu0 %v5088
  %v5120 = vpop.xlane.xlu0 %5119
  %5121 = vadd.xlane.f32.xlu0 %v5090
  %v5122 = vpop.xlane.xlu0 %5121
  %5123 = vadd.xlane.f32.xlu0 %v5092
  %v5124 = vpop.xlane.xlu0 %5123
  %5125 = vadd.xlane.f32.xlu0 %v5094
  %v5126 = vpop.xlane.xlu0 %5125
  %5127 = vadd.xlane.f32.xlu0 %v5096
  %v5128 = vpop.xlane.xlu0 %5127
  %5129 = vadd.xlane.f32.xlu0 %v5098
  %v5130 = vpop.xlane.xlu0 %5129
  %5131 = vadd.xlane.f32.xlu0 %v5100
  %v5132 = vpop.xlane.xlu0 %5131
  %5133 = vadd.xlane.f32.xlu0 %v5102
  %v5134 = vpop.xlane.xlu0 %5133
  %5135 = vadd.xlane.f32.xlu0 %v5104
  %v5136 = vpop.xlane.xlu0 %5135
  %5137 = vadd.xlane.f32.xlu0 %v5106
  %v5138 = vpop.xlane.xlu0 %5137
  %v5139 = vrcp.pop %v5108
  %v5140 = vrcp.pop %v5110
  %v5141 = vrcp.pop %v5112
  %v5142 = vrcp.pop %v5114
  %v5143 = vrcp.pop %v5116
  %v5144 = vrcp.pop %v5118
  %v5145 = vrcp.pop %v5120
  %v5146 = vrcp.pop %v5122
  %v5147 = vrcp.pop %v5124
  %v5148 = vrcp.pop %v5126
  %v5149 = vrcp.pop %v5128
  %v5150 = vrcp.pop %v5130
  %v5151 = vrcp.pop %v5132
  %v5152 = vrcp.pop %v5134
  %v5153 = vrcp.pop %v5136
  %v5154 = vrcp.pop %v5138
  %v5155 = vmul.f32 %v5076, %v5139
  %v5156 = vmul.f32 %v5078, %v5140
  %v5157 = vmul.f32 %v5080, %v5141
  %v5158 = vmul.f32 %v5082, %v5142
  %v5159 = vmul.f32 %v5084, %v5143
  %v5160 = vmul.f32 %v5086, %v5144
  %v5161 = vmul.f32 %v5088, %v5145
  %v5162 = vmul.f32 %v5090, %v5146
  %v5163 = vmul.f32 %v5092, %v5147
  %v5164 = vmul.f32 %v5094, %v5148
  %v5165 = vmul.f32 %v5096, %v5149
  %v5166 = vmul.f32 %v5098, %v5150
  %v5167 = vmul.f32 %v5100, %v5151
  %v5168 = vmul.f32 %v5102, %v5152
  %v5169 = vmul.f32 %v5104, %v5153
  %v5170 = vmul.f32 %v5106, %v5154
  %v5171 = vpack.c.bf16 %v5156, %v5155
  %v5172 = vpack.c.bf16 %v5158, %v5157
  %v5173 = vpack.c.bf16 %v5160, %v5159
  %v5174 = vpack.c.bf16 %v5162, %v5161
  %v5175 = vpack.c.bf16 %v5164, %v5163
  %v5176 = vpack.c.bf16 %v5166, %v5165
  %v5177 = vpack.c.bf16 %v5168, %v5167
  %v5178 = vpack.c.bf16 %v5170, %v5169
  %5179 = vmatpush.bf16.msra.mxu0 %v4446
  %5180 = vmatpush.bf16.msra.mxu0 %v4444
  %5181 = vmatpush.bf16.msra.mxu0 %v4442
  %5182 = vmatpush.bf16.msra.mxu0 %v4440
  %5183 = vmatpush.bf16.msra.mxu0 %v4438
  %5184 = vmatpush.bf16.msra.mxu0 %v4436
  %5185 = vmatpush.bf16.msra.mxu0 %v4434
  %5186 = vmatpush.bf16.msra.mxu0 %v4432
  %5187 = vmatmul.bf16.gmra.mxu0 %v5171
  %v5188 = vpop.f32.mrf.mxu0
  %v5189 = vadd.f32 0.0, %v5188
  %v5190 = vpop.f32.mrf.mxu0
  %v5191 = vadd.f32 0.0, %v5190
  %5192 = vmatmul.bf16.gmra.mxu0 %v5172
  %v5193 = vpop.f32.mrf.mxu0
  %v5194 = vadd.f32 0.0, %v5193
  %v5195 = vpop.f32.mrf.mxu0
  %v5196 = vadd.f32 0.0, %v5195
  %5197 = vmatmul.bf16.gmra.mxu0 %v5173
  %v5198 = vpop.f32.mrf.mxu0
  %v5199 = vadd.f32 0.0, %v5198
  %v5200 = vpop.f32.mrf.mxu0
  %v5201 = vadd.f32 0.0, %v5200
  %5202 = vmatmul.bf16.gmra.mxu0 %v5174
  %v5203 = vpop.f32.mrf.mxu0
  %v5204 = vadd.f32 0.0, %v5203
  %v5205 = vpop.f32.mrf.mxu0
  %v5206 = vadd.f32 0.0, %v5205
  %5207 = vmatmul.bf16.gmra.mxu0 %v5175
  %v5208 = vpop.f32.mrf.mxu0
  %v5209 = vadd.f32 0.0, %v5208
  %v5210 = vpop.f32.mrf.mxu0
  %v5211 = vadd.f32 0.0, %v5210
  %5212 = vmatmul.bf16.gmra.mxu0 %v5176
  %v5213 = vpop.f32.mrf.mxu0
  %v5214 = vadd.f32 0.0, %v5213
  %v5215 = vpop.f32.mrf.mxu0
  %v5216 = vadd.f32 0.0, %v5215
  %5217 = vmatmul.bf16.gmra.mxu0 %v5177
  %v5218 = vpop.f32.mrf.mxu0
  %v5219 = vadd.f32 0.0, %v5218
  %v5220 = vpop.f32.mrf.mxu0
  %v5221 = vadd.f32 0.0, %v5220
  %5222 = vmatmul.bf16.gmra.mxu0 %v5178
  %v5223 = vpop.f32.mrf.mxu0
  %v5224 = vadd.f32 0.0, %v5223
  %v5225 = vpop.f32.mrf.mxu0
  %v5226 = vadd.f32 0.0, %v5225
  %5227 = vdwg.mxu0
  %v5228 = vmul.f32 %v1052, %v5189
  %v5229 = vmul.f32 %v1052, %v5191
  %v5230 = vmul.f32 %v1052, %v5194
  %v5231 = vmul.f32 %v1052, %v5196
  %v5232 = vmul.f32 %v1052, %v5199
  %v5233 = vmul.f32 %v1052, %v5201
  %v5234 = vmul.f32 %v1052, %v5204
  %v5235 = vmul.f32 %v1052, %v5206
  %v5236 = vmul.f32 %v1052, %v5209
  %v5237 = vmul.f32 %v1052, %v5211
  %v5238 = vmul.f32 %v1052, %v5214
  %v5239 = vmul.f32 %v1052, %v5216
  %v5240 = vmul.f32 %v1052, %v5219
  %v5241 = vmul.f32 %v1052, %v5221
  %v5242 = vmul.f32 %v1052, %v5224
  %v5243 = vmul.f32 %v1052, %v5226
  %v5244 = vadd.f32 %v4882, %v5228
  %v5245 = vadd.f32 %v4883, %v5229
  %v5246 = vadd.f32 %v4884, %v5230
  %v5247 = vadd.f32 %v4885, %v5231
  %v5248 = vadd.f32 %v4886, %v5232
  %v5249 = vadd.f32 %v4887, %v5233
  %v5250 = vadd.f32 %v4888, %v5234
  %v5251 = vadd.f32 %v4889, %v5235
  %v5252 = vadd.f32 %v4890, %v5236
  %v5253 = vadd.f32 %v4891, %v5237
  %v5254 = vadd.f32 %v4892, %v5238
  %v5255 = vadd.f32 %v4893, %v5239
  %v5256 = vadd.f32 %v4894, %v5240
  %v5257 = vadd.f32 %v4895, %v5241
  %v5258 = vadd.f32 %v4896, %v5242
  %v5259 = vadd.f32 %v4897, %v5243
  %v5260 = vmul.f32 %v4055, %v1057
  %v5261 = vmul.f32 %v4057, %v1057
  %v5262 = vmul.f32 %v4060, %v1057
  %v5263 = vmul.f32 %v4062, %v1057
  %v5264 = vmul.f32 %v4065, %v1057
  %v5265 = vmul.f32 %v4067, %v1057
  %v5266 = vmul.f32 %v4070, %v1057
  %v5267 = vmul.f32 %v4072, %v1057
  %v5268 = vmul.f32 %v4075, %v1057
  %v5269 = vmul.f32 %v4077, %v1057
  %v5270 = vmul.f32 %v4080, %v1057
  %v5271 = vmul.f32 %v4082, %v1057
  %v5272 = vmul.f32 %v4085, %v1057
  %v5273 = vmul.f32 %v4087, %v1057
  %v5274 = vmul.f32 %v4090, %v1057
  %v5275 = vmul.f32 %v4092, %v1057
  %v5276 = vpack.c.bf16 %v5261, %v5260
  %v5277 = vpack.c.bf16 %v5263, %v5262
  %v5278 = vpack.c.bf16 %v5265, %v5264
  %v5279 = vpack.c.bf16 %v5267, %v5266
  %v5280 = vpack.c.bf16 %v5269, %v5268
  %v5281 = vpack.c.bf16 %v5271, %v5270
  %v5282 = vpack.c.bf16 %v5273, %v5272
  %v5283 = vpack.c.bf16 %v5275, %v5274
  %v5285 = vsel %vm1102, %v5276, 0
  %v5288 = vsel %vm1102, %v5277, 0
  %v5291 = vsel %vm1102, %v5278, 0
  %v5294 = vsel %vm1102, %v5279, 0
  %v5297 = vsel %vm1102, %v5280, 0
  %v5300 = vsel %vm1102, %v5281, 0
  %v5303 = vsel %vm1102, %v5282, 0
  %v5306 = vsel %vm1102, %v5283, 0
  %5308 = vmatpush.bf16.xpose.msra.mxu0 %v4196
  %5309 = vmatpush.bf16.xpose.msra.mxu0 %v4193
  %5310 = vmatpush.bf16.xpose.msra.mxu0 %v4190
  %5311 = vmatpush.bf16.xpose.msra.mxu0 %v4187
  %5312 = vmatpush.bf16.xpose.msra.mxu0 %v4184
  %5313 = vmatpush.bf16.xpose.msra.mxu0 %v4181
  %5314 = vmatpush.bf16.xpose.msra.mxu0 %v4178
  %5315 = vmatpush.bf16.xpose.msra.mxu0 %v4175
  %5316 = vmatmul.bf16.gmra.mxu0 %v5285
  %v5317 = vpop.f32.mrf.mxu0
  %v5318 = vadd.f32 0.0, %v5317
  %v5319 = vpop.f32.mrf.mxu0
  %v5320 = vadd.f32 0.0, %v5319
  %5321 = vmatmul.bf16.gmra.mxu0 %v5288
  %v5322 = vpop.f32.mrf.mxu0
  %v5323 = vadd.f32 0.0, %v5322
  %v5324 = vpop.f32.mrf.mxu0
  %v5325 = vadd.f32 0.0, %v5324
  %5326 = vmatmul.bf16.gmra.mxu0 %v5291
  %v5327 = vpop.f32.mrf.mxu0
  %v5328 = vadd.f32 0.0, %v5327
  %v5329 = vpop.f32.mrf.mxu0
  %v5330 = vadd.f32 0.0, %v5329
  %5331 = vmatmul.bf16.gmra.mxu0 %v5294
  %v5332 = vpop.f32.mrf.mxu0
  %v5333 = vadd.f32 0.0, %v5332
  %v5334 = vpop.f32.mrf.mxu0
  %v5335 = vadd.f32 0.0, %v5334
  %5336 = vmatmul.bf16.gmra.mxu0 %v5297
  %v5337 = vpop.f32.mrf.mxu0
  %v5338 = vadd.f32 0.0, %v5337
  %v5339 = vpop.f32.mrf.mxu0
  %v5340 = vadd.f32 0.0, %v5339
  %5341 = vmatmul.bf16.gmra.mxu0 %v5300
  %v5342 = vpop.f32.mrf.mxu0
  %v5343 = vadd.f32 0.0, %v5342
  %v5344 = vpop.f32.mrf.mxu0
  %v5345 = vadd.f32 0.0, %v5344
  %5346 = vmatmul.bf16.gmra.mxu0 %v5303
  %v5347 = vpop.f32.mrf.mxu0
  %v5348 = vadd.f32 0.0, %v5347
  %v5349 = vpop.f32.mrf.mxu0
  %v5350 = vadd.f32 0.0, %v5349
  %5351 = vmatmul.bf16.gmra.mxu0 %v5306
  %v5352 = vpop.f32.mrf.mxu0
  %v5353 = vadd.f32 0.0, %v5352
  %v5354 = vpop.f32.mrf.mxu0
  %v5355 = vadd.f32 0.0, %v5354
  %5356 = vdwg.mxu0
  %v5357 = vmul.f32 %v5318, 0.35355338
  %v5358 = vmul.f32 %v5320, 0.35355338
  %v5359 = vmul.f32 %v5323, 0.35355338
  %v5360 = vmul.f32 %v5325, 0.35355338
  %v5361 = vmul.f32 %v5328, 0.35355338
  %v5362 = vmul.f32 %v5330, 0.35355338
  %v5363 = vmul.f32 %v5333, 0.35355338
  %v5364 = vmul.f32 %v5335, 0.35355338
  %v5365 = vmul.f32 %v5338, 0.35355338
  %v5366 = vmul.f32 %v5340, 0.35355338
  %v5367 = vmul.f32 %v5343, 0.35355338
  %v5368 = vmul.f32 %v5345, 0.35355338
  %v5369 = vmul.f32 %v5348, 0.35355338
  %v5370 = vmul.f32 %v5350, 0.35355338
  %v5371 = vmul.f32 %v5353, 0.35355338
  %v5372 = vmul.f32 %v5355, 0.35355338
  %v5373 = vadd.f32 %v5357, %v1058
  %v5374 = vadd.f32 %v5358, %v1059
  %v5375 = vadd.f32 %v5359, %v1060
  %v5376 = vadd.f32 %v5360, %v1061
  %v5377 = vadd.f32 %v5361, %v1062
  %v5378 = vadd.f32 %v5362, %v1063
  %v5379 = vadd.f32 %v5363, %v1064
  %v5380 = vadd.f32 %v5364, %v1065
  %v5381 = vadd.f32 %v5365, %v1066
  %v5382 = vadd.f32 %v5366, %v1067
  %v5383 = vadd.f32 %v5367, %v1068
  %v5384 = vadd.f32 %v5368, %v1069
  %v5385 = vadd.f32 %v5369, %v1070
  %v5386 = vadd.f32 %v5370, %v1071
  %v5387 = vadd.f32 %v5371, %v1072
  %v5388 = vadd.f32 %v5372, %v1073
  %5389 = vmax.xlane.f32.xlu0 %v5373
  %v5390 = vpop.xlane.xlu0 %5389
  %5391 = vmax.xlane.f32.xlu0 %v5374
  %v5392 = vpop.xlane.xlu0 %5391
  %5393 = vmax.xlane.f32.xlu0 %v5375
  %v5394 = vpop.xlane.xlu0 %5393
  %5395 = vmax.xlane.f32.xlu0 %v5376
  %v5396 = vpop.xlane.xlu0 %5395
  %5397 = vmax.xlane.f32.xlu0 %v5377
  %v5398 = vpop.xlane.xlu0 %5397
  %5399 = vmax.xlane.f32.xlu0 %v5378
  %v5400 = vpop.xlane.xlu0 %5399
  %5401 = vmax.xlane.f32.xlu0 %v5379
  %v5402 = vpop.xlane.xlu0 %5401
  %5403 = vmax.xlane.f32.xlu0 %v5380
  %v5404 = vpop.xlane.xlu0 %5403
  %5405 = vmax.xlane.f32.xlu0 %v5381
  %v5406 = vpop.xlane.xlu0 %5405
  %5407 = vmax.xlane.f32.xlu0 %v5382
  %v5408 = vpop.xlane.xlu0 %5407
  %5409 = vmax.xlane.f32.xlu0 %v5383
  %v5410 = vpop.xlane.xlu0 %5409
  %5411 = vmax.xlane.f32.xlu0 %v5384
  %v5412 = vpop.xlane.xlu0 %5411
  %5413 = vmax.xlane.f32.xlu0 %v5385
  %v5414 = vpop.xlane.xlu0 %5413
  %5415 = vmax.xlane.f32.xlu0 %v5386
  %v5416 = vpop.xlane.xlu0 %5415
  %5417 = vmax.xlane.f32.xlu0 %v5387
  %v5418 = vpop.xlane.xlu0 %5417
  %5419 = vmax.xlane.f32.xlu0 %v5388
  %v5420 = vpop.xlane.xlu0 %5419
  %v5421 = vsub.f32 %v5373, %v5390
  %v5422 = vsub.f32 %v5374, %v5392
  %v5423 = vsub.f32 %v5375, %v5394
  %v5424 = vsub.f32 %v5376, %v5396
  %v5425 = vsub.f32 %v5377, %v5398
  %v5426 = vsub.f32 %v5378, %v5400
  %v5427 = vsub.f32 %v5379, %v5402
  %v5428 = vsub.f32 %v5380, %v5404
  %v5429 = vsub.f32 %v5381, %v5406
  %v5430 = vsub.f32 %v5382, %v5408
  %v5431 = vsub.f32 %v5383, %v5410
  %v5432 = vsub.f32 %v5384, %v5412
  %v5433 = vsub.f32 %v5385, %v5414
  %v5434 = vsub.f32 %v5386, %v5416
  %v5435 = vsub.f32 %v5387, %v5418
  %v5436 = vsub.f32 %v5388, %v5420
  %v5437 = vmul.f32 %v5421, 1.442695
  %v5438 = vpow.pop %v5437
  %v5439 = vmul.f32 %v5422, 1.442695
  %v5440 = vpow.pop %v5439
  %v5441 = vmul.f32 %v5423, 1.442695
  %v5442 = vpow.pop %v5441
  %v5443 = vmul.f32 %v5424, 1.442695
  %v5444 = vpow.pop %v5443
  %v5445 = vmul.f32 %v5425, 1.442695
  %v5446 = vpow.pop %v5445
  %v5447 = vmul.f32 %v5426, 1.442695
  %v5448 = vpow.pop %v5447
  %v5449 = vmul.f32 %v5427, 1.442695
  %v5450 = vpow.pop %v5449
  %v5451 = vmul.f32 %v5428, 1.442695
  %v5452 = vpow.pop %v5451
  %v5453 = vmul.f32 %v5429, 1.442695
  %v5454 = vpow.pop %v5453
  %v5455 = vmul.f32 %v5430, 1.442695
  %v5456 = vpow.pop %v5455
  %v5457 = vmul.f32 %v5431, 1.442695
  %v5458 = vpow.pop %v5457
  %v5459 = vmul.f32 %v5432, 1.442695
  %v5460 = vpow.pop %v5459
  %v5461 = vmul.f32 %v5433, 1.442695
  %v5462 = vpow.pop %v5461
  %v5463 = vmul.f32 %v5434, 1.442695
  %v5464 = vpow.pop %v5463
  %v5465 = vmul.f32 %v5435, 1.442695
  %v5466 = vpow.pop %v5465
  %v5467 = vmul.f32 %v5436, 1.442695
  %v5468 = vpow.pop %v5467
  %5469 = vadd.xlane.f32.xlu0 %v5438
  %v5470 = vpop.xlane.xlu0 %5469
  %5471 = vadd.xlane.f32.xlu0 %v5440
  %v5472 = vpop.xlane.xlu0 %5471
  %5473 = vadd.xlane.f32.xlu0 %v5442
  %v5474 = vpop.xlane.xlu0 %5473
  %5475 = vadd.xlane.f32.xlu0 %v5444
  %v5476 = vpop.xlane.xlu0 %5475
  %5477 = vadd.xlane.f32.xlu0 %v5446
  %v5478 = vpop.xlane.xlu0 %5477
  %5479 = vadd.xlane.f32.xlu0 %v5448
  %v5480 = vpop.xlane.xlu0 %5479
  %5481 = vadd.xlane.f32.xlu0 %v5450
  %v5482 = vpop.xlane.xlu0 %5481
  %5483 = vadd.xlane.f32.xlu0 %v5452
  %v5484 = vpop.xlane.xlu0 %5483
  %5485 = vadd.xlane.f32.xlu0 %v5454
  %v5486 = vpop.xlane.xlu0 %5485
  %5487 = vadd.xlane.f32.xlu0 %v5456
  %v5488 = vpop.xlane.xlu0 %5487
  %5489 = vadd.xlane.f32.xlu0 %v5458
  %v5490 = vpop.xlane.xlu0 %5489
  %5491 = vadd.xlane.f32.xlu0 %v5460
  %v5492 = vpop.xlane.xlu0 %5491
  %5493 = vadd.xlane.f32.xlu0 %v5462
  %v5494 = vpop.xlane.xlu0 %5493
  %5495 = vadd.xlane.f32.xlu0 %v5464
  %v5496 = vpop.xlane.xlu0 %5495
  %5497 = vadd.xlane.f32.xlu0 %v5466
  %v5498 = vpop.xlane.xlu0 %5497
  %5499 = vadd.xlane.f32.xlu0 %v5468
  %v5500 = vpop.xlane.xlu0 %5499
  %v5501 = vrcp.pop %v5470
  %v5502 = vrcp.pop %v5472
  %v5503 = vrcp.pop %v5474
  %v5504 = vrcp.pop %v5476
  %v5505 = vrcp.pop %v5478
  %v5506 = vrcp.pop %v5480
  %v5507 = vrcp.pop %v5482
  %v5508 = vrcp.pop %v5484
  %v5509 = vrcp.pop %v5486
  %v5510 = vrcp.pop %v5488
  %v5511 = vrcp.pop %v5490
  %v5512 = vrcp.pop %v5492
  %v5513 = vrcp.pop %v5494
  %v5514 = vrcp.pop %v5496
  %v5515 = vrcp.pop %v5498
  %v5516 = vrcp.pop %v5500
  %v5517 = vmul.f32 %v5438, %v5501
  %v5518 = vmul.f32 %v5440, %v5502
  %v5519 = vmul.f32 %v5442, %v5503
  %v5520 = vmul.f32 %v5444, %v5504
  %v5521 = vmul.f32 %v5446, %v5505
  %v5522 = vmul.f32 %v5448, %v5506
  %v5523 = vmul.f32 %v5450, %v5507
  %v5524 = vmul.f32 %v5452, %v5508
  %v5525 = vmul.f32 %v5454, %v5509
  %v5526 = vmul.f32 %v5456, %v5510
  %v5527 = vmul.f32 %v5458, %v5511
  %v5528 = vmul.f32 %v5460, %v5512
  %v5529 = vmul.f32 %v5462, %v5513
  %v5530 = vmul.f32 %v5464, %v5514
  %v5531 = vmul.f32 %v5466, %v5515
  %v5532 = vmul.f32 %v5468, %v5516
  %v5533 = vpack.c.bf16 %v5518, %v5517
  %v5534 = vpack.c.bf16 %v5520, %v5519
  %v5535 = vpack.c.bf16 %v5522, %v5521
  %v5536 = vpack.c.bf16 %v5524, %v5523
  %v5537 = vpack.c.bf16 %v5526, %v5525
  %v5538 = vpack.c.bf16 %v5528, %v5527
  %v5539 = vpack.c.bf16 %v5530, %v5529
  %v5540 = vpack.c.bf16 %v5532, %v5531
  %5541 = vmatpush.bf16.msra.mxu0 %v4446
  %5542 = vmatpush.bf16.msra.mxu0 %v4444
  %5543 = vmatpush.bf16.msra.mxu0 %v4442
  %5544 = vmatpush.bf16.msra.mxu0 %v4440
  %5545 = vmatpush.bf16.msra.mxu0 %v4438
  %5546 = vmatpush.bf16.msra.mxu0 %v4436
  %5547 = vmatpush.bf16.msra.mxu0 %v4434
  %5548 = vmatpush.bf16.msra.mxu0 %v4432
  %5549 = vmatmul.bf16.gmra.mxu0 %v5533
  %v5550 = vpop.f32.mrf.mxu0
  %v5551 = vadd.f32 0.0, %v5550
  %v5552 = vpop.f32.mrf.mxu0
  %v5553 = vadd.f32 0.0, %v5552
  %5554 = vmatmul.bf16.gmra.mxu0 %v5534
  %v5555 = vpop.f32.mrf.mxu0
  %v5556 = vadd.f32 0.0, %v5555
  %v5557 = vpop.f32.mrf.mxu0
  %v5558 = vadd.f32 0.0, %v5557
  %5559 = vmatmul.bf16.gmra.mxu0 %v5535
  %v5560 = vpop.f32.mrf.mxu0
  %v5561 = vadd.f32 0.0, %v5560
  %v5562 = vpop.f32.mrf.mxu0
  %v5563 = vadd.f32 0.0, %v5562
  %5564 = vmatmul.bf16.gmra.mxu0 %v5536
  %v5565 = vpop.f32.mrf.mxu0
  %v5566 = vadd.f32 0.0, %v5565
  %v5567 = vpop.f32.mrf.mxu0
  %v5568 = vadd.f32 0.0, %v5567
  %5569 = vmatmul.bf16.gmra.mxu0 %v5537
  %v5570 = vpop.f32.mrf.mxu0
  %v5571 = vadd.f32 0.0, %v5570
  %v5572 = vpop.f32.mrf.mxu0
  %v5573 = vadd.f32 0.0, %v5572
  %5574 = vmatmul.bf16.gmra.mxu0 %v5538
  %v5575 = vpop.f32.mrf.mxu0
  %v5576 = vadd.f32 0.0, %v5575
  %v5577 = vpop.f32.mrf.mxu0
  %v5578 = vadd.f32 0.0, %v5577
  %5579 = vmatmul.bf16.gmra.mxu0 %v5539
  %v5580 = vpop.f32.mrf.mxu0
  %v5581 = vadd.f32 0.0, %v5580
  %v5582 = vpop.f32.mrf.mxu0
  %v5583 = vadd.f32 0.0, %v5582
  %5584 = vmatmul.bf16.gmra.mxu0 %v5540
  %v5585 = vpop.f32.mrf.mxu0
  %v5586 = vadd.f32 0.0, %v5585
  %v5587 = vpop.f32.mrf.mxu0
  %v5588 = vadd.f32 0.0, %v5587
  %5589 = vdwg.mxu0
  %v5590 = vmul.f32 %v1057, %v5551
  %v5591 = vmul.f32 %v1057, %v5553
  %v5592 = vmul.f32 %v1057, %v5556
  %v5593 = vmul.f32 %v1057, %v5558
  %v5594 = vmul.f32 %v1057, %v5561
  %v5595 = vmul.f32 %v1057, %v5563
  %v5596 = vmul.f32 %v1057, %v5566
  %v5597 = vmul.f32 %v1057, %v5568
  %v5598 = vmul.f32 %v1057, %v5571
  %v5599 = vmul.f32 %v1057, %v5573
  %v5600 = vmul.f32 %v1057, %v5576
  %v5601 = vmul.f32 %v1057, %v5578
  %v5602 = vmul.f32 %v1057, %v5581
  %v5603 = vmul.f32 %v1057, %v5583
  %v5604 = vmul.f32 %v1057, %v5586
  %v5605 = vmul.f32 %v1057, %v5588
  %v5606 = vadd.f32 %v5244, %v5590
  %v5607 = vadd.f32 %v5245, %v5591
  %v5608 = vadd.f32 %v5246, %v5592
  %v5609 = vadd.f32 %v5247, %v5593
  %v5610 = vadd.f32 %v5248, %v5594
  %v5611 = vadd.f32 %v5249, %v5595
  %v5612 = vadd.f32 %v5250, %v5596
  %v5613 = vadd.f32 %v5251, %v5597
  %v5614 = vadd.f32 %v5252, %v5598
  %v5615 = vadd.f32 %v5253, %v5599
  %v5616 = vadd.f32 %v5254, %v5600
  %v5617 = vadd.f32 %v5255, %v5601
  %v5618 = vadd.f32 %v5256, %v5602
  %v5619 = vadd.f32 %v5257, %v5603
  %v5620 = vadd.f32 %v5258, %v5604
  %v5621 = vadd.f32 %v5259, %v5605
  %v5622 = vpack.c.bf16 %v5607, %v5606
  %v5623 = vpack.c.bf16 %v5609, %v5608
  %v5624 = vpack.c.bf16 %v5611, %v5610
  %v5625 = vpack.c.bf16 %v5613, %v5612
  %v5626 = vpack.c.bf16 %v5615, %v5614
  %v5627 = vpack.c.bf16 %v5617, %v5616
  %v5628 = vpack.c.bf16 %v5619, %v5618
  %v5629 = vpack.c.bf16 %v5621, %v5620
  %s5630 = scalar_lea.vmem %s6, 16
  %v5631 = vld [vmem:[%s5630] sm:$0xf]
  %v5632 = vld [vmem:[%s5630 + $0x4] sm:$0xf]
  %v5633 = vld [vmem:[%s5630 + $0x8] sm:$0xf]
  %v5634 = vld [vmem:[%s5630 + $0xc] sm:$0xf]
  %s5635 = scalar_lea.vmem %s7, 1
  %v5636 = vld [vmem:[%s5635] sm:$0x1]
  %v5638 = vperm.slane %v5636, 0
  %v5644 = vunpack.c.l.b16 %v5631
  %v5645 = vunpack.c.l.b16 %v5632
  %v5646 = vunpack.c.l.b16 %v5633
  %v5647 = vunpack.c.l.b16 %v5634
  %v5648 = vpack.c.b16 %v5645, %v5644
  %v5649 = vpack.c.b16 %v5647, %v5646
  %v5653 = vsel %vm1102, %v5622, 0
  %v5656 = vsel %vm1102, %v5623, 0
  %v5659 = vsel %vm1102, %v5624, 0
  %v5662 = vsel %vm1102, %v5625, 0
  %v5665 = vsel %vm1102, %v5626, 0
  %v5668 = vsel %vm1102, %v5627, 0
  %v5671 = vsel %vm1102, %v5628, 0
  %v5674 = vsel %vm1102, %v5629, 0
  %5676 = vmatpush.bf16.msra.mxu0 0
  %5677 = vmatpush.bf16.msra.mxu0 0
  %5678 = vmatpush.bf16.msra.mxu0 0
  %5679 = vmatpush.bf16.msra.mxu0 0
  %5680 = vmatpush.bf16.msra.mxu0 0
  %5681 = vmatpush.bf16.msra.mxu0 0
  %5682 = vmatpush.bf16.msra.mxu0 %v5649
  %5683 = vmatpush.bf16.msra.mxu0 %v5648
  %5684 = vmatmul.bf16.gmra.mxu0 %v5653
  %v5685 = vpop.f32.mrf.mxu0
  %v5686 = vadd.f32 %v5638, %v5685
  %v5687 = vpop.f32.mrf.mxu0
  %v5688 = vadd.f32 %v5638, %v5687
  %5689 = vmatmul.bf16.gmra.mxu0 %v5656
  %v5690 = vpop.f32.mrf.mxu0
  %v5691 = vadd.f32 %v5638, %v5690
  %v5692 = vpop.f32.mrf.mxu0
  %v5693 = vadd.f32 %v5638, %v5692
  %5694 = vmatmul.bf16.gmra.mxu0 %v5659
  %v5695 = vpop.f32.mrf.mxu0
  %v5696 = vadd.f32 %v5638, %v5695
  %v5697 = vpop.f32.mrf.mxu0
  %v5698 = vadd.f32 %v5638, %v5697
  %5699 = vmatmul.bf16.gmra.mxu0 %v5662
  %v5700 = vpop.f32.mrf.mxu0
  %v5701 = vadd.f32 %v5638, %v5700
  %v5702 = vpop.f32.mrf.mxu0
  %v5703 = vadd.f32 %v5638, %v5702
  %5704 = vmatmul.bf16.gmra.mxu0 %v5665
  %v5705 = vpop.f32.mrf.mxu0
  %v5706 = vadd.f32 %v5638, %v5705
  %v5707 = vpop.f32.mrf.mxu0
  %v5708 = vadd.f32 %v5638, %v5707
  %5709 = vmatmul.bf16.gmra.mxu0 %v5668
  %v5710 = vpop.f32.mrf.mxu0
  %v5711 = vadd.f32 %v5638, %v5710
  %v5712 = vpop.f32.mrf.mxu0
  %v5713 = vadd.f32 %v5638, %v5712
  %5714 = vmatmul.bf16.gmra.mxu0 %v5671
  %v5715 = vpop.f32.mrf.mxu0
  %v5716 = vadd.f32 %v5638, %v5715
  %v5717 = vpop.f32.mrf.mxu0
  %v5718 = vadd.f32 %v5638, %v5717
  %5719 = vmatmul.bf16.gmra.mxu0 %v5674
  %v5720 = vpop.f32.mrf.mxu0
  %v5721 = vadd.f32 %v5638, %v5720
  %v5722 = vpop.f32.mrf.mxu0
  %v5723 = vadd.f32 %v5638, %v5722
  %5724 = vdwg.mxu0
  %v5725 = vadd.f32 %v3975, %v5686
  %v5726 = vadd.f32 %v3976, %v5688
  %v5727 = vadd.f32 %v3977, %v5691
  %v5728 = vadd.f32 %v3978, %v5693
  %v5729 = vadd.f32 %v3979, %v5696
  %v5730 = vadd.f32 %v3980, %v5698
  %v5731 = vadd.f32 %v3981, %v5701
  %v5732 = vadd.f32 %v3982, %v5703
  %v5733 = vadd.f32 %v3983, %v5706
  %v5734 = vadd.f32 %v3984, %v5708
  %v5735 = vadd.f32 %v3985, %v5711
  %v5736 = vadd.f32 %v3986, %v5713
  %v5737 = vadd.f32 %v3987, %v5716
  %v5738 = vadd.f32 %v3988, %v5718
  %v5739 = vadd.f32 %v3989, %v5721
  %v5740 = vadd.f32 %v3990, %v5723
  %s5741 = scalar_lea.vmem %s8, 1
  %v5742 = vld [vmem:[%s5741] sm:$0x1]
  %s5743 = scalar_lea.vmem %s9, 1
  %v5744 = vld [vmem:[%s5743] sm:$0x1]
  %v5745 = vsel %vm1102, %v5725, 0.0
  %5746 = vadd.xlane.f32.xlu0 %v5745
  %v5747 = vpop.xlane.xlu0 %5746
  %v5748 = vsel %vm1102, %v5726, 0.0
  %5749 = vadd.xlane.f32.xlu0 %v5748
  %v5750 = vpop.xlane.xlu0 %5749
  %v5751 = vsel %vm1102, %v5727, 0.0
  %5752 = vadd.xlane.f32.xlu0 %v5751
  %v5753 = vpop.xlane.xlu0 %5752
  %v5754 = vsel %vm1102, %v5728, 0.0
  %5755 = vadd.xlane.f32.xlu0 %v5754
  %v5756 = vpop.xlane.xlu0 %5755
  %v5757 = vsel %vm1102, %v5729, 0.0
  %5758 = vadd.xlane.f32.xlu0 %v5757
  %v5759 = vpop.xlane.xlu0 %5758
  %v5760 = vsel %vm1102, %v5730, 0.0
  %5761 = vadd.xlane.f32.xlu0 %v5760
  %v5762 = vpop.xlane.xlu0 %5761
  %v5763 = vsel %vm1102, %v5731, 0.0
  %5764 = vadd.xlane.f32.xlu0 %v5763
  %v5765 = vpop.xlane.xlu0 %5764
  %v5766 = vsel %vm1102, %v5732, 0.0
  %5767 = vadd.xlane.f32.xlu0 %v5766
  %v5768 = vpop.xlane.xlu0 %5767
  %v5769 = vsel %vm1102, %v5733, 0.0
  %5770 = vadd.xlane.f32.xlu0 %v5769
  %v5771 = vpop.xlane.xlu0 %5770
  %v5772 = vsel %vm1102, %v5734, 0.0
  %5773 = vadd.xlane.f32.xlu0 %v5772
  %v5774 = vpop.xlane.xlu0 %5773
  %v5775 = vsel %vm1102, %v5735, 0.0
  %5776 = vadd.xlane.f32.xlu0 %v5775
  %v5777 = vpop.xlane.xlu0 %5776
  %v5778 = vsel %vm1102, %v5736, 0.0
  %5779 = vadd.xlane.f32.xlu0 %v5778
  %v5780 = vpop.xlane.xlu0 %5779
  %v5781 = vsel %vm1102, %v5737, 0.0
  %5782 = vadd.xlane.f32.xlu0 %v5781
  %v5783 = vpop.xlane.xlu0 %5782
  %v5784 = vsel %vm1102, %v5738, 0.0
  %5785 = vadd.xlane.f32.xlu0 %v5784
  %v5786 = vpop.xlane.xlu0 %5785
  %v5787 = vsel %vm1102, %v5739, 0.0
  %5788 = vadd.xlane.f32.xlu0 %v5787
  %v5789 = vpop.xlane.xlu0 %5788
  %v5790 = vsel %vm1102, %v5740, 0.0
  %5791 = vadd.xlane.f32.xlu0 %v5790
  %v5792 = vpop.xlane.xlu0 %5791
  %v5793 = vmul.f32 %v5747, %v2877
  %v5794 = vmul.f32 %v5750, %v2877
  %v5795 = vmul.f32 %v5753, %v2877
  %v5796 = vmul.f32 %v5756, %v2877
  %v5797 = vmul.f32 %v5759, %v2877
  %v5798 = vmul.f32 %v5762, %v2877
  %v5799 = vmul.f32 %v5765, %v2877
  %v5800 = vmul.f32 %v5768, %v2877
  %v5801 = vmul.f32 %v5771, %v2877
  %v5802 = vmul.f32 %v5774, %v2877
  %v5803 = vmul.f32 %v5777, %v2877
  %v5804 = vmul.f32 %v5780, %v2877
  %v5805 = vmul.f32 %v5783, %v2877
  %v5806 = vmul.f32 %v5786, %v2877
  %v5807 = vmul.f32 %v5789, %v2877
  %v5808 = vmul.f32 %v5792, %v2877
  %v5809 = vsub.f32 %v5725, %v5793
  %v5810 = vsub.f32 %v5726, %v5794
  %v5811 = vsub.f32 %v5727, %v5795
  %v5812 = vsub.f32 %v5728, %v5796
  %v5813 = vsub.f32 %v5729, %v5797
  %v5814 = vsub.f32 %v5730, %v5798
  %v5815 = vsub.f32 %v5731, %v5799
  %v5816 = vsub.f32 %v5732, %v5800
  %v5817 = vsub.f32 %v5733, %v5801
  %v5818 = vsub.f32 %v5734, %v5802
  %v5819 = vsub.f32 %v5735, %v5803
  %v5820 = vsub.f32 %v5736, %v5804
  %v5821 = vsub.f32 %v5737, %v5805
  %v5822 = vsub.f32 %v5738, %v5806
  %v5823 = vsub.f32 %v5739, %v5807
  %v5824 = vsub.f32 %v5740, %v5808
  %v5825 = vmul.f32 %v5809, %v5809
  %v5826 = vmul.f32 %v5810, %v5810
  %v5827 = vmul.f32 %v5811, %v5811
  %v5828 = vmul.f32 %v5812, %v5812
  %v5829 = vmul.f32 %v5813, %v5813
  %v5830 = vmul.f32 %v5814, %v5814
  %v5831 = vmul.f32 %v5815, %v5815
  %v5832 = vmul.f32 %v5816, %v5816
  %v5833 = vmul.f32 %v5817, %v5817
  %v5834 = vmul.f32 %v5818, %v5818
  %v5835 = vmul.f32 %v5819, %v5819
  %v5836 = vmul.f32 %v5820, %v5820
  %v5837 = vmul.f32 %v5821, %v5821
  %v5838 = vmul.f32 %v5822, %v5822
  %v5839 = vmul.f32 %v5823, %v5823
  %v5840 = vmul.f32 %v5824, %v5824
  %v5841 = vsel %vm1102, %v5825, 0.0
  %5842 = vadd.xlane.f32.xlu0 %v5841
  %v5843 = vpop.xlane.xlu0 %5842
  %v5844 = vsel %vm1102, %v5826, 0.0
  %5845 = vadd.xlane.f32.xlu0 %v5844
  %v5846 = vpop.xlane.xlu0 %5845
  %v5847 = vsel %vm1102, %v5827, 0.0
  %5848 = vadd.xlane.f32.xlu0 %v5847
  %v5849 = vpop.xlane.xlu0 %5848
  %v5850 = vsel %vm1102, %v5828, 0.0
  %5851 = vadd.xlane.f32.xlu0 %v5850
  %v5852 = vpop.xlane.xlu0 %5851
  %v5853 = vsel %vm1102, %v5829, 0.0
  %5854 = vadd.xlane.f32.xlu0 %v5853
  %v5855 = vpop.xlane.xlu0 %5854
  %v5856 = vsel %vm1102, %v5830, 0.0
  %5857 = vadd.xlane.f32.xlu0 %v5856
  %v5858 = vpop.xlane.xlu0 %5857
  %v5859 = vsel %vm1102, %v5831, 0.0
  %5860 = vadd.xlane.f32.xlu0 %v5859
  %v5861 = vpop.xlane.xlu0 %5860
  %v5862 = vsel %vm1102, %v5832, 0.0
  %5863 = vadd.xlane.f32.xlu0 %v5862
  %v5864 = vpop.xlane.xlu0 %5863
  %v5865 = vsel %vm1102, %v5833, 0.0
  %5866 = vadd.xlane.f32.xlu0 %v5865
  %v5867 = vpop.xlane.xlu0 %5866
  %v5868 = vsel %vm1102, %v5834, 0.0
  %5869 = vadd.xlane.f32.xlu0 %v5868
  %v5870 = vpop.xlane.xlu0 %5869
  %v5871 = vsel %vm1102, %v5835, 0.0
  %5872 = vadd.xlane.f32.xlu0 %v5871
  %v5873 = vpop.xlane.xlu0 %5872
  %v5874 = vsel %vm1102, %v5836, 0.0
  %5875 = vadd.xlane.f32.xlu0 %v5874
  %v5876 = vpop.xlane.xlu0 %5875
  %v5877 = vsel %vm1102, %v5837, 0.0
  %5878 = vadd.xlane.f32.xlu0 %v5877
  %v5879 = vpop.xlane.xlu0 %5878
  %v5880 = vsel %vm1102, %v5838, 0.0
  %5881 = vadd.xlane.f32.xlu0 %v5880
  %v5882 = vpop.xlane.xlu0 %5881
  %v5883 = vsel %vm1102, %v5839, 0.0
  %5884 = vadd.xlane.f32.xlu0 %v5883
  %v5885 = vpop.xlane.xlu0 %5884
  %v5886 = vsel %vm1102, %v5840, 0.0
  %5887 = vadd.xlane.f32.xlu0 %v5886
  %v5888 = vpop.xlane.xlu0 %5887
  %v5889 = vmul.f32 %v5843, %v2877
  %v5890 = vmul.f32 %v5846, %v2877
  %v5891 = vmul.f32 %v5849, %v2877
  %v5892 = vmul.f32 %v5852, %v2877
  %v5893 = vmul.f32 %v5855, %v2877
  %v5894 = vmul.f32 %v5858, %v2877
  %v5895 = vmul.f32 %v5861, %v2877
  %v5896 = vmul.f32 %v5864, %v2877
  %v5897 = vmul.f32 %v5867, %v2877
  %v5898 = vmul.f32 %v5870, %v2877
  %v5899 = vmul.f32 %v5873, %v2877
  %v5900 = vmul.f32 %v5876, %v2877
  %v5901 = vmul.f32 %v5879, %v2877
  %v5902 = vmul.f32 %v5882, %v2877
  %v5903 = vmul.f32 %v5885, %v2877
  %v5904 = vmul.f32 %v5888, %v2877
  %v5905 = vadd.f32 %v5889, 1e-05
  %v5906 = vadd.f32 %v5890, 1e-05
  %v5907 = vadd.f32 %v5891, 1e-05
  %v5908 = vadd.f32 %v5892, 1e-05
  %v5909 = vadd.f32 %v5893, 1e-05
  %v5910 = vadd.f32 %v5894, 1e-05
  %v5911 = vadd.f32 %v5895, 1e-05
  %v5912 = vadd.f32 %v5896, 1e-05
  %v5913 = vadd.f32 %v5897, 1e-05
  %v5914 = vadd.f32 %v5898, 1e-05
  %v5915 = vadd.f32 %v5899, 1e-05
  %v5916 = vadd.f32 %v5900, 1e-05
  %v5917 = vadd.f32 %v5901, 1e-05
  %v5918 = vadd.f32 %v5902, 1e-05
  %v5919 = vadd.f32 %v5903, 1e-05
  %v5920 = vadd.f32 %v5904, 1e-05
  %v5921 = vrsqrt.pop %v5905
  %v5922 = vmul.f32 %v5921, %v5905
  %v5923 = vmul.f32 %v5922, %v5921
  %v5924 = vmul.f32 0.5, %v5923
  %v5925 = vsub.f32 1.5, %v5924
  %v5926 = vmul.f32 %v5921, %v5925
  %vm5927 = vweird.f32 %v5905
  %vm5928 = vweird.f32 %v5921
  %vm5929 = vmor %vm5927, %vm5928
  %v5930 = vsel %vm5929, %v5921, %v5926
  %v5931 = vrsqrt.pop %v5906
  %v5932 = vmul.f32 %v5931, %v5906
  %v5933 = vmul.f32 %v5932, %v5931
  %v5934 = vmul.f32 0.5, %v5933
  %v5935 = vsub.f32 1.5, %v5934
  %v5936 = vmul.f32 %v5931, %v5935
  %vm5937 = vweird.f32 %v5906
  %vm5938 = vweird.f32 %v5931
  %vm5939 = vmor %vm5937, %vm5938
  %v5940 = vsel %vm5939, %v5931, %v5936
  %v5941 = vrsqrt.pop %v5907
  %v5942 = vmul.f32 %v5941, %v5907
  %v5943 = vmul.f32 %v5942, %v5941
  %v5944 = vmul.f32 0.5, %v5943
  %v5945 = vsub.f32 1.5, %v5944
  %v5946 = vmul.f32 %v5941, %v5945
  %vm5947 = vweird.f32 %v5907
  %vm5948 = vweird.f32 %v5941
  %vm5949 = vmor %vm5947, %vm5948
  %v5950 = vsel %vm5949, %v5941, %v5946
  %v5951 = vrsqrt.pop %v5908
  %v5952 = vmul.f32 %v5951, %v5908
  %v5953 = vmul.f32 %v5952, %v5951
  %v5954 = vmul.f32 0.5, %v5953
  %v5955 = vsub.f32 1.5, %v5954
  %v5956 = vmul.f32 %v5951, %v5955
  %vm5957 = vweird.f32 %v5908
  %vm5958 = vweird.f32 %v5951
  %vm5959 = vmor %vm5957, %vm5958
  %v5960 = vsel %vm5959, %v5951, %v5956
  %v5961 = vrsqrt.pop %v5909
  %v5962 = vmul.f32 %v5961, %v5909
  %v5963 = vmul.f32 %v5962, %v5961
  %v5964 = vmul.f32 0.5, %v5963
  %v5965 = vsub.f32 1.5, %v5964
  %v5966 = vmul.f32 %v5961, %v5965
  %vm5967 = vweird.f32 %v5909
  %vm5968 = vweird.f32 %v5961
  %vm5969 = vmor %vm5967, %vm5968
  %v5970 = vsel %vm5969, %v5961, %v5966
  %v5971 = vrsqrt.pop %v5910
  %v5972 = vmul.f32 %v5971, %v5910
  %v5973 = vmul.f32 %v5972, %v5971
  %v5974 = vmul.f32 0.5, %v5973
  %v5975 = vsub.f32 1.5, %v5974
  %v5976 = vmul.f32 %v5971, %v5975
  %vm5977 = vweird.f32 %v5910
  %vm5978 = vweird.f32 %v5971
  %vm5979 = vmor %vm5977, %vm5978
  %v5980 = vsel %vm5979, %v5971, %v5976
  %v5981 = vrsqrt.pop %v5911
  %v5982 = vmul.f32 %v5981, %v5911
  %v5983 = vmul.f32 %v5982, %v5981
  %v5984 = vmul.f32 0.5, %v5983
  %v5985 = vsub.f32 1.5, %v5984
  %v5986 = vmul.f32 %v5981, %v5985
  %vm5987 = vweird.f32 %v5911
  %vm5988 = vweird.f32 %v5981
  %vm5989 = vmor %vm5987, %vm5988
  %v5990 = vsel %vm5989, %v5981, %v5986
  %v5991 = vrsqrt.pop %v5912
  %v5992 = vmul.f32 %v5991, %v5912
  %v5993 = vmul.f32 %v5992, %v5991
  %v5994 = vmul.f32 0.5, %v5993
  %v5995 = vsub.f32 1.5, %v5994
  %v5996 = vmul.f32 %v5991, %v5995
  %vm5997 = vweird.f32 %v5912
  %vm5998 = vweird.f32 %v5991
  %vm5999 = vmor %vm5997, %vm5998
  %v6000 = vsel %vm5999, %v5991, %v5996
  %v6001 = vrsqrt.pop %v5913
  %v6002 = vmul.f32 %v6001, %v5913
  %v6003 = vmul.f32 %v6002, %v6001
  %v6004 = vmul.f32 0.5, %v6003
  %v6005 = vsub.f32 1.5, %v6004
  %v6006 = vmul.f32 %v6001, %v6005
  %vm6007 = vweird.f32 %v5913
  %vm6008 = vweird.f32 %v6001
  %vm6009 = vmor %vm6007, %vm6008
  %v6010 = vsel %vm6009, %v6001, %v6006
  %v6011 = vrsqrt.pop %v5914
  %v6012 = vmul.f32 %v6011, %v5914
  %v6013 = vmul.f32 %v6012, %v6011
  %v6014 = vmul.f32 0.5, %v6013
  %v6015 = vsub.f32 1.5, %v6014
  %v6016 = vmul.f32 %v6011, %v6015
  %vm6017 = vweird.f32 %v5914
  %vm6018 = vweird.f32 %v6011
  %vm6019 = vmor %vm6017, %vm6018
  %v6020 = vsel %vm6019, %v6011, %v6016
  %v6021 = vrsqrt.pop %v5915
  %v6022 = vmul.f32 %v6021, %v5915
  %v6023 = vmul.f32 %v6022, %v6021
  %v6024 = vmul.f32 0.5, %v6023
  %v6025 = vsub.f32 1.5, %v6024
  %v6026 = vmul.f32 %v6021, %v6025
  %vm6027 = vweird.f32 %v5915
  %vm6028 = vweird.f32 %v6021
  %vm6029 = vmor %vm6027, %vm6028
  %v6030 = vsel %vm6029, %v6021, %v6026
  %v6031 = vrsqrt.pop %v5916
  %v6032 = vmul.f32 %v6031, %v5916
  %v6033 = vmul.f32 %v6032, %v6031
  %v6034 = vmul.f32 0.5, %v6033
  %v6035 = vsub.f32 1.5, %v6034
  %v6036 = vmul.f32 %v6031, %v6035
  %vm6037 = vweird.f32 %v5916
  %vm6038 = vweird.f32 %v6031
  %vm6039 = vmor %vm6037, %vm6038
  %v6040 = vsel %vm6039, %v6031, %v6036
  %v6041 = vrsqrt.pop %v5917
  %v6042 = vmul.f32 %v6041, %v5917
  %v6043 = vmul.f32 %v6042, %v6041
  %v6044 = vmul.f32 0.5, %v6043
  %v6045 = vsub.f32 1.5, %v6044
  %v6046 = vmul.f32 %v6041, %v6045
  %vm6047 = vweird.f32 %v5917
  %vm6048 = vweird.f32 %v6041
  %vm6049 = vmor %vm6047, %vm6048
  %v6050 = vsel %vm6049, %v6041, %v6046
  %v6051 = vrsqrt.pop %v5918
  %v6052 = vmul.f32 %v6051, %v5918
  %v6053 = vmul.f32 %v6052, %v6051
  %v6054 = vmul.f32 0.5, %v6053
  %v6055 = vsub.f32 1.5, %v6054
  %v6056 = vmul.f32 %v6051, %v6055
  %vm6057 = vweird.f32 %v5918
  %vm6058 = vweird.f32 %v6051
  %vm6059 = vmor %vm6057, %vm6058
  %v6060 = vsel %vm6059, %v6051, %v6056
  %v6061 = vrsqrt.pop %v5919
  %v6062 = vmul.f32 %v6061, %v5919
  %v6063 = vmul.f32 %v6062, %v6061
  %v6064 = vmul.f32 0.5, %v6063
  %v6065 = vsub.f32 1.5, %v6064
  %v6066 = vmul.f32 %v6061, %v6065
  %vm6067 = vweird.f32 %v5919
  %vm6068 = vweird.f32 %v6061
  %vm6069 = vmor %vm6067, %vm6068
  %v6070 = vsel %vm6069, %v6061, %v6066
  %v6071 = vrsqrt.pop %v5920
  %v6072 = vmul.f32 %v6071, %v5920
  %v6073 = vmul.f32 %v6072, %v6071
  %v6074 = vmul.f32 0.5, %v6073
  %v6075 = vsub.f32 1.5, %v6074
  %v6076 = vmul.f32 %v6071, %v6075
  %vm6077 = vweird.f32 %v5920
  %vm6078 = vweird.f32 %v6071
  %vm6079 = vmor %vm6077, %vm6078
  %v6080 = vsel %vm6079, %v6071, %v6076
  %v6081 = vmul.f32 %v5809, %v5930
  %v6082 = vmul.f32 %v5810, %v5940
  %v6083 = vmul.f32 %v5811, %v5950
  %v6084 = vmul.f32 %v5812, %v5960
  %v6085 = vmul.f32 %v5813, %v5970
  %v6086 = vmul.f32 %v5814, %v5980
  %v6087 = vmul.f32 %v5815, %v5990
  %v6088 = vmul.f32 %v5816, %v6000
  %v6089 = vmul.f32 %v5817, %v6010
  %v6090 = vmul.f32 %v5818, %v6020
  %v6091 = vmul.f32 %v5819, %v6030
  %v6092 = vmul.f32 %v5820, %v6040
  %v6093 = vmul.f32 %v5821, %v6050
  %v6094 = vmul.f32 %v5822, %v6060
  %v6095 = vmul.f32 %v5823, %v6070
  %v6096 = vmul.f32 %v5824, %v6080
  %v6098 = vperm.slane %v5742, 0
  %v6100 = vmul.f32 %v6081, %v6098
  %v6101 = vmul.f32 %v6082, %v6098
  %v6102 = vmul.f32 %v6083, %v6098
  %v6103 = vmul.f32 %v6084, %v6098
  %v6104 = vmul.f32 %v6085, %v6098
  %v6105 = vmul.f32 %v6086, %v6098
  %v6106 = vmul.f32 %v6087, %v6098
  %v6107 = vmul.f32 %v6088, %v6098
  %v6108 = vmul.f32 %v6089, %v6098
  %v6109 = vmul.f32 %v6090, %v6098
  %v6110 = vmul.f32 %v6091, %v6098
  %v6111 = vmul.f32 %v6092, %v6098
  %v6112 = vmul.f32 %v6093, %v6098
  %v6113 = vmul.f32 %v6094, %v6098
  %v6114 = vmul.f32 %v6095, %v6098
  %v6115 = vmul.f32 %v6096, %v6098
  %v6117 = vperm.slane %v5744, 0
  %v6119 = vadd.f32 %v6100, %v6117
  %v6120 = vadd.f32 %v6101, %v6117
  %v6121 = vadd.f32 %v6102, %v6117
  %v6122 = vadd.f32 %v6103, %v6117
  %v6123 = vadd.f32 %v6104, %v6117
  %v6124 = vadd.f32 %v6105, %v6117
  %v6125 = vadd.f32 %v6106, %v6117
  %v6126 = vadd.f32 %v6107, %v6117
  %v6127 = vadd.f32 %v6108, %v6117
  %v6128 = vadd.f32 %v6109, %v6117
  %v6129 = vadd.f32 %v6110, %v6117
  %v6130 = vadd.f32 %v6111, %v6117
  %v6131 = vadd.f32 %v6112, %v6117
  %v6132 = vadd.f32 %v6113, %v6117
  %v6133 = vadd.f32 %v6114, %v6117
  %v6134 = vadd.f32 %v6115, %v6117
  %v6135 = vpack.c.bf16 %v6120, %v6119
  %v6136 = vpack.c.bf16 %v6122, %v6121
  %v6137 = vpack.c.bf16 %v6124, %v6123
  %v6138 = vpack.c.bf16 %v6126, %v6125
  %v6139 = vpack.c.bf16 %v6128, %v6127
  %v6140 = vpack.c.bf16 %v6130, %v6129
  %v6141 = vpack.c.bf16 %v6132, %v6131
  %v6142 = vpack.c.bf16 %v6134, %v6133
  %s6143 = scalar_lea.vmem %s10, 16
  %v6144 = vld [vmem:[%s6143] sm:$0xf]
  %v6145 = vld [vmem:[%s6143 + $0x4] sm:$0xf]
  %v6146 = vld [vmem:[%s6143 + $0x8] sm:$0xf]
  %v6147 = vld [vmem:[%s6143 + $0xc] sm:$0xf]
  %s6148 = scalar_lea.vmem %s11, 1
  %v6149 = vld [vmem:[%s6148] sm:$0x1]
  %v6151 = vperm.slane %v6149, 0
  %v6157 = vunpack.c.l.b16 %v6144
  %v6158 = vunpack.c.l.b16 %v6145
  %v6159 = vunpack.c.l.b16 %v6146
  %v6160 = vunpack.c.l.b16 %v6147
  %v6161 = vpack.c.b16 %v6158, %v6157
  %v6162 = vpack.c.b16 %v6160, %v6159
  %v6166 = vsel %vm1102, %v6135, 0
  %v6169 = vsel %vm1102, %v6136, 0
  %v6172 = vsel %vm1102, %v6137, 0
  %v6175 = vsel %vm1102, %v6138, 0
  %v6178 = vsel %vm1102, %v6139, 0
  %v6181 = vsel %vm1102, %v6140, 0
  %v6184 = vsel %vm1102, %v6141, 0
  %v6187 = vsel %vm1102, %v6142, 0
  %6189 = vmatpush.bf16.msra.mxu0 0
  %6190 = vmatpush.bf16.msra.mxu0 0
  %6191 = vmatpush.bf16.msra.mxu0 0
  %6192 = vmatpush.bf16.msra.mxu0 0
  %6193 = vmatpush.bf16.msra.mxu0 0
  %6194 = vmatpush.bf16.msra.mxu0 0
  %6195 = vmatpush.bf16.msra.mxu0 %v6162
  %6196 = vmatpush.bf16.msra.mxu0 %v6161
  %6197 = vmatmul.bf16.gmra.mxu0 %v6166
  %v6198 = vpop.f32.mrf.mxu0
  %v6199 = vadd.f32 %v6151, %v6198
  %v6200 = vpop.f32.mrf.mxu0
  %v6201 = vadd.f32 %v6151, %v6200
  %6202 = vmatmul.bf16.gmra.mxu0 %v6169
  %v6203 = vpop.f32.mrf.mxu0
  %v6204 = vadd.f32 %v6151, %v6203
  %v6205 = vpop.f32.mrf.mxu0
  %v6206 = vadd.f32 %v6151, %v6205
  %6207 = vmatmul.bf16.gmra.mxu0 %v6172
  %v6208 = vpop.f32.mrf.mxu0
  %v6209 = vadd.f32 %v6151, %v6208
  %v6210 = vpop.f32.mrf.mxu0
  %v6211 = vadd.f32 %v6151, %v6210
  %6212 = vmatmul.bf16.gmra.mxu0 %v6175
  %v6213 = vpop.f32.mrf.mxu0
  %v6214 = vadd.f32 %v6151, %v6213
  %v6215 = vpop.f32.mrf.mxu0
  %v6216 = vadd.f32 %v6151, %v6215
  %6217 = vmatmul.bf16.gmra.mxu0 %v6178
  %v6218 = vpop.f32.mrf.mxu0
  %v6219 = vadd.f32 %v6151, %v6218
  %v6220 = vpop.f32.mrf.mxu0
  %v6221 = vadd.f32 %v6151, %v6220
  %6222 = vmatmul.bf16.gmra.mxu0 %v6181
  %v6223 = vpop.f32.mrf.mxu0
  %v6224 = vadd.f32 %v6151, %v6223
  %v6225 = vpop.f32.mrf.mxu0
  %v6226 = vadd.f32 %v6151, %v6225
  %6227 = vmatmul.bf16.gmra.mxu0 %v6184
  %v6228 = vpop.f32.mrf.mxu0
  %v6229 = vadd.f32 %v6151, %v6228
  %v6230 = vpop.f32.mrf.mxu0
  %v6231 = vadd.f32 %v6151, %v6230
  %6232 = vmatmul.bf16.gmra.mxu0 %v6187
  %v6233 = vpop.f32.mrf.mxu0
  %v6234 = vadd.f32 %v6151, %v6233
  %v6235 = vpop.f32.mrf.mxu0
  %v6236 = vadd.f32 %v6151, %v6235
  %6237 = vdwg.mxu0
  %v6238 = vmul.f32 %v6199, 0.5
  %v6239 = vmul.f32 %v6201, 0.5
  %v6240 = vmul.f32 %v6204, 0.5
  %v6241 = vmul.f32 %v6206, 0.5
  %v6242 = vmul.f32 %v6209, 0.5
  %v6243 = vmul.f32 %v6211, 0.5
  %v6244 = vmul.f32 %v6214, 0.5
  %v6245 = vmul.f32 %v6216, 0.5
  %v6246 = vmul.f32 %v6219, 0.5
  %v6247 = vmul.f32 %v6221, 0.5
  %v6248 = vmul.f32 %v6224, 0.5
  %v6249 = vmul.f32 %v6226, 0.5
  %v6250 = vmul.f32 %v6229, 0.5
  %v6251 = vmul.f32 %v6231, 0.5
  %v6252 = vmul.f32 %v6234, 0.5
  %v6253 = vmul.f32 %v6236, 0.5
  %v6254 = vmul.f32 %v6199, 0.044715
  %v6255 = vmul.f32 %v6201, 0.044715
  %v6256 = vmul.f32 %v6204, 0.044715
  %v6257 = vmul.f32 %v6206, 0.044715
  %v6258 = vmul.f32 %v6209, 0.044715
  %v6259 = vmul.f32 %v6211, 0.044715
  %v6260 = vmul.f32 %v6214, 0.044715
  %v6261 = vmul.f32 %v6216, 0.044715
  %v6262 = vmul.f32 %v6219, 0.044715
  %v6263 = vmul.f32 %v6221, 0.044715
  %v6264 = vmul.f32 %v6224, 0.044715
  %v6265 = vmul.f32 %v6226, 0.044715
  %v6266 = vmul.f32 %v6229, 0.044715
  %v6267 = vmul.f32 %v6231, 0.044715
  %v6268 = vmul.f32 %v6234, 0.044715
  %v6269 = vmul.f32 %v6236, 0.044715
  %v6270 = vmul.f32 %v6254, %v6199
  %v6271 = vmul.f32 %v6255, %v6201
  %v6272 = vmul.f32 %v6256, %v6204
  %v6273 = vmul.f32 %v6257, %v6206
  %v6274 = vmul.f32 %v6258, %v6209
  %v6275 = vmul.f32 %v6259, %v6211
  %v6276 = vmul.f32 %v6260, %v6214
  %v6277 = vmul.f32 %v6261, %v6216
  %v6278 = vmul.f32 %v6262, %v6219
  %v6279 = vmul.f32 %v6263, %v6221
  %v6280 = vmul.f32 %v6264, %v6224
  %v6281 = vmul.f32 %v6265, %v6226
  %v6282 = vmul.f32 %v6266, %v6229
  %v6283 = vmul.f32 %v6267, %v6231
  %v6284 = vmul.f32 %v6268, %v6234
  %v6285 = vmul.f32 %v6269, %v6236
  %v6286 = vmul.f32 %v6270, %v6199
  %v6287 = vmul.f32 %v6271, %v6201
  %v6288 = vmul.f32 %v6272, %v6204
  %v6289 = vmul.f32 %v6273, %v6206
  %v6290 = vmul.f32 %v6274, %v6209
  %v6291 = vmul.f32 %v6275, %v6211
  %v6292 = vmul.f32 %v6276, %v6214
  %v6293 = vmul.f32 %v6277, %v6216
  %v6294 = vmul.f32 %v6278, %v6219
  %v6295 = vmul.f32 %v6279, %v6221
  %v6296 = vmul.f32 %v6280, %v6224
  %v6297 = vmul.f32 %v6281, %v6226
  %v6298 = vmul.f32 %v6282, %v6229
  %v6299 = vmul.f32 %v6283, %v6231
  %v6300 = vmul.f32 %v6284, %v6234
  %v6301 = vmul.f32 %v6285, %v6236
  %v6302 = vadd.f32 %v6199, %v6286
  %v6303 = vadd.f32 %v6201, %v6287
  %v6304 = vadd.f32 %v6204, %v6288
  %v6305 = vadd.f32 %v6206, %v6289
  %v6306 = vadd.f32 %v6209, %v6290
  %v6307 = vadd.f32 %v6211, %v6291
  %v6308 = vadd.f32 %v6214, %v6292
  %v6309 = vadd.f32 %v6216, %v6293
  %v6310 = vadd.f32 %v6219, %v6294
  %v6311 = vadd.f32 %v6221, %v6295
  %v6312 = vadd.f32 %v6224, %v6296
  %v6313 = vadd.f32 %v6226, %v6297
  %v6314 = vadd.f32 %v6229, %v6298
  %v6315 = vadd.f32 %v6231, %v6299
  %v6316 = vadd.f32 %v6234, %v6300
  %v6317 = vadd.f32 %v6236, %v6301
  %v6318 = vmul.f32 %v6302, 0.7978846
  %v6319 = vmul.f32 %v6303, 0.7978846
  %v6320 = vmul.f32 %v6304, 0.7978846
  %v6321 = vmul.f32 %v6305, 0.7978846
  %v6322 = vmul.f32 %v6306, 0.7978846
  %v6323 = vmul.f32 %v6307, 0.7978846
  %v6324 = vmul.f32 %v6308, 0.7978846
  %v6325 = vmul.f32 %v6309, 0.7978846
  %v6326 = vmul.f32 %v6310, 0.7978846
  %v6327 = vmul.f32 %v6311, 0.7978846
  %v6328 = vmul.f32 %v6312, 0.7978846
  %v6329 = vmul.f32 %v6313, 0.7978846
  %v6330 = vmul.f32 %v6314, 0.7978846
  %v6331 = vmul.f32 %v6315, 0.7978846
  %v6332 = vmul.f32 %v6316, 0.7978846
  %v6333 = vmul.f32 %v6317, 0.7978846
  %v6334 = vtanh.pop %v6318
  %v6335 = vtanh.pop %v6319
  %v6336 = vtanh.pop %v6320
  %v6337 = vtanh.pop %v6321
  %v6338 = vtanh.pop %v6322
  %v6339 = vtanh.pop %v6323
  %v6340 = vtanh.pop %v6324
  %v6341 = vtanh.pop %v6325
  %v6342 = vtanh.pop %v6326
  %v6343 = vtanh.pop %v6327
  %v6344 = vtanh.pop %v6328
  %v6345 = vtanh.pop %v6329
  %v6346 = vtanh.pop %v6330
  %v6347 = vtanh.pop %v6331
  %v6348 = vtanh.pop %v6332
  %v6349 = vtanh.pop %v6333
  %v6350 = vadd.f32 %v6334, 1.0
  %v6351 = vadd.f32 %v6335, 1.0
  %v6352 = vadd.f32 %v6336, 1.0
  %v6353 = vadd.f32 %v6337, 1.0
  %v6354 = vadd.f32 %v6338, 1.0
  %v6355 = vadd.f32 %v6339, 1.0
  %v6356 = vadd.f32 %v6340, 1.0
  %v6357 = vadd.f32 %v6341, 1.0
  %v6358 = vadd.f32 %v6342, 1.0
  %v6359 = vadd.f32 %v6343, 1.0
  %v6360 = vadd.f32 %v6344, 1.0
  %v6361 = vadd.f32 %v6345, 1.0
  %v6362 = vadd.f32 %v6346, 1.0
  %v6363 = vadd.f32 %v6347, 1.0
  %v6364 = vadd.f32 %v6348, 1.0
  %v6365 = vadd.f32 %v6349, 1.0
  %v6366 = vmul.f32 %v6238, %v6350
  %v6367 = vmul.f32 %v6239, %v6351
  %v6368 = vmul.f32 %v6240, %v6352
  %v6369 = vmul.f32 %v6241, %v6353
  %v6370 = vmul.f32 %v6242, %v6354
  %v6371 = vmul.f32 %v6243, %v6355
  %v6372 = vmul.f32 %v6244, %v6356
  %v6373 = vmul.f32 %v6245, %v6357
  %v6374 = vmul.f32 %v6246, %v6358
  %v6375 = vmul.f32 %v6247, %v6359
  %v6376 = vmul.f32 %v6248, %v6360
  %v6377 = vmul.f32 %v6249, %v6361
  %v6378 = vmul.f32 %v6250, %v6362
  %v6379 = vmul.f32 %v6251, %v6363
  %v6380 = vmul.f32 %v6252, %v6364
  %v6381 = vmul.f32 %v6253, %v6365
  %v6382 = vpack.c.bf16 %v6367, %v6366
  %v6383 = vpack.c.bf16 %v6369, %v6368
  %v6384 = vpack.c.bf16 %v6371, %v6370
  %v6385 = vpack.c.bf16 %v6373, %v6372
  %v6386 = vpack.c.bf16 %v6375, %v6374
  %v6387 = vpack.c.bf16 %v6377, %v6376
  %v6388 = vpack.c.bf16 %v6379, %v6378
  %v6389 = vpack.c.bf16 %v6381, %v6380
  %s6390 = scalar_lea.vmem %s12, 32
  %v6391 = vld [vmem:[%s6390] sm:$0xf]
  %v6392 = vld [vmem:[%s6390 + $0x4] sm:$0xf]
  %v6393 = vld [vmem:[%s6390 + $0x8] sm:$0xf]
  %v6394 = vld [vmem:[%s6390 + $0xc] sm:$0xf]
  %v6395 = vld [vmem:[%s6390 + $0x10] sm:$0xf]
  %v6396 = vld [vmem:[%s6390 + $0x14] sm:$0xf]
  %v6397 = vld [vmem:[%s6390 + $0x18] sm:$0xf]
  %v6398 = vld [vmem:[%s6390 + $0x1c] sm:$0xf]
  %s6399 = scalar_lea.vmem %s13, 1
  %v6400 = vld [vmem:[%s6399] sm:$0x1]
  %v6402 = vperm.slane %v6400, 0
  %v6412 = vunpack.c.l.b16 %v6391
  %v6413 = vunpack.c.l.b16 %v6392
  %v6414 = vunpack.c.l.b16 %v6393
  %v6415 = vunpack.c.l.b16 %v6394
  %v6416 = vunpack.c.l.b16 %v6395
  %v6417 = vunpack.c.l.b16 %v6396
  %v6418 = vunpack.c.l.b16 %v6397
  %v6419 = vunpack.c.l.b16 %v6398
  %v6420 = vpack.c.b16 %v6413, %v6412
  %v6421 = vpack.c.b16 %v6415, %v6414
  %v6422 = vpack.c.b16 %v6417, %v6416
  %v6423 = vpack.c.b16 %v6419, %v6418
  %v6429 = vsel %vm3509, %v6382, 0
  %v6432 = vsel %vm3509, %v6383, 0
  %v6435 = vsel %vm3509, %v6384, 0
  %v6438 = vsel %vm3509, %v6385, 0
  %v6441 = vsel %vm3509, %v6386, 0
  %v6444 = vsel %vm3509, %v6387, 0
  %v6447 = vsel %vm3509, %v6388, 0
  %v6450 = vsel %vm3509, %v6389, 0
  %6452 = vmatpush.bf16.msra.mxu0 0
  %6453 = vmatpush.bf16.msra.mxu0 0
  %6454 = vmatpush.bf16.msra.mxu0 0
  %6455 = vmatpush.bf16.msra.mxu0 0
  %6456 = vmatpush.bf16.msra.mxu0 %v6423
  %6457 = vmatpush.bf16.msra.mxu0 %v6422
  %6458 = vmatpush.bf16.msra.mxu0 %v6421
  %6459 = vmatpush.bf16.msra.mxu0 %v6420
  %6460 = vmatmul.bf16.gmra.mxu0 %v6429
  %v6461 = vpop.f32.mrf.mxu0
  %v6462 = vadd.f32 %v6402, %v6461
  %v6463 = vpop.f32.mrf.mxu0
  %v6464 = vadd.f32 %v6402, %v6463
  %6465 = vmatmul.bf16.gmra.mxu0 %v6432
  %v6466 = vpop.f32.mrf.mxu0
  %v6467 = vadd.f32 %v6402, %v6466
  %v6468 = vpop.f32.mrf.mxu0
  %v6469 = vadd.f32 %v6402, %v6468
  %6470 = vmatmul.bf16.gmra.mxu0 %v6435
  %v6471 = vpop.f32.mrf.mxu0
  %v6472 = vadd.f32 %v6402, %v6471
  %v6473 = vpop.f32.mrf.mxu0
  %v6474 = vadd.f32 %v6402, %v6473
  %6475 = vmatmul.bf16.gmra.mxu0 %v6438
  %v6476 = vpop.f32.mrf.mxu0
  %v6477 = vadd.f32 %v6402, %v6476
  %v6478 = vpop.f32.mrf.mxu0
  %v6479 = vadd.f32 %v6402, %v6478
  %6480 = vmatmul.bf16.gmra.mxu0 %v6441
  %v6481 = vpop.f32.mrf.mxu0
  %v6482 = vadd.f32 %v6402, %v6481
  %v6483 = vpop.f32.mrf.mxu0
  %v6484 = vadd.f32 %v6402, %v6483
  %6485 = vmatmul.bf16.gmra.mxu0 %v6444
  %v6486 = vpop.f32.mrf.mxu0
  %v6487 = vadd.f32 %v6402, %v6486
  %v6488 = vpop.f32.mrf.mxu0
  %v6489 = vadd.f32 %v6402, %v6488
  %6490 = vmatmul.bf16.gmra.mxu0 %v6447
  %v6491 = vpop.f32.mrf.mxu0
  %v6492 = vadd.f32 %v6402, %v6491
  %v6493 = vpop.f32.mrf.mxu0
  %v6494 = vadd.f32 %v6402, %v6493
  %6495 = vmatmul.bf16.gmra.mxu0 %v6450
  %v6496 = vpop.f32.mrf.mxu0
  %v6497 = vadd.f32 %v6402, %v6496
  %v6498 = vpop.f32.mrf.mxu0
  %v6499 = vadd.f32 %v6402, %v6498
  %6500 = vdwg.mxu0
  %v6501 = vadd.f32 %v6119, %v6462
  %v6502 = vadd.f32 %v6120, %v6464
  %v6503 = vadd.f32 %v6121, %v6467
  %v6504 = vadd.f32 %v6122, %v6469
  %v6505 = vadd.f32 %v6123, %v6472
  %v6506 = vadd.f32 %v6124, %v6474
  %v6507 = vadd.f32 %v6125, %v6477
  %v6508 = vadd.f32 %v6126, %v6479
  %v6509 = vadd.f32 %v6127, %v6482
  %v6510 = vadd.f32 %v6128, %v6484
  %v6511 = vadd.f32 %v6129, %v6487
  %v6512 = vadd.f32 %v6130, %v6489
  %v6513 = vadd.f32 %v6131, %v6492
  %v6514 = vadd.f32 %v6132, %v6494
  %v6515 = vadd.f32 %v6133, %v6497
  %v6516 = vadd.f32 %v6134, %v6499
  %s6517 = scalar_lea.vmem %s14, 1
  %v6518 = vld [vmem:[%s6517] sm:$0x1]
  %s6519 = scalar_lea.vmem %s15, 1
  %v6520 = vld [vmem:[%s6519] sm:$0x1]
  %v6521 = vsel %vm1102, %v6501, 0.0
  %6522 = vadd.xlane.f32.xlu0 %v6521
  %v6523 = vpop.xlane.xlu0 %6522
  %v6524 = vsel %vm1102, %v6502, 0.0
  %6525 = vadd.xlane.f32.xlu0 %v6524
  %v6526 = vpop.xlane.xlu0 %6525
  %v6527 = vsel %vm1102, %v6503, 0.0
  %6528 = vadd.xlane.f32.xlu0 %v6527
  %v6529 = vpop.xlane.xlu0 %6528
  %v6530 = vsel %vm1102, %v6504, 0.0
  %6531 = vadd.xlane.f32.xlu0 %v6530
  %v6532 = vpop.xlane.xlu0 %6531
  %v6533 = vsel %vm1102, %v6505, 0.0
  %6534 = vadd.xlane.f32.xlu0 %v6533
  %v6535 = vpop.xlane.xlu0 %6534
  %v6536 = vsel %vm1102, %v6506, 0.0
  %6537 = vadd.xlane.f32.xlu0 %v6536
  %v6538 = vpop.xlane.xlu0 %6537
  %v6539 = vsel %vm1102, %v6507, 0.0
  %6540 = vadd.xlane.f32.xlu0 %v6539
  %v6541 = vpop.xlane.xlu0 %6540
  %v6542 = vsel %vm1102, %v6508, 0.0
  %6543 = vadd.xlane.f32.xlu0 %v6542
  %v6544 = vpop.xlane.xlu0 %6543
  %v6545 = vsel %vm1102, %v6509, 0.0
  %6546 = vadd.xlane.f32.xlu0 %v6545
  %v6547 = vpop.xlane.xlu0 %6546
  %v6548 = vsel %vm1102, %v6510, 0.0
  %6549 = vadd.xlane.f32.xlu0 %v6548
  %v6550 = vpop.xlane.xlu0 %6549
  %v6551 = vsel %vm1102, %v6511, 0.0
  %6552 = vadd.xlane.f32.xlu0 %v6551
  %v6553 = vpop.xlane.xlu0 %6552
  %v6554 = vsel %vm1102, %v6512, 0.0
  %6555 = vadd.xlane.f32.xlu0 %v6554
  %v6556 = vpop.xlane.xlu0 %6555
  %v6557 = vsel %vm1102, %v6513, 0.0
  %6558 = vadd.xlane.f32.xlu0 %v6557
  %v6559 = vpop.xlane.xlu0 %6558
  %v6560 = vsel %vm1102, %v6514, 0.0
  %6561 = vadd.xlane.f32.xlu0 %v6560
  %v6562 = vpop.xlane.xlu0 %6561
  %v6563 = vsel %vm1102, %v6515, 0.0
  %6564 = vadd.xlane.f32.xlu0 %v6563
  %v6565 = vpop.xlane.xlu0 %6564
  %v6566 = vsel %vm1102, %v6516, 0.0
  %6567 = vadd.xlane.f32.xlu0 %v6566
  %v6568 = vpop.xlane.xlu0 %6567
  %v6569 = vmul.f32 %v6523, %v2877
  %v6570 = vmul.f32 %v6526, %v2877
  %v6571 = vmul.f32 %v6529, %v2877
  %v6572 = vmul.f32 %v6532, %v2877
  %v6573 = vmul.f32 %v6535, %v2877
  %v6574 = vmul.f32 %v6538, %v2877
  %v6575 = vmul.f32 %v6541, %v2877
  %v6576 = vmul.f32 %v6544, %v2877
  %v6577 = vmul.f32 %v6547, %v2877
  %v6578 = vmul.f32 %v6550, %v2877
  %v6579 = vmul.f32 %v6553, %v2877
  %v6580 = vmul.f32 %v6556, %v2877
  %v6581 = vmul.f32 %v6559, %v2877
  %v6582 = vmul.f32 %v6562, %v2877
  %v6583 = vmul.f32 %v6565, %v2877
  %v6584 = vmul.f32 %v6568, %v2877
  %v6585 = vsub.f32 %v6501, %v6569
  %v6586 = vsub.f32 %v6502, %v6570
  %v6587 = vsub.f32 %v6503, %v6571
  %v6588 = vsub.f32 %v6504, %v6572
  %v6589 = vsub.f32 %v6505, %v6573
  %v6590 = vsub.f32 %v6506, %v6574
  %v6591 = vsub.f32 %v6507, %v6575
  %v6592 = vsub.f32 %v6508, %v6576
  %v6593 = vsub.f32 %v6509, %v6577
  %v6594 = vsub.f32 %v6510, %v6578
  %v6595 = vsub.f32 %v6511, %v6579
  %v6596 = vsub.f32 %v6512, %v6580
  %v6597 = vsub.f32 %v6513, %v6581
  %v6598 = vsub.f32 %v6514, %v6582
  %v6599 = vsub.f32 %v6515, %v6583
  %v6600 = vsub.f32 %v6516, %v6584
  %v6601 = vmul.f32 %v6585, %v6585
  %v6602 = vmul.f32 %v6586, %v6586
  %v6603 = vmul.f32 %v6587, %v6587
  %v6604 = vmul.f32 %v6588, %v6588
  %v6605 = vmul.f32 %v6589, %v6589
  %v6606 = vmul.f32 %v6590, %v6590
  %v6607 = vmul.f32 %v6591, %v6591
  %v6608 = vmul.f32 %v6592, %v6592
  %v6609 = vmul.f32 %v6593, %v6593
  %v6610 = vmul.f32 %v6594, %v6594
  %v6611 = vmul.f32 %v6595, %v6595
  %v6612 = vmul.f32 %v6596, %v6596
  %v6613 = vmul.f32 %v6597, %v6597
  %v6614 = vmul.f32 %v6598, %v6598
  %v6615 = vmul.f32 %v6599, %v6599
  %v6616 = vmul.f32 %v6600, %v6600
  %v6617 = vsel %vm1102, %v6601, 0.0
  %6618 = vadd.xlane.f32.xlu0 %v6617
  %v6619 = vpop.xlane.xlu0 %6618
  %v6620 = vsel %vm1102, %v6602, 0.0
  %6621 = vadd.xlane.f32.xlu0 %v6620
  %v6622 = vpop.xlane.xlu0 %6621
  %v6623 = vsel %vm1102, %v6603, 0.0
  %6624 = vadd.xlane.f32.xlu0 %v6623
  %v6625 = vpop.xlane.xlu0 %6624
  %v6626 = vsel %vm1102, %v6604, 0.0
  %6627 = vadd.xlane.f32.xlu0 %v6626
  %v6628 = vpop.xlane.xlu0 %6627
  %v6629 = vsel %vm1102, %v6605, 0.0
  %6630 = vadd.xlane.f32.xlu0 %v6629
  %v6631 = vpop.xlane.xlu0 %6630
  %v6632 = vsel %vm1102, %v6606, 0.0
  %6633 = vadd.xlane.f32.xlu0 %v6632
  %v6634 = vpop.xlane.xlu0 %6633
  %v6635 = vsel %vm1102, %v6607, 0.0
  %6636 = vadd.xlane.f32.xlu0 %v6635
  %v6637 = vpop.xlane.xlu0 %6636
  %v6638 = vsel %vm1102, %v6608, 0.0
  %6639 = vadd.xlane.f32.xlu0 %v6638
  %v6640 = vpop.xlane.xlu0 %6639
  %v6641 = vsel %vm1102, %v6609, 0.0
  %6642 = vadd.xlane.f32.xlu0 %v6641
  %v6643 = vpop.xlane.xlu0 %6642
  %v6644 = vsel %vm1102, %v6610, 0.0
  %6645 = vadd.xlane.f32.xlu0 %v6644
  %v6646 = vpop.xlane.xlu0 %6645
  %v6647 = vsel %vm1102, %v6611, 0.0
  %6648 = vadd.xlane.f32.xlu0 %v6647
  %v6649 = vpop.xlane.xlu0 %6648
  %v6650 = vsel %vm1102, %v6612, 0.0
  %6651 = vadd.xlane.f32.xlu0 %v6650
  %v6652 = vpop.xlane.xlu0 %6651
  %v6653 = vsel %vm1102, %v6613, 0.0
  %6654 = vadd.xlane.f32.xlu0 %v6653
  %v6655 = vpop.xlane.xlu0 %6654
  %v6656 = vsel %vm1102, %v6614, 0.0
  %6657 = vadd.xlane.f32.xlu0 %v6656
  %v6658 = vpop.xlane.xlu0 %6657
  %v6659 = vsel %vm1102, %v6615, 0.0
  %6660 = vadd.xlane.f32.xlu0 %v6659
  %v6661 = vpop.xlane.xlu0 %6660
  %v6662 = vsel %vm1102, %v6616, 0.0
  %6663 = vadd.xlane.f32.xlu0 %v6662
  %v6664 = vpop.xlane.xlu0 %6663
  %v6665 = vmul.f32 %v6619, %v2877
  %v6666 = vmul.f32 %v6622, %v2877
  %v6667 = vmul.f32 %v6625, %v2877
  %v6668 = vmul.f32 %v6628, %v2877
  %v6669 = vmul.f32 %v6631, %v2877
  %v6670 = vmul.f32 %v6634, %v2877
  %v6671 = vmul.f32 %v6637, %v2877
  %v6672 = vmul.f32 %v6640, %v2877
  %v6673 = vmul.f32 %v6643, %v2877
  %v6674 = vmul.f32 %v6646, %v2877
  %v6675 = vmul.f32 %v6649, %v2877
  %v6676 = vmul.f32 %v6652, %v2877
  %v6677 = vmul.f32 %v6655, %v2877
  %v6678 = vmul.f32 %v6658, %v2877
  %v6679 = vmul.f32 %v6661, %v2877
  %v6680 = vmul.f32 %v6664, %v2877
  %v6681 = vadd.f32 %v6665, 1e-05
  %v6682 = vadd.f32 %v6666, 1e-05
  %v6683 = vadd.f32 %v6667, 1e-05
  %v6684 = vadd.f32 %v6668, 1e-05
  %v6685 = vadd.f32 %v6669, 1e-05
  %v6686 = vadd.f32 %v6670, 1e-05
  %v6687 = vadd.f32 %v6671, 1e-05
  %v6688 = vadd.f32 %v6672, 1e-05
  %v6689 = vadd.f32 %v6673, 1e-05
  %v6690 = vadd.f32 %v6674, 1e-05
  %v6691 = vadd.f32 %v6675, 1e-05
  %v6692 = vadd.f32 %v6676, 1e-05
  %v6693 = vadd.f32 %v6677, 1e-05
  %v6694 = vadd.f32 %v6678, 1e-05
  %v6695 = vadd.f32 %v6679, 1e-05
  %v6696 = vadd.f32 %v6680, 1e-05
  %v6697 = vrsqrt.pop %v6681
  %v6698 = vmul.f32 %v6697, %v6681
  %v6699 = vmul.f32 %v6698, %v6697
  %v6700 = vmul.f32 0.5, %v6699
  %v6701 = vsub.f32 1.5, %v6700
  %v6702 = vmul.f32 %v6697, %v6701
  %vm6703 = vweird.f32 %v6681
  %vm6704 = vweird.f32 %v6697
  %vm6705 = vmor %vm6703, %vm6704
  %v6706 = vsel %vm6705, %v6697, %v6702
  %v6707 = vrsqrt.pop %v6682
  %v6708 = vmul.f32 %v6707, %v6682
  %v6709 = vmul.f32 %v6708, %v6707
  %v6710 = vmul.f32 0.5, %v6709
  %v6711 = vsub.f32 1.5, %v6710
  %v6712 = vmul.f32 %v6707, %v6711
  %vm6713 = vweird.f32 %v6682
  %vm6714 = vweird.f32 %v6707
  %vm6715 = vmor %vm6713, %vm6714
  %v6716 = vsel %vm6715, %v6707, %v6712
  %v6717 = vrsqrt.pop %v6683
  %v6718 = vmul.f32 %v6717, %v6683
  %v6719 = vmul.f32 %v6718, %v6717
  %v6720 = vmul.f32 0.5, %v6719
  %v6721 = vsub.f32 1.5, %v6720
  %v6722 = vmul.f32 %v6717, %v6721
  %vm6723 = vweird.f32 %v6683
  %vm6724 = vweird.f32 %v6717
  %vm6725 = vmor %vm6723, %vm6724
  %v6726 = vsel %vm6725, %v6717, %v6722
  %v6727 = vrsqrt.pop %v6684
  %v6728 = vmul.f32 %v6727, %v6684
  %v6729 = vmul.f32 %v6728, %v6727
  %v6730 = vmul.f32 0.5, %v6729
  %v6731 = vsub.f32 1.5, %v6730
  %v6732 = vmul.f32 %v6727, %v6731
  %vm6733 = vweird.f32 %v6684
  %vm6734 = vweird.f32 %v6727
  %vm6735 = vmor %vm6733, %vm6734
  %v6736 = vsel %vm6735, %v6727, %v6732
  %v6737 = vrsqrt.pop %v6685
  %v6738 = vmul.f32 %v6737, %v6685
  %v6739 = vmul.f32 %v6738, %v6737
  %v6740 = vmul.f32 0.5, %v6739
  %v6741 = vsub.f32 1.5, %v6740
  %v6742 = vmul.f32 %v6737, %v6741
  %vm6743 = vweird.f32 %v6685
  %vm6744 = vweird.f32 %v6737
  %vm6745 = vmor %vm6743, %vm6744
  %v6746 = vsel %vm6745, %v6737, %v6742
  %v6747 = vrsqrt.pop %v6686
  %v6748 = vmul.f32 %v6747, %v6686
  %v6749 = vmul.f32 %v6748, %v6747
  %v6750 = vmul.f32 0.5, %v6749
  %v6751 = vsub.f32 1.5, %v6750
  %v6752 = vmul.f32 %v6747, %v6751
  %vm6753 = vweird.f32 %v6686
  %vm6754 = vweird.f32 %v6747
  %vm6755 = vmor %vm6753, %vm6754
  %v6756 = vsel %vm6755, %v6747, %v6752
  %v6757 = vrsqrt.pop %v6687
  %v6758 = vmul.f32 %v6757, %v6687
  %v6759 = vmul.f32 %v6758, %v6757
  %v6760 = vmul.f32 0.5, %v6759
  %v6761 = vsub.f32 1.5, %v6760
  %v6762 = vmul.f32 %v6757, %v6761
  %vm6763 = vweird.f32 %v6687
  %vm6764 = vweird.f32 %v6757
  %vm6765 = vmor %vm6763, %vm6764
  %v6766 = vsel %vm6765, %v6757, %v6762
  %v6767 = vrsqrt.pop %v6688
  %v6768 = vmul.f32 %v6767, %v6688
  %v6769 = vmul.f32 %v6768, %v6767
  %v6770 = vmul.f32 0.5, %v6769
  %v6771 = vsub.f32 1.5, %v6770
  %v6772 = vmul.f32 %v6767, %v6771
  %vm6773 = vweird.f32 %v6688
  %vm6774 = vweird.f32 %v6767
  %vm6775 = vmor %vm6773, %vm6774
  %v6776 = vsel %vm6775, %v6767, %v6772
  %v6777 = vrsqrt.pop %v6689
  %v6778 = vmul.f32 %v6777, %v6689
  %v6779 = vmul.f32 %v6778, %v6777
  %v6780 = vmul.f32 0.5, %v6779
  %v6781 = vsub.f32 1.5, %v6780
  %v6782 = vmul.f32 %v6777, %v6781
  %vm6783 = vweird.f32 %v6689
  %vm6784 = vweird.f32 %v6777
  %vm6785 = vmor %vm6783, %vm6784
  %v6786 = vsel %vm6785, %v6777, %v6782
  %v6787 = vrsqrt.pop %v6690
  %v6788 = vmul.f32 %v6787, %v6690
  %v6789 = vmul.f32 %v6788, %v6787
  %v6790 = vmul.f32 0.5, %v6789
  %v6791 = vsub.f32 1.5, %v6790
  %v6792 = vmul.f32 %v6787, %v6791
  %vm6793 = vweird.f32 %v6690
  %vm6794 = vweird.f32 %v6787
  %vm6795 = vmor %vm6793, %vm6794
  %v6796 = vsel %vm6795, %v6787, %v6792
  %v6797 = vrsqrt.pop %v6691
  %v6798 = vmul.f32 %v6797, %v6691
  %v6799 = vmul.f32 %v6798, %v6797
  %v6800 = vmul.f32 0.5, %v6799
  %v6801 = vsub.f32 1.5, %v6800
  %v6802 = vmul.f32 %v6797, %v6801
  %vm6803 = vweird.f32 %v6691
  %vm6804 = vweird.f32 %v6797
  %vm6805 = vmor %vm6803, %vm6804
  %v6806 = vsel %vm6805, %v6797, %v6802
  %v6807 = vrsqrt.pop %v6692
  %v6808 = vmul.f32 %v6807, %v6692
  %v6809 = vmul.f32 %v6808, %v6807
  %v6810 = vmul.f32 0.5, %v6809
  %v6811 = vsub.f32 1.5, %v6810
  %v6812 = vmul.f32 %v6807, %v6811
  %vm6813 = vweird.f32 %v6692
  %vm6814 = vweird.f32 %v6807
  %vm6815 = vmor %vm6813, %vm6814
  %v6816 = vsel %vm6815, %v6807, %v6812
  %v6817 = vrsqrt.pop %v6693
  %v6818 = vmul.f32 %v6817, %v6693
  %v6819 = vmul.f32 %v6818, %v6817
  %v6820 = vmul.f32 0.5, %v6819
  %v6821 = vsub.f32 1.5, %v6820
  %v6822 = vmul.f32 %v6817, %v6821
  %vm6823 = vweird.f32 %v6693
  %vm6824 = vweird.f32 %v6817
  %vm6825 = vmor %vm6823, %vm6824
  %v6826 = vsel %vm6825, %v6817, %v6822
  %v6827 = vrsqrt.pop %v6694
  %v6828 = vmul.f32 %v6827, %v6694
  %v6829 = vmul.f32 %v6828, %v6827
  %v6830 = vmul.f32 0.5, %v6829
  %v6831 = vsub.f32 1.5, %v6830
  %v6832 = vmul.f32 %v6827, %v6831
  %vm6833 = vweird.f32 %v6694
  %vm6834 = vweird.f32 %v6827
  %vm6835 = vmor %vm6833, %vm6834
  %v6836 = vsel %vm6835, %v6827, %v6832
  %v6837 = vrsqrt.pop %v6695
  %v6838 = vmul.f32 %v6837, %v6695
  %v6839 = vmul.f32 %v6838, %v6837
  %v6840 = vmul.f32 0.5, %v6839
  %v6841 = vsub.f32 1.5, %v6840
  %v6842 = vmul.f32 %v6837, %v6841
  %vm6843 = vweird.f32 %v6695
  %vm6844 = vweird.f32 %v6837
  %vm6845 = vmor %vm6843, %vm6844
  %v6846 = vsel %vm6845, %v6837, %v6842
  %v6847 = vrsqrt.pop %v6696
  %v6848 = vmul.f32 %v6847, %v6696
  %v6849 = vmul.f32 %v6848, %v6847
  %v6850 = vmul.f32 0.5, %v6849
  %v6851 = vsub.f32 1.5, %v6850
  %v6852 = vmul.f32 %v6847, %v6851
  %vm6853 = vweird.f32 %v6696
  %vm6854 = vweird.f32 %v6847
  %vm6855 = vmor %vm6853, %vm6854
  %v6856 = vsel %vm6855, %v6847, %v6852
  %v6857 = vmul.f32 %v6585, %v6706
  %v6858 = vmul.f32 %v6586, %v6716
  %v6859 = vmul.f32 %v6587, %v6726
  %v6860 = vmul.f32 %v6588, %v6736
  %v6861 = vmul.f32 %v6589, %v6746
  %v6862 = vmul.f32 %v6590, %v6756
  %v6863 = vmul.f32 %v6591, %v6766
  %v6864 = vmul.f32 %v6592, %v6776
  %v6865 = vmul.f32 %v6593, %v6786
  %v6866 = vmul.f32 %v6594, %v6796
  %v6867 = vmul.f32 %v6595, %v6806
  %v6868 = vmul.f32 %v6596, %v6816
  %v6869 = vmul.f32 %v6597, %v6826
  %v6870 = vmul.f32 %v6598, %v6836
  %v6871 = vmul.f32 %v6599, %v6846
  %v6872 = vmul.f32 %v6600, %v6856
  %v6874 = vperm.slane %v6518, 0
  %v6876 = vmul.f32 %v6857, %v6874
  %v6877 = vmul.f32 %v6858, %v6874
  %v6878 = vmul.f32 %v6859, %v6874
  %v6879 = vmul.f32 %v6860, %v6874
  %v6880 = vmul.f32 %v6861, %v6874
  %v6881 = vmul.f32 %v6862, %v6874
  %v6882 = vmul.f32 %v6863, %v6874
  %v6883 = vmul.f32 %v6864, %v6874
  %v6884 = vmul.f32 %v6865, %v6874
  %v6885 = vmul.f32 %v6866, %v6874
  %v6886 = vmul.f32 %v6867, %v6874
  %v6887 = vmul.f32 %v6868, %v6874
  %v6888 = vmul.f32 %v6869, %v6874
  %v6889 = vmul.f32 %v6870, %v6874
  %v6890 = vmul.f32 %v6871, %v6874
  %v6891 = vmul.f32 %v6872, %v6874
  %v6893 = vperm.slane %v6520, 0
  %v6895 = vadd.f32 %v6876, %v6893
  %v6896 = vadd.f32 %v6877, %v6893
  %v6897 = vadd.f32 %v6878, %v6893
  %v6898 = vadd.f32 %v6879, %v6893
  %v6899 = vadd.f32 %v6880, %v6893
  %v6900 = vadd.f32 %v6881, %v6893
  %v6901 = vadd.f32 %v6882, %v6893
  %v6902 = vadd.f32 %v6883, %v6893
  %v6903 = vadd.f32 %v6884, %v6893
  %v6904 = vadd.f32 %v6885, %v6893
  %v6905 = vadd.f32 %v6886, %v6893
  %v6906 = vadd.f32 %v6887, %v6893
  %v6907 = vadd.f32 %v6888, %v6893
  %v6908 = vadd.f32 %v6889, %v6893
  %v6909 = vadd.f32 %v6890, %v6893
  %v6910 = vadd.f32 %v6891, %v6893
  %6911 = vst.msk [vmem:[%s16] sm:$0xff] %vm1102, %v6895
  %6912 = vst.msk [vmem:[%s16 + $0x8] sm:$0xff] %vm1102, %v6896
  %6913 = vst.msk [vmem:[%s16 + $0x10] sm:$0xff] %vm1102, %v6897
  %6914 = vst.msk [vmem:[%s16 + $0x18] sm:$0xff] %vm1102, %v6898
  %6915 = vst.msk [vmem:[%s16 + $0x20] sm:$0xff] %vm1102, %v6899
  %6916 = vst.msk [vmem:[%s16 + $0x28] sm:$0xff] %vm1102, %v6900
  %6917 = vst.msk [vmem:[%s16 + $0x30] sm:$0xff] %vm1102, %v6901
  %6918 = vst.msk [vmem:[%s16 + $0x38] sm:$0xff] %vm1102, %v6902
  %6919 = vst.msk [vmem:[%s16 + $0x40] sm:$0xff] %vm1102, %v6903
  %6920 = vst.msk [vmem:[%s16 + $0x48] sm:$0xff] %vm1102, %v6904
  %6921 = vst.msk [vmem:[%s16 + $0x50] sm:$0xff] %vm1102, %v6905
  %6922 = vst.msk [vmem:[%s16 + $0x58] sm:$0xff] %vm1102, %v6906
  %6923 = vst.msk [vmem:[%s16 + $0x60] sm:$0xff] %vm1102, %v6907
  %6924 = vst.msk [vmem:[%s16 + $0x68] sm:$0xff] %vm1102, %v6908
  %6925 = vst.msk [vmem:[%s16 + $0x70] sm:$0xff] %vm1102, %v6909
  %6926 = vst.msk [vmem:[%s16 + $0x78] sm:$0xff] %vm1102, %v6910
  // Predicated region
  $region66: #{clvit_forward.1} parent=0 // pred_check
    _
  $region67: #{clvit_forward.1} parent=0 // pred_check_branch
    %6928 = sbr.rel (0) target = $region69
  $region68: #{clvit_forward.1} parent=0 // pred_region
    _
  $region69: #{clvit_forward.1} parent=0 // pred_fallthru
    _
  // Predicated region
  $region70: #{clvit_forward.1} parent=0 // pred_check
    _
  $region71: #{clvit_forward.1} parent=0 // pred_check_branch
    %6930 = sbr.rel (0) target = $region73
  $region72: #{clvit_forward.1} parent=0 // pred_region
    _
  $region73: #{clvit_forward.1} parent=0 // pred_fallthru
    _

</llo_original>
